<compile_context>
chip_gen: v7x
topology: tpu7x:2x2x1
jax: 0.10.0
libtpu: 0.0.40
codegen_flags: <defaults>
</compile_context>

<pallas_src>
import jax
import jax.numpy as jnp
from jax.experimental import pallas as pl
from jax.experimental.pallas import tpu as pltpu  # noqa: F401  (TPU backend)

EPS = 1e-5  # BatchNorm1d eps


# ------------------------- in-kernel building blocks -------------------------

def _gru_layer_blockdiag(x, w_ih, w_hh, b_ih, b_hh):
    """One GRU 'layer' covering all F feature streams via block-diagonal
    weights with gate-major columns.

    x:    (L, Cin)      feature-major input sequence (L = recurrence axis)
    w_ih: (Cin, 3*FH)   columns ordered [r_f0..r_fF | z_f0.. | n_f0..]
    w_hh: (FH,  3*FH)
    b_ih: (1, 3*FH), b_hh: (1, 3*FH)
    returns (L, FH)     feature-major hidden sequence
    """
    L = x.shape[0]
    FH = w_hh.shape[0]
    # Hoist ALL input projections out of the recurrence: one 2-D matmul.
    gx = jnp.dot(x, w_ih, preferred_element_type=jnp.float32) + b_ih   # (L, 3FH)
    h = jnp.zeros((1, FH), jnp.float32)
    hs = []
    for t in range(L):   # L is small & static -> fully unrolled recurrence
        gh = jnp.dot(h, w_hh, preferred_element_type=jnp.float32) + b_hh
        g = gx[t:t + 1, :]                                             # (1, 3FH)
        r = jax.nn.sigmoid(g[:, :FH] + gh[:, :FH])
        z = jax.nn.sigmoid(g[:, FH:2 * FH] + gh[:, FH:2 * FH])
        n = jnp.tanh(g[:, 2 * FH:] + r * gh[:, 2 * FH:])
        h = (1.0 - z) * n + z * h
        hs.append(h)
    return jnp.concatenate(hs, axis=0)                                 # (L, FH)


# ------------------------------ fused forward --------------------------------

def tts_fused_forward(params, X_static, X_ts, Phis):
    """TTS.forward ('tensor' dataloader, dynamic_bias=False, eval mode)."""
    D, _ = X_static.shape
    _, Fdim, T = X_ts.shape
    _, N_max, _ = Phis.shape
    n_gru = len(params['gru'])
    n_mlp_rest = len(params['mlp'])

    # Layout plumbing only (host/XLA side): feature-major flattening so the
    # kernel's block-diagonal GRU covers all F streams at once.
    x_ts_fm = X_ts.reshape(D, Fdim * T)                                # (D, F*T)

    args = [X_static, x_ts_fm, Phis,
            params['fc_static']['w'], params['fc_static']['b']]
    for lp in params['gru']:
        args += [lp['w_ih'], lp['w_hh'], lp['b_ih'], lp['b_hh']]
    args += [params['mlp0']['w_s'], params['mlp0']['w_r'], params['mlp0']['b']]
    for lp in params['mlp']:
        args += [lp['w'], lp['b']]
    args += [params['out']['w'], params['out']['b'], params['bias']]

    def kernel(*refs):
        xs_ref, xfm_ref, phis_ref, fsw, fsb = refs[:5]
        rest = list(refs[5:])
        gru_refs = [tuple(rest[4 * l:4 * l + 4]) for l in range(n_gru)]
        rest = rest[4 * n_gru:]
        m0s, m0r, m0b = rest[:3]
        rest = rest[3:]
        mlp_refs = [tuple(rest[2 * l:2 * l + 2]) for l in range(n_mlp_rest)]
        rest = rest[2 * n_mlp_rest:]
        ow, ob, bias_ref, o_ref = rest

        # fc_static: ReLU(x @ W' + b')   (BN folded, Dropout = identity)
        static_out = jnp.maximum(
            jnp.dot(xs_ref[...], fsw[...],
                    preferred_element_type=jnp.float32) + fsb[...], 0.0)

        # GRU stack: 3 layers, all feature streams block-diagonally fused.
        x = xfm_ref[...]                                               # (D, F*T)
        for (w_ih, w_hh, b_ih, b_hh) in gru_refs:
            x = _gru_layer_blockdiag(x, w_ih[...], w_hh[...],
                                     b_ih[...], b_hh[...])
        rnn_comb = x                                                   # (D, F*H)

        # First MLP layer with the weight split by input block (avoids an
        # in-kernel lane concat of [static_out | rnn_comb]).
        h = jnp.maximum(
            jnp.dot(static_out, m0s[...], preferred_element_type=jnp.float32)
            + jnp.dot(rnn_comb, m0r[...], preferred_element_type=jnp.float32)
            + m0b[...], 0.0)
        for (w, b) in mlp_refs:
            h = jnp.maximum(
                jnp.dot(h, w[...], preferred_element_type=jnp.float32) + b[...],
                0.0)
        h = jnp.dot(h, ow[...], preferred_element_type=jnp.float32) + ob[...]

        # decode: out[d] = Phis[d] @ h[d] + bias  (batched matvec as a lane
        # reduction -> no per-sample grid, no per-step pipeline overhead).
        out = jnp.sum(phis_ref[...] * h[:, None, :], axis=-1)          # (D, N)
        o_ref[...] = out + bias_ref[...]

    # TODO(synk): 'iterative' dataloader path (Python list of ragged Phi
    # matrices) and dynamic_bias=True are not implemented; only the 'tensor'
    # path with the static bias parameter is.
    return pl.pallas_call(
        kernel,
        out_shape=jax.ShapeDtypeStruct((D, N_max), jnp.float32),
    )(*args)


# --------------------------- parameter construction --------------------------

class KeyGen:
    def __init__(self, key):
        self.key = key

    def __call__(self):
        self.key, sub = jax.random.split(self.key)
        return sub


def _init_linear(kg, din, dout):
    w = jax.random.normal(kg(), (din, dout), jnp.float32) * 0.1
    b = jax.random.normal(kg(), (dout,), jnp.float32) * 0.1
    return w, b


def _init_bn(dout):
    # gamma, beta, running_mean, running_var at PyTorch init values
    return (jnp.ones((dout,), jnp.float32), jnp.zeros((dout,), jnp.float32),
            jnp.zeros((dout,), jnp.float32), jnp.ones((dout,), jnp.float32))


def init_tts_params(key, n_static, n_ts_features, ts_length, hidden_sizes,
                    rnn_hidden, n_basis):
    """Raw (un-folded, per-feature) parameters; GRU gate weights stored
    pre-transposed as (in, 3H) with gate order [r|z|n]."""
    kg = KeyGen(key)
    raw = {}

    grus = []
    for _ in range(n_ts_features):
        layers, din = [], ts_length
        for _ in range(3):
            layers.append(dict(
                w_ih=jax.random.normal(kg(), (din, 3 * rnn_hidden), jnp.float32) * 0.1,
                w_hh=jax.random.normal(kg(), (rnn_hidden, 3 * rnn_hidden), jnp.float32) * 0.1,
                b_ih=jax.random.normal(kg(), (3 * rnn_hidden,), jnp.float32) * 0.1,
                b_hh=jax.random.normal(kg(), (3 * rnn_hidden,), jnp.float32) * 0.1))
            din = rnn_hidden
        grus.append(layers)
    raw['gru'] = grus

    w, b = _init_linear(kg, n_static, hidden_sizes[0])
    raw['fc_static'] = dict(w=w, b=b, bn=_init_bn(hidden_sizes[0]))

    mlp_in = rnn_hidden * n_ts_features + hidden_sizes[0]
    dims = [mlp_in] + list(hidden_sizes)
    mlp = []
    for i in range(len(hidden_sizes)):
        w, b = _init_linear(kg, dims[i], dims[i + 1])
        mlp.append(dict(w=w, b=b, bn=_init_bn(dims[i + 1])))
    raw['mlp'] = mlp

    w, b = _init_linear(kg, hidden_sizes[-1], n_basis)
    raw['out'] = dict(w=w, b=b)
    raw['bias'] = jnp.zeros((1,), jnp.float32)
    return raw


def fold_tts_params(raw):
    """Host-side precompute (layout plumbing, done once):
       * fold eval-mode BatchNorm into the Linears,
       * build block-diagonal, gate-major GRU weight slabs,
       * split the first MLP layer's weight into static / rnn blocks."""
    def fold(w, b, bn):
        g, beta, mu, var = bn
        s = g / jnp.sqrt(var + EPS)
        return w * s[None, :], ((b - mu) * s + beta).reshape(1, -1)

    p = {}
    fw, fb = fold(raw['fc_static']['w'], raw['fc_static']['b'],
                  raw['fc_static']['bn'])
    p['fc_static'] = dict(w=fw, b=fb)

    Fdim = len(raw['gru'])
    n_layers = len(raw['gru'][0])
    H = raw['gru'][0][0]['w_hh'].shape[0]
    FH = Fdim * H
    gru = []
    for l in range(n_layers):
        In = raw['gru'][0][l]['w_ih'].shape[0]
        Wih = jnp.zeros((Fdim * In, 3 * FH), jnp.float32)
        Whh = jnp.zeros((FH, 3 * FH), jnp.float32)
        bih = jnp.zeros((3 * FH,), jnp.float32)
        bhh = jnp.zeros((3 * FH,), jnp.float32)
        for f in range(Fdim):
            lp = raw['gru'][f][l]
            for g in range(3):
                c0 = g * FH + f * H
                Wih = Wih.at[f * In:(f + 1) * In, c0:c0 + H].set(
                    lp['w_ih'][:, g * H:(g + 1) * H])
                Whh = Whh.at[f * H:(f + 1) * H, c0:c0 + H].set(
                    lp['w_hh'][:, g * H:(g + 1) * H])
                bih = bih.at[c0:c0 + H].set(lp['b_ih'][g * H:(g + 1) * H])
                bhh = bhh.at[c0:c0 + H].set(lp['b_hh'][g * H:(g + 1) * H])
        gru.append(dict(w_ih=Wih, w_hh=Whh,
                        b_ih=bih.reshape(1, -1), b_hh=bhh.reshape(1, -1)))
    p['gru'] = gru

    # First MLP layer: fold BN, split rows into [static_out | rnn_comb] blocks.
    h0 = raw['fc_static']['w'].shape[1]
    mw0, mb0 = fold(raw['mlp'][0]['w'], raw['mlp'][0]['b'], raw['mlp'][0]['bn'])
    p['mlp0'] = dict(w_s=mw0[:h0], w_r=mw0[h0:], b=mb0)

    p['mlp'] = []
    for m in raw['mlp'][1:]:
        mw, mb = fold(m['w'], m['b'], m['bn'])
        p['mlp'].append(dict(w=mw, b=mb))

    p['out'] = dict(w=raw['out']['w'], b=raw['out']['b'].reshape(1, -1))
    p['bias'] = raw['bias'].reshape(1, 1)
    return p


# ------------------------ pure-JAX reference (un-fused) -----------------------

def tts_reference(raw, X_static, X_ts, Phis):
    def bn(y, bnp):
        g, beta, mu, var = bnp
        return (y - mu) / jnp.sqrt(var + EPS) * g + beta

    fs = raw['fc_static']
    static_out = jnp.maximum(bn(X_static @ fs['w'] + fs['b'], fs['bn']), 0.0)

    D = X_ts.shape[0]
    rnn_outs = []
    for f, layers in enumerate(raw['gru']):
        x = X_ts[:, f, :]                       # (D, T); D = recurrence axis
        for lp in layers:
            H = lp['w_hh'].shape[0]
            h = jnp.zeros((H,), jnp.float32)
            hs = []
            for t in range(D):
                gx = x[t] @ lp['w_ih'] + lp['b_ih']
                gh = h @ lp['w_hh'] + lp['b_hh']
                r = jax.nn.sigmoid(gx[:H] + gh[:H])
                z = jax.nn.sigmoid(gx[H:2 * H] + gh[H:2 * H])
                n = jnp.tanh(gx[2 * H:] + r * gh[2 * H:])
                h = (1.0 - z) * n + z * h
                hs.append(h)
            x = jnp.stack(hs, axis=0)
        rnn_outs.append(x)
    rnn_comb = jnp.concatenate(rnn_outs, axis=1)

    x = jnp.concatenate([static_out, rnn_comb], axis=1)
    for m in raw['mlp']:
        x = jnp.maximum(bn(x @ m['w'] + m['b'], m['bn']), 0.0)
    h = x @ raw['out']['w'] + raw['out']['b']
    return jnp.einsum('dnb,db->dn', Phis, h) + raw['bias']


# ----------------------------------- main ------------------------------------

if __name__ == "__main__":
    D = 8               # number of samples (also the GRU recurrence length)
    M = 6               # n_static_features
    T_f = 3             # n_features (number of time series)
    ts_length = 16      # GRU input_size
    hidden_sizes = [32, 16]
    rnn_hidden = 32
    n_basis = 5
    N_max = 12          # time points per sample in Phis

    key = jax.random.PRNGKey(0)
    k1, k2, k3, kp = jax.random.split(key, 4)
    X_static = jax.random.normal(k1, (D, M), jnp.float32)
    X_ts = jax.random.normal(k2, (D, T_f, ts_length), jnp.float32)
    Phis = jax.random.normal(k3, (D, N_max, n_basis), jnp.float32)

    raw = init_tts_params(kp, M, T_f, ts_length, hidden_sizes, rnn_hidden, n_basis)
    params = fold_tts_params(raw)

    fwd = jax.jit(tts_fused_forward)
    out = jax.block_until_ready(fwd(params, X_static, X_ts, Phis))
    assert out.shape == (D, N_max), out.shape
    assert out.dtype == jnp.float32

    # Correctness check against an un-fused pure-JAX reference.
    with jax.default_matmul_precision('float32'):
        ref = jax.jit(tts_reference)(raw, X_static, X_ts, Phis)
    ref = jax.block_until_ready(ref)
    max_err = float(jnp.max(jnp.abs(out - ref)))
    assert max_err < 1e-2, f"mismatch vs reference: max abs err={max_err}"

    print("KERNEL_OK")
</pallas_src>

<mosaic_0001>
module attributes {stable_mosaic.version = 11 : i64} {
  func.func @kernel(%arg0: memref<8x6xf32, #tpu.memory_space<vmem>>, %arg1: memref<8x48xf32, #tpu.memory_space<vmem>>, %arg2: memref<8x12x5xf32, #tpu.memory_space<vmem>>, %arg3: memref<6x32xf32, #tpu.memory_space<vmem>>, %arg4: memref<1x32xf32, #tpu.memory_space<vmem>>, %arg5: memref<48x288xf32, #tpu.memory_space<vmem>>, %arg6: memref<96x288xf32, #tpu.memory_space<vmem>>, %arg7: memref<1x288xf32, #tpu.memory_space<vmem>>, %arg8: memref<1x288xf32, #tpu.memory_space<vmem>>, %arg9: memref<96x288xf32, #tpu.memory_space<vmem>>, %arg10: memref<96x288xf32, #tpu.memory_space<vmem>>, %arg11: memref<1x288xf32, #tpu.memory_space<vmem>>, %arg12: memref<1x288xf32, #tpu.memory_space<vmem>>, %arg13: memref<96x288xf32, #tpu.memory_space<vmem>>, %arg14: memref<96x288xf32, #tpu.memory_space<vmem>>, %arg15: memref<1x288xf32, #tpu.memory_space<vmem>>, %arg16: memref<1x288xf32, #tpu.memory_space<vmem>>, %arg17: memref<32x32xf32, #tpu.memory_space<vmem>>, %arg18: memref<96x32xf32, #tpu.memory_space<vmem>>, %arg19: memref<1x32xf32, #tpu.memory_space<vmem>>, %arg20: memref<32x16xf32, #tpu.memory_space<vmem>>, %arg21: memref<1x16xf32, #tpu.memory_space<vmem>>, %arg22: memref<16x5xf32, #tpu.memory_space<vmem>>, %arg23: memref<1x5xf32, #tpu.memory_space<vmem>>, %arg24: memref<1x1xf32, #tpu.memory_space<vmem>>, %arg25: memref<8x12xf32, #tpu.memory_space<vmem>>) attributes {dimension_semantics = [], scalar_prefetch = 0 : i64, scratch_operands = 0 : i64, tpu.core_type = #tpu.core_type<tc>} {
    %c0 = arith.constant 0 : index
    %c0_0 = arith.constant 0 : index
    %0 = vector.load %arg0[%c0, %c0_0] : memref<8x6xf32, #tpu.memory_space<vmem>>, vector<8x6xf32>
    %c0_1 = arith.constant 0 : index
    %c0_2 = arith.constant 0 : index
    %1 = vector.load %arg3[%c0_1, %c0_2] : memref<6x32xf32, #tpu.memory_space<vmem>>, vector<6x32xf32>
    %cst = arith.constant dense<0.000000e+00> : vector<8x32xf32>
    %2 = tpu.matmul %0, %1, %cst {dimension_numbers = #tpu.dot_dimension_numbers<[1], [0], [0], [1], [0, 0, 1, 1], [], []>} : vector<8x6xf32>, vector<6x32xf32>, vector<8x32xf32> -> vector<8x32xf32>
    %c0_3 = arith.constant 0 : index
    %c0_4 = arith.constant 0 : index
    %3 = vector.load %arg4[%c0_3, %c0_4] : memref<1x32xf32, #tpu.memory_space<vmem>>, vector<1x32xf32>
    %4 = vector.broadcast %3 : vector<1x32xf32> to vector<8x32xf32>
    %5 = arith.addf %2, %4 : vector<8x32xf32>
    %cst_5 = arith.constant 0.000000e+00 : f32
    %6 = vector.broadcast %cst_5 : f32 to vector<8x32xf32>
    %7 = arith.maximumf %5, %6 : vector<8x32xf32>
    %c0_6 = arith.constant 0 : index
    %c0_7 = arith.constant 0 : index
    %8 = vector.load %arg1[%c0_6, %c0_7] : memref<8x48xf32, #tpu.memory_space<vmem>>, vector<8x48xf32>
    %c0_8 = arith.constant 0 : index
    %c0_9 = arith.constant 0 : index
    %9 = vector.load %arg5[%c0_8, %c0_9] : memref<48x288xf32, #tpu.memory_space<vmem>>, vector<48x288xf32>
    %c0_10 = arith.constant 0 : index
    %c0_11 = arith.constant 0 : index
    %10 = vector.load %arg6[%c0_10, %c0_11] : memref<96x288xf32, #tpu.memory_space<vmem>>, vector<96x288xf32>
    %c0_12 = arith.constant 0 : index
    %c0_13 = arith.constant 0 : index
    %11 = vector.load %arg7[%c0_12, %c0_13] : memref<1x288xf32, #tpu.memory_space<vmem>>, vector<1x288xf32>
    %c0_14 = arith.constant 0 : index
    %c0_15 = arith.constant 0 : index
    %12 = vector.load %arg8[%c0_14, %c0_15] : memref<1x288xf32, #tpu.memory_space<vmem>>, vector<1x288xf32>
    %cst_16 = arith.constant dense<0.000000e+00> : vector<8x288xf32>
    %13 = tpu.matmul %8, %9, %cst_16 {dimension_numbers = #tpu.dot_dimension_numbers<[1], [0], [0], [1], [0, 0, 1, 1], [], []>} : vector<8x48xf32>, vector<48x288xf32>, vector<8x288xf32> -> vector<8x288xf32>
    %14 = vector.broadcast %11 : vector<1x288xf32> to vector<8x288xf32>
    %15 = arith.addf %13, %14 : vector<8x288xf32>
    %cst_17 = arith.constant 0.000000e+00 : f32
    %16 = vector.broadcast %cst_17 : f32 to vector<1x96xf32>
    %cst_18 = arith.constant dense<0.000000e+00> : vector<1x288xf32>
    %17 = tpu.matmul %16, %10, %cst_18 {dimension_numbers = #tpu.dot_dimension_numbers<[1], [0], [0], [1], [0, 0, 1, 1], [], []>} : vector<1x96xf32>, vector<96x288xf32>, vector<1x288xf32> -> vector<1x288xf32>
    %18 = arith.addf %17, %12 : vector<1x288xf32>
    %19 = vector.extract_strided_slice %15 {offsets = [0, 0], sizes = [1, 288], strides = [1, 1]} : vector<8x288xf32> to vector<1x288xf32>
    %20 = vector.extract_strided_slice %19 {offsets = [0, 0], sizes = [1, 96], strides = [1, 1]} : vector<1x288xf32> to vector<1x96xf32>
    %21 = vector.extract_strided_slice %18 {offsets = [0, 0], sizes = [1, 96], strides = [1, 1]} : vector<1x288xf32> to vector<1x96xf32>
    %22 = arith.addf %20, %21 : vector<1x96xf32>
    %23 = arith.negf %22 : vector<1x96xf32>
    %24 = math.exp %23 : vector<1x96xf32>
    %cst_19 = arith.constant 1.000000e+00 : f32
    %25 = vector.broadcast %cst_19 : f32 to vector<1x96xf32>
    %26 = arith.addf %25, %24 : vector<1x96xf32>
    %27 = arith.divf %25, %26 : vector<1x96xf32>
    %28 = vector.extract_strided_slice %19 {offsets = [0, 96], sizes = [1, 96], strides = [1, 1]} : vector<1x288xf32> to vector<1x96xf32>
    %29 = vector.extract_strided_slice %18 {offsets = [0, 96], sizes = [1, 96], strides = [1, 1]} : vector<1x288xf32> to vector<1x96xf32>
    %30 = arith.addf %28, %29 : vector<1x96xf32>
    %31 = arith.negf %30 : vector<1x96xf32>
    %32 = math.exp %31 : vector<1x96xf32>
    %cst_20 = arith.constant 1.000000e+00 : f32
    %33 = vector.broadcast %cst_20 : f32 to vector<1x96xf32>
    %34 = arith.addf %33, %32 : vector<1x96xf32>
    %35 = arith.divf %33, %34 : vector<1x96xf32>
    %36 = vector.extract_strided_slice %19 {offsets = [0, 192], sizes = [1, 96], strides = [1, 1]} : vector<1x288xf32> to vector<1x96xf32>
    %37 = vector.extract_strided_slice %18 {offsets = [0, 192], sizes = [1, 96], strides = [1, 1]} : vector<1x288xf32> to vector<1x96xf32>
    %38 = arith.mulf %27, %37 : vector<1x96xf32>
    %39 = arith.addf %36, %38 : vector<1x96xf32>
    %40 = math.tanh %39 : vector<1x96xf32>
    %cst_21 = arith.constant 1.000000e+00 : f32
    %41 = vector.broadcast %cst_21 : f32 to vector<1x96xf32>
    %42 = arith.subf %41, %35 : vector<1x96xf32>
    %43 = arith.mulf %42, %40 : vector<1x96xf32>
    %44 = arith.mulf %35, %16 : vector<1x96xf32>
    %45 = arith.addf %43, %44 : vector<1x96xf32>
    %cst_22 = arith.constant dense<0.000000e+00> : vector<1x288xf32>
    %46 = tpu.matmul %45, %10, %cst_22 {dimension_numbers = #tpu.dot_dimension_numbers<[1], [0], [0], [1], [0, 0, 1, 1], [], []>} : vector<1x96xf32>, vector<96x288xf32>, vector<1x288xf32> -> vector<1x288xf32>
    %47 = arith.addf %46, %12 : vector<1x288xf32>
    %48 = vector.extract_strided_slice %15 {offsets = [1, 0], sizes = [1, 288], strides = [1, 1]} : vector<8x288xf32> to vector<1x288xf32>
    %49 = vector.extract_strided_slice %48 {offsets = [0, 0], sizes = [1, 96], strides = [1, 1]} : vector<1x288xf32> to vector<1x96xf32>
    %50 = vector.extract_strided_slice %47 {offsets = [0, 0], sizes = [1, 96], strides = [1, 1]} : vector<1x288xf32> to vector<1x96xf32>
    %51 = arith.addf %49, %50 : vector<1x96xf32>
    %52 = arith.negf %51 : vector<1x96xf32>
    %53 = math.exp %52 : vector<1x96xf32>
    %cst_23 = arith.constant 1.000000e+00 : f32
    %54 = vector.broadcast %cst_23 : f32 to vector<1x96xf32>
    %55 = arith.addf %54, %53 : vector<1x96xf32>
    %56 = arith.divf %54, %55 : vector<1x96xf32>
    %57 = vector.extract_strided_slice %48 {offsets = [0, 96], sizes = [1, 96], strides = [1, 1]} : vector<1x288xf32> to vector<1x96xf32>
    %58 = vector.extract_strided_slice %47 {offsets = [0, 96], sizes = [1, 96], strides = [1, 1]} : vector<1x288xf32> to vector<1x96xf32>
    %59 = arith.addf %57, %58 : vector<1x96xf32>
    %60 = arith.negf %59 : vector<1x96xf32>
    %61 = math.exp %60 : vector<1x96xf32>
    %cst_24 = arith.constant 1.000000e+00 : f32
    %62 = vector.broadcast %cst_24 : f32 to vector<1x96xf32>
    %63 = arith.addf %62, %61 : vector<1x96xf32>
    %64 = arith.divf %62, %63 : vector<1x96xf32>
    %65 = vector.extract_strided_slice %48 {offsets = [0, 192], sizes = [1, 96], strides = [1, 1]} : vector<1x288xf32> to vector<1x96xf32>
    %66 = vector.extract_strided_slice %47 {offsets = [0, 192], sizes = [1, 96], strides = [1, 1]} : vector<1x288xf32> to vector<1x96xf32>
    %67 = arith.mulf %56, %66 : vector<1x96xf32>
    %68 = arith.addf %65, %67 : vector<1x96xf32>
    %69 = math.tanh %68 : vector<1x96xf32>
    %cst_25 = arith.constant 1.000000e+00 : f32
    %70 = vector.broadcast %cst_25 : f32 to vector<1x96xf32>
    %71 = arith.subf %70, %64 : vector<1x96xf32>
    %72 = arith.mulf %71, %69 : vector<1x96xf32>
    %73 = arith.mulf %64, %45 : vector<1x96xf32>
    %74 = arith.addf %72, %73 : vector<1x96xf32>
    %cst_26 = arith.constant dense<0.000000e+00> : vector<1x288xf32>
    %75 = tpu.matmul %74, %10, %cst_26 {dimension_numbers = #tpu.dot_dimension_numbers<[1], [0], [0], [1], [0, 0, 1, 1], [], []>} : vector<1x96xf32>, vector<96x288xf32>, vector<1x288xf32> -> vector<1x288xf32>
    %76 = arith.addf %75, %12 : vector<1x288xf32>
    %77 = vector.extract_strided_slice %15 {offsets = [2, 0], sizes = [1, 288], strides = [1, 1]} : vector<8x288xf32> to vector<1x288xf32>
    %78 = vector.extract_strided_slice %77 {offsets = [0, 0], sizes = [1, 96], strides = [1, 1]} : vector<1x288xf32> to vector<1x96xf32>
    %79 = vector.extract_strided_slice %76 {offsets = [0, 0], sizes = [1, 96], strides = [1, 1]} : vector<1x288xf32> to vector<1x96xf32>
    %80 = arith.addf %78, %79 : vector<1x96xf32>
    %81 = arith.negf %80 : vector<1x96xf32>
    %82 = math.exp %81 : vector<1x96xf32>
    %cst_27 = arith.constant 1.000000e+00 : f32
    %83 = vector.broadcast %cst_27 : f32 to vector<1x96xf32>
    %84 = arith.addf %83, %82 : vector<1x96xf32>
    %85 = arith.divf %83, %84 : vector<1x96xf32>
    %86 = vector.extract_strided_slice %77 {offsets = [0, 96], sizes = [1, 96], strides = [1, 1]} : vector<1x288xf32> to vector<1x96xf32>
    %87 = vector.extract_strided_slice %76 {offsets = [0, 96], sizes = [1, 96], strides = [1, 1]} : vector<1x288xf32> to vector<1x96xf32>
    %88 = arith.addf %86, %87 : vector<1x96xf32>
    %89 = arith.negf %88 : vector<1x96xf32>
    %90 = math.exp %89 : vector<1x96xf32>
    %cst_28 = arith.constant 1.000000e+00 : f32
    %91 = vector.broadcast %cst_28 : f32 to vector<1x96xf32>
    %92 = arith.addf %91, %90 : vector<1x96xf32>
    %93 = arith.divf %91, %92 : vector<1x96xf32>
    %94 = vector.extract_strided_slice %77 {offsets = [0, 192], sizes = [1, 96], strides = [1, 1]} : vector<1x288xf32> to vector<1x96xf32>
    %95 = vector.extract_strided_slice %76 {offsets = [0, 192], sizes = [1, 96], strides = [1, 1]} : vector<1x288xf32> to vector<1x96xf32>
    %96 = arith.mulf %85, %95 : vector<1x96xf32>
    %97 = arith.addf %94, %96 : vector<1x96xf32>
    %98 = math.tanh %97 : vector<1x96xf32>
    %cst_29 = arith.constant 1.000000e+00 : f32
    %99 = vector.broadcast %cst_29 : f32 to vector<1x96xf32>
    %100 = arith.subf %99, %93 : vector<1x96xf32>
    %101 = arith.mulf %100, %98 : vector<1x96xf32>
    %102 = arith.mulf %93, %74 : vector<1x96xf32>
    %103 = arith.addf %101, %102 : vector<1x96xf32>
    %cst_30 = arith.constant dense<0.000000e+00> : vector<1x288xf32>
    %104 = tpu.matmul %103, %10, %cst_30 {dimension_numbers = #tpu.dot_dimension_numbers<[1], [0], [0], [1], [0, 0, 1, 1], [], []>} : vector<1x96xf32>, vector<96x288xf32>, vector<1x288xf32> -> vector<1x288xf32>
    %105 = arith.addf %104, %12 : vector<1x288xf32>
    %106 = vector.extract_strided_slice %15 {offsets = [3, 0], sizes = [1, 288], strides = [1, 1]} : vector<8x288xf32> to vector<1x288xf32>
    %107 = vector.extract_strided_slice %106 {offsets = [0, 0], sizes = [1, 96], strides = [1, 1]} : vector<1x288xf32> to vector<1x96xf32>
    %108 = vector.extract_strided_slice %105 {offsets = [0, 0], sizes = [1, 96], strides = [1, 1]} : vector<1x288xf32> to vector<1x96xf32>
    %109 = arith.addf %107, %108 : vector<1x96xf32>
    %110 = arith.negf %109 : vector<1x96xf32>
    %111 = math.exp %110 : vector<1x96xf32>
    %cst_31 = arith.constant 1.000000e+00 : f32
    %112 = vector.broadcast %cst_31 : f32 to vector<1x96xf32>
    %113 = arith.addf %112, %111 : vector<1x96xf32>
    %114 = arith.divf %112, %113 : vector<1x96xf32>
    %115 = vector.extract_strided_slice %106 {offsets = [0, 96], sizes = [1, 96], strides = [1, 1]} : vector<1x288xf32> to vector<1x96xf32>
    %116 = vector.extract_strided_slice %105 {offsets = [0, 96], sizes = [1, 96], strides = [1, 1]} : vector<1x288xf32> to vector<1x96xf32>
    %117 = arith.addf %115, %116 : vector<1x96xf32>
    %118 = arith.negf %117 : vector<1x96xf32>
    %119 = math.exp %118 : vector<1x96xf32>
    %cst_32 = arith.constant 1.000000e+00 : f32
    %120 = vector.broadcast %cst_32 : f32 to vector<1x96xf32>
    %121 = arith.addf %120, %119 : vector<1x96xf32>
    %122 = arith.divf %120, %121 : vector<1x96xf32>
    %123 = vector.extract_strided_slice %106 {offsets = [0, 192], sizes = [1, 96], strides = [1, 1]} : vector<1x288xf32> to vector<1x96xf32>
    %124 = vector.extract_strided_slice %105 {offsets = [0, 192], sizes = [1, 96], strides = [1, 1]} : vector<1x288xf32> to vector<1x96xf32>
    %125 = arith.mulf %114, %124 : vector<1x96xf32>
    %126 = arith.addf %123, %125 : vector<1x96xf32>
    %127 = math.tanh %126 : vector<1x96xf32>
    %cst_33 = arith.constant 1.000000e+00 : f32
    %128 = vector.broadcast %cst_33 : f32 to vector<1x96xf32>
    %129 = arith.subf %128, %122 : vector<1x96xf32>
    %130 = arith.mulf %129, %127 : vector<1x96xf32>
    %131 = arith.mulf %122, %103 : vector<1x96xf32>
    %132 = arith.addf %130, %131 : vector<1x96xf32>
    %cst_34 = arith.constant dense<0.000000e+00> : vector<1x288xf32>
    %133 = tpu.matmul %132, %10, %cst_34 {dimension_numbers = #tpu.dot_dimension_numbers<[1], [0], [0], [1], [0, 0, 1, 1], [], []>} : vector<1x96xf32>, vector<96x288xf32>, vector<1x288xf32> -> vector<1x288xf32>
    %134 = arith.addf %133, %12 : vector<1x288xf32>
    %135 = vector.extract_strided_slice %15 {offsets = [4, 0], sizes = [1, 288], strides = [1, 1]} : vector<8x288xf32> to vector<1x288xf32>
    %136 = vector.extract_strided_slice %135 {offsets = [0, 0], sizes = [1, 96], strides = [1, 1]} : vector<1x288xf32> to vector<1x96xf32>
    %137 = vector.extract_strided_slice %134 {offsets = [0, 0], sizes = [1, 96], strides = [1, 1]} : vector<1x288xf32> to vector<1x96xf32>
    %138 = arith.addf %136, %137 : vector<1x96xf32>
    %139 = arith.negf %138 : vector<1x96xf32>
    %140 = math.exp %139 : vector<1x96xf32>
    %cst_35 = arith.constant 1.000000e+00 : f32
    %141 = vector.broadcast %cst_35 : f32 to vector<1x96xf32>
    %142 = arith.addf %141, %140 : vector<1x96xf32>
    %143 = arith.divf %141, %142 : vector<1x96xf32>
    %144 = vector.extract_strided_slice %135 {offsets = [0, 96], sizes = [1, 96], strides = [1, 1]} : vector<1x288xf32> to vector<1x96xf32>
    %145 = vector.extract_strided_slice %134 {offsets = [0, 96], sizes = [1, 96], strides = [1, 1]} : vector<1x288xf32> to vector<1x96xf32>
    %146 = arith.addf %144, %145 : vector<1x96xf32>
    %147 = arith.negf %146 : vector<1x96xf32>
    %148 = math.exp %147 : vector<1x96xf32>
    %cst_36 = arith.constant 1.000000e+00 : f32
    %149 = vector.broadcast %cst_36 : f32 to vector<1x96xf32>
    %150 = arith.addf %149, %148 : vector<1x96xf32>
    %151 = arith.divf %149, %150 : vector<1x96xf32>
    %152 = vector.extract_strided_slice %135 {offsets = [0, 192], sizes = [1, 96], strides = [1, 1]} : vector<1x288xf32> to vector<1x96xf32>
    %153 = vector.extract_strided_slice %134 {offsets = [0, 192], sizes = [1, 96], strides = [1, 1]} : vector<1x288xf32> to vector<1x96xf32>
    %154 = arith.mulf %143, %153 : vector<1x96xf32>
    %155 = arith.addf %152, %154 : vector<1x96xf32>
    %156 = math.tanh %155 : vector<1x96xf32>
    %cst_37 = arith.constant 1.000000e+00 : f32
    %157 = vector.broadcast %cst_37 : f32 to vector<1x96xf32>
    %158 = arith.subf %157, %151 : vector<1x96xf32>
    %159 = arith.mulf %158, %156 : vector<1x96xf32>
    %160 = arith.mulf %151, %132 : vector<1x96xf32>
    %161 = arith.addf %159, %160 : vector<1x96xf32>
    %cst_38 = arith.constant dense<0.000000e+00> : vector<1x288xf32>
    %162 = tpu.matmul %161, %10, %cst_38 {dimension_numbers = #tpu.dot_dimension_numbers<[1], [0], [0], [1], [0, 0, 1, 1], [], []>} : vector<1x96xf32>, vector<96x288xf32>, vector<1x288xf32> -> vector<1x288xf32>
    %163 = arith.addf %162, %12 : vector<1x288xf32>
    %164 = vector.extract_strided_slice %15 {offsets = [5, 0], sizes = [1, 288], strides = [1, 1]} : vector<8x288xf32> to vector<1x288xf32>
    %165 = vector.extract_strided_slice %164 {offsets = [0, 0], sizes = [1, 96], strides = [1, 1]} : vector<1x288xf32> to vector<1x96xf32>
    %166 = vector.extract_strided_slice %163 {offsets = [0, 0], sizes = [1, 96], strides = [1, 1]} : vector<1x288xf32> to vector<1x96xf32>
    %167 = arith.addf %165, %166 : vector<1x96xf32>
    %168 = arith.negf %167 : vector<1x96xf32>
    %169 = math.exp %168 : vector<1x96xf32>
    %cst_39 = arith.constant 1.000000e+00 : f32
    %170 = vector.broadcast %cst_39 : f32 to vector<1x96xf32>
    %171 = arith.addf %170, %169 : vector<1x96xf32>
    %172 = arith.divf %170, %171 : vector<1x96xf32>
    %173 = vector.extract_strided_slice %164 {offsets = [0, 96], sizes = [1, 96], strides = [1, 1]} : vector<1x288xf32> to vector<1x96xf32>
    %174 = vector.extract_strided_slice %163 {offsets = [0, 96], sizes = [1, 96], strides = [1, 1]} : vector<1x288xf32> to vector<1x96xf32>
    %175 = arith.addf %173, %174 : vector<1x96xf32>
    %176 = arith.negf %175 : vector<1x96xf32>
    %177 = math.exp %176 : vector<1x96xf32>
    %cst_40 = arith.constant 1.000000e+00 : f32
    %178 = vector.broadcast %cst_40 : f32 to vector<1x96xf32>
    %179 = arith.addf %178, %177 : vector<1x96xf32>
    %180 = arith.divf %178, %179 : vector<1x96xf32>
    %181 = vector.extract_strided_slice %164 {offsets = [0, 192], sizes = [1, 96], strides = [1, 1]} : vector<1x288xf32> to vector<1x96xf32>
    %182 = vector.extract_strided_slice %163 {offsets = [0, 192], sizes = [1, 96], strides = [1, 1]} : vector<1x288xf32> to vector<1x96xf32>
    %183 = arith.mulf %172, %182 : vector<1x96xf32>
    %184 = arith.addf %181, %183 : vector<1x96xf32>
    %185 = math.tanh %184 : vector<1x96xf32>
    %cst_41 = arith.constant 1.000000e+00 : f32
    %186 = vector.broadcast %cst_41 : f32 to vector<1x96xf32>
    %187 = arith.subf %186, %180 : vector<1x96xf32>
    %188 = arith.mulf %187, %185 : vector<1x96xf32>
    %189 = arith.mulf %180, %161 : vector<1x96xf32>
    %190 = arith.addf %188, %189 : vector<1x96xf32>
    %cst_42 = arith.constant dense<0.000000e+00> : vector<1x288xf32>
    %191 = tpu.matmul %190, %10, %cst_42 {dimension_numbers = #tpu.dot_dimension_numbers<[1], [0], [0], [1], [0, 0, 1, 1], [], []>} : vector<1x96xf32>, vector<96x288xf32>, vector<1x288xf32> -> vector<1x288xf32>
    %192 = arith.addf %191, %12 : vector<1x288xf32>
    %193 = vector.extract_strided_slice %15 {offsets = [6, 0], sizes = [1, 288], strides = [1, 1]} : vector<8x288xf32> to vector<1x288xf32>
    %194 = vector.extract_strided_slice %193 {offsets = [0, 0], sizes = [1, 96], strides = [1, 1]} : vector<1x288xf32> to vector<1x96xf32>
    %195 = vector.extract_strided_slice %192 {offsets = [0, 0], sizes = [1, 96], strides = [1, 1]} : vector<1x288xf32> to vector<1x96xf32>
    %196 = arith.addf %194, %195 : vector<1x96xf32>
    %197 = arith.negf %196 : vector<1x96xf32>
    %198 = math.exp %197 : vector<1x96xf32>
    %cst_43 = arith.constant 1.000000e+00 : f32
    %199 = vector.broadcast %cst_43 : f32 to vector<1x96xf32>
    %200 = arith.addf %199, %198 : vector<1x96xf32>
    %201 = arith.divf %199, %200 : vector<1x96xf32>
    %202 = vector.extract_strided_slice %193 {offsets = [0, 96], sizes = [1, 96], strides = [1, 1]} : vector<1x288xf32> to vector<1x96xf32>
    %203 = vector.extract_strided_slice %192 {offsets = [0, 96], sizes = [1, 96], strides = [1, 1]} : vector<1x288xf32> to vector<1x96xf32>
    %204 = arith.addf %202, %203 : vector<1x96xf32>
    %205 = arith.negf %204 : vector<1x96xf32>
    %206 = math.exp %205 : vector<1x96xf32>
    %cst_44 = arith.constant 1.000000e+00 : f32
    %207 = vector.broadcast %cst_44 : f32 to vector<1x96xf32>
    %208 = arith.addf %207, %206 : vector<1x96xf32>
    %209 = arith.divf %207, %208 : vector<1x96xf32>
    %210 = vector.extract_strided_slice %193 {offsets = [0, 192], sizes = [1, 96], strides = [1, 1]} : vector<1x288xf32> to vector<1x96xf32>
    %211 = vector.extract_strided_slice %192 {offsets = [0, 192], sizes = [1, 96], strides = [1, 1]} : vector<1x288xf32> to vector<1x96xf32>
    %212 = arith.mulf %201, %211 : vector<1x96xf32>
    %213 = arith.addf %210, %212 : vector<1x96xf32>
    %214 = math.tanh %213 : vector<1x96xf32>
    %cst_45 = arith.constant 1.000000e+00 : f32
    %215 = vector.broadcast %cst_45 : f32 to vector<1x96xf32>
    %216 = arith.subf %215, %209 : vector<1x96xf32>
    %217 = arith.mulf %216, %214 : vector<1x96xf32>
    %218 = arith.mulf %209, %190 : vector<1x96xf32>
    %219 = arith.addf %217, %218 : vector<1x96xf32>
    %cst_46 = arith.constant dense<0.000000e+00> : vector<1x288xf32>
    %220 = tpu.matmul %219, %10, %cst_46 {dimension_numbers = #tpu.dot_dimension_numbers<[1], [0], [0], [1], [0, 0, 1, 1], [], []>} : vector<1x96xf32>, vector<96x288xf32>, vector<1x288xf32> -> vector<1x288xf32>
    %221 = arith.addf %220, %12 : vector<1x288xf32>
    %222 = vector.extract_strided_slice %15 {offsets = [7, 0], sizes = [1, 288], strides = [1, 1]} : vector<8x288xf32> to vector<1x288xf32>
    %223 = vector.extract_strided_slice %222 {offsets = [0, 0], sizes = [1, 96], strides = [1, 1]} : vector<1x288xf32> to vector<1x96xf32>
    %224 = vector.extract_strided_slice %221 {offsets = [0, 0], sizes = [1, 96], strides = [1, 1]} : vector<1x288xf32> to vector<1x96xf32>
    %225 = arith.addf %223, %224 : vector<1x96xf32>
    %226 = arith.negf %225 : vector<1x96xf32>
    %227 = math.exp %226 : vector<1x96xf32>
    %cst_47 = arith.constant 1.000000e+00 : f32
    %228 = vector.broadcast %cst_47 : f32 to vector<1x96xf32>
    %229 = arith.addf %228, %227 : vector<1x96xf32>
    %230 = arith.divf %228, %229 : vector<1x96xf32>
    %231 = vector.extract_strided_slice %222 {offsets = [0, 96], sizes = [1, 96], strides = [1, 1]} : vector<1x288xf32> to vector<1x96xf32>
    %232 = vector.extract_strided_slice %221 {offsets = [0, 96], sizes = [1, 96], strides = [1, 1]} : vector<1x288xf32> to vector<1x96xf32>
    %233 = arith.addf %231, %232 : vector<1x96xf32>
    %234 = arith.negf %233 : vector<1x96xf32>
    %235 = math.exp %234 : vector<1x96xf32>
    %cst_48 = arith.constant 1.000000e+00 : f32
    %236 = vector.broadcast %cst_48 : f32 to vector<1x96xf32>
    %237 = arith.addf %236, %235 : vector<1x96xf32>
    %238 = arith.divf %236, %237 : vector<1x96xf32>
    %239 = vector.extract_strided_slice %222 {offsets = [0, 192], sizes = [1, 96], strides = [1, 1]} : vector<1x288xf32> to vector<1x96xf32>
    %240 = vector.extract_strided_slice %221 {offsets = [0, 192], sizes = [1, 96], strides = [1, 1]} : vector<1x288xf32> to vector<1x96xf32>
    %241 = arith.mulf %230, %240 : vector<1x96xf32>
    %242 = arith.addf %239, %241 : vector<1x96xf32>
    %243 = math.tanh %242 : vector<1x96xf32>
    %cst_49 = arith.constant 1.000000e+00 : f32
    %244 = vector.broadcast %cst_49 : f32 to vector<1x96xf32>
    %245 = arith.subf %244, %238 : vector<1x96xf32>
    %246 = arith.mulf %245, %243 : vector<1x96xf32>
    %247 = arith.mulf %238, %219 : vector<1x96xf32>
    %248 = arith.addf %246, %247 : vector<1x96xf32>
    %249 = tpu.concatenate %45, %74, %103, %132, %161, %190, %219, %248 in 0 : vector<1x96xf32>, vector<1x96xf32>, vector<1x96xf32>, vector<1x96xf32>, vector<1x96xf32>, vector<1x96xf32>, vector<1x96xf32>, vector<1x96xf32> -> vector<8x96xf32>
    %c0_50 = arith.constant 0 : index
    %c0_51 = arith.constant 0 : index
    %250 = vector.load %arg9[%c0_50, %c0_51] : memref<96x288xf32, #tpu.memory_space<vmem>>, vector<96x288xf32>
    %c0_52 = arith.constant 0 : index
    %c0_53 = arith.constant 0 : index
    %251 = vector.load %arg10[%c0_52, %c0_53] : memref<96x288xf32, #tpu.memory_space<vmem>>, vector<96x288xf32>
    %c0_54 = arith.constant 0 : index
    %c0_55 = arith.constant 0 : index
    %252 = vector.load %arg11[%c0_54, %c0_55] : memref<1x288xf32, #tpu.memory_space<vmem>>, vector<1x288xf32>
    %c0_56 = arith.constant 0 : index
    %c0_57 = arith.constant 0 : index
    %253 = vector.load %arg12[%c0_56, %c0_57] : memref<1x288xf32, #tpu.memory_space<vmem>>, vector<1x288xf32>
    %cst_58 = arith.constant dense<0.000000e+00> : vector<8x288xf32>
    %254 = tpu.matmul %249, %250, %cst_58 {dimension_numbers = #tpu.dot_dimension_numbers<[1], [0], [0], [1], [0, 0, 1, 1], [], []>} : vector<8x96xf32>, vector<96x288xf32>, vector<8x288xf32> -> vector<8x288xf32>
    %255 = vector.broadcast %252 : vector<1x288xf32> to vector<8x288xf32>
    %256 = arith.addf %254, %255 : vector<8x288xf32>
    %cst_59 = arith.constant 0.000000e+00 : f32
    %257 = vector.broadcast %cst_59 : f32 to vector<1x96xf32>
    %cst_60 = arith.constant dense<0.000000e+00> : vector<1x288xf32>
    %258 = tpu.matmul %257, %251, %cst_60 {dimension_numbers = #tpu.dot_dimension_numbers<[1], [0], [0], [1], [0, 0, 1, 1], [], []>} : vector<1x96xf32>, vector<96x288xf32>, vector<1x288xf32> -> vector<1x288xf32>
    %259 = arith.addf %258, %253 : vector<1x288xf32>
    %260 = vector.extract_strided_slice %256 {offsets = [0, 0], sizes = [1, 288], strides = [1, 1]} : vector<8x288xf32> to vector<1x288xf32>
    %261 = vector.extract_strided_slice %260 {offsets = [0, 0], sizes = [1, 96], strides = [1, 1]} : vector<1x288xf32> to vector<1x96xf32>
    %262 = vector.extract_strided_slice %259 {offsets = [0, 0], sizes = [1, 96], strides = [1, 1]} : vector<1x288xf32> to vector<1x96xf32>
    %263 = arith.addf %261, %262 : vector<1x96xf32>
    %264 = arith.negf %263 : vector<1x96xf32>
    %265 = math.exp %264 : vector<1x96xf32>
    %cst_61 = arith.constant 1.000000e+00 : f32
    %266 = vector.broadcast %cst_61 : f32 to vector<1x96xf32>
    %267 = arith.addf %266, %265 : vector<1x96xf32>
    %268 = arith.divf %266, %267 : vector<1x96xf32>
    %269 = vector.extract_strided_slice %260 {offsets = [0, 96], sizes = [1, 96], strides = [1, 1]} : vector<1x288xf32> to vector<1x96xf32>
    %270 = vector.extract_strided_slice %259 {offsets = [0, 96], sizes = [1, 96], strides = [1, 1]} : vector<1x288xf32> to vector<1x96xf32>
    %271 = arith.addf %269, %270 : vector<1x96xf32>
    %272 = arith.negf %271 : vector<1x96xf32>
    %273 = math.exp %272 : vector<1x96xf32>
    %cst_62 = arith.constant 1.000000e+00 : f32
    %274 = vector.broadcast %cst_62 : f32 to vector<1x96xf32>
    %275 = arith.addf %274, %273 : vector<1x96xf32>
    %276 = arith.divf %274, %275 : vector<1x96xf32>
    %277 = vector.extract_strided_slice %260 {offsets = [0, 192], sizes = [1, 96], strides = [1, 1]} : vector<1x288xf32> to vector<1x96xf32>
    %278 = vector.extract_strided_slice %259 {offsets = [0, 192], sizes = [1, 96], strides = [1, 1]} : vector<1x288xf32> to vector<1x96xf32>
    %279 = arith.mulf %268, %278 : vector<1x96xf32>
    %280 = arith.addf %277, %279 : vector<1x96xf32>
    %281 = math.tanh %280 : vector<1x96xf32>
    %cst_63 = arith.constant 1.000000e+00 : f32
    %282 = vector.broadcast %cst_63 : f32 to vector<1x96xf32>
    %283 = arith.subf %282, %276 : vector<1x96xf32>
    %284 = arith.mulf %283, %281 : vector<1x96xf32>
    %285 = arith.mulf %276, %257 : vector<1x96xf32>
    %286 = arith.addf %284, %285 : vector<1x96xf32>
    %cst_64 = arith.constant dense<0.000000e+00> : vector<1x288xf32>
    %287 = tpu.matmul %286, %251, %cst_64 {dimension_numbers = #tpu.dot_dimension_numbers<[1], [0], [0], [1], [0, 0, 1, 1], [], []>} : vector<1x96xf32>, vector<96x288xf32>, vector<1x288xf32> -> vector<1x288xf32>
    %288 = arith.addf %287, %253 : vector<1x288xf32>
    %289 = vector.extract_strided_slice %256 {offsets = [1, 0], sizes = [1, 288], strides = [1, 1]} : vector<8x288xf32> to vector<1x288xf32>
    %290 = vector.extract_strided_slice %289 {offsets = [0, 0], sizes = [1, 96], strides = [1, 1]} : vector<1x288xf32> to vector<1x96xf32>
    %291 = vector.extract_strided_slice %288 {offsets = [0, 0], sizes = [1, 96], strides = [1, 1]} : vector<1x288xf32> to vector<1x96xf32>
    %292 = arith.addf %290, %291 : vector<1x96xf32>
    %293 = arith.negf %292 : vector<1x96xf32>
    %294 = math.exp %293 : vector<1x96xf32>
    %cst_65 = arith.constant 1.000000e+00 : f32
    %295 = vector.broadcast %cst_65 : f32 to vector<1x96xf32>
    %296 = arith.addf %295, %294 : vector<1x96xf32>
    %297 = arith.divf %295, %296 : vector<1x96xf32>
    %298 = vector.extract_strided_slice %289 {offsets = [0, 96], sizes = [1, 96], strides = [1, 1]} : vector<1x288xf32> to vector<1x96xf32>
    %299 = vector.extract_strided_slice %288 {offsets = [0, 96], sizes = [1, 96], strides = [1, 1]} : vector<1x288xf32> to vector<1x96xf32>
    %300 = arith.addf %298, %299 : vector<1x96xf32>
    %301 = arith.negf %300 : vector<1x96xf32>
    %302 = math.exp %301 : vector<1x96xf32>
    %cst_66 = arith.constant 1.000000e+00 : f32
    %303 = vector.broadcast %cst_66 : f32 to vector<1x96xf32>
    %304 = arith.addf %303, %302 : vector<1x96xf32>
    %305 = arith.divf %303, %304 : vector<1x96xf32>
    %306 = vector.extract_strided_slice %289 {offsets = [0, 192], sizes = [1, 96], strides = [1, 1]} : vector<1x288xf32> to vector<1x96xf32>
    %307 = vector.extract_strided_slice %288 {offsets = [0, 192], sizes = [1, 96], strides = [1, 1]} : vector<1x288xf32> to vector<1x96xf32>
    %308 = arith.mulf %297, %307 : vector<1x96xf32>
    %309 = arith.addf %306, %308 : vector<1x96xf32>
    %310 = math.tanh %309 : vector<1x96xf32>
    %cst_67 = arith.constant 1.000000e+00 : f32
    %311 = vector.broadcast %cst_67 : f32 to vector<1x96xf32>
    %312 = arith.subf %311, %305 : vector<1x96xf32>
    %313 = arith.mulf %312, %310 : vector<1x96xf32>
    %314 = arith.mulf %305, %286 : vector<1x96xf32>
    %315 = arith.addf %313, %314 : vector<1x96xf32>
    %cst_68 = arith.constant dense<0.000000e+00> : vector<1x288xf32>
    %316 = tpu.matmul %315, %251, %cst_68 {dimension_numbers = #tpu.dot_dimension_numbers<[1], [0], [0], [1], [0, 0, 1, 1], [], []>} : vector<1x96xf32>, vector<96x288xf32>, vector<1x288xf32> -> vector<1x288xf32>
    %317 = arith.addf %316, %253 : vector<1x288xf32>
    %318 = vector.extract_strided_slice %256 {offsets = [2, 0], sizes = [1, 288], strides = [1, 1]} : vector<8x288xf32> to vector<1x288xf32>
    %319 = vector.extract_strided_slice %318 {offsets = [0, 0], sizes = [1, 96], strides = [1, 1]} : vector<1x288xf32> to vector<1x96xf32>
    %320 = vector.extract_strided_slice %317 {offsets = [0, 0], sizes = [1, 96], strides = [1, 1]} : vector<1x288xf32> to vector<1x96xf32>
    %321 = arith.addf %319, %320 : vector<1x96xf32>
    %322 = arith.negf %321 : vector<1x96xf32>
    %323 = math.exp %322 : vector<1x96xf32>
    %cst_69 = arith.constant 1.000000e+00 : f32
    %324 = vector.broadcast %cst_69 : f32 to vector<1x96xf32>
    %325 = arith.addf %324, %323 : vector<1x96xf32>
    %326 = arith.divf %324, %325 : vector<1x96xf32>
    %327 = vector.extract_strided_slice %318 {offsets = [0, 96], sizes = [1, 96], strides = [1, 1]} : vector<1x288xf32> to vector<1x96xf32>
    %328 = vector.extract_strided_slice %317 {offsets = [0, 96], sizes = [1, 96], strides = [1, 1]} : vector<1x288xf32> to vector<1x96xf32>
    %329 = arith.addf %327, %328 : vector<1x96xf32>
    %330 = arith.negf %329 : vector<1x96xf32>
    %331 = math.exp %330 : vector<1x96xf32>
    %cst_70 = arith.constant 1.000000e+00 : f32
    %332 = vector.broadcast %cst_70 : f32 to vector<1x96xf32>
    %333 = arith.addf %332, %331 : vector<1x96xf32>
    %334 = arith.divf %332, %333 : vector<1x96xf32>
    %335 = vector.extract_strided_slice %318 {offsets = [0, 192], sizes = [1, 96], strides = [1, 1]} : vector<1x288xf32> to vector<1x96xf32>
    %336 = vector.extract_strided_slice %317 {offsets = [0, 192], sizes = [1, 96], strides = [1, 1]} : vector<1x288xf32> to vector<1x96xf32>
    %337 = arith.mulf %326, %336 : vector<1x96xf32>
    %338 = arith.addf %335, %337 : vector<1x96xf32>
    %339 = math.tanh %338 : vector<1x96xf32>
    %cst_71 = arith.constant 1.000000e+00 : f32
    %340 = vector.broadcast %cst_71 : f32 to vector<1x96xf32>
    %341 = arith.subf %340, %334 : vector<1x96xf32>
    %342 = arith.mulf %341, %339 : vector<1x96xf32>
    %343 = arith.mulf %334, %315 : vector<1x96xf32>
    %344 = arith.addf %342, %343 : vector<1x96xf32>
    %cst_72 = arith.constant dense<0.000000e+00> : vector<1x288xf32>
    %345 = tpu.matmul %344, %251, %cst_72 {dimension_numbers = #tpu.dot_dimension_numbers<[1], [0], [0], [1], [0, 0, 1, 1], [], []>} : vector<1x96xf32>, vector<96x288xf32>, vector<1x288xf32> -> vector<1x288xf32>
    %346 = arith.addf %345, %253 : vector<1x288xf32>
    %347 = vector.extract_strided_slice %256 {offsets = [3, 0], sizes = [1, 288], strides = [1, 1]} : vector<8x288xf32> to vector<1x288xf32>
    %348 = vector.extract_strided_slice %347 {offsets = [0, 0], sizes = [1, 96], strides = [1, 1]} : vector<1x288xf32> to vector<1x96xf32>
    %349 = vector.extract_strided_slice %346 {offsets = [0, 0], sizes = [1, 96], strides = [1, 1]} : vector<1x288xf32> to vector<1x96xf32>
    %350 = arith.addf %348, %349 : vector<1x96xf32>
    %351 = arith.negf %350 : vector<1x96xf32>
    %352 = math.exp %351 : vector<1x96xf32>
    %cst_73 = arith.constant 1.000000e+00 : f32
    %353 = vector.broadcast %cst_73 : f32 to vector<1x96xf32>
    %354 = arith.addf %353, %352 : vector<1x96xf32>
    %355 = arith.divf %353, %354 : vector<1x96xf32>
    %356 = vector.extract_strided_slice %347 {offsets = [0, 96], sizes = [1, 96], strides = [1, 1]} : vector<1x288xf32> to vector<1x96xf32>
    %357 = vector.extract_strided_slice %346 {offsets = [0, 96], sizes = [1, 96], strides = [1, 1]} : vector<1x288xf32> to vector<1x96xf32>
    %358 = arith.addf %356, %357 : vector<1x96xf32>
    %359 = arith.negf %358 : vector<1x96xf32>
    %360 = math.exp %359 : vector<1x96xf32>
    %cst_74 = arith.constant 1.000000e+00 : f32
    %361 = vector.broadcast %cst_74 : f32 to vector<1x96xf32>
    %362 = arith.addf %361, %360 : vector<1x96xf32>
    %363 = arith.divf %361, %362 : vector<1x96xf32>
    %364 = vector.extract_strided_slice %347 {offsets = [0, 192], sizes = [1, 96], strides = [1, 1]} : vector<1x288xf32> to vector<1x96xf32>
    %365 = vector.extract_strided_slice %346 {offsets = [0, 192], sizes = [1, 96], strides = [1, 1]} : vector<1x288xf32> to vector<1x96xf32>
    %366 = arith.mulf %355, %365 : vector<1x96xf32>
    %367 = arith.addf %364, %366 : vector<1x96xf32>
    %368 = math.tanh %367 : vector<1x96xf32>
    %cst_75 = arith.constant 1.000000e+00 : f32
    %369 = vector.broadcast %cst_75 : f32 to vector<1x96xf32>
    %370 = arith.subf %369, %363 : vector<1x96xf32>
    %371 = arith.mulf %370, %368 : vector<1x96xf32>
    %372 = arith.mulf %363, %344 : vector<1x96xf32>
    %373 = arith.addf %371, %372 : vector<1x96xf32>
    %cst_76 = arith.constant dense<0.000000e+00> : vector<1x288xf32>
    %374 = tpu.matmul %373, %251, %cst_76 {dimension_numbers = #tpu.dot_dimension_numbers<[1], [0], [0], [1], [0, 0, 1, 1], [], []>} : vector<1x96xf32>, vector<96x288xf32>, vector<1x288xf32> -> vector<1x288xf32>
    %375 = arith.addf %374, %253 : vector<1x288xf32>
    %376 = vector.extract_strided_slice %256 {offsets = [4, 0], sizes = [1, 288], strides = [1, 1]} : vector<8x288xf32> to vector<1x288xf32>
    %377 = vector.extract_strided_slice %376 {offsets = [0, 0], sizes = [1, 96], strides = [1, 1]} : vector<1x288xf32> to vector<1x96xf32>
    %378 = vector.extract_strided_slice %375 {offsets = [0, 0], sizes = [1, 96], strides = [1, 1]} : vector<1x288xf32> to vector<1x96xf32>
    %379 = arith.addf %377, %378 : vector<1x96xf32>
    %380 = arith.negf %379 : vector<1x96xf32>
    %381 = math.exp %380 : vector<1x96xf32>
    %cst_77 = arith.constant 1.000000e+00 : f32
    %382 = vector.broadcast %cst_77 : f32 to vector<1x96xf32>
    %383 = arith.addf %382, %381 : vector<1x96xf32>
    %384 = arith.divf %382, %383 : vector<1x96xf32>
    %385 = vector.extract_strided_slice %376 {offsets = [0, 96], sizes = [1, 96], strides = [1, 1]} : vector<1x288xf32> to vector<1x96xf32>
    %386 = vector.extract_strided_slice %375 {offsets = [0, 96], sizes = [1, 96], strides = [1, 1]} : vector<1x288xf32> to vector<1x96xf32>
    %387 = arith.addf %385, %386 : vector<1x96xf32>
    %388 = arith.negf %387 : vector<1x96xf32>
    %389 = math.exp %388 : vector<1x96xf32>
    %cst_78 = arith.constant 1.000000e+00 : f32
    %390 = vector.broadcast %cst_78 : f32 to vector<1x96xf32>
    %391 = arith.addf %390, %389 : vector<1x96xf32>
    %392 = arith.divf %390, %391 : vector<1x96xf32>
    %393 = vector.extract_strided_slice %376 {offsets = [0, 192], sizes = [1, 96], strides = [1, 1]} : vector<1x288xf32> to vector<1x96xf32>
    %394 = vector.extract_strided_slice %375 {offsets = [0, 192], sizes = [1, 96], strides = [1, 1]} : vector<1x288xf32> to vector<1x96xf32>
    %395 = arith.mulf %384, %394 : vector<1x96xf32>
    %396 = arith.addf %393, %395 : vector<1x96xf32>
    %397 = math.tanh %396 : vector<1x96xf32>
    %cst_79 = arith.constant 1.000000e+00 : f32
    %398 = vector.broadcast %cst_79 : f32 to vector<1x96xf32>
    %399 = arith.subf %398, %392 : vector<1x96xf32>
    %400 = arith.mulf %399, %397 : vector<1x96xf32>
    %401 = arith.mulf %392, %373 : vector<1x96xf32>
    %402 = arith.addf %400, %401 : vector<1x96xf32>
    %cst_80 = arith.constant dense<0.000000e+00> : vector<1x288xf32>
    %403 = tpu.matmul %402, %251, %cst_80 {dimension_numbers = #tpu.dot_dimension_numbers<[1], [0], [0], [1], [0, 0, 1, 1], [], []>} : vector<1x96xf32>, vector<96x288xf32>, vector<1x288xf32> -> vector<1x288xf32>
    %404 = arith.addf %403, %253 : vector<1x288xf32>
    %405 = vector.extract_strided_slice %256 {offsets = [5, 0], sizes = [1, 288], strides = [1, 1]} : vector<8x288xf32> to vector<1x288xf32>
    %406 = vector.extract_strided_slice %405 {offsets = [0, 0], sizes = [1, 96], strides = [1, 1]} : vector<1x288xf32> to vector<1x96xf32>
    %407 = vector.extract_strided_slice %404 {offsets = [0, 0], sizes = [1, 96], strides = [1, 1]} : vector<1x288xf32> to vector<1x96xf32>
    %408 = arith.addf %406, %407 : vector<1x96xf32>
    %409 = arith.negf %408 : vector<1x96xf32>
    %410 = math.exp %409 : vector<1x96xf32>
    %cst_81 = arith.constant 1.000000e+00 : f32
    %411 = vector.broadcast %cst_81 : f32 to vector<1x96xf32>
    %412 = arith.addf %411, %410 : vector<1x96xf32>
    %413 = arith.divf %411, %412 : vector<1x96xf32>
    %414 = vector.extract_strided_slice %405 {offsets = [0, 96], sizes = [1, 96], strides = [1, 1]} : vector<1x288xf32> to vector<1x96xf32>
    %415 = vector.extract_strided_slice %404 {offsets = [0, 96], sizes = [1, 96], strides = [1, 1]} : vector<1x288xf32> to vector<1x96xf32>
    %416 = arith.addf %414, %415 : vector<1x96xf32>
    %417 = arith.negf %416 : vector<1x96xf32>
    %418 = math.exp %417 : vector<1x96xf32>
    %cst_82 = arith.constant 1.000000e+00 : f32
    %419 = vector.broadcast %cst_82 : f32 to vector<1x96xf32>
    %420 = arith.addf %419, %418 : vector<1x96xf32>
    %421 = arith.divf %419, %420 : vector<1x96xf32>
    %422 = vector.extract_strided_slice %405 {offsets = [0, 192], sizes = [1, 96], strides = [1, 1]} : vector<1x288xf32> to vector<1x96xf32>
    %423 = vector.extract_strided_slice %404 {offsets = [0, 192], sizes = [1, 96], strides = [1, 1]} : vector<1x288xf32> to vector<1x96xf32>
    %424 = arith.mulf %413, %423 : vector<1x96xf32>
    %425 = arith.addf %422, %424 : vector<1x96xf32>
    %426 = math.tanh %425 : vector<1x96xf32>
    %cst_83 = arith.constant 1.000000e+00 : f32
    %427 = vector.broadcast %cst_83 : f32 to vector<1x96xf32>
    %428 = arith.subf %427, %421 : vector<1x96xf32>
    %429 = arith.mulf %428, %426 : vector<1x96xf32>
    %430 = arith.mulf %421, %402 : vector<1x96xf32>
    %431 = arith.addf %429, %430 : vector<1x96xf32>
    %cst_84 = arith.constant dense<0.000000e+00> : vector<1x288xf32>
    %432 = tpu.matmul %431, %251, %cst_84 {dimension_numbers = #tpu.dot_dimension_numbers<[1], [0], [0], [1], [0, 0, 1, 1], [], []>} : vector<1x96xf32>, vector<96x288xf32>, vector<1x288xf32> -> vector<1x288xf32>
    %433 = arith.addf %432, %253 : vector<1x288xf32>
    %434 = vector.extract_strided_slice %256 {offsets = [6, 0], sizes = [1, 288], strides = [1, 1]} : vector<8x288xf32> to vector<1x288xf32>
    %435 = vector.extract_strided_slice %434 {offsets = [0, 0], sizes = [1, 96], strides = [1, 1]} : vector<1x288xf32> to vector<1x96xf32>
    %436 = vector.extract_strided_slice %433 {offsets = [0, 0], sizes = [1, 96], strides = [1, 1]} : vector<1x288xf32> to vector<1x96xf32>
    %437 = arith.addf %435, %436 : vector<1x96xf32>
    %438 = arith.negf %437 : vector<1x96xf32>
    %439 = math.exp %438 : vector<1x96xf32>
    %cst_85 = arith.constant 1.000000e+00 : f32
    %440 = vector.broadcast %cst_85 : f32 to vector<1x96xf32>
    %441 = arith.addf %440, %439 : vector<1x96xf32>
    %442 = arith.divf %440, %441 : vector<1x96xf32>
    %443 = vector.extract_strided_slice %434 {offsets = [0, 96], sizes = [1, 96], strides = [1, 1]} : vector<1x288xf32> to vector<1x96xf32>
    %444 = vector.extract_strided_slice %433 {offsets = [0, 96], sizes = [1, 96], strides = [1, 1]} : vector<1x288xf32> to vector<1x96xf32>
    %445 = arith.addf %443, %444 : vector<1x96xf32>
    %446 = arith.negf %445 : vector<1x96xf32>
    %447 = math.exp %446 : vector<1x96xf32>
    %cst_86 = arith.constant 1.000000e+00 : f32
    %448 = vector.broadcast %cst_86 : f32 to vector<1x96xf32>
    %449 = arith.addf %448, %447 : vector<1x96xf32>
    %450 = arith.divf %448, %449 : vector<1x96xf32>
    %451 = vector.extract_strided_slice %434 {offsets = [0, 192], sizes = [1, 96], strides = [1, 1]} : vector<1x288xf32> to vector<1x96xf32>
    %452 = vector.extract_strided_slice %433 {offsets = [0, 192], sizes = [1, 96], strides = [1, 1]} : vector<1x288xf32> to vector<1x96xf32>
    %453 = arith.mulf %442, %452 : vector<1x96xf32>
    %454 = arith.addf %451, %453 : vector<1x96xf32>
    %455 = math.tanh %454 : vector<1x96xf32>
    %cst_87 = arith.constant 1.000000e+00 : f32
    %456 = vector.broadcast %cst_87 : f32 to vector<1x96xf32>
    %457 = arith.subf %456, %450 : vector<1x96xf32>
    %458 = arith.mulf %457, %455 : vector<1x96xf32>
    %459 = arith.mulf %450, %431 : vector<1x96xf32>
    %460 = arith.addf %458, %459 : vector<1x96xf32>
    %cst_88 = arith.constant dense<0.000000e+00> : vector<1x288xf32>
    %461 = tpu.matmul %460, %251, %cst_88 {dimension_numbers = #tpu.dot_dimension_numbers<[1], [0], [0], [1], [0, 0, 1, 1], [], []>} : vector<1x96xf32>, vector<96x288xf32>, vector<1x288xf32> -> vector<1x288xf32>
    %462 = arith.addf %461, %253 : vector<1x288xf32>
    %463 = vector.extract_strided_slice %256 {offsets = [7, 0], sizes = [1, 288], strides = [1, 1]} : vector<8x288xf32> to vector<1x288xf32>
    %464 = vector.extract_strided_slice %463 {offsets = [0, 0], sizes = [1, 96], strides = [1, 1]} : vector<1x288xf32> to vector<1x96xf32>
    %465 = vector.extract_strided_slice %462 {offsets = [0, 0], sizes = [1, 96], strides = [1, 1]} : vector<1x288xf32> to vector<1x96xf32>
    %466 = arith.addf %464, %465 : vector<1x96xf32>
    %467 = arith.negf %466 : vector<1x96xf32>
    %468 = math.exp %467 : vector<1x96xf32>
    %cst_89 = arith.constant 1.000000e+00 : f32
    %469 = vector.broadcast %cst_89 : f32 to vector<1x96xf32>
    %470 = arith.addf %469, %468 : vector<1x96xf32>
    %471 = arith.divf %469, %470 : vector<1x96xf32>
    %472 = vector.extract_strided_slice %463 {offsets = [0, 96], sizes = [1, 96], strides = [1, 1]} : vector<1x288xf32> to vector<1x96xf32>
    %473 = vector.extract_strided_slice %462 {offsets = [0, 96], sizes = [1, 96], strides = [1, 1]} : vector<1x288xf32> to vector<1x96xf32>
    %474 = arith.addf %472, %473 : vector<1x96xf32>
    %475 = arith.negf %474 : vector<1x96xf32>
    %476 = math.exp %475 : vector<1x96xf32>
    %cst_90 = arith.constant 1.000000e+00 : f32
    %477 = vector.broadcast %cst_90 : f32 to vector<1x96xf32>
    %478 = arith.addf %477, %476 : vector<1x96xf32>
    %479 = arith.divf %477, %478 : vector<1x96xf32>
    %480 = vector.extract_strided_slice %463 {offsets = [0, 192], sizes = [1, 96], strides = [1, 1]} : vector<1x288xf32> to vector<1x96xf32>
    %481 = vector.extract_strided_slice %462 {offsets = [0, 192], sizes = [1, 96], strides = [1, 1]} : vector<1x288xf32> to vector<1x96xf32>
    %482 = arith.mulf %471, %481 : vector<1x96xf32>
    %483 = arith.addf %480, %482 : vector<1x96xf32>
    %484 = math.tanh %483 : vector<1x96xf32>
    %cst_91 = arith.constant 1.000000e+00 : f32
    %485 = vector.broadcast %cst_91 : f32 to vector<1x96xf32>
    %486 = arith.subf %485, %479 : vector<1x96xf32>
    %487 = arith.mulf %486, %484 : vector<1x96xf32>
    %488 = arith.mulf %479, %460 : vector<1x96xf32>
    %489 = arith.addf %487, %488 : vector<1x96xf32>
    %490 = tpu.concatenate %286, %315, %344, %373, %402, %431, %460, %489 in 0 : vector<1x96xf32>, vector<1x96xf32>, vector<1x96xf32>, vector<1x96xf32>, vector<1x96xf32>, vector<1x96xf32>, vector<1x96xf32>, vector<1x96xf32> -> vector<8x96xf32>
    %c0_92 = arith.constant 0 : index
    %c0_93 = arith.constant 0 : index
    %491 = vector.load %arg13[%c0_92, %c0_93] : memref<96x288xf32, #tpu.memory_space<vmem>>, vector<96x288xf32>
    %c0_94 = arith.constant 0 : index
    %c0_95 = arith.constant 0 : index
    %492 = vector.load %arg14[%c0_94, %c0_95] : memref<96x288xf32, #tpu.memory_space<vmem>>, vector<96x288xf32>
    %c0_96 = arith.constant 0 : index
    %c0_97 = arith.constant 0 : index
    %493 = vector.load %arg15[%c0_96, %c0_97] : memref<1x288xf32, #tpu.memory_space<vmem>>, vector<1x288xf32>
    %c0_98 = arith.constant 0 : index
    %c0_99 = arith.constant 0 : index
    %494 = vector.load %arg16[%c0_98, %c0_99] : memref<1x288xf32, #tpu.memory_space<vmem>>, vector<1x288xf32>
    %cst_100 = arith.constant dense<0.000000e+00> : vector<8x288xf32>
    %495 = tpu.matmul %490, %491, %cst_100 {dimension_numbers = #tpu.dot_dimension_numbers<[1], [0], [0], [1], [0, 0, 1, 1], [], []>} : vector<8x96xf32>, vector<96x288xf32>, vector<8x288xf32> -> vector<8x288xf32>
    %496 = vector.broadcast %493 : vector<1x288xf32> to vector<8x288xf32>
    %497 = arith.addf %495, %496 : vector<8x288xf32>
    %cst_101 = arith.constant 0.000000e+00 : f32
    %498 = vector.broadcast %cst_101 : f32 to vector<1x96xf32>
    %cst_102 = arith.constant dense<0.000000e+00> : vector<1x288xf32>
    %499 = tpu.matmul %498, %492, %cst_102 {dimension_numbers = #tpu.dot_dimension_numbers<[1], [0], [0], [1], [0, 0, 1, 1], [], []>} : vector<1x96xf32>, vector<96x288xf32>, vector<1x288xf32> -> vector<1x288xf32>
    %500 = arith.addf %499, %494 : vector<1x288xf32>
    %501 = vector.extract_strided_slice %497 {offsets = [0, 0], sizes = [1, 288], strides = [1, 1]} : vector<8x288xf32> to vector<1x288xf32>
    %502 = vector.extract_strided_slice %501 {offsets = [0, 0], sizes = [1, 96], strides = [1, 1]} : vector<1x288xf32> to vector<1x96xf32>
    %503 = vector.extract_strided_slice %500 {offsets = [0, 0], sizes = [1, 96], strides = [1, 1]} : vector<1x288xf32> to vector<1x96xf32>
    %504 = arith.addf %502, %503 : vector<1x96xf32>
    %505 = arith.negf %504 : vector<1x96xf32>
    %506 = math.exp %505 : vector<1x96xf32>
    %cst_103 = arith.constant 1.000000e+00 : f32
    %507 = vector.broadcast %cst_103 : f32 to vector<1x96xf32>
    %508 = arith.addf %507, %506 : vector<1x96xf32>
    %509 = arith.divf %507, %508 : vector<1x96xf32>
    %510 = vector.extract_strided_slice %501 {offsets = [0, 96], sizes = [1, 96], strides = [1, 1]} : vector<1x288xf32> to vector<1x96xf32>
    %511 = vector.extract_strided_slice %500 {offsets = [0, 96], sizes = [1, 96], strides = [1, 1]} : vector<1x288xf32> to vector<1x96xf32>
    %512 = arith.addf %510, %511 : vector<1x96xf32>
    %513 = arith.negf %512 : vector<1x96xf32>
    %514 = math.exp %513 : vector<1x96xf32>
    %cst_104 = arith.constant 1.000000e+00 : f32
    %515 = vector.broadcast %cst_104 : f32 to vector<1x96xf32>
    %516 = arith.addf %515, %514 : vector<1x96xf32>
    %517 = arith.divf %515, %516 : vector<1x96xf32>
    %518 = vector.extract_strided_slice %501 {offsets = [0, 192], sizes = [1, 96], strides = [1, 1]} : vector<1x288xf32> to vector<1x96xf32>
    %519 = vector.extract_strided_slice %500 {offsets = [0, 192], sizes = [1, 96], strides = [1, 1]} : vector<1x288xf32> to vector<1x96xf32>
    %520 = arith.mulf %509, %519 : vector<1x96xf32>
    %521 = arith.addf %518, %520 : vector<1x96xf32>
    %522 = math.tanh %521 : vector<1x96xf32>
    %cst_105 = arith.constant 1.000000e+00 : f32
    %523 = vector.broadcast %cst_105 : f32 to vector<1x96xf32>
    %524 = arith.subf %523, %517 : vector<1x96xf32>
    %525 = arith.mulf %524, %522 : vector<1x96xf32>
    %526 = arith.mulf %517, %498 : vector<1x96xf32>
    %527 = arith.addf %525, %526 : vector<1x96xf32>
    %cst_106 = arith.constant dense<0.000000e+00> : vector<1x288xf32>
    %528 = tpu.matmul %527, %492, %cst_106 {dimension_numbers = #tpu.dot_dimension_numbers<[1], [0], [0], [1], [0, 0, 1, 1], [], []>} : vector<1x96xf32>, vector<96x288xf32>, vector<1x288xf32> -> vector<1x288xf32>
    %529 = arith.addf %528, %494 : vector<1x288xf32>
    %530 = vector.extract_strided_slice %497 {offsets = [1, 0], sizes = [1, 288], strides = [1, 1]} : vector<8x288xf32> to vector<1x288xf32>
    %531 = vector.extract_strided_slice %530 {offsets = [0, 0], sizes = [1, 96], strides = [1, 1]} : vector<1x288xf32> to vector<1x96xf32>
    %532 = vector.extract_strided_slice %529 {offsets = [0, 0], sizes = [1, 96], strides = [1, 1]} : vector<1x288xf32> to vector<1x96xf32>
    %533 = arith.addf %531, %532 : vector<1x96xf32>
    %534 = arith.negf %533 : vector<1x96xf32>
    %535 = math.exp %534 : vector<1x96xf32>
    %cst_107 = arith.constant 1.000000e+00 : f32
    %536 = vector.broadcast %cst_107 : f32 to vector<1x96xf32>
    %537 = arith.addf %536, %535 : vector<1x96xf32>
    %538 = arith.divf %536, %537 : vector<1x96xf32>
    %539 = vector.extract_strided_slice %530 {offsets = [0, 96], sizes = [1, 96], strides = [1, 1]} : vector<1x288xf32> to vector<1x96xf32>
    %540 = vector.extract_strided_slice %529 {offsets = [0, 96], sizes = [1, 96], strides = [1, 1]} : vector<1x288xf32> to vector<1x96xf32>
    %541 = arith.addf %539, %540 : vector<1x96xf32>
    %542 = arith.negf %541 : vector<1x96xf32>
    %543 = math.exp %542 : vector<1x96xf32>
    %cst_108 = arith.constant 1.000000e+00 : f32
    %544 = vector.broadcast %cst_108 : f32 to vector<1x96xf32>
    %545 = arith.addf %544, %543 : vector<1x96xf32>
    %546 = arith.divf %544, %545 : vector<1x96xf32>
    %547 = vector.extract_strided_slice %530 {offsets = [0, 192], sizes = [1, 96], strides = [1, 1]} : vector<1x288xf32> to vector<1x96xf32>
    %548 = vector.extract_strided_slice %529 {offsets = [0, 192], sizes = [1, 96], strides = [1, 1]} : vector<1x288xf32> to vector<1x96xf32>
    %549 = arith.mulf %538, %548 : vector<1x96xf32>
    %550 = arith.addf %547, %549 : vector<1x96xf32>
    %551 = math.tanh %550 : vector<1x96xf32>
    %cst_109 = arith.constant 1.000000e+00 : f32
    %552 = vector.broadcast %cst_109 : f32 to vector<1x96xf32>
    %553 = arith.subf %552, %546 : vector<1x96xf32>
    %554 = arith.mulf %553, %551 : vector<1x96xf32>
    %555 = arith.mulf %546, %527 : vector<1x96xf32>
    %556 = arith.addf %554, %555 : vector<1x96xf32>
    %cst_110 = arith.constant dense<0.000000e+00> : vector<1x288xf32>
    %557 = tpu.matmul %556, %492, %cst_110 {dimension_numbers = #tpu.dot_dimension_numbers<[1], [0], [0], [1], [0, 0, 1, 1], [], []>} : vector<1x96xf32>, vector<96x288xf32>, vector<1x288xf32> -> vector<1x288xf32>
    %558 = arith.addf %557, %494 : vector<1x288xf32>
    %559 = vector.extract_strided_slice %497 {offsets = [2, 0], sizes = [1, 288], strides = [1, 1]} : vector<8x288xf32> to vector<1x288xf32>
    %560 = vector.extract_strided_slice %559 {offsets = [0, 0], sizes = [1, 96], strides = [1, 1]} : vector<1x288xf32> to vector<1x96xf32>
    %561 = vector.extract_strided_slice %558 {offsets = [0, 0], sizes = [1, 96], strides = [1, 1]} : vector<1x288xf32> to vector<1x96xf32>
    %562 = arith.addf %560, %561 : vector<1x96xf32>
    %563 = arith.negf %562 : vector<1x96xf32>
    %564 = math.exp %563 : vector<1x96xf32>
    %cst_111 = arith.constant 1.000000e+00 : f32
    %565 = vector.broadcast %cst_111 : f32 to vector<1x96xf32>
    %566 = arith.addf %565, %564 : vector<1x96xf32>
    %567 = arith.divf %565, %566 : vector<1x96xf32>
    %568 = vector.extract_strided_slice %559 {offsets = [0, 96], sizes = [1, 96], strides = [1, 1]} : vector<1x288xf32> to vector<1x96xf32>
    %569 = vector.extract_strided_slice %558 {offsets = [0, 96], sizes = [1, 96], strides = [1, 1]} : vector<1x288xf32> to vector<1x96xf32>
    %570 = arith.addf %568, %569 : vector<1x96xf32>
    %571 = arith.negf %570 : vector<1x96xf32>
    %572 = math.exp %571 : vector<1x96xf32>
    %cst_112 = arith.constant 1.000000e+00 : f32
    %573 = vector.broadcast %cst_112 : f32 to vector<1x96xf32>
    %574 = arith.addf %573, %572 : vector<1x96xf32>
    %575 = arith.divf %573, %574 : vector<1x96xf32>
    %576 = vector.extract_strided_slice %559 {offsets = [0, 192], sizes = [1, 96], strides = [1, 1]} : vector<1x288xf32> to vector<1x96xf32>
    %577 = vector.extract_strided_slice %558 {offsets = [0, 192], sizes = [1, 96], strides = [1, 1]} : vector<1x288xf32> to vector<1x96xf32>
    %578 = arith.mulf %567, %577 : vector<1x96xf32>
    %579 = arith.addf %576, %578 : vector<1x96xf32>
    %580 = math.tanh %579 : vector<1x96xf32>
    %cst_113 = arith.constant 1.000000e+00 : f32
    %581 = vector.broadcast %cst_113 : f32 to vector<1x96xf32>
    %582 = arith.subf %581, %575 : vector<1x96xf32>
    %583 = arith.mulf %582, %580 : vector<1x96xf32>
    %584 = arith.mulf %575, %556 : vector<1x96xf32>
    %585 = arith.addf %583, %584 : vector<1x96xf32>
    %cst_114 = arith.constant dense<0.000000e+00> : vector<1x288xf32>
    %586 = tpu.matmul %585, %492, %cst_114 {dimension_numbers = #tpu.dot_dimension_numbers<[1], [0], [0], [1], [0, 0, 1, 1], [], []>} : vector<1x96xf32>, vector<96x288xf32>, vector<1x288xf32> -> vector<1x288xf32>
    %587 = arith.addf %586, %494 : vector<1x288xf32>
    %588 = vector.extract_strided_slice %497 {offsets = [3, 0], sizes = [1, 288], strides = [1, 1]} : vector<8x288xf32> to vector<1x288xf32>
    %589 = vector.extract_strided_slice %588 {offsets = [0, 0], sizes = [1, 96], strides = [1, 1]} : vector<1x288xf32> to vector<1x96xf32>
    %590 = vector.extract_strided_slice %587 {offsets = [0, 0], sizes = [1, 96], strides = [1, 1]} : vector<1x288xf32> to vector<1x96xf32>
    %591 = arith.addf %589, %590 : vector<1x96xf32>
    %592 = arith.negf %591 : vector<1x96xf32>
    %593 = math.exp %592 : vector<1x96xf32>
    %cst_115 = arith.constant 1.000000e+00 : f32
    %594 = vector.broadcast %cst_115 : f32 to vector<1x96xf32>
    %595 = arith.addf %594, %593 : vector<1x96xf32>
    %596 = arith.divf %594, %595 : vector<1x96xf32>
    %597 = vector.extract_strided_slice %588 {offsets = [0, 96], sizes = [1, 96], strides = [1, 1]} : vector<1x288xf32> to vector<1x96xf32>
    %598 = vector.extract_strided_slice %587 {offsets = [0, 96], sizes = [1, 96], strides = [1, 1]} : vector<1x288xf32> to vector<1x96xf32>
    %599 = arith.addf %597, %598 : vector<1x96xf32>
    %600 = arith.negf %599 : vector<1x96xf32>
    %601 = math.exp %600 : vector<1x96xf32>
    %cst_116 = arith.constant 1.000000e+00 : f32
    %602 = vector.broadcast %cst_116 : f32 to vector<1x96xf32>
    %603 = arith.addf %602, %601 : vector<1x96xf32>
    %604 = arith.divf %602, %603 : vector<1x96xf32>
    %605 = vector.extract_strided_slice %588 {offsets = [0, 192], sizes = [1, 96], strides = [1, 1]} : vector<1x288xf32> to vector<1x96xf32>
    %606 = vector.extract_strided_slice %587 {offsets = [0, 192], sizes = [1, 96], strides = [1, 1]} : vector<1x288xf32> to vector<1x96xf32>
    %607 = arith.mulf %596, %606 : vector<1x96xf32>
    %608 = arith.addf %605, %607 : vector<1x96xf32>
    %609 = math.tanh %608 : vector<1x96xf32>
    %cst_117 = arith.constant 1.000000e+00 : f32
    %610 = vector.broadcast %cst_117 : f32 to vector<1x96xf32>
    %611 = arith.subf %610, %604 : vector<1x96xf32>
    %612 = arith.mulf %611, %609 : vector<1x96xf32>
    %613 = arith.mulf %604, %585 : vector<1x96xf32>
    %614 = arith.addf %612, %613 : vector<1x96xf32>
    %cst_118 = arith.constant dense<0.000000e+00> : vector<1x288xf32>
    %615 = tpu.matmul %614, %492, %cst_118 {dimension_numbers = #tpu.dot_dimension_numbers<[1], [0], [0], [1], [0, 0, 1, 1], [], []>} : vector<1x96xf32>, vector<96x288xf32>, vector<1x288xf32> -> vector<1x288xf32>
    %616 = arith.addf %615, %494 : vector<1x288xf32>
    %617 = vector.extract_strided_slice %497 {offsets = [4, 0], sizes = [1, 288], strides = [1, 1]} : vector<8x288xf32> to vector<1x288xf32>
    %618 = vector.extract_strided_slice %617 {offsets = [0, 0], sizes = [1, 96], strides = [1, 1]} : vector<1x288xf32> to vector<1x96xf32>
    %619 = vector.extract_strided_slice %616 {offsets = [0, 0], sizes = [1, 96], strides = [1, 1]} : vector<1x288xf32> to vector<1x96xf32>
    %620 = arith.addf %618, %619 : vector<1x96xf32>
    %621 = arith.negf %620 : vector<1x96xf32>
    %622 = math.exp %621 : vector<1x96xf32>
    %cst_119 = arith.constant 1.000000e+00 : f32
    %623 = vector.broadcast %cst_119 : f32 to vector<1x96xf32>
    %624 = arith.addf %623, %622 : vector<1x96xf32>
    %625 = arith.divf %623, %624 : vector<1x96xf32>
    %626 = vector.extract_strided_slice %617 {offsets = [0, 96], sizes = [1, 96], strides = [1, 1]} : vector<1x288xf32> to vector<1x96xf32>
    %627 = vector.extract_strided_slice %616 {offsets = [0, 96], sizes = [1, 96], strides = [1, 1]} : vector<1x288xf32> to vector<1x96xf32>
    %628 = arith.addf %626, %627 : vector<1x96xf32>
    %629 = arith.negf %628 : vector<1x96xf32>
    %630 = math.exp %629 : vector<1x96xf32>
    %cst_120 = arith.constant 1.000000e+00 : f32
    %631 = vector.broadcast %cst_120 : f32 to vector<1x96xf32>
    %632 = arith.addf %631, %630 : vector<1x96xf32>
    %633 = arith.divf %631, %632 : vector<1x96xf32>
    %634 = vector.extract_strided_slice %617 {offsets = [0, 192], sizes = [1, 96], strides = [1, 1]} : vector<1x288xf32> to vector<1x96xf32>
    %635 = vector.extract_strided_slice %616 {offsets = [0, 192], sizes = [1, 96], strides = [1, 1]} : vector<1x288xf32> to vector<1x96xf32>
    %636 = arith.mulf %625, %635 : vector<1x96xf32>
    %637 = arith.addf %634, %636 : vector<1x96xf32>
    %638 = math.tanh %637 : vector<1x96xf32>
    %cst_121 = arith.constant 1.000000e+00 : f32
    %639 = vector.broadcast %cst_121 : f32 to vector<1x96xf32>
    %640 = arith.subf %639, %633 : vector<1x96xf32>
    %641 = arith.mulf %640, %638 : vector<1x96xf32>
    %642 = arith.mulf %633, %614 : vector<1x96xf32>
    %643 = arith.addf %641, %642 : vector<1x96xf32>
    %cst_122 = arith.constant dense<0.000000e+00> : vector<1x288xf32>
    %644 = tpu.matmul %643, %492, %cst_122 {dimension_numbers = #tpu.dot_dimension_numbers<[1], [0], [0], [1], [0, 0, 1, 1], [], []>} : vector<1x96xf32>, vector<96x288xf32>, vector<1x288xf32> -> vector<1x288xf32>
    %645 = arith.addf %644, %494 : vector<1x288xf32>
    %646 = vector.extract_strided_slice %497 {offsets = [5, 0], sizes = [1, 288], strides = [1, 1]} : vector<8x288xf32> to vector<1x288xf32>
    %647 = vector.extract_strided_slice %646 {offsets = [0, 0], sizes = [1, 96], strides = [1, 1]} : vector<1x288xf32> to vector<1x96xf32>
    %648 = vector.extract_strided_slice %645 {offsets = [0, 0], sizes = [1, 96], strides = [1, 1]} : vector<1x288xf32> to vector<1x96xf32>
    %649 = arith.addf %647, %648 : vector<1x96xf32>
    %650 = arith.negf %649 : vector<1x96xf32>
    %651 = math.exp %650 : vector<1x96xf32>
    %cst_123 = arith.constant 1.000000e+00 : f32
    %652 = vector.broadcast %cst_123 : f32 to vector<1x96xf32>
    %653 = arith.addf %652, %651 : vector<1x96xf32>
    %654 = arith.divf %652, %653 : vector<1x96xf32>
    %655 = vector.extract_strided_slice %646 {offsets = [0, 96], sizes = [1, 96], strides = [1, 1]} : vector<1x288xf32> to vector<1x96xf32>
    %656 = vector.extract_strided_slice %645 {offsets = [0, 96], sizes = [1, 96], strides = [1, 1]} : vector<1x288xf32> to vector<1x96xf32>
    %657 = arith.addf %655, %656 : vector<1x96xf32>
    %658 = arith.negf %657 : vector<1x96xf32>
    %659 = math.exp %658 : vector<1x96xf32>
    %cst_124 = arith.constant 1.000000e+00 : f32
    %660 = vector.broadcast %cst_124 : f32 to vector<1x96xf32>
    %661 = arith.addf %660, %659 : vector<1x96xf32>
    %662 = arith.divf %660, %661 : vector<1x96xf32>
    %663 = vector.extract_strided_slice %646 {offsets = [0, 192], sizes = [1, 96], strides = [1, 1]} : vector<1x288xf32> to vector<1x96xf32>
    %664 = vector.extract_strided_slice %645 {offsets = [0, 192], sizes = [1, 96], strides = [1, 1]} : vector<1x288xf32> to vector<1x96xf32>
    %665 = arith.mulf %654, %664 : vector<1x96xf32>
    %666 = arith.addf %663, %665 : vector<1x96xf32>
    %667 = math.tanh %666 : vector<1x96xf32>
    %cst_125 = arith.constant 1.000000e+00 : f32
    %668 = vector.broadcast %cst_125 : f32 to vector<1x96xf32>
    %669 = arith.subf %668, %662 : vector<1x96xf32>
    %670 = arith.mulf %669, %667 : vector<1x96xf32>
    %671 = arith.mulf %662, %643 : vector<1x96xf32>
    %672 = arith.addf %670, %671 : vector<1x96xf32>
    %cst_126 = arith.constant dense<0.000000e+00> : vector<1x288xf32>
    %673 = tpu.matmul %672, %492, %cst_126 {dimension_numbers = #tpu.dot_dimension_numbers<[1], [0], [0], [1], [0, 0, 1, 1], [], []>} : vector<1x96xf32>, vector<96x288xf32>, vector<1x288xf32> -> vector<1x288xf32>
    %674 = arith.addf %673, %494 : vector<1x288xf32>
    %675 = vector.extract_strided_slice %497 {offsets = [6, 0], sizes = [1, 288], strides = [1, 1]} : vector<8x288xf32> to vector<1x288xf32>
    %676 = vector.extract_strided_slice %675 {offsets = [0, 0], sizes = [1, 96], strides = [1, 1]} : vector<1x288xf32> to vector<1x96xf32>
    %677 = vector.extract_strided_slice %674 {offsets = [0, 0], sizes = [1, 96], strides = [1, 1]} : vector<1x288xf32> to vector<1x96xf32>
    %678 = arith.addf %676, %677 : vector<1x96xf32>
    %679 = arith.negf %678 : vector<1x96xf32>
    %680 = math.exp %679 : vector<1x96xf32>
    %cst_127 = arith.constant 1.000000e+00 : f32
    %681 = vector.broadcast %cst_127 : f32 to vector<1x96xf32>
    %682 = arith.addf %681, %680 : vector<1x96xf32>
    %683 = arith.divf %681, %682 : vector<1x96xf32>
    %684 = vector.extract_strided_slice %675 {offsets = [0, 96], sizes = [1, 96], strides = [1, 1]} : vector<1x288xf32> to vector<1x96xf32>
    %685 = vector.extract_strided_slice %674 {offsets = [0, 96], sizes = [1, 96], strides = [1, 1]} : vector<1x288xf32> to vector<1x96xf32>
    %686 = arith.addf %684, %685 : vector<1x96xf32>
    %687 = arith.negf %686 : vector<1x96xf32>
    %688 = math.exp %687 : vector<1x96xf32>
    %cst_128 = arith.constant 1.000000e+00 : f32
    %689 = vector.broadcast %cst_128 : f32 to vector<1x96xf32>
    %690 = arith.addf %689, %688 : vector<1x96xf32>
    %691 = arith.divf %689, %690 : vector<1x96xf32>
    %692 = vector.extract_strided_slice %675 {offsets = [0, 192], sizes = [1, 96], strides = [1, 1]} : vector<1x288xf32> to vector<1x96xf32>
    %693 = vector.extract_strided_slice %674 {offsets = [0, 192], sizes = [1, 96], strides = [1, 1]} : vector<1x288xf32> to vector<1x96xf32>
    %694 = arith.mulf %683, %693 : vector<1x96xf32>
    %695 = arith.addf %692, %694 : vector<1x96xf32>
    %696 = math.tanh %695 : vector<1x96xf32>
    %cst_129 = arith.constant 1.000000e+00 : f32
    %697 = vector.broadcast %cst_129 : f32 to vector<1x96xf32>
    %698 = arith.subf %697, %691 : vector<1x96xf32>
    %699 = arith.mulf %698, %696 : vector<1x96xf32>
    %700 = arith.mulf %691, %672 : vector<1x96xf32>
    %701 = arith.addf %699, %700 : vector<1x96xf32>
    %cst_130 = arith.constant dense<0.000000e+00> : vector<1x288xf32>
    %702 = tpu.matmul %701, %492, %cst_130 {dimension_numbers = #tpu.dot_dimension_numbers<[1], [0], [0], [1], [0, 0, 1, 1], [], []>} : vector<1x96xf32>, vector<96x288xf32>, vector<1x288xf32> -> vector<1x288xf32>
    %703 = arith.addf %702, %494 : vector<1x288xf32>
    %704 = vector.extract_strided_slice %497 {offsets = [7, 0], sizes = [1, 288], strides = [1, 1]} : vector<8x288xf32> to vector<1x288xf32>
    %705 = vector.extract_strided_slice %704 {offsets = [0, 0], sizes = [1, 96], strides = [1, 1]} : vector<1x288xf32> to vector<1x96xf32>
    %706 = vector.extract_strided_slice %703 {offsets = [0, 0], sizes = [1, 96], strides = [1, 1]} : vector<1x288xf32> to vector<1x96xf32>
    %707 = arith.addf %705, %706 : vector<1x96xf32>
    %708 = arith.negf %707 : vector<1x96xf32>
    %709 = math.exp %708 : vector<1x96xf32>
    %cst_131 = arith.constant 1.000000e+00 : f32
    %710 = vector.broadcast %cst_131 : f32 to vector<1x96xf32>
    %711 = arith.addf %710, %709 : vector<1x96xf32>
    %712 = arith.divf %710, %711 : vector<1x96xf32>
    %713 = vector.extract_strided_slice %704 {offsets = [0, 96], sizes = [1, 96], strides = [1, 1]} : vector<1x288xf32> to vector<1x96xf32>
    %714 = vector.extract_strided_slice %703 {offsets = [0, 96], sizes = [1, 96], strides = [1, 1]} : vector<1x288xf32> to vector<1x96xf32>
    %715 = arith.addf %713, %714 : vector<1x96xf32>
    %716 = arith.negf %715 : vector<1x96xf32>
    %717 = math.exp %716 : vector<1x96xf32>
    %cst_132 = arith.constant 1.000000e+00 : f32
    %718 = vector.broadcast %cst_132 : f32 to vector<1x96xf32>
    %719 = arith.addf %718, %717 : vector<1x96xf32>
    %720 = arith.divf %718, %719 : vector<1x96xf32>
    %721 = vector.extract_strided_slice %704 {offsets = [0, 192], sizes = [1, 96], strides = [1, 1]} : vector<1x288xf32> to vector<1x96xf32>
    %722 = vector.extract_strided_slice %703 {offsets = [0, 192], sizes = [1, 96], strides = [1, 1]} : vector<1x288xf32> to vector<1x96xf32>
    %723 = arith.mulf %712, %722 : vector<1x96xf32>
    %724 = arith.addf %721, %723 : vector<1x96xf32>
    %725 = math.tanh %724 : vector<1x96xf32>
    %cst_133 = arith.constant 1.000000e+00 : f32
    %726 = vector.broadcast %cst_133 : f32 to vector<1x96xf32>
    %727 = arith.subf %726, %720 : vector<1x96xf32>
    %728 = arith.mulf %727, %725 : vector<1x96xf32>
    %729 = arith.mulf %720, %701 : vector<1x96xf32>
    %730 = arith.addf %728, %729 : vector<1x96xf32>
    %731 = tpu.concatenate %527, %556, %585, %614, %643, %672, %701, %730 in 0 : vector<1x96xf32>, vector<1x96xf32>, vector<1x96xf32>, vector<1x96xf32>, vector<1x96xf32>, vector<1x96xf32>, vector<1x96xf32>, vector<1x96xf32> -> vector<8x96xf32>
    %c0_134 = arith.constant 0 : index
    %c0_135 = arith.constant 0 : index
    %732 = vector.load %arg17[%c0_134, %c0_135] : memref<32x32xf32, #tpu.memory_space<vmem>>, vector<32x32xf32>
    %cst_136 = arith.constant dense<0.000000e+00> : vector<8x32xf32>
    %733 = tpu.matmul %7, %732, %cst_136 {dimension_numbers = #tpu.dot_dimension_numbers<[1], [0], [0], [1], [0, 0, 1, 1], [], []>} : vector<8x32xf32>, vector<32x32xf32>, vector<8x32xf32> -> vector<8x32xf32>
    %c0_137 = arith.constant 0 : index
    %c0_138 = arith.constant 0 : index
    %734 = vector.load %arg18[%c0_137, %c0_138] : memref<96x32xf32, #tpu.memory_space<vmem>>, vector<96x32xf32>
    %cst_139 = arith.constant dense<0.000000e+00> : vector<8x32xf32>
    %735 = tpu.matmul %731, %734, %cst_139 {dimension_numbers = #tpu.dot_dimension_numbers<[1], [0], [0], [1], [0, 0, 1, 1], [], []>} : vector<8x96xf32>, vector<96x32xf32>, vector<8x32xf32> -> vector<8x32xf32>
    %736 = arith.addf %733, %735 : vector<8x32xf32>
    %c0_140 = arith.constant 0 : index
    %c0_141 = arith.constant 0 : index
    %737 = vector.load %arg19[%c0_140, %c0_141] : memref<1x32xf32, #tpu.memory_space<vmem>>, vector<1x32xf32>
    %738 = vector.broadcast %737 : vector<1x32xf32> to vector<8x32xf32>
    %739 = arith.addf %736, %738 : vector<8x32xf32>
    %cst_142 = arith.constant 0.000000e+00 : f32
    %740 = vector.broadcast %cst_142 : f32 to vector<8x32xf32>
    %741 = arith.maximumf %739, %740 : vector<8x32xf32>
    %c0_143 = arith.constant 0 : index
    %c0_144 = arith.constant 0 : index
    %742 = vector.load %arg20[%c0_143, %c0_144] : memref<32x16xf32, #tpu.memory_space<vmem>>, vector<32x16xf32>
    %cst_145 = arith.constant dense<0.000000e+00> : vector<8x16xf32>
    %743 = tpu.matmul %741, %742, %cst_145 {dimension_numbers = #tpu.dot_dimension_numbers<[1], [0], [0], [1], [0, 0, 1, 1], [], []>} : vector<8x32xf32>, vector<32x16xf32>, vector<8x16xf32> -> vector<8x16xf32>
    %c0_146 = arith.constant 0 : index
    %c0_147 = arith.constant 0 : index
    %744 = vector.load %arg21[%c0_146, %c0_147] : memref<1x16xf32, #tpu.memory_space<vmem>>, vector<1x16xf32>
    %745 = vector.broadcast %744 : vector<1x16xf32> to vector<8x16xf32>
    %746 = arith.addf %743, %745 : vector<8x16xf32>
    %cst_148 = arith.constant 0.000000e+00 : f32
    %747 = vector.broadcast %cst_148 : f32 to vector<8x16xf32>
    %748 = arith.maximumf %746, %747 : vector<8x16xf32>
    %c0_149 = arith.constant 0 : index
    %c0_150 = arith.constant 0 : index
    %749 = vector.load %arg22[%c0_149, %c0_150] : memref<16x5xf32, #tpu.memory_space<vmem>>, vector<16x5xf32>
    %cst_151 = arith.constant dense<0.000000e+00> : vector<8x5xf32>
    %750 = tpu.matmul %748, %749, %cst_151 {dimension_numbers = #tpu.dot_dimension_numbers<[1], [0], [0], [1], [0, 0, 1, 1], [], []>} : vector<8x16xf32>, vector<16x5xf32>, vector<8x5xf32> -> vector<8x5xf32>
    %c0_152 = arith.constant 0 : index
    %c0_153 = arith.constant 0 : index
    %751 = vector.load %arg23[%c0_152, %c0_153] : memref<1x5xf32, #tpu.memory_space<vmem>>, vector<1x5xf32>
    %752 = vector.broadcast %751 : vector<1x5xf32> to vector<8x5xf32>
    %753 = arith.addf %750, %752 : vector<8x5xf32>
    %c0_154 = arith.constant 0 : index
    %c0_155 = arith.constant 0 : index
    %c0_156 = arith.constant 0 : index
    %754 = vector.load %arg2[%c0_154, %c0_155, %c0_156] : memref<8x12x5xf32, #tpu.memory_space<vmem>>, vector<8x12x5xf32>
    %755 = vector.shape_cast %753 : vector<8x5xf32> to vector<8x1x5xf32>
    %756 = vector.broadcast %755 : vector<8x1x5xf32> to vector<8x12x5xf32>
    %757 = arith.mulf %754, %756 : vector<8x12x5xf32>
    %cst_157 = arith.constant dense<0.000000e+00> : vector<8x12xf32>
    %758 = vector.multi_reduction <add>, %757, %cst_157 [2] : vector<8x12x5xf32> to vector<8x12xf32>
    %c0_158 = arith.constant 0 : index
    %c0_159 = arith.constant 0 : index
    %759 = vector.load %arg24[%c0_158, %c0_159] : memref<1x1xf32, #tpu.memory_space<vmem>>, vector<1x1xf32>
    %760 = vector.broadcast %759 : vector<1x1xf32> to vector<8x12xf32>
    %761 = arith.addf %758, %760 : vector<8x12xf32>
    %c0_160 = arith.constant 0 : index
    %c0_161 = arith.constant 0 : index
    %762 = vector.load %arg25[%c0_160, %c0_161] : memref<8x12xf32, #tpu.memory_space<vmem>>, vector<8x12xf32>
    tpu.vector_store %arg25[%c0_160, %c0_161], %761 {strides = array<i32>} : memref<8x12xf32, #tpu.memory_space<vmem>>, vector<8x12xf32>,
    return
  }
}

</mosaic_0001>

<llo_original>
// kernel: tts_fused_forward.1
$region0: #{tts_fused_forward.1}
  #allocation0 [shape = 'u32[]', space=smem, size = 0x4, offset = 0x4, fixed_abs, tag = 'smem constant byte address 0x4 - core index']
  #allocation1 [shape = 'u32[144,128]{1,0:T(1,128)}', space=vmem, size = 0x12000, scoped, tag = 'internal scratch']
  #allocation2 [shape = 'f32[1,1]{1,0:T(1,128)S(1)}', space=vmem, size = 0x200, scoped, tag = 'scoped memory for tts_fused_forward.1']
  %s0 = inlined_call_operand.vmem [shape: f32[8,6], index: 0, kind: input, shape index: {}]
  %s1 = inlined_call_operand.vmem [shape: f32[8,48], index: 1, kind: input, shape index: {}]
  %s2 = inlined_call_operand.vmem [shape: f32[8,12,5], index: 2, kind: input, shape index: {}]
  %s3 = inlined_call_operand.hbm [shape: f32[6,32], index: 3, kind: input, shape index: {}]
  %s4 = inlined_call_operand.hbm [shape: f32[1,32], index: 4, kind: input, shape index: {}]
  %s5 = inlined_call_operand.vmem [shape: f32[48,288], index: 5, kind: input, shape index: {}]
  %s6 = inlined_call_operand.vmem [shape: f32[96,288], index: 6, kind: input, shape index: {}]
  %s7 = inlined_call_operand.hbm [shape: f32[1,288], index: 7, kind: input, shape index: {}]
  %s8 = inlined_call_operand.hbm [shape: f32[1,288], index: 8, kind: input, shape index: {}]
  %s9 = inlined_call_operand.hbm [shape: f32[96,288], index: 9, kind: input, shape index: {}]
  %s10 = inlined_call_operand.hbm [shape: f32[96,288], index: 10, kind: input, shape index: {}]
  %s11 = inlined_call_operand.hbm [shape: f32[1,288], index: 11, kind: input, shape index: {}]
  %s12 = inlined_call_operand.hbm [shape: f32[1,288], index: 12, kind: input, shape index: {}]
  %s13 = inlined_call_operand.hbm [shape: f32[96,288], index: 13, kind: input, shape index: {}]
  %s14 = inlined_call_operand.hbm [shape: f32[96,288], index: 14, kind: input, shape index: {}]
  %s15 = inlined_call_operand.hbm [shape: f32[1,288], index: 15, kind: input, shape index: {}]
  %s16 = inlined_call_operand.hbm [shape: f32[1,288], index: 16, kind: input, shape index: {}]
  %s17 = inlined_call_operand.vmem [shape: f32[32,32], index: 17, kind: input, shape index: {}]
  %s18 = inlined_call_operand.vmem [shape: f32[96,32], index: 18, kind: input, shape index: {}]
  %s19 = inlined_call_operand.hbm [shape: f32[1,32], index: 19, kind: input, shape index: {}]
  %s20 = inlined_call_operand.vmem [shape: f32[32,16], index: 20, kind: input, shape index: {}]
  %s21 = inlined_call_operand.hbm [shape: f32[1,16], index: 21, kind: input, shape index: {}]
  %s22 = inlined_call_operand.vmem [shape: f32[16,5], index: 22, kind: input, shape index: {}]
  %s23 = inlined_call_operand.vmem [shape: f32[1,5], index: 23, kind: input, shape index: {}]
  %s24 = inlined_call_operand.<no memory space> [shape: f32[1,1], index: 24, kind: input, shape index: {}]
  %s25 = inlined_call_operand.hbm [shape: f32[8,12], index: 25, kind: output, shape index: {}]
  %s26 = sld [smem:[#allocation0]]
  $region166: #{tts_fused_forward.1} parent=0
    _
  %s28 = ssub.s32 1, %s26
  %s29 = scalar_select 0, %s28, %s26
  %v30 = vstv %s24
  %31 = vst [vmem:[#allocation2] sm:$0x1] %v30
  $region1: #{tts_fused_forward.1} parent=0
    #allocation3 [shape = 'u8[4096]{0}', space=vmem, size = 0x1000, scoped, tag = 'input window, operand 3, single buffered']
    #allocation4 [shape = 's32[1]{0}', space=sflag, size = 0x4, scoped, tag = 'scoped memory for tts_fused_forward.1']
    #allocation5 [shape = 's32[1]{0}', space=sflag, size = 0x4, scoped, tag = 'scoped memory for tts_fused_forward.1']
    #allocation6 [shape = 'u8[512]{0}', space=vmem, size = 0x400, scoped, tag = 'input window, operand 4, single buffered']
    #allocation7 [shape = 's32[1]{0}', space=sflag, size = 0x4, scoped, tag = 'scoped memory for tts_fused_forward.1']
    #allocation8 [shape = 'u8[1536]{0}', space=vmem, size = 0x800, scoped, tag = 'input window, operand 7, single buffered']
    #allocation9 [shape = 'u8[1536]{0}', space=vmem, size = 0x800, scoped, tag = 'input window, operand 8, single buffered']
    #allocation10 [shape = 's32[1]{0}', space=sflag, size = 0x4, scoped, tag = 'scoped memory for tts_fused_forward.1']
    #allocation11 [shape = 'u8[147456]{0}', space=vmem, size = 0x24000, scoped, tag = 'input window, operand 9, single buffered']
    #allocation12 [shape = 'u8[147456]{0}', space=vmem, size = 0x24000, scoped, tag = 'input window, operand 10, single buffered']
    #allocation13 [shape = 's32[1]{0}', space=sflag, size = 0x4, scoped, tag = 'scoped memory for tts_fused_forward.1']
    #allocation14 [shape = 'u8[1536]{0}', space=vmem, size = 0x800, scoped, tag = 'input window, operand 11, single buffered']
    #allocation15 [shape = 'u8[1536]{0}', space=vmem, size = 0x800, scoped, tag = 'input window, operand 12, single buffered']
    #allocation16 [shape = 's32[1]{0}', space=sflag, size = 0x4, scoped, tag = 'scoped memory for tts_fused_forward.1']
    #allocation17 [shape = 'u8[147456]{0}', space=vmem, size = 0x24000, scoped, tag = 'input window, operand 13, single buffered']
    #allocation18 [shape = 'u8[147456]{0}', space=vmem, size = 0x24000, scoped, tag = 'input window, operand 14, single buffered']
    #allocation19 [shape = 's32[1]{0}', space=sflag, size = 0x4, scoped, tag = 'scoped memory for tts_fused_forward.1']
    #allocation20 [shape = 'u8[1536]{0}', space=vmem, size = 0x800, scoped, tag = 'input window, operand 15, single buffered']
    #allocation21 [shape = 'u8[1536]{0}', space=vmem, size = 0x800, scoped, tag = 'input window, operand 16, single buffered']
    #allocation22 [shape = 's32[1]{0}', space=sflag, size = 0x4, scoped, tag = 'scoped memory for tts_fused_forward.1']
    #allocation23 [shape = 'u8[512]{0}', space=vmem, size = 0x400, scoped, tag = 'input window, operand 19, single buffered']
    #allocation24 [shape = 'u8[512]{0}', space=vmem, size = 0x400, scoped, tag = 'input window, operand 21, single buffered']
    #allocation25 [shape = 's32[1]{0}', space=sflag, size = 0x4, scoped, tag = 'scoped memory for tts_fused_forward.1']
    #allocation26 [shape = 'u8[4096]{0}', space=vmem, size = 0x1000, scoped, tag = 'output window, operand 0, single buffered']
    %32 = vsyncpa [#allocation4], 0
    %33 = vsyncpa [#allocation7], 0
    %34 = vsyncpa [#allocation10], 0
    %35 = vsyncpa [#allocation13], 0
    %36 = vsyncpa [#allocation16], 0
    %37 = vsyncpa [#allocation19], 0
    %38 = vsyncpa [#allocation22], 0
    %39 = vsyncpa [#allocation25], 0
    %40 = vsyncpa [#allocation5], 0
    // Predicated region
    $region2: #{tts_fused_forward.1} parent=1 // pred_check
      _
    $region3: #{tts_fused_forward.1} parent=1 // pred_check_branch
      %42 = sbr.rel (0) target = $region5
    $region4: #{tts_fused_forward.1} parent=1 // pred_region
      _
    $region5: #{tts_fused_forward.1} parent=1 // pred_fallthru
      _
    // Predicated region
    $region6: #{tts_fused_forward.1} parent=1 // pred_check
      _
    $region7: #{tts_fused_forward.1} parent=1 // pred_check_branch
      %44 = sbr.rel (0) target = $region9
    $region8: #{tts_fused_forward.1} parent=1 // pred_region
      _
    $region9: #{tts_fused_forward.1} parent=1 // pred_fallthru
      _
    // Predicated region
    $region10: #{tts_fused_forward.1} parent=1 // pred_check
      _
    $region11: #{tts_fused_forward.1} parent=1 // pred_check_branch
      %46 = sbr.rel (0) target = $region13
    $region12: #{tts_fused_forward.1} parent=1 // pred_region
      _
    $region13: #{tts_fused_forward.1} parent=1 // pred_fallthru
      _
    // Predicated region
    $region14: #{tts_fused_forward.1} parent=1 // pred_check
      _
    $region15: #{tts_fused_forward.1} parent=1 // pred_check_branch
      %48 = sbr.rel (0) target = $region17
    $region16: #{tts_fused_forward.1} parent=1 // pred_region
      %s50 = ssub.s32 128, 128
      %51 = vsyncadd [#allocation4], %s50
      %s53 = sshll.u32 [#allocation3], 4
      %s54 = int_to_ptr.vmem [resolvable:$true] %s53
      %56 = dma.hbm_to_vmem [thread:$0]  %s3, 128, %s54, [#allocation4]
    $region17: #{tts_fused_forward.1} parent=1 // pred_fallthru
      _
    // Predicated region
    $region18: #{tts_fused_forward.1} parent=1 // pred_check
      _
    $region19: #{tts_fused_forward.1} parent=1 // pred_check_branch
      %58 = sbr.rel (0) target = $region21
    $region20: #{tts_fused_forward.1} parent=1 // pred_region
      %s60 = ssub.s32 16, 16
      %61 = vsyncadd [#allocation7], %s60
      %s63 = sshll.u32 [#allocation6], 4
      %s64 = int_to_ptr.vmem [resolvable:$true] %s63
      %66 = dma.hbm_to_vmem [thread:$0]  %s4, 16, %s64, [#allocation7]
    $region21: #{tts_fused_forward.1} parent=1 // pred_fallthru
      _
    // Predicated region
    $region22: #{tts_fused_forward.1} parent=1 // pred_check
      _
    $region23: #{tts_fused_forward.1} parent=1 // pred_check_branch
      %68 = sbr.rel (0) target = $region25
    $region24: #{tts_fused_forward.1} parent=1 // pred_region
      _
    $region25: #{tts_fused_forward.1} parent=1 // pred_fallthru
      _
    // Predicated region
    $region26: #{tts_fused_forward.1} parent=1 // pred_check
      _
    $region27: #{tts_fused_forward.1} parent=1 // pred_check_branch
      %70 = sbr.rel (0) target = $region29
    $region28: #{tts_fused_forward.1} parent=1 // pred_region
      _
    $region29: #{tts_fused_forward.1} parent=1 // pred_fallthru
      _
    // Predicated region
    $region30: #{tts_fused_forward.1} parent=1 // pred_check
      _
    $region31: #{tts_fused_forward.1} parent=1 // pred_check_branch
      %72 = sbr.rel (0) target = $region33
    $region32: #{tts_fused_forward.1} parent=1 // pred_region
      %s74 = ssub.s32 48, 48
      %75 = vsyncadd [#allocation7], %s74
      %s77 = sshll.u32 [#allocation8], 4
      %s78 = int_to_ptr.vmem [resolvable:$true] %s77
      %80 = dma.hbm_to_vmem [thread:$0]  %s7, 48, %s78, [#allocation7]
    $region33: #{tts_fused_forward.1} parent=1 // pred_fallthru
      _
    // Predicated region
    $region34: #{tts_fused_forward.1} parent=1 // pred_check
      _
    $region35: #{tts_fused_forward.1} parent=1 // pred_check_branch
      %82 = sbr.rel (0) target = $region37
    $region36: #{tts_fused_forward.1} parent=1 // pred_region
      %s84 = ssub.s32 48, 48
      %85 = vsyncadd [#allocation10], %s84
      %s87 = sshll.u32 [#allocation9], 4
      %s88 = int_to_ptr.vmem [resolvable:$true] %s87
      %90 = dma.hbm_to_vmem [thread:$0]  %s8, 48, %s88, [#allocation10]
    $region37: #{tts_fused_forward.1} parent=1 // pred_fallthru
      _
    // Predicated region
    $region38: #{tts_fused_forward.1} parent=1 // pred_check
      _
    $region39: #{tts_fused_forward.1} parent=1 // pred_check_branch
      %92 = sbr.rel (0) target = $region41
    $region40: #{tts_fused_forward.1} parent=1 // pred_region
      %s94 = ssub.s32 4608, 4608
      %95 = vsyncadd [#allocation10], %s94
      %s96 = sshll.u32 [#allocation11], 4
      %s97 = int_to_ptr.vmem [resolvable:$true] %s96
      %102 = dma.hbm_to_vmem [thread:$0]  %s9, 4608, %s97, [#allocation10], 384, 384, 24
    $region41: #{tts_fused_forward.1} parent=1 // pred_fallthru
      _
    // Predicated region
    $region42: #{tts_fused_forward.1} parent=1 // pred_check
      _
    $region43: #{tts_fused_forward.1} parent=1 // pred_check_branch
      %104 = sbr.rel (0) target = $region45
    $region44: #{tts_fused_forward.1} parent=1 // pred_region
      %s106 = ssub.s32 4608, 4608
      %107 = vsyncadd [#allocation13], %s106
      %s108 = sshll.u32 [#allocation12], 4
      %s109 = int_to_ptr.vmem [resolvable:$true] %s108
      %114 = dma.hbm_to_vmem [thread:$0]  %s10, 4608, %s109, [#allocation13], 384, 384, 24
    $region45: #{tts_fused_forward.1} parent=1 // pred_fallthru
      _
    // Predicated region
    $region46: #{tts_fused_forward.1} parent=1 // pred_check
      _
    $region47: #{tts_fused_forward.1} parent=1 // pred_check_branch
      %116 = sbr.rel (0) target = $region49
    $region48: #{tts_fused_forward.1} parent=1 // pred_region
      %s118 = ssub.s32 48, 48
      %119 = vsyncadd [#allocation13], %s118
      %s121 = sshll.u32 [#allocation14], 4
      %s122 = int_to_ptr.vmem [resolvable:$true] %s121
      %124 = dma.hbm_to_vmem [thread:$0]  %s11, 48, %s122, [#allocation13]
    $region49: #{tts_fused_forward.1} parent=1 // pred_fallthru
      _
    // Predicated region
    $region50: #{tts_fused_forward.1} parent=1 // pred_check
      _
    $region51: #{tts_fused_forward.1} parent=1 // pred_check_branch
      %126 = sbr.rel (0) target = $region53
    $region52: #{tts_fused_forward.1} parent=1 // pred_region
      %s128 = ssub.s32 48, 48
      %129 = vsyncadd [#allocation16], %s128
      %s131 = sshll.u32 [#allocation15], 4
      %s132 = int_to_ptr.vmem [resolvable:$true] %s131
      %134 = dma.hbm_to_vmem [thread:$0]  %s12, 48, %s132, [#allocation16]
    $region53: #{tts_fused_forward.1} parent=1 // pred_fallthru
      _
    // Predicated region
    $region54: #{tts_fused_forward.1} parent=1 // pred_check
      _
    $region55: #{tts_fused_forward.1} parent=1 // pred_check_branch
      %136 = sbr.rel (0) target = $region57
    $region56: #{tts_fused_forward.1} parent=1 // pred_region
      %s138 = ssub.s32 4608, 4608
      %139 = vsyncadd [#allocation16], %s138
      %s140 = sshll.u32 [#allocation17], 4
      %s141 = int_to_ptr.vmem [resolvable:$true] %s140
      %146 = dma.hbm_to_vmem [thread:$0]  %s13, 4608, %s141, [#allocation16], 384, 384, 24
    $region57: #{tts_fused_forward.1} parent=1 // pred_fallthru
      _
    // Predicated region
    $region58: #{tts_fused_forward.1} parent=1 // pred_check
      _
    $region59: #{tts_fused_forward.1} parent=1 // pred_check_branch
      %148 = sbr.rel (0) target = $region61
    $region60: #{tts_fused_forward.1} parent=1 // pred_region
      %s150 = ssub.s32 4608, 4608
      %151 = vsyncadd [#allocation19], %s150
      %s152 = sshll.u32 [#allocation18], 4
      %s153 = int_to_ptr.vmem [resolvable:$true] %s152
      %158 = dma.hbm_to_vmem [thread:$0]  %s14, 4608, %s153, [#allocation19], 384, 384, 24
    $region61: #{tts_fused_forward.1} parent=1 // pred_fallthru
      _
    // Predicated region
    $region62: #{tts_fused_forward.1} parent=1 // pred_check
      _
    $region63: #{tts_fused_forward.1} parent=1 // pred_check_branch
      %160 = sbr.rel (0) target = $region65
    $region64: #{tts_fused_forward.1} parent=1 // pred_region
      %s162 = ssub.s32 48, 48
      %163 = vsyncadd [#allocation19], %s162
      %s165 = sshll.u32 [#allocation20], 4
      %s166 = int_to_ptr.vmem [resolvable:$true] %s165
      %168 = dma.hbm_to_vmem [thread:$0]  %s15, 48, %s166, [#allocation19]
    $region65: #{tts_fused_forward.1} parent=1 // pred_fallthru
      _
    // Predicated region
    $region66: #{tts_fused_forward.1} parent=1 // pred_check
      _
    $region67: #{tts_fused_forward.1} parent=1 // pred_check_branch
      %170 = sbr.rel (0) target = $region69
    $region68: #{tts_fused_forward.1} parent=1 // pred_region
      %s172 = ssub.s32 48, 48
      %173 = vsyncadd [#allocation22], %s172
      %s175 = sshll.u32 [#allocation21], 4
      %s176 = int_to_ptr.vmem [resolvable:$true] %s175
      %178 = dma.hbm_to_vmem [thread:$0]  %s16, 48, %s176, [#allocation22]
    $region69: #{tts_fused_forward.1} parent=1 // pred_fallthru
      _
    // Predicated region
    $region70: #{tts_fused_forward.1} parent=1 // pred_check
      _
    $region71: #{tts_fused_forward.1} parent=1 // pred_check_branch
      %180 = sbr.rel (0) target = $region73
    $region72: #{tts_fused_forward.1} parent=1 // pred_region
      _
    $region73: #{tts_fused_forward.1} parent=1 // pred_fallthru
      _
    // Predicated region
    $region74: #{tts_fused_forward.1} parent=1 // pred_check
      _
    $region75: #{tts_fused_forward.1} parent=1 // pred_check_branch
      %182 = sbr.rel (0) target = $region77
    $region76: #{tts_fused_forward.1} parent=1 // pred_region
      _
    $region77: #{tts_fused_forward.1} parent=1 // pred_fallthru
      _
    // Predicated region
    $region78: #{tts_fused_forward.1} parent=1 // pred_check
      _
    $region79: #{tts_fused_forward.1} parent=1 // pred_check_branch
      %184 = sbr.rel (0) target = $region81
    $region80: #{tts_fused_forward.1} parent=1 // pred_region
      %s186 = ssub.s32 16, 16
      %187 = vsyncadd [#allocation22], %s186
      %s189 = sshll.u32 [#allocation23], 4
      %s190 = int_to_ptr.vmem [resolvable:$true] %s189
      %192 = dma.hbm_to_vmem [thread:$0]  %s19, 16, %s190, [#allocation22]
    $region81: #{tts_fused_forward.1} parent=1 // pred_fallthru
      _
    // Predicated region
    $region82: #{tts_fused_forward.1} parent=1 // pred_check
      _
    $region83: #{tts_fused_forward.1} parent=1 // pred_check_branch
      %194 = sbr.rel (0) target = $region85
    $region84: #{tts_fused_forward.1} parent=1 // pred_region
      _
    $region85: #{tts_fused_forward.1} parent=1 // pred_fallthru
      _
    // Predicated region
    $region86: #{tts_fused_forward.1} parent=1 // pred_check
      _
    $region87: #{tts_fused_forward.1} parent=1 // pred_check_branch
      %196 = sbr.rel (0) target = $region89
    $region88: #{tts_fused_forward.1} parent=1 // pred_region
      %s198 = ssub.s32 16, 16
      %199 = vsyncadd [#allocation25], %s198
      %s201 = sshll.u32 [#allocation24], 4
      %s202 = int_to_ptr.vmem [resolvable:$true] %s201
      %204 = dma.hbm_to_vmem [thread:$0]  %s21, 16, %s202, [#allocation25]
    $region89: #{tts_fused_forward.1} parent=1 // pred_fallthru
      _
    // Predicated region
    $region90: #{tts_fused_forward.1} parent=1 // pred_check
      _
    $region91: #{tts_fused_forward.1} parent=1 // pred_check_branch
      %206 = sbr.rel (0) target = $region93
    $region92: #{tts_fused_forward.1} parent=1 // pred_region
      _
    $region93: #{tts_fused_forward.1} parent=1 // pred_fallthru
      _
    // Predicated region
    $region94: #{tts_fused_forward.1} parent=1 // pred_check
      _
    $region95: #{tts_fused_forward.1} parent=1 // pred_check_branch
      %208 = sbr.rel (0) target = $region97
    $region96: #{tts_fused_forward.1} parent=1 // pred_region
      _
    $region97: #{tts_fused_forward.1} parent=1 // pred_fallthru
      _
    // Predicated region
    $region98: #{tts_fused_forward.1} parent=1 // pred_check
      _
    $region99: #{tts_fused_forward.1} parent=1 // pred_check_branch
      %210 = sbr.rel (0) target = $region101
    $region100: #{tts_fused_forward.1} parent=1 // pred_region
      _
    $region101: #{tts_fused_forward.1} parent=1 // pred_fallthru
      _
    // Predicated region
    $region102: #{tts_fused_forward.1} parent=1 // pred_check
      _
    $region103: #{tts_fused_forward.1} parent=1 // pred_check_branch
      %212 = sbr.rel (0) target = $region105
    $region104: #{tts_fused_forward.1} parent=1 // pred_region
      %213 = dma.done [#allocation4], 128
    $region105: #{tts_fused_forward.1} parent=1 // pred_fallthru
      _
    // Predicated region
    $region106: #{tts_fused_forward.1} parent=1 // pred_check
      _
    $region107: #{tts_fused_forward.1} parent=1 // pred_check_branch
      %215 = sbr.rel (0) target = $region109
    $region108: #{tts_fused_forward.1} parent=1 // pred_region
      %216 = dma.done [#allocation7], 16
    $region109: #{tts_fused_forward.1} parent=1 // pred_fallthru
      _
    // Predicated region
    $region110: #{tts_fused_forward.1} parent=1 // pred_check
      _
    $region111: #{tts_fused_forward.1} parent=1 // pred_check_branch
      %218 = sbr.rel (0) target = $region113
    $region112: #{tts_fused_forward.1} parent=1 // pred_region
      %219 = dma.done [#allocation7], 48
    $region113: #{tts_fused_forward.1} parent=1 // pred_fallthru
      _
    // Predicated region
    $region114: #{tts_fused_forward.1} parent=1 // pred_check
      _
    $region115: #{tts_fused_forward.1} parent=1 // pred_check_branch
      %221 = sbr.rel (0) target = $region117
    $region116: #{tts_fused_forward.1} parent=1 // pred_region
      %222 = dma.done [#allocation10], 48
    $region117: #{tts_fused_forward.1} parent=1 // pred_fallthru
      _
    // Predicated region
    $region118: #{tts_fused_forward.1} parent=1 // pred_check
      _
    $region119: #{tts_fused_forward.1} parent=1 // pred_check_branch
      %224 = sbr.rel (0) target = $region121
    $region120: #{tts_fused_forward.1} parent=1 // pred_region
      %225 = dma.done [#allocation10], 4608
    $region121: #{tts_fused_forward.1} parent=1 // pred_fallthru
      _
    // Predicated region
    $region122: #{tts_fused_forward.1} parent=1 // pred_check
      _
    $region123: #{tts_fused_forward.1} parent=1 // pred_check_branch
      %227 = sbr.rel (0) target = $region125
    $region124: #{tts_fused_forward.1} parent=1 // pred_region
      %228 = dma.done [#allocation13], 4608
    $region125: #{tts_fused_forward.1} parent=1 // pred_fallthru
      _
    // Predicated region
    $region126: #{tts_fused_forward.1} parent=1 // pred_check
      _
    $region127: #{tts_fused_forward.1} parent=1 // pred_check_branch
      %230 = sbr.rel (0) target = $region129
    $region128: #{tts_fused_forward.1} parent=1 // pred_region
      %231 = dma.done [#allocation13], 48
    $region129: #{tts_fused_forward.1} parent=1 // pred_fallthru
      _
    // Predicated region
    $region130: #{tts_fused_forward.1} parent=1 // pred_check
      _
    $region131: #{tts_fused_forward.1} parent=1 // pred_check_branch
      %233 = sbr.rel (0) target = $region133
    $region132: #{tts_fused_forward.1} parent=1 // pred_region
      %234 = dma.done [#allocation16], 48
    $region133: #{tts_fused_forward.1} parent=1 // pred_fallthru
      _
    // Predicated region
    $region134: #{tts_fused_forward.1} parent=1 // pred_check
      _
    $region135: #{tts_fused_forward.1} parent=1 // pred_check_branch
      %236 = sbr.rel (0) target = $region137
    $region136: #{tts_fused_forward.1} parent=1 // pred_region
      %237 = dma.done [#allocation16], 4608
    $region137: #{tts_fused_forward.1} parent=1 // pred_fallthru
      _
    // Predicated region
    $region138: #{tts_fused_forward.1} parent=1 // pred_check
      _
    $region139: #{tts_fused_forward.1} parent=1 // pred_check_branch
      %239 = sbr.rel (0) target = $region141
    $region140: #{tts_fused_forward.1} parent=1 // pred_region
      %240 = dma.done [#allocation19], 4608
    $region141: #{tts_fused_forward.1} parent=1 // pred_fallthru
      _
    // Predicated region
    $region142: #{tts_fused_forward.1} parent=1 // pred_check
      _
    $region143: #{tts_fused_forward.1} parent=1 // pred_check_branch
      %242 = sbr.rel (0) target = $region145
    $region144: #{tts_fused_forward.1} parent=1 // pred_region
      %243 = dma.done [#allocation19], 48
    $region145: #{tts_fused_forward.1} parent=1 // pred_fallthru
      _
    // Predicated region
    $region146: #{tts_fused_forward.1} parent=1 // pred_check
      _
    $region147: #{tts_fused_forward.1} parent=1 // pred_check_branch
      %245 = sbr.rel (0) target = $region149
    $region148: #{tts_fused_forward.1} parent=1 // pred_region
      %246 = dma.done [#allocation22], 48
    $region149: #{tts_fused_forward.1} parent=1 // pred_fallthru
      _
    // Predicated region
    $region150: #{tts_fused_forward.1} parent=1 // pred_check
      _
    $region151: #{tts_fused_forward.1} parent=1 // pred_check_branch
      %248 = sbr.rel (0) target = $region153
    $region152: #{tts_fused_forward.1} parent=1 // pred_region
      %249 = dma.done [#allocation22], 16
    $region153: #{tts_fused_forward.1} parent=1 // pred_fallthru
      _
    // Predicated region
    $region154: #{tts_fused_forward.1} parent=1 // pred_check
      _
    $region155: #{tts_fused_forward.1} parent=1 // pred_check_branch
      %251 = sbr.rel (0) target = $region157
    $region156: #{tts_fused_forward.1} parent=1 // pred_region
      %252 = dma.done [#allocation25], 16
    $region157: #{tts_fused_forward.1} parent=1 // pred_fallthru
      _
    %v253 = vld [vmem:[%s0] sm:$0xff]
    %v254 = vld [vmem:[#allocation3] sm:$0x3f]
    %v255 = vld [vmem:[#allocation6] sm:$0x1]
    %v257 = vlaneseq
    %v258 = vshrl.u32 %v257, 7
    %v259 = vsub.s32 0, %v258
    %v260 = vrot.slane %v255, %v259
    %vm262 = vcmask 48128
    %v264 = vsel %vm262, %v253, 0
    %vm266 = vcmask 1045504
    %v268 = vsel %vm266, %v254, 0
    %270 = vmatprep.subr.mxu0 0.0
    %271 = vmatpush1.msra.mxu0 %v268
    %272 = vmatprep.subr.mxu0 0.0
    %273 = vmatpush1.msra.mxu0 0.0
    %274 = vmatprep.subr.mxu0 0.0
    %275 = vmatpush1.msra.mxu0 0.0
    %276 = vmatprep.subr.mxu0 0.0
    %277 = vmatpush1.msra.mxu0 0.0
    %278 = vmatprep.subr.mxu0 0.0
    %279 = vmatpush1.msra.mxu0 0.0
    %280 = vmatprep.subr.mxu0 0.0
    %281 = vmatpush1.msra.mxu0 0.0
    %282 = vmatprep.subr.mxu0 0.0
    %283 = vmatpush1.msra.mxu0 0.0
    %284 = vmatprep.subr.mxu0 0.0
    %285 = vmatpush1.msra.mxu0 0.0
    %286 = vmatprep.subr.mxu0 0.0
    %287 = vmatpush1.msra.mxu0 0.0
    %288 = vmatprep.subr.mxu0 0.0
    %289 = vmatpush1.msra.mxu0 0.0
    %290 = vmatprep.subr.mxu0 0.0
    %291 = vmatpush1.msra.mxu0 0.0
    %292 = vmatprep.subr.mxu0 0.0
    %293 = vmatpush1.msra.mxu0 0.0
    %294 = vmatprep.subr.mxu0 0.0
    %295 = vmatpush1.msra.mxu0 0.0
    %296 = vmatprep.subr.mxu0 0.0
    %297 = vmatpush1.msra.mxu0 0.0
    %298 = vmatprep.subr.mxu0 0.0
    %299 = vmatpush1.msra.mxu0 0.0
    %300 = vmatprep.subr.mxu0 0.0
    %301 = vmatpush1.msra.mxu0 0.0
    %302 = vmatprep.subr.mxu0 0.0
    %303 = vmatpush1.msra.mxu0 0.0
    %304 = vmatprep.subr.mxu0 0.0
    %305 = vmatpush1.msra.mxu0 0.0
    %306 = vmatprep.subr.mxu0 0.0
    %307 = vmatpush1.msra.mxu0 0.0
    %308 = vmatprep.subr.mxu0 0.0
    %309 = vmatpush1.msra.mxu0 0.0
    %310 = vmatprep.subr.mxu0 0.0
    %311 = vmatpush1.msra.mxu0 0.0
    %312 = vmatprep.subr.mxu0 0.0
    %313 = vmatpush1.msra.mxu0 0.0
    %314 = vmatprep.subr.mxu0 0.0
    %315 = vmatpush1.msra.mxu0 0.0
    %316 = vmatprep.subr.mxu0 0.0
    %317 = vmatpush1.msra.mxu0 0.0
    %318 = vmatprep.subr.mxu0 0.0
    %319 = vmatpush1.msra.mxu0 0.0
    %320 = vmatprep.subr.mxu0 0.0
    %321 = vmatpush1.msra.mxu0 0.0
    %322 = vmatprep.subr.mxu0 0.0
    %323 = vmatpush1.msra.mxu0 0.0
    %324 = vmatprep.subr.mxu0 0.0
    %325 = vmatpush1.msra.mxu0 0.0
    %326 = vmatprep.subr.mxu0 0.0
    %327 = vmatpush1.msra.mxu0 0.0
    %328 = vmatprep.subr.mxu0 0.0
    %329 = vmatpush1.msra.mxu0 0.0
    %330 = vmatprep.subr.mxu0 0.0
    %331 = vmatpush1.msra.mxu0 0.0
    %332 = vmatprep.subr.mxu0 0.0
    %333 = vmatpush1.msra.mxu0 0.0
    %334 = vmatprep.mubr.f32.mxu0 0.0
    %335 = vmatmul.mubr.f32.gmra.mrb[0].mxu0 %v264
    %v336 = vpop.f32.mrb[0].mxu0
    %v337 = vadd.f32 %v260, %v336
    %v338 = vpop.f32.mrb[0].mxu0
    %339 = vdwg.mxu0
    %v340 = vmax.f32 %v337, 0.0
    %v341 = vld [vmem:[%s1] sm:$0xff]
    %v342 = vld [vmem:[%s5] sm:$0xff]
    %v343 = vld [vmem:[%s5 + $0x8] sm:$0xff]
    %v344 = vld [vmem:[%s5 + $0x10] sm:$0xff]
    %v345 = vld [vmem:[%s5 + $0x18] sm:$0xff]
    %v346 = vld [vmem:[%s5 + $0x20] sm:$0xff]
    %v347 = vld [vmem:[%s5 + $0x28] sm:$0xff]
    %v348 = vld [vmem:[%s5 + $0x30] sm:$0xff]
    %v349 = vld [vmem:[%s5 + $0x38] sm:$0xff]
    %v350 = vld [vmem:[%s5 + $0x40] sm:$0xff]
    %v351 = vld [vmem:[%s5 + $0x48] sm:$0xff]
    %v352 = vld [vmem:[%s5 + $0x50] sm:$0xff]
    %v353 = vld [vmem:[%s5 + $0x58] sm:$0xff]
    %v354 = vld [vmem:[%s5 + $0x60] sm:$0xff]
    %v355 = vld [vmem:[%s5 + $0x68] sm:$0xff]
    %v356 = vld [vmem:[%s5 + $0x70] sm:$0xff]
    %v357 = vld [vmem:[%s5 + $0x78] sm:$0xff]
    %v358 = vld [vmem:[%s5 + $0x80] sm:$0xff]
    %v359 = vld [vmem:[%s5 + $0x88] sm:$0xff]
    %v360 = vld [vmem:[%s6] sm:$0xff]
    %v361 = vld [vmem:[%s6 + $0x8] sm:$0xff]
    %v362 = vld [vmem:[%s6 + $0x10] sm:$0xff]
    %v363 = vld [vmem:[%s6 + $0x18] sm:$0xff]
    %v364 = vld [vmem:[%s6 + $0x20] sm:$0xff]
    %v365 = vld [vmem:[%s6 + $0x28] sm:$0xff]
    %v366 = vld [vmem:[%s6 + $0x30] sm:$0xff]
    %v367 = vld [vmem:[%s6 + $0x38] sm:$0xff]
    %v368 = vld [vmem:[%s6 + $0x40] sm:$0xff]
    %v369 = vld [vmem:[%s6 + $0x48] sm:$0xff]
    %v370 = vld [vmem:[%s6 + $0x50] sm:$0xff]
    %v371 = vld [vmem:[%s6 + $0x58] sm:$0xff]
    %v372 = vld [vmem:[%s6 + $0x60] sm:$0xff]
    %v373 = vld [vmem:[%s6 + $0x68] sm:$0xff]
    %v374 = vld [vmem:[%s6 + $0x70] sm:$0xff]
    %v375 = vld [vmem:[%s6 + $0x78] sm:$0xff]
    %v376 = vld [vmem:[%s6 + $0x80] sm:$0xff]
    %v377 = vld [vmem:[%s6 + $0x88] sm:$0xff]
    %v378 = vld [vmem:[%s6 + $0x90] sm:$0xff]
    %v379 = vld [vmem:[%s6 + $0x98] sm:$0xff]
    %v380 = vld [vmem:[%s6 + $0xa0] sm:$0xff]
    %v381 = vld [vmem:[%s6 + $0xa8] sm:$0xff]
    %v382 = vld [vmem:[%s6 + $0xb0] sm:$0xff]
    %v383 = vld [vmem:[%s6 + $0xb8] sm:$0xff]
    %v384 = vld [vmem:[%s6 + $0xc0] sm:$0xff]
    %v385 = vld [vmem:[%s6 + $0xc8] sm:$0xff]
    %v386 = vld [vmem:[%s6 + $0xd0] sm:$0xff]
    %v387 = vld [vmem:[%s6 + $0xd8] sm:$0xff]
    %v388 = vld [vmem:[%s6 + $0xe0] sm:$0xff]
    %v389 = vld [vmem:[%s6 + $0xe8] sm:$0xff]
    %v390 = vld [vmem:[%s6 + $0xf0] sm:$0xff]
    %v391 = vld [vmem:[%s6 + $0xf8] sm:$0xff]
    %v392 = vld [vmem:[%s6 + $0x100] sm:$0xff]
    %v393 = vld [vmem:[%s6 + $0x108] sm:$0xff]
    %v394 = vld [vmem:[%s6 + $0x110] sm:$0xff]
    %v395 = vld [vmem:[%s6 + $0x118] sm:$0xff]
    %v396 = vld [vmem:[#allocation8] sm:$0x7]
    %v397 = vld [vmem:[#allocation9] sm:$0x7]
    %v399 = vlaneseq
    %v400 = vshrl.u32 %v399, 7
    %v401 = vsub.s32 0, %v400
    %v402 = vrot.slane %v396, %v401
    %v403 = vlaneseq
    %v404 = vshrl.u32 %v403, 7
    %v405 = vsub.s32 1, %v404
    %v406 = vrot.slane %v396, %v405
    %v407 = vlaneseq
    %v408 = vshrl.u32 %v407, 7
    %v409 = vsub.s32 2, %v408
    %v410 = vrot.slane %v396, %v409
    %vm414 = vcmask 392192
    %v416 = vsel %vm414, %v341, 0
    %418 = vmatprep.subr.mxu0 %v343
    %419 = vmatpush1.msra.mxu0 %v342
    %420 = vmatprep.subr.mxu0 %v346
    %421 = vmatpush1.msra.mxu0 %v345
    %422 = vmatprep.subr.mxu0 %v349
    %423 = vmatpush1.msra.mxu0 %v348
    %424 = vmatprep.subr.mxu0 %v352
    %425 = vmatpush1.msra.mxu0 %v351
    %426 = vmatprep.subr.mxu0 %v355
    %427 = vmatpush1.msra.mxu0 %v354
    %428 = vmatprep.subr.mxu0 %v358
    %429 = vmatpush1.msra.mxu0 %v357
    %430 = vmatprep.subr.mxu0 0.0
    %431 = vmatpush1.msra.mxu0 0.0
    %432 = vmatprep.subr.mxu0 0.0
    %433 = vmatpush1.msra.mxu0 0.0
    %434 = vmatprep.subr.mxu0 0.0
    %435 = vmatpush1.msra.mxu0 0.0
    %436 = vmatprep.subr.mxu0 0.0
    %437 = vmatpush1.msra.mxu0 0.0
    %438 = vmatprep.subr.mxu0 0.0
    %439 = vmatpush1.msra.mxu0 0.0
    %440 = vmatprep.subr.mxu0 0.0
    %441 = vmatpush1.msra.mxu0 0.0
    %442 = vmatprep.subr.mxu0 0.0
    %443 = vmatpush1.msra.mxu0 0.0
    %444 = vmatprep.subr.mxu0 0.0
    %445 = vmatpush1.msra.mxu0 0.0
    %446 = vmatprep.subr.mxu0 0.0
    %447 = vmatpush1.msra.mxu0 0.0
    %448 = vmatprep.subr.mxu0 0.0
    %449 = vmatpush1.msra.mxu0 0.0
    %450 = vmatprep.subr.mxu0 0.0
    %451 = vmatpush1.msra.mxu0 0.0
    %452 = vmatprep.subr.mxu0 0.0
    %453 = vmatpush1.msra.mxu0 0.0
    %454 = vmatprep.subr.mxu0 0.0
    %455 = vmatpush1.msra.mxu0 0.0
    %456 = vmatprep.subr.mxu0 0.0
    %457 = vmatpush1.msra.mxu0 0.0
    %458 = vmatprep.subr.mxu0 0.0
    %459 = vmatpush1.msra.mxu0 0.0
    %460 = vmatprep.subr.mxu0 0.0
    %461 = vmatpush1.msra.mxu0 0.0
    %462 = vmatprep.subr.mxu0 0.0
    %463 = vmatpush1.msra.mxu0 0.0
    %464 = vmatprep.subr.mxu0 0.0
    %465 = vmatpush1.msra.mxu0 0.0
    %466 = vmatprep.subr.mxu0 0.0
    %467 = vmatpush1.msra.mxu0 0.0
    %468 = vmatprep.subr.mxu0 0.0
    %469 = vmatpush1.msra.mxu0 0.0
    %470 = vmatprep.subr.mxu0 0.0
    %471 = vmatpush1.msra.mxu0 0.0
    %472 = vmatprep.subr.mxu0 0.0
    %473 = vmatpush1.msra.mxu0 0.0
    %474 = vmatprep.subr.mxu0 0.0
    %475 = vmatpush1.msra.mxu0 0.0
    %476 = vmatprep.subr.mxu0 0.0
    %477 = vmatpush1.msra.mxu0 0.0
    %478 = vmatprep.subr.mxu0 0.0
    %479 = vmatpush1.msra.mxu0 0.0
    %480 = vmatprep.subr.mxu0 0.0
    %481 = vmatpush1.msra.mxu0 0.0
    %482 = vmatprep.mubr.f32.mxu0 0.0
    %483 = vmatmul.mubr.f32.gmra.mrb[0].mxu0 %v416
    %v484 = vpop.f32.mrb[0].mxu0
    %v485 = vadd.f32 %v402, %v484
    %v486 = vpop.f32.mrb[0].mxu0
    %v487 = vadd.f32 %v406, %v486
    %488 = vdwg.mxu0
    %489 = vmatprep.subr.mxu0 0.0
    %490 = vmatpush1.msra.mxu0 %v344
    %491 = vmatprep.subr.mxu0 0.0
    %492 = vmatpush1.msra.mxu0 %v347
    %493 = vmatprep.subr.mxu0 0.0
    %494 = vmatpush1.msra.mxu0 %v350
    %495 = vmatprep.subr.mxu0 0.0
    %496 = vmatpush1.msra.mxu0 %v353
    %497 = vmatprep.subr.mxu0 0.0
    %498 = vmatpush1.msra.mxu0 %v356
    %499 = vmatprep.subr.mxu0 0.0
    %500 = vmatpush1.msra.mxu0 %v359
    %501 = vmatprep.subr.mxu0 0.0
    %502 = vmatpush1.msra.mxu0 0.0
    %503 = vmatprep.subr.mxu0 0.0
    %504 = vmatpush1.msra.mxu0 0.0
    %505 = vmatprep.subr.mxu0 0.0
    %506 = vmatpush1.msra.mxu0 0.0
    %507 = vmatprep.subr.mxu0 0.0
    %508 = vmatpush1.msra.mxu0 0.0
    %509 = vmatprep.subr.mxu0 0.0
    %510 = vmatpush1.msra.mxu0 0.0
    %511 = vmatprep.subr.mxu0 0.0
    %512 = vmatpush1.msra.mxu0 0.0
    %513 = vmatprep.subr.mxu0 0.0
    %514 = vmatpush1.msra.mxu0 0.0
    %515 = vmatprep.subr.mxu0 0.0
    %516 = vmatpush1.msra.mxu0 0.0
    %517 = vmatprep.subr.mxu0 0.0
    %518 = vmatpush1.msra.mxu0 0.0
    %519 = vmatprep.subr.mxu0 0.0
    %520 = vmatpush1.msra.mxu0 0.0
    %521 = vmatprep.subr.mxu0 0.0
    %522 = vmatpush1.msra.mxu0 0.0
    %523 = vmatprep.subr.mxu0 0.0
    %524 = vmatpush1.msra.mxu0 0.0
    %525 = vmatprep.subr.mxu0 0.0
    %526 = vmatpush1.msra.mxu0 0.0
    %527 = vmatprep.subr.mxu0 0.0
    %528 = vmatpush1.msra.mxu0 0.0
    %529 = vmatprep.subr.mxu0 0.0
    %530 = vmatpush1.msra.mxu0 0.0
    %531 = vmatprep.subr.mxu0 0.0
    %532 = vmatpush1.msra.mxu0 0.0
    %533 = vmatprep.subr.mxu0 0.0
    %534 = vmatpush1.msra.mxu0 0.0
    %535 = vmatprep.subr.mxu0 0.0
    %536 = vmatpush1.msra.mxu0 0.0
    %537 = vmatprep.subr.mxu0 0.0
    %538 = vmatpush1.msra.mxu0 0.0
    %539 = vmatprep.subr.mxu0 0.0
    %540 = vmatpush1.msra.mxu0 0.0
    %541 = vmatprep.subr.mxu0 0.0
    %542 = vmatpush1.msra.mxu0 0.0
    %543 = vmatprep.subr.mxu0 0.0
    %544 = vmatpush1.msra.mxu0 0.0
    %545 = vmatprep.subr.mxu0 0.0
    %546 = vmatpush1.msra.mxu0 0.0
    %547 = vmatprep.subr.mxu0 0.0
    %548 = vmatpush1.msra.mxu0 0.0
    %549 = vmatprep.subr.mxu0 0.0
    %550 = vmatpush1.msra.mxu0 0.0
    %551 = vmatprep.subr.mxu0 0.0
    %552 = vmatpush1.msra.mxu0 0.0
    %553 = vmatprep.mubr.f32.mxu0 0.0
    %554 = vmatmul.mubr.f32.gmra.mrb[0].mxu0 %v416
    %v555 = vpop.f32.mrb[0].mxu0
    %v556 = vadd.f32 %v410, %v555
    %v557 = vpop.f32.mrb[0].mxu0
    %558 = vdwg.mxu0
    %v560 = vlaneseq
    %v561 = vshrl.u32 %v560, 7
    %v562 = vsub.s32 0, %v561
    %v563 = vrot.slane %v397, %v562
    %v564 = vlaneseq
    %v565 = vshrl.u32 %v564, 7
    %v566 = vsub.s32 1, %v565
    %v567 = vrot.slane %v397, %v566
    %v568 = vlaneseq
    %v569 = vshrl.u32 %v568, 7
    %v570 = vsub.s32 2, %v569
    %v571 = vrot.slane %v397, %v570
    %vm575 = vcmask 785408
    %v577 = vsel %vm575, 0.0, 0
    %579 = vmatprep.subr.mxu0 %v361
    %580 = vmatpush1.msra.mxu0 %v360
    %581 = vmatprep.subr.mxu0 %v364
    %582 = vmatpush1.msra.mxu0 %v363
    %583 = vmatprep.subr.mxu0 %v367
    %584 = vmatpush1.msra.mxu0 %v366
    %585 = vmatprep.subr.mxu0 %v370
    %586 = vmatpush1.msra.mxu0 %v369
    %587 = vmatprep.subr.mxu0 %v373
    %588 = vmatpush1.msra.mxu0 %v372
    %589 = vmatprep.subr.mxu0 %v376
    %590 = vmatpush1.msra.mxu0 %v375
    %591 = vmatprep.subr.mxu0 %v379
    %592 = vmatpush1.msra.mxu0 %v378
    %593 = vmatprep.subr.mxu0 %v382
    %594 = vmatpush1.msra.mxu0 %v381
    %595 = vmatprep.subr.mxu0 %v385
    %596 = vmatpush1.msra.mxu0 %v384
    %597 = vmatprep.subr.mxu0 %v388
    %598 = vmatpush1.msra.mxu0 %v387
    %599 = vmatprep.subr.mxu0 %v391
    %600 = vmatpush1.msra.mxu0 %v390
    %601 = vmatprep.subr.mxu0 %v394
    %602 = vmatpush1.msra.mxu0 %v393
    %603 = vmatprep.subr.mxu0 0.0
    %604 = vmatpush1.msra.mxu0 0.0
    %605 = vmatprep.subr.mxu0 0.0
    %606 = vmatpush1.msra.mxu0 0.0
    %607 = vmatprep.subr.mxu0 0.0
    %608 = vmatpush1.msra.mxu0 0.0
    %609 = vmatprep.subr.mxu0 0.0
    %610 = vmatpush1.msra.mxu0 0.0
    %611 = vmatprep.subr.mxu0 0.0
    %612 = vmatpush1.msra.mxu0 0.0
    %613 = vmatprep.subr.mxu0 0.0
    %614 = vmatpush1.msra.mxu0 0.0
    %615 = vmatprep.subr.mxu0 0.0
    %616 = vmatpush1.msra.mxu0 0.0
    %617 = vmatprep.subr.mxu0 0.0
    %618 = vmatpush1.msra.mxu0 0.0
    %619 = vmatprep.subr.mxu0 0.0
    %620 = vmatpush1.msra.mxu0 0.0
    %621 = vmatprep.subr.mxu0 0.0
    %622 = vmatpush1.msra.mxu0 0.0
    %623 = vmatprep.subr.mxu0 0.0
    %624 = vmatpush1.msra.mxu0 0.0
    %625 = vmatprep.subr.mxu0 0.0
    %626 = vmatpush1.msra.mxu0 0.0
    %627 = vmatprep.subr.mxu0 0.0
    %628 = vmatpush1.msra.mxu0 0.0
    %629 = vmatprep.subr.mxu0 0.0
    %630 = vmatpush1.msra.mxu0 0.0
    %631 = vmatprep.subr.mxu0 0.0
    %632 = vmatpush1.msra.mxu0 0.0
    %633 = vmatprep.subr.mxu0 0.0
    %634 = vmatpush1.msra.mxu0 0.0
    %635 = vmatprep.subr.mxu0 0.0
    %636 = vmatpush1.msra.mxu0 0.0
    %637 = vmatprep.subr.mxu0 0.0
    %638 = vmatpush1.msra.mxu0 0.0
    %639 = vmatprep.subr.mxu0 0.0
    %640 = vmatpush1.msra.mxu0 0.0
    %641 = vmatprep.subr.mxu0 0.0
    %642 = vmatpush1.msra.mxu0 0.0
    %643 = vmatprep.mubr.f32.mxu0 0.0
    %644 = vmatmul.mubr.f32.gmra.mrb[0].mxu0 %v577
    %v645 = vpop.f32.mrb[0].mxu0
    %v646 = vadd.f32 %v563, %v645
    %v647 = vpop.f32.mrb[0].mxu0
    %v648 = vadd.f32 %v567, %v647
    %649 = vdwg.mxu0
    %650 = vmatprep.subr.mxu0 0.0
    %651 = vmatpush1.msra.mxu0 %v362
    %652 = vmatprep.subr.mxu0 0.0
    %653 = vmatpush1.msra.mxu0 %v365
    %654 = vmatprep.subr.mxu0 0.0
    %655 = vmatpush1.msra.mxu0 %v368
    %656 = vmatprep.subr.mxu0 0.0
    %657 = vmatpush1.msra.mxu0 %v371
    %658 = vmatprep.subr.mxu0 0.0
    %659 = vmatpush1.msra.mxu0 %v374
    %660 = vmatprep.subr.mxu0 0.0
    %661 = vmatpush1.msra.mxu0 %v377
    %662 = vmatprep.subr.mxu0 0.0
    %663 = vmatpush1.msra.mxu0 %v380
    %664 = vmatprep.subr.mxu0 0.0
    %665 = vmatpush1.msra.mxu0 %v383
    %666 = vmatprep.subr.mxu0 0.0
    %667 = vmatpush1.msra.mxu0 %v386
    %668 = vmatprep.subr.mxu0 0.0
    %669 = vmatpush1.msra.mxu0 %v389
    %670 = vmatprep.subr.mxu0 0.0
    %671 = vmatpush1.msra.mxu0 %v392
    %672 = vmatprep.subr.mxu0 0.0
    %673 = vmatpush1.msra.mxu0 %v395
    %674 = vmatprep.subr.mxu0 0.0
    %675 = vmatpush1.msra.mxu0 0.0
    %676 = vmatprep.subr.mxu0 0.0
    %677 = vmatpush1.msra.mxu0 0.0
    %678 = vmatprep.subr.mxu0 0.0
    %679 = vmatpush1.msra.mxu0 0.0
    %680 = vmatprep.subr.mxu0 0.0
    %681 = vmatpush1.msra.mxu0 0.0
    %682 = vmatprep.subr.mxu0 0.0
    %683 = vmatpush1.msra.mxu0 0.0
    %684 = vmatprep.subr.mxu0 0.0
    %685 = vmatpush1.msra.mxu0 0.0
    %686 = vmatprep.subr.mxu0 0.0
    %687 = vmatpush1.msra.mxu0 0.0
    %688 = vmatprep.subr.mxu0 0.0
    %689 = vmatpush1.msra.mxu0 0.0
    %690 = vmatprep.subr.mxu0 0.0
    %691 = vmatpush1.msra.mxu0 0.0
    %692 = vmatprep.subr.mxu0 0.0
    %693 = vmatpush1.msra.mxu0 0.0
    %694 = vmatprep.subr.mxu0 0.0
    %695 = vmatpush1.msra.mxu0 0.0
    %696 = vmatprep.subr.mxu0 0.0
    %697 = vmatpush1.msra.mxu0 0.0
    %698 = vmatprep.subr.mxu0 0.0
    %699 = vmatpush1.msra.mxu0 0.0
    %700 = vmatprep.subr.mxu0 0.0
    %701 = vmatpush1.msra.mxu0 0.0
    %702 = vmatprep.subr.mxu0 0.0
    %703 = vmatpush1.msra.mxu0 0.0
    %704 = vmatprep.subr.mxu0 0.0
    %705 = vmatpush1.msra.mxu0 0.0
    %706 = vmatprep.subr.mxu0 0.0
    %707 = vmatpush1.msra.mxu0 0.0
    %708 = vmatprep.subr.mxu0 0.0
    %709 = vmatpush1.msra.mxu0 0.0
    %710 = vmatprep.subr.mxu0 0.0
    %711 = vmatpush1.msra.mxu0 0.0
    %712 = vmatprep.subr.mxu0 0.0
    %713 = vmatpush1.msra.mxu0 0.0
    %714 = vmatprep.mubr.f32.mxu0 0.0
    %715 = vmatmul.mubr.f32.gmra.mrb[0].mxu0 %v577
    %v716 = vpop.f32.mrb[0].mxu0
    %v717 = vadd.f32 %v571, %v716
    %v718 = vpop.f32.mrb[0].mxu0
    %719 = vdwg.mxu0
    %v720 = vadd.f32 %v485, %v646
    %v721 = vxor.u32 %v720, 2147483648
    %v722 = vmul.f32 %v721, 1.442695
    %v723 = vpow.pop %v722
    %v724 = vadd.f32 %v723, 1.0
    %v725 = vrcp.pop %v724
    %v726 = vmul.f32 1.0, %v725
    %v727 = vadd.f32 %v487, %v648
    %v728 = vxor.u32 %v727, 2147483648
    %v729 = vmul.f32 %v728, 1.442695
    %v730 = vpow.pop %v729
    %v731 = vadd.f32 %v730, 1.0
    %v732 = vrcp.pop %v731
    %v733 = vmul.f32 1.0, %v732
    %736 = vrot.lane.b32.xlu0 %v648, 64
    %v737 = vpop.permute.xlu0 %736
    %738 = vrot.lane.b32.xlu0 %v717, 64
    %v739 = vpop.permute.xlu0 %738
    %vm740 = vcmask 523264
    %v741 = vsel %vm740, %v737, %v739
    %v743 = vmul.f32 %v726, %v741
    %745 = vrot.lane.b32.xlu0 %v743, 64
    %v746 = vpop.permute.xlu0 %745
    %v748 = vadd.f32 %v487, %v746
    %v749 = vadd.f32 %v556, %v746
    %v750 = vtanh.pop %v748
    %v751 = vtanh.pop %v749
    %v752 = vsub.f32 1.0, %v726
    %v753 = vsub.f32 1.0, %v733
    %756 = vrot.lane.b32.xlu0 %v750, 32
    %v757 = vpop.permute.xlu0 %756
    %758 = vrot.lane.b32.xlu0 %v751, 32
    %v759 = vpop.permute.xlu0 %758
    %vm760 = vcmask 261120
    %v761 = vsel %vm760, %v757, %v759
    %v764 = vmul.f32 %v752, %v757
    %v765 = vmul.f32 %v753, %v761
    %v766 = vmul.f32 %v726, 0.0
    %v767 = vmul.f32 %v733, 0.0
    %v768 = vadd.f32 %v764, %v766
    %v769 = vadd.f32 %v765, %v767
    %772 = vrot.lane.b32.xlu0 %v768, 32
    %v773 = vpop.permute.xlu0 %772
    %774 = vrot.lane.b32.xlu0 %v769, 32
    %v775 = vpop.permute.xlu0 %774
    %v776 = vsel %vm760, %v773, %v775
    %v777 = vsel %vm575, %v776, 0
    %779 = vmatprep.subr.mxu0 %v361
    %780 = vmatpush1.msra.mxu0 %v360
    %781 = vmatprep.subr.mxu0 %v364
    %782 = vmatpush1.msra.mxu0 %v363
    %783 = vmatprep.subr.mxu0 %v367
    %784 = vmatpush1.msra.mxu0 %v366
    %785 = vmatprep.subr.mxu0 %v370
    %786 = vmatpush1.msra.mxu0 %v369
    %787 = vmatprep.subr.mxu0 %v373
    %788 = vmatpush1.msra.mxu0 %v372
    %789 = vmatprep.subr.mxu0 %v376
    %790 = vmatpush1.msra.mxu0 %v375
    %791 = vmatprep.subr.mxu0 %v379
    %792 = vmatpush1.msra.mxu0 %v378
    %793 = vmatprep.subr.mxu0 %v382
    %794 = vmatpush1.msra.mxu0 %v381
    %795 = vmatprep.subr.mxu0 %v385
    %796 = vmatpush1.msra.mxu0 %v384
    %797 = vmatprep.subr.mxu0 %v388
    %798 = vmatpush1.msra.mxu0 %v387
    %799 = vmatprep.subr.mxu0 %v391
    %800 = vmatpush1.msra.mxu0 %v390
    %801 = vmatprep.subr.mxu0 %v394
    %802 = vmatpush1.msra.mxu0 %v393
    %803 = vmatprep.subr.mxu0 0.0
    %804 = vmatpush1.msra.mxu0 0.0
    %805 = vmatprep.subr.mxu0 0.0
    %806 = vmatpush1.msra.mxu0 0.0
    %807 = vmatprep.subr.mxu0 0.0
    %808 = vmatpush1.msra.mxu0 0.0
    %809 = vmatprep.subr.mxu0 0.0
    %810 = vmatpush1.msra.mxu0 0.0
    %811 = vmatprep.subr.mxu0 0.0
    %812 = vmatpush1.msra.mxu0 0.0
    %813 = vmatprep.subr.mxu0 0.0
    %814 = vmatpush1.msra.mxu0 0.0
    %815 = vmatprep.subr.mxu0 0.0
    %816 = vmatpush1.msra.mxu0 0.0
    %817 = vmatprep.subr.mxu0 0.0
    %818 = vmatpush1.msra.mxu0 0.0
    %819 = vmatprep.subr.mxu0 0.0
    %820 = vmatpush1.msra.mxu0 0.0
    %821 = vmatprep.subr.mxu0 0.0
    %822 = vmatpush1.msra.mxu0 0.0
    %823 = vmatprep.subr.mxu0 0.0
    %824 = vmatpush1.msra.mxu0 0.0
    %825 = vmatprep.subr.mxu0 0.0
    %826 = vmatpush1.msra.mxu0 0.0
    %827 = vmatprep.subr.mxu0 0.0
    %828 = vmatpush1.msra.mxu0 0.0
    %829 = vmatprep.subr.mxu0 0.0
    %830 = vmatpush1.msra.mxu0 0.0
    %831 = vmatprep.subr.mxu0 0.0
    %832 = vmatpush1.msra.mxu0 0.0
    %833 = vmatprep.subr.mxu0 0.0
    %834 = vmatpush1.msra.mxu0 0.0
    %835 = vmatprep.subr.mxu0 0.0
    %836 = vmatpush1.msra.mxu0 0.0
    %837 = vmatprep.subr.mxu0 0.0
    %838 = vmatpush1.msra.mxu0 0.0
    %839 = vmatprep.subr.mxu0 0.0
    %840 = vmatpush1.msra.mxu0 0.0
    %841 = vmatprep.subr.mxu0 0.0
    %842 = vmatpush1.msra.mxu0 0.0
    %843 = vmatprep.mubr.f32.mxu0 0.0
    %844 = vmatmul.mubr.f32.gmra.mrb[0].mxu0 %v777
    %v845 = vpop.f32.mrb[0].mxu0
    %v846 = vadd.f32 %v563, %v845
    %v847 = vpop.f32.mrb[0].mxu0
    %v848 = vadd.f32 %v567, %v847
    %849 = vdwg.mxu0
    %850 = vmatprep.subr.mxu0 0.0
    %851 = vmatpush1.msra.mxu0 %v362
    %852 = vmatprep.subr.mxu0 0.0
    %853 = vmatpush1.msra.mxu0 %v365
    %854 = vmatprep.subr.mxu0 0.0
    %855 = vmatpush1.msra.mxu0 %v368
    %856 = vmatprep.subr.mxu0 0.0
    %857 = vmatpush1.msra.mxu0 %v371
    %858 = vmatprep.subr.mxu0 0.0
    %859 = vmatpush1.msra.mxu0 %v374
    %860 = vmatprep.subr.mxu0 0.0
    %861 = vmatpush1.msra.mxu0 %v377
    %862 = vmatprep.subr.mxu0 0.0
    %863 = vmatpush1.msra.mxu0 %v380
    %864 = vmatprep.subr.mxu0 0.0
    %865 = vmatpush1.msra.mxu0 %v383
    %866 = vmatprep.subr.mxu0 0.0
    %867 = vmatpush1.msra.mxu0 %v386
    %868 = vmatprep.subr.mxu0 0.0
    %869 = vmatpush1.msra.mxu0 %v389
    %870 = vmatprep.subr.mxu0 0.0
    %871 = vmatpush1.msra.mxu0 %v392
    %872 = vmatprep.subr.mxu0 0.0
    %873 = vmatpush1.msra.mxu0 %v395
    %874 = vmatprep.subr.mxu0 0.0
    %875 = vmatpush1.msra.mxu0 0.0
    %876 = vmatprep.subr.mxu0 0.0
    %877 = vmatpush1.msra.mxu0 0.0
    %878 = vmatprep.subr.mxu0 0.0
    %879 = vmatpush1.msra.mxu0 0.0
    %880 = vmatprep.subr.mxu0 0.0
    %881 = vmatpush1.msra.mxu0 0.0
    %882 = vmatprep.subr.mxu0 0.0
    %883 = vmatpush1.msra.mxu0 0.0
    %884 = vmatprep.subr.mxu0 0.0
    %885 = vmatpush1.msra.mxu0 0.0
    %886 = vmatprep.subr.mxu0 0.0
    %887 = vmatpush1.msra.mxu0 0.0
    %888 = vmatprep.subr.mxu0 0.0
    %889 = vmatpush1.msra.mxu0 0.0
    %890 = vmatprep.subr.mxu0 0.0
    %891 = vmatpush1.msra.mxu0 0.0
    %892 = vmatprep.subr.mxu0 0.0
    %893 = vmatpush1.msra.mxu0 0.0
    %894 = vmatprep.subr.mxu0 0.0
    %895 = vmatpush1.msra.mxu0 0.0
    %896 = vmatprep.subr.mxu0 0.0
    %897 = vmatpush1.msra.mxu0 0.0
    %898 = vmatprep.subr.mxu0 0.0
    %899 = vmatpush1.msra.mxu0 0.0
    %900 = vmatprep.subr.mxu0 0.0
    %901 = vmatpush1.msra.mxu0 0.0
    %902 = vmatprep.subr.mxu0 0.0
    %903 = vmatpush1.msra.mxu0 0.0
    %904 = vmatprep.subr.mxu0 0.0
    %905 = vmatpush1.msra.mxu0 0.0
    %906 = vmatprep.subr.mxu0 0.0
    %907 = vmatpush1.msra.mxu0 0.0
    %908 = vmatprep.subr.mxu0 0.0
    %909 = vmatpush1.msra.mxu0 0.0
    %910 = vmatprep.subr.mxu0 0.0
    %911 = vmatpush1.msra.mxu0 0.0
    %912 = vmatprep.subr.mxu0 0.0
    %913 = vmatpush1.msra.mxu0 0.0
    %914 = vmatprep.mubr.f32.mxu0 0.0
    %915 = vmatmul.mubr.f32.gmra.mrb[0].mxu0 %v777
    %v916 = vpop.f32.mrb[0].mxu0
    %v917 = vadd.f32 %v571, %v916
    %v918 = vpop.f32.mrb[0].mxu0
    %919 = vdwg.mxu0
    %v921 = vrot.slane %v846, 7
    %v923 = vadd.f32 %v485, %v921
    %v924 = vxor.u32 %v923, 2147483648
    %v925 = vmul.f32 %v924, 1.442695
    %v926 = vpow.pop %v925
    %v927 = vadd.f32 %v926, 1.0
    %v928 = vrcp.pop %v927
    %v929 = vmul.f32 1.0, %v928
    %v931 = vrot.slane %v848, 7
    %v933 = vadd.f32 %v487, %v931
    %v934 = vxor.u32 %v933, 2147483648
    %v935 = vmul.f32 %v934, 1.442695
    %v936 = vpow.pop %v935
    %v937 = vadd.f32 %v936, 1.0
    %v938 = vrcp.pop %v937
    %v939 = vmul.f32 1.0, %v938
    %v941 = vrot.slane %v917, 7
    %942 = vrot.lane.b32.xlu0 %v931, 64
    %v943 = vpop.permute.xlu0 %942
    %944 = vrot.lane.b32.xlu0 %v941, 64
    %v945 = vpop.permute.xlu0 %944
    %v946 = vsel %vm740, %v943, %v945
    %v948 = vmul.f32 %v929, %v946
    %950 = vrot.lane.b32.xlu0 %v948, 64
    %v951 = vpop.permute.xlu0 %950
    %v953 = vadd.f32 %v487, %v951
    %v954 = vadd.f32 %v556, %v951
    %v955 = vtanh.pop %v953
    %v956 = vtanh.pop %v954
    %v957 = vsub.f32 1.0, %v929
    %v958 = vsub.f32 1.0, %v939
    %961 = vrot.lane.b32.xlu0 %v955, 32
    %v962 = vpop.permute.xlu0 %961
    %963 = vrot.lane.b32.xlu0 %v956, 32
    %v964 = vpop.permute.xlu0 %963
    %v965 = vsel %vm760, %v962, %v964
    %v968 = vmul.f32 %v957, %v962
    %v969 = vmul.f32 %v958, %v965
    %v970 = vrot.slane %v768, 7
    %v971 = vrot.slane %v769, 7
    %v974 = vmul.f32 %v929, %v970
    %v975 = vmul.f32 %v939, %v971
    %v976 = vadd.f32 %v968, %v974
    %v977 = vadd.f32 %v969, %v975
    %v980 = vrot.slane %v976, 1
    %v981 = vrot.slane %v977, 1
    %982 = vrot.lane.b32.xlu0 %v980, 32
    %v983 = vpop.permute.xlu0 %982
    %984 = vrot.lane.b32.xlu0 %v981, 32
    %v985 = vpop.permute.xlu0 %984
    %v986 = vsel %vm760, %v983, %v985
    %v987 = vsel %vm575, %v986, 0
    %989 = vmatprep.subr.mxu0 %v361
    %990 = vmatpush1.msra.mxu0 %v360
    %991 = vmatprep.subr.mxu0 %v364
    %992 = vmatpush1.msra.mxu0 %v363
    %993 = vmatprep.subr.mxu0 %v367
    %994 = vmatpush1.msra.mxu0 %v366
    %995 = vmatprep.subr.mxu0 %v370
    %996 = vmatpush1.msra.mxu0 %v369
    %997 = vmatprep.subr.mxu0 %v373
    %998 = vmatpush1.msra.mxu0 %v372
    %999 = vmatprep.subr.mxu0 %v376
    %1000 = vmatpush1.msra.mxu0 %v375
    %1001 = vmatprep.subr.mxu0 %v379
    %1002 = vmatpush1.msra.mxu0 %v378
    %1003 = vmatprep.subr.mxu0 %v382
    %1004 = vmatpush1.msra.mxu0 %v381
    %1005 = vmatprep.subr.mxu0 %v385
    %1006 = vmatpush1.msra.mxu0 %v384
    %1007 = vmatprep.subr.mxu0 %v388
    %1008 = vmatpush1.msra.mxu0 %v387
    %1009 = vmatprep.subr.mxu0 %v391
    %1010 = vmatpush1.msra.mxu0 %v390
    %1011 = vmatprep.subr.mxu0 %v394
    %1012 = vmatpush1.msra.mxu0 %v393
    %1013 = vmatprep.subr.mxu0 0.0
    %1014 = vmatpush1.msra.mxu0 0.0
    %1015 = vmatprep.subr.mxu0 0.0
    %1016 = vmatpush1.msra.mxu0 0.0
    %1017 = vmatprep.subr.mxu0 0.0
    %1018 = vmatpush1.msra.mxu0 0.0
    %1019 = vmatprep.subr.mxu0 0.0
    %1020 = vmatpush1.msra.mxu0 0.0
    %1021 = vmatprep.subr.mxu0 0.0
    %1022 = vmatpush1.msra.mxu0 0.0
    %1023 = vmatprep.subr.mxu0 0.0
    %1024 = vmatpush1.msra.mxu0 0.0
    %1025 = vmatprep.subr.mxu0 0.0
    %1026 = vmatpush1.msra.mxu0 0.0
    %1027 = vmatprep.subr.mxu0 0.0
    %1028 = vmatpush1.msra.mxu0 0.0
    %1029 = vmatprep.subr.mxu0 0.0
    %1030 = vmatpush1.msra.mxu0 0.0
    %1031 = vmatprep.subr.mxu0 0.0
    %1032 = vmatpush1.msra.mxu0 0.0
    %1033 = vmatprep.subr.mxu0 0.0
    %1034 = vmatpush1.msra.mxu0 0.0
    %1035 = vmatprep.subr.mxu0 0.0
    %1036 = vmatpush1.msra.mxu0 0.0
    %1037 = vmatprep.subr.mxu0 0.0
    %1038 = vmatpush1.msra.mxu0 0.0
    %1039 = vmatprep.subr.mxu0 0.0
    %1040 = vmatpush1.msra.mxu0 0.0
    %1041 = vmatprep.subr.mxu0 0.0
    %1042 = vmatpush1.msra.mxu0 0.0
    %1043 = vmatprep.subr.mxu0 0.0
    %1044 = vmatpush1.msra.mxu0 0.0
    %1045 = vmatprep.subr.mxu0 0.0
    %1046 = vmatpush1.msra.mxu0 0.0
    %1047 = vmatprep.subr.mxu0 0.0
    %1048 = vmatpush1.msra.mxu0 0.0
    %1049 = vmatprep.subr.mxu0 0.0
    %1050 = vmatpush1.msra.mxu0 0.0
    %1051 = vmatprep.subr.mxu0 0.0
    %1052 = vmatpush1.msra.mxu0 0.0
    %1053 = vmatprep.mubr.f32.mxu0 0.0
    %1054 = vmatmul.mubr.f32.gmra.mrb[0].mxu0 %v987
    %v1055 = vpop.f32.mrb[0].mxu0
    %v1056 = vadd.f32 %v563, %v1055
    %v1057 = vpop.f32.mrb[0].mxu0
    %v1058 = vadd.f32 %v567, %v1057
    %1059 = vdwg.mxu0
    %1060 = vmatprep.subr.mxu0 0.0
    %1061 = vmatpush1.msra.mxu0 %v362
    %1062 = vmatprep.subr.mxu0 0.0
    %1063 = vmatpush1.msra.mxu0 %v365
    %1064 = vmatprep.subr.mxu0 0.0
    %1065 = vmatpush1.msra.mxu0 %v368
    %1066 = vmatprep.subr.mxu0 0.0
    %1067 = vmatpush1.msra.mxu0 %v371
    %1068 = vmatprep.subr.mxu0 0.0
    %1069 = vmatpush1.msra.mxu0 %v374
    %1070 = vmatprep.subr.mxu0 0.0
    %1071 = vmatpush1.msra.mxu0 %v377
    %1072 = vmatprep.subr.mxu0 0.0
    %1073 = vmatpush1.msra.mxu0 %v380
    %1074 = vmatprep.subr.mxu0 0.0
    %1075 = vmatpush1.msra.mxu0 %v383
    %1076 = vmatprep.subr.mxu0 0.0
    %1077 = vmatpush1.msra.mxu0 %v386
    %1078 = vmatprep.subr.mxu0 0.0
    %1079 = vmatpush1.msra.mxu0 %v389
    %1080 = vmatprep.subr.mxu0 0.0
    %1081 = vmatpush1.msra.mxu0 %v392
    %1082 = vmatprep.subr.mxu0 0.0
    %1083 = vmatpush1.msra.mxu0 %v395
    %1084 = vmatprep.subr.mxu0 0.0
    %1085 = vmatpush1.msra.mxu0 0.0
    %1086 = vmatprep.subr.mxu0 0.0
    %1087 = vmatpush1.msra.mxu0 0.0
    %1088 = vmatprep.subr.mxu0 0.0
    %1089 = vmatpush1.msra.mxu0 0.0
    %1090 = vmatprep.subr.mxu0 0.0
    %1091 = vmatpush1.msra.mxu0 0.0
    %1092 = vmatprep.subr.mxu0 0.0
    %1093 = vmatpush1.msra.mxu0 0.0
    %1094 = vmatprep.subr.mxu0 0.0
    %1095 = vmatpush1.msra.mxu0 0.0
    %1096 = vmatprep.subr.mxu0 0.0
    %1097 = vmatpush1.msra.mxu0 0.0
    %1098 = vmatprep.subr.mxu0 0.0
    %1099 = vmatpush1.msra.mxu0 0.0
    %1100 = vmatprep.subr.mxu0 0.0
    %1101 = vmatpush1.msra.mxu0 0.0
    %1102 = vmatprep.subr.mxu0 0.0
    %1103 = vmatpush1.msra.mxu0 0.0
    %1104 = vmatprep.subr.mxu0 0.0
    %1105 = vmatpush1.msra.mxu0 0.0
    %1106 = vmatprep.subr.mxu0 0.0
    %1107 = vmatpush1.msra.mxu0 0.0
    %1108 = vmatprep.subr.mxu0 0.0
    %1109 = vmatpush1.msra.mxu0 0.0
    %1110 = vmatprep.subr.mxu0 0.0
    %1111 = vmatpush1.msra.mxu0 0.0
    %1112 = vmatprep.subr.mxu0 0.0
    %1113 = vmatpush1.msra.mxu0 0.0
    %1114 = vmatprep.subr.mxu0 0.0
    %1115 = vmatpush1.msra.mxu0 0.0
    %1116 = vmatprep.subr.mxu0 0.0
    %1117 = vmatpush1.msra.mxu0 0.0
    %1118 = vmatprep.subr.mxu0 0.0
    %1119 = vmatpush1.msra.mxu0 0.0
    %1120 = vmatprep.subr.mxu0 0.0
    %1121 = vmatpush1.msra.mxu0 0.0
    %1122 = vmatprep.subr.mxu0 0.0
    %1123 = vmatpush1.msra.mxu0 0.0
    %1124 = vmatprep.mubr.f32.mxu0 0.0
    %1125 = vmatmul.mubr.f32.gmra.mrb[0].mxu0 %v987
    %v1126 = vpop.f32.mrb[0].mxu0
    %v1127 = vadd.f32 %v571, %v1126
    %v1128 = vpop.f32.mrb[0].mxu0
    %1129 = vdwg.mxu0
    %v1131 = vrot.slane %v1056, 6
    %v1133 = vadd.f32 %v485, %v1131
    %v1134 = vxor.u32 %v1133, 2147483648
    %v1135 = vmul.f32 %v1134, 1.442695
    %v1136 = vpow.pop %v1135
    %v1137 = vadd.f32 %v1136, 1.0
    %v1138 = vrcp.pop %v1137
    %v1139 = vmul.f32 1.0, %v1138
    %v1141 = vrot.slane %v1058, 6
    %v1143 = vadd.f32 %v487, %v1141
    %v1144 = vxor.u32 %v1143, 2147483648
    %v1145 = vmul.f32 %v1144, 1.442695
    %v1146 = vpow.pop %v1145
    %v1147 = vadd.f32 %v1146, 1.0
    %v1148 = vrcp.pop %v1147
    %v1149 = vmul.f32 1.0, %v1148
    %v1151 = vrot.slane %v1127, 6
    %1152 = vrot.lane.b32.xlu0 %v1141, 64
    %v1153 = vpop.permute.xlu0 %1152
    %1154 = vrot.lane.b32.xlu0 %v1151, 64
    %v1155 = vpop.permute.xlu0 %1154
    %v1156 = vsel %vm740, %v1153, %v1155
    %v1158 = vmul.f32 %v1139, %v1156
    %1160 = vrot.lane.b32.xlu0 %v1158, 64
    %v1161 = vpop.permute.xlu0 %1160
    %v1163 = vadd.f32 %v487, %v1161
    %v1164 = vadd.f32 %v556, %v1161
    %v1165 = vtanh.pop %v1163
    %v1166 = vtanh.pop %v1164
    %v1167 = vsub.f32 1.0, %v1139
    %v1168 = vsub.f32 1.0, %v1149
    %1171 = vrot.lane.b32.xlu0 %v1165, 32
    %v1172 = vpop.permute.xlu0 %1171
    %1173 = vrot.lane.b32.xlu0 %v1166, 32
    %v1174 = vpop.permute.xlu0 %1173
    %v1175 = vsel %vm760, %v1172, %v1174
    %v1178 = vmul.f32 %v1167, %v1172
    %v1179 = vmul.f32 %v1168, %v1175
    %v1180 = vrot.slane %v976, 7
    %v1181 = vrot.slane %v977, 7
    %v1184 = vmul.f32 %v1139, %v1180
    %v1185 = vmul.f32 %v1149, %v1181
    %v1186 = vadd.f32 %v1178, %v1184
    %v1187 = vadd.f32 %v1179, %v1185
    %v1190 = vrot.slane %v1186, 2
    %v1191 = vrot.slane %v1187, 2
    %1192 = vrot.lane.b32.xlu0 %v1190, 32
    %v1193 = vpop.permute.xlu0 %1192
    %1194 = vrot.lane.b32.xlu0 %v1191, 32
    %v1195 = vpop.permute.xlu0 %1194
    %v1196 = vsel %vm760, %v1193, %v1195
    %v1197 = vsel %vm575, %v1196, 0
    %1199 = vmatprep.subr.mxu0 %v361
    %1200 = vmatpush1.msra.mxu0 %v360
    %1201 = vmatprep.subr.mxu0 %v364
    %1202 = vmatpush1.msra.mxu0 %v363
    %1203 = vmatprep.subr.mxu0 %v367
    %1204 = vmatpush1.msra.mxu0 %v366
    %1205 = vmatprep.subr.mxu0 %v370
    %1206 = vmatpush1.msra.mxu0 %v369
    %1207 = vmatprep.subr.mxu0 %v373
    %1208 = vmatpush1.msra.mxu0 %v372
    %1209 = vmatprep.subr.mxu0 %v376
    %1210 = vmatpush1.msra.mxu0 %v375
    %1211 = vmatprep.subr.mxu0 %v379
    %1212 = vmatpush1.msra.mxu0 %v378
    %1213 = vmatprep.subr.mxu0 %v382
    %1214 = vmatpush1.msra.mxu0 %v381
    %1215 = vmatprep.subr.mxu0 %v385
    %1216 = vmatpush1.msra.mxu0 %v384
    %1217 = vmatprep.subr.mxu0 %v388
    %1218 = vmatpush1.msra.mxu0 %v387
    %1219 = vmatprep.subr.mxu0 %v391
    %1220 = vmatpush1.msra.mxu0 %v390
    %1221 = vmatprep.subr.mxu0 %v394
    %1222 = vmatpush1.msra.mxu0 %v393
    %1223 = vmatprep.subr.mxu0 0.0
    %1224 = vmatpush1.msra.mxu0 0.0
    %1225 = vmatprep.subr.mxu0 0.0
    %1226 = vmatpush1.msra.mxu0 0.0
    %1227 = vmatprep.subr.mxu0 0.0
    %1228 = vmatpush1.msra.mxu0 0.0
    %1229 = vmatprep.subr.mxu0 0.0
    %1230 = vmatpush1.msra.mxu0 0.0
    %1231 = vmatprep.subr.mxu0 0.0
    %1232 = vmatpush1.msra.mxu0 0.0
    %1233 = vmatprep.subr.mxu0 0.0
    %1234 = vmatpush1.msra.mxu0 0.0
    %1235 = vmatprep.subr.mxu0 0.0
    %1236 = vmatpush1.msra.mxu0 0.0
    %1237 = vmatprep.subr.mxu0 0.0
    %1238 = vmatpush1.msra.mxu0 0.0
    %1239 = vmatprep.subr.mxu0 0.0
    %1240 = vmatpush1.msra.mxu0 0.0
    %1241 = vmatprep.subr.mxu0 0.0
    %1242 = vmatpush1.msra.mxu0 0.0
    %1243 = vmatprep.subr.mxu0 0.0
    %1244 = vmatpush1.msra.mxu0 0.0
    %1245 = vmatprep.subr.mxu0 0.0
    %1246 = vmatpush1.msra.mxu0 0.0
    %1247 = vmatprep.subr.mxu0 0.0
    %1248 = vmatpush1.msra.mxu0 0.0
    %1249 = vmatprep.subr.mxu0 0.0
    %1250 = vmatpush1.msra.mxu0 0.0
    %1251 = vmatprep.subr.mxu0 0.0
    %1252 = vmatpush1.msra.mxu0 0.0
    %1253 = vmatprep.subr.mxu0 0.0
    %1254 = vmatpush1.msra.mxu0 0.0
    %1255 = vmatprep.subr.mxu0 0.0
    %1256 = vmatpush1.msra.mxu0 0.0
    %1257 = vmatprep.subr.mxu0 0.0
    %1258 = vmatpush1.msra.mxu0 0.0
    %1259 = vmatprep.subr.mxu0 0.0
    %1260 = vmatpush1.msra.mxu0 0.0
    %1261 = vmatprep.subr.mxu0 0.0
    %1262 = vmatpush1.msra.mxu0 0.0
    %1263 = vmatprep.mubr.f32.mxu0 0.0
    %1264 = vmatmul.mubr.f32.gmra.mrb[0].mxu0 %v1197
    %v1265 = vpop.f32.mrb[0].mxu0
    %v1266 = vadd.f32 %v563, %v1265
    %v1267 = vpop.f32.mrb[0].mxu0
    %v1268 = vadd.f32 %v567, %v1267
    %1269 = vdwg.mxu0
    %1270 = vmatprep.subr.mxu0 0.0
    %1271 = vmatpush1.msra.mxu0 %v362
    %1272 = vmatprep.subr.mxu0 0.0
    %1273 = vmatpush1.msra.mxu0 %v365
    %1274 = vmatprep.subr.mxu0 0.0
    %1275 = vmatpush1.msra.mxu0 %v368
    %1276 = vmatprep.subr.mxu0 0.0
    %1277 = vmatpush1.msra.mxu0 %v371
    %1278 = vmatprep.subr.mxu0 0.0
    %1279 = vmatpush1.msra.mxu0 %v374
    %1280 = vmatprep.subr.mxu0 0.0
    %1281 = vmatpush1.msra.mxu0 %v377
    %1282 = vmatprep.subr.mxu0 0.0
    %1283 = vmatpush1.msra.mxu0 %v380
    %1284 = vmatprep.subr.mxu0 0.0
    %1285 = vmatpush1.msra.mxu0 %v383
    %1286 = vmatprep.subr.mxu0 0.0
    %1287 = vmatpush1.msra.mxu0 %v386
    %1288 = vmatprep.subr.mxu0 0.0
    %1289 = vmatpush1.msra.mxu0 %v389
    %1290 = vmatprep.subr.mxu0 0.0
    %1291 = vmatpush1.msra.mxu0 %v392
    %1292 = vmatprep.subr.mxu0 0.0
    %1293 = vmatpush1.msra.mxu0 %v395
    %1294 = vmatprep.subr.mxu0 0.0
    %1295 = vmatpush1.msra.mxu0 0.0
    %1296 = vmatprep.subr.mxu0 0.0
    %1297 = vmatpush1.msra.mxu0 0.0
    %1298 = vmatprep.subr.mxu0 0.0
    %1299 = vmatpush1.msra.mxu0 0.0
    %1300 = vmatprep.subr.mxu0 0.0
    %1301 = vmatpush1.msra.mxu0 0.0
    %1302 = vmatprep.subr.mxu0 0.0
    %1303 = vmatpush1.msra.mxu0 0.0
    %1304 = vmatprep.subr.mxu0 0.0
    %1305 = vmatpush1.msra.mxu0 0.0
    %1306 = vmatprep.subr.mxu0 0.0
    %1307 = vmatpush1.msra.mxu0 0.0
    %1308 = vmatprep.subr.mxu0 0.0
    %1309 = vmatpush1.msra.mxu0 0.0
    %1310 = vmatprep.subr.mxu0 0.0
    %1311 = vmatpush1.msra.mxu0 0.0
    %1312 = vmatprep.subr.mxu0 0.0
    %1313 = vmatpush1.msra.mxu0 0.0
    %1314 = vmatprep.subr.mxu0 0.0
    %1315 = vmatpush1.msra.mxu0 0.0
    %1316 = vmatprep.subr.mxu0 0.0
    %1317 = vmatpush1.msra.mxu0 0.0
    %1318 = vmatprep.subr.mxu0 0.0
    %1319 = vmatpush1.msra.mxu0 0.0
    %1320 = vmatprep.subr.mxu0 0.0
    %1321 = vmatpush1.msra.mxu0 0.0
    %1322 = vmatprep.subr.mxu0 0.0
    %1323 = vmatpush1.msra.mxu0 0.0
    %1324 = vmatprep.subr.mxu0 0.0
    %1325 = vmatpush1.msra.mxu0 0.0
    %1326 = vmatprep.subr.mxu0 0.0
    %1327 = vmatpush1.msra.mxu0 0.0
    %1328 = vmatprep.subr.mxu0 0.0
    %1329 = vmatpush1.msra.mxu0 0.0
    %1330 = vmatprep.subr.mxu0 0.0
    %1331 = vmatpush1.msra.mxu0 0.0
    %1332 = vmatprep.subr.mxu0 0.0
    %1333 = vmatpush1.msra.mxu0 0.0
    %1334 = vmatprep.mubr.f32.mxu0 0.0
    %1335 = vmatmul.mubr.f32.gmra.mrb[0].mxu0 %v1197
    %v1336 = vpop.f32.mrb[0].mxu0
    %v1337 = vadd.f32 %v571, %v1336
    %v1338 = vpop.f32.mrb[0].mxu0
    %1339 = vdwg.mxu0
    %v1341 = vrot.slane %v1266, 5
    %v1343 = vadd.f32 %v485, %v1341
    %v1344 = vxor.u32 %v1343, 2147483648
    %v1345 = vmul.f32 %v1344, 1.442695
    %v1346 = vpow.pop %v1345
    %v1347 = vadd.f32 %v1346, 1.0
    %v1348 = vrcp.pop %v1347
    %v1349 = vmul.f32 1.0, %v1348
    %v1351 = vrot.slane %v1268, 5
    %v1353 = vadd.f32 %v487, %v1351
    %v1354 = vxor.u32 %v1353, 2147483648
    %v1355 = vmul.f32 %v1354, 1.442695
    %v1356 = vpow.pop %v1355
    %v1357 = vadd.f32 %v1356, 1.0
    %v1358 = vrcp.pop %v1357
    %v1359 = vmul.f32 1.0, %v1358
    %v1361 = vrot.slane %v1337, 5
    %1362 = vrot.lane.b32.xlu0 %v1351, 64
    %v1363 = vpop.permute.xlu0 %1362
    %1364 = vrot.lane.b32.xlu0 %v1361, 64
    %v1365 = vpop.permute.xlu0 %1364
    %v1366 = vsel %vm740, %v1363, %v1365
    %v1368 = vmul.f32 %v1349, %v1366
    %1370 = vrot.lane.b32.xlu0 %v1368, 64
    %v1371 = vpop.permute.xlu0 %1370
    %v1373 = vadd.f32 %v487, %v1371
    %v1374 = vadd.f32 %v556, %v1371
    %v1375 = vtanh.pop %v1373
    %v1376 = vtanh.pop %v1374
    %v1377 = vsub.f32 1.0, %v1349
    %v1378 = vsub.f32 1.0, %v1359
    %1381 = vrot.lane.b32.xlu0 %v1375, 32
    %v1382 = vpop.permute.xlu0 %1381
    %1383 = vrot.lane.b32.xlu0 %v1376, 32
    %v1384 = vpop.permute.xlu0 %1383
    %v1385 = vsel %vm760, %v1382, %v1384
    %v1388 = vmul.f32 %v1377, %v1382
    %v1389 = vmul.f32 %v1378, %v1385
    %v1390 = vrot.slane %v1186, 7
    %v1391 = vrot.slane %v1187, 7
    %v1394 = vmul.f32 %v1349, %v1390
    %v1395 = vmul.f32 %v1359, %v1391
    %v1396 = vadd.f32 %v1388, %v1394
    %v1397 = vadd.f32 %v1389, %v1395
    %v1400 = vrot.slane %v1396, 3
    %v1401 = vrot.slane %v1397, 3
    %1402 = vrot.lane.b32.xlu0 %v1400, 32
    %v1403 = vpop.permute.xlu0 %1402
    %1404 = vrot.lane.b32.xlu0 %v1401, 32
    %v1405 = vpop.permute.xlu0 %1404
    %v1406 = vsel %vm760, %v1403, %v1405
    %v1407 = vsel %vm575, %v1406, 0
    %1409 = vmatprep.subr.mxu0 %v361
    %1410 = vmatpush1.msra.mxu0 %v360
    %1411 = vmatprep.subr.mxu0 %v364
    %1412 = vmatpush1.msra.mxu0 %v363
    %1413 = vmatprep.subr.mxu0 %v367
    %1414 = vmatpush1.msra.mxu0 %v366
    %1415 = vmatprep.subr.mxu0 %v370
    %1416 = vmatpush1.msra.mxu0 %v369
    %1417 = vmatprep.subr.mxu0 %v373
    %1418 = vmatpush1.msra.mxu0 %v372
    %1419 = vmatprep.subr.mxu0 %v376
    %1420 = vmatpush1.msra.mxu0 %v375
    %1421 = vmatprep.subr.mxu0 %v379
    %1422 = vmatpush1.msra.mxu0 %v378
    %1423 = vmatprep.subr.mxu0 %v382
    %1424 = vmatpush1.msra.mxu0 %v381
    %1425 = vmatprep.subr.mxu0 %v385
    %1426 = vmatpush1.msra.mxu0 %v384
    %1427 = vmatprep.subr.mxu0 %v388
    %1428 = vmatpush1.msra.mxu0 %v387
    %1429 = vmatprep.subr.mxu0 %v391
    %1430 = vmatpush1.msra.mxu0 %v390
    %1431 = vmatprep.subr.mxu0 %v394
    %1432 = vmatpush1.msra.mxu0 %v393
    %1433 = vmatprep.subr.mxu0 0.0
    %1434 = vmatpush1.msra.mxu0 0.0
    %1435 = vmatprep.subr.mxu0 0.0
    %1436 = vmatpush1.msra.mxu0 0.0
    %1437 = vmatprep.subr.mxu0 0.0
    %1438 = vmatpush1.msra.mxu0 0.0
    %1439 = vmatprep.subr.mxu0 0.0
    %1440 = vmatpush1.msra.mxu0 0.0
    %1441 = vmatprep.subr.mxu0 0.0
    %1442 = vmatpush1.msra.mxu0 0.0
    %1443 = vmatprep.subr.mxu0 0.0
    %1444 = vmatpush1.msra.mxu0 0.0
    %1445 = vmatprep.subr.mxu0 0.0
    %1446 = vmatpush1.msra.mxu0 0.0
    %1447 = vmatprep.subr.mxu0 0.0
    %1448 = vmatpush1.msra.mxu0 0.0
    %1449 = vmatprep.subr.mxu0 0.0
    %1450 = vmatpush1.msra.mxu0 0.0
    %1451 = vmatprep.subr.mxu0 0.0
    %1452 = vmatpush1.msra.mxu0 0.0
    %1453 = vmatprep.subr.mxu0 0.0
    %1454 = vmatpush1.msra.mxu0 0.0
    %1455 = vmatprep.subr.mxu0 0.0
    %1456 = vmatpush1.msra.mxu0 0.0
    %1457 = vmatprep.subr.mxu0 0.0
    %1458 = vmatpush1.msra.mxu0 0.0
    %1459 = vmatprep.subr.mxu0 0.0
    %1460 = vmatpush1.msra.mxu0 0.0
    %1461 = vmatprep.subr.mxu0 0.0
    %1462 = vmatpush1.msra.mxu0 0.0
    %1463 = vmatprep.subr.mxu0 0.0
    %1464 = vmatpush1.msra.mxu0 0.0
    %1465 = vmatprep.subr.mxu0 0.0
    %1466 = vmatpush1.msra.mxu0 0.0
    %1467 = vmatprep.subr.mxu0 0.0
    %1468 = vmatpush1.msra.mxu0 0.0
    %1469 = vmatprep.subr.mxu0 0.0
    %1470 = vmatpush1.msra.mxu0 0.0
    %1471 = vmatprep.subr.mxu0 0.0
    %1472 = vmatpush1.msra.mxu0 0.0
    %1473 = vmatprep.mubr.f32.mxu0 0.0
    %1474 = vmatmul.mubr.f32.gmra.mrb[0].mxu0 %v1407
    %v1475 = vpop.f32.mrb[0].mxu0
    %v1476 = vadd.f32 %v563, %v1475
    %v1477 = vpop.f32.mrb[0].mxu0
    %v1478 = vadd.f32 %v567, %v1477
    %1479 = vdwg.mxu0
    %1480 = vmatprep.subr.mxu0 0.0
    %1481 = vmatpush1.msra.mxu0 %v362
    %1482 = vmatprep.subr.mxu0 0.0
    %1483 = vmatpush1.msra.mxu0 %v365
    %1484 = vmatprep.subr.mxu0 0.0
    %1485 = vmatpush1.msra.mxu0 %v368
    %1486 = vmatprep.subr.mxu0 0.0
    %1487 = vmatpush1.msra.mxu0 %v371
    %1488 = vmatprep.subr.mxu0 0.0
    %1489 = vmatpush1.msra.mxu0 %v374
    %1490 = vmatprep.subr.mxu0 0.0
    %1491 = vmatpush1.msra.mxu0 %v377
    %1492 = vmatprep.subr.mxu0 0.0
    %1493 = vmatpush1.msra.mxu0 %v380
    %1494 = vmatprep.subr.mxu0 0.0
    %1495 = vmatpush1.msra.mxu0 %v383
    %1496 = vmatprep.subr.mxu0 0.0
    %1497 = vmatpush1.msra.mxu0 %v386
    %1498 = vmatprep.subr.mxu0 0.0
    %1499 = vmatpush1.msra.mxu0 %v389
    %1500 = vmatprep.subr.mxu0 0.0
    %1501 = vmatpush1.msra.mxu0 %v392
    %1502 = vmatprep.subr.mxu0 0.0
    %1503 = vmatpush1.msra.mxu0 %v395
    %1504 = vmatprep.subr.mxu0 0.0
    %1505 = vmatpush1.msra.mxu0 0.0
    %1506 = vmatprep.subr.mxu0 0.0
    %1507 = vmatpush1.msra.mxu0 0.0
    %1508 = vmatprep.subr.mxu0 0.0
    %1509 = vmatpush1.msra.mxu0 0.0
    %1510 = vmatprep.subr.mxu0 0.0
    %1511 = vmatpush1.msra.mxu0 0.0
    %1512 = vmatprep.subr.mxu0 0.0
    %1513 = vmatpush1.msra.mxu0 0.0
    %1514 = vmatprep.subr.mxu0 0.0
    %1515 = vmatpush1.msra.mxu0 0.0
    %1516 = vmatprep.subr.mxu0 0.0
    %1517 = vmatpush1.msra.mxu0 0.0
    %1518 = vmatprep.subr.mxu0 0.0
    %1519 = vmatpush1.msra.mxu0 0.0
    %1520 = vmatprep.subr.mxu0 0.0
    %1521 = vmatpush1.msra.mxu0 0.0
    %1522 = vmatprep.subr.mxu0 0.0
    %1523 = vmatpush1.msra.mxu0 0.0
    %1524 = vmatprep.subr.mxu0 0.0
    %1525 = vmatpush1.msra.mxu0 0.0
    %1526 = vmatprep.subr.mxu0 0.0
    %1527 = vmatpush1.msra.mxu0 0.0
    %1528 = vmatprep.subr.mxu0 0.0
    %1529 = vmatpush1.msra.mxu0 0.0
    %1530 = vmatprep.subr.mxu0 0.0
    %1531 = vmatpush1.msra.mxu0 0.0
    %1532 = vmatprep.subr.mxu0 0.0
    %1533 = vmatpush1.msra.mxu0 0.0
    %1534 = vmatprep.subr.mxu0 0.0
    %1535 = vmatpush1.msra.mxu0 0.0
    %1536 = vmatprep.subr.mxu0 0.0
    %1537 = vmatpush1.msra.mxu0 0.0
    %1538 = vmatprep.subr.mxu0 0.0
    %1539 = vmatpush1.msra.mxu0 0.0
    %1540 = vmatprep.subr.mxu0 0.0
    %1541 = vmatpush1.msra.mxu0 0.0
    %1542 = vmatprep.subr.mxu0 0.0
    %1543 = vmatpush1.msra.mxu0 0.0
    %1544 = vmatprep.mubr.f32.mxu0 0.0
    %1545 = vmatmul.mubr.f32.gmra.mrb[0].mxu0 %v1407
    %v1546 = vpop.f32.mrb[0].mxu0
    %v1547 = vadd.f32 %v571, %v1546
    %v1548 = vpop.f32.mrb[0].mxu0
    %1549 = vdwg.mxu0
    %v1551 = vrot.slane %v1476, 4
    %v1553 = vadd.f32 %v485, %v1551
    %v1554 = vxor.u32 %v1553, 2147483648
    %v1555 = vmul.f32 %v1554, 1.442695
    %v1556 = vpow.pop %v1555
    %v1557 = vadd.f32 %v1556, 1.0
    %v1558 = vrcp.pop %v1557
    %v1559 = vmul.f32 1.0, %v1558
    %v1561 = vrot.slane %v1478, 4
    %v1563 = vadd.f32 %v487, %v1561
    %v1564 = vxor.u32 %v1563, 2147483648
    %v1565 = vmul.f32 %v1564, 1.442695
    %v1566 = vpow.pop %v1565
    %v1567 = vadd.f32 %v1566, 1.0
    %v1568 = vrcp.pop %v1567
    %v1569 = vmul.f32 1.0, %v1568
    %v1571 = vrot.slane %v1547, 4
    %1572 = vrot.lane.b32.xlu0 %v1561, 64
    %v1573 = vpop.permute.xlu0 %1572
    %1574 = vrot.lane.b32.xlu0 %v1571, 64
    %v1575 = vpop.permute.xlu0 %1574
    %v1576 = vsel %vm740, %v1573, %v1575
    %v1578 = vmul.f32 %v1559, %v1576
    %1580 = vrot.lane.b32.xlu0 %v1578, 64
    %v1581 = vpop.permute.xlu0 %1580
    %v1583 = vadd.f32 %v487, %v1581
    %v1584 = vadd.f32 %v556, %v1581
    %v1585 = vtanh.pop %v1583
    %v1586 = vtanh.pop %v1584
    %v1587 = vsub.f32 1.0, %v1559
    %v1588 = vsub.f32 1.0, %v1569
    %1591 = vrot.lane.b32.xlu0 %v1585, 32
    %v1592 = vpop.permute.xlu0 %1591
    %1593 = vrot.lane.b32.xlu0 %v1586, 32
    %v1594 = vpop.permute.xlu0 %1593
    %v1595 = vsel %vm760, %v1592, %v1594
    %v1598 = vmul.f32 %v1587, %v1592
    %v1599 = vmul.f32 %v1588, %v1595
    %v1600 = vrot.slane %v1396, 7
    %v1601 = vrot.slane %v1397, 7
    %v1604 = vmul.f32 %v1559, %v1600
    %v1605 = vmul.f32 %v1569, %v1601
    %v1606 = vadd.f32 %v1598, %v1604
    %v1607 = vadd.f32 %v1599, %v1605
    %v1610 = vrot.slane %v1606, 4
    %v1611 = vrot.slane %v1607, 4
    %1612 = vrot.lane.b32.xlu0 %v1610, 32
    %v1613 = vpop.permute.xlu0 %1612
    %1614 = vrot.lane.b32.xlu0 %v1611, 32
    %v1615 = vpop.permute.xlu0 %1614
    %v1616 = vsel %vm760, %v1613, %v1615
    %v1617 = vsel %vm575, %v1616, 0
    %1619 = vmatprep.subr.mxu0 %v361
    %1620 = vmatpush1.msra.mxu0 %v360
    %1621 = vmatprep.subr.mxu0 %v364
    %1622 = vmatpush1.msra.mxu0 %v363
    %1623 = vmatprep.subr.mxu0 %v367
    %1624 = vmatpush1.msra.mxu0 %v366
    %1625 = vmatprep.subr.mxu0 %v370
    %1626 = vmatpush1.msra.mxu0 %v369
    %1627 = vmatprep.subr.mxu0 %v373
    %1628 = vmatpush1.msra.mxu0 %v372
    %1629 = vmatprep.subr.mxu0 %v376
    %1630 = vmatpush1.msra.mxu0 %v375
    %1631 = vmatprep.subr.mxu0 %v379
    %1632 = vmatpush1.msra.mxu0 %v378
    %1633 = vmatprep.subr.mxu0 %v382
    %1634 = vmatpush1.msra.mxu0 %v381
    %1635 = vmatprep.subr.mxu0 %v385
    %1636 = vmatpush1.msra.mxu0 %v384
    %1637 = vmatprep.subr.mxu0 %v388
    %1638 = vmatpush1.msra.mxu0 %v387
    %1639 = vmatprep.subr.mxu0 %v391
    %1640 = vmatpush1.msra.mxu0 %v390
    %1641 = vmatprep.subr.mxu0 %v394
    %1642 = vmatpush1.msra.mxu0 %v393
    %1643 = vmatprep.subr.mxu0 0.0
    %1644 = vmatpush1.msra.mxu0 0.0
    %1645 = vmatprep.subr.mxu0 0.0
    %1646 = vmatpush1.msra.mxu0 0.0
    %1647 = vmatprep.subr.mxu0 0.0
    %1648 = vmatpush1.msra.mxu0 0.0
    %1649 = vmatprep.subr.mxu0 0.0
    %1650 = vmatpush1.msra.mxu0 0.0
    %1651 = vmatprep.subr.mxu0 0.0
    %1652 = vmatpush1.msra.mxu0 0.0
    %1653 = vmatprep.subr.mxu0 0.0
    %1654 = vmatpush1.msra.mxu0 0.0
    %1655 = vmatprep.subr.mxu0 0.0
    %1656 = vmatpush1.msra.mxu0 0.0
    %1657 = vmatprep.subr.mxu0 0.0
    %1658 = vmatpush1.msra.mxu0 0.0
    %1659 = vmatprep.subr.mxu0 0.0
    %1660 = vmatpush1.msra.mxu0 0.0
    %1661 = vmatprep.subr.mxu0 0.0
    %1662 = vmatpush1.msra.mxu0 0.0
    %1663 = vmatprep.subr.mxu0 0.0
    %1664 = vmatpush1.msra.mxu0 0.0
    %1665 = vmatprep.subr.mxu0 0.0
    %1666 = vmatpush1.msra.mxu0 0.0
    %1667 = vmatprep.subr.mxu0 0.0
    %1668 = vmatpush1.msra.mxu0 0.0
    %1669 = vmatprep.subr.mxu0 0.0
    %1670 = vmatpush1.msra.mxu0 0.0
    %1671 = vmatprep.subr.mxu0 0.0
    %1672 = vmatpush1.msra.mxu0 0.0
    %1673 = vmatprep.subr.mxu0 0.0
    %1674 = vmatpush1.msra.mxu0 0.0
    %1675 = vmatprep.subr.mxu0 0.0
    %1676 = vmatpush1.msra.mxu0 0.0
    %1677 = vmatprep.subr.mxu0 0.0
    %1678 = vmatpush1.msra.mxu0 0.0
    %1679 = vmatprep.subr.mxu0 0.0
    %1680 = vmatpush1.msra.mxu0 0.0
    %1681 = vmatprep.subr.mxu0 0.0
    %1682 = vmatpush1.msra.mxu0 0.0
    %1683 = vmatprep.mubr.f32.mxu0 0.0
    %1684 = vmatmul.mubr.f32.gmra.mrb[0].mxu0 %v1617
    %v1685 = vpop.f32.mrb[0].mxu0
    %v1686 = vadd.f32 %v563, %v1685
    %v1687 = vpop.f32.mrb[0].mxu0
    %v1688 = vadd.f32 %v567, %v1687
    %1689 = vdwg.mxu0
    %1690 = vmatprep.subr.mxu0 0.0
    %1691 = vmatpush1.msra.mxu0 %v362
    %1692 = vmatprep.subr.mxu0 0.0
    %1693 = vmatpush1.msra.mxu0 %v365
    %1694 = vmatprep.subr.mxu0 0.0
    %1695 = vmatpush1.msra.mxu0 %v368
    %1696 = vmatprep.subr.mxu0 0.0
    %1697 = vmatpush1.msra.mxu0 %v371
    %1698 = vmatprep.subr.mxu0 0.0
    %1699 = vmatpush1.msra.mxu0 %v374
    %1700 = vmatprep.subr.mxu0 0.0
    %1701 = vmatpush1.msra.mxu0 %v377
    %1702 = vmatprep.subr.mxu0 0.0
    %1703 = vmatpush1.msra.mxu0 %v380
    %1704 = vmatprep.subr.mxu0 0.0
    %1705 = vmatpush1.msra.mxu0 %v383
    %1706 = vmatprep.subr.mxu0 0.0
    %1707 = vmatpush1.msra.mxu0 %v386
    %1708 = vmatprep.subr.mxu0 0.0
    %1709 = vmatpush1.msra.mxu0 %v389
    %1710 = vmatprep.subr.mxu0 0.0
    %1711 = vmatpush1.msra.mxu0 %v392
    %1712 = vmatprep.subr.mxu0 0.0
    %1713 = vmatpush1.msra.mxu0 %v395
    %1714 = vmatprep.subr.mxu0 0.0
    %1715 = vmatpush1.msra.mxu0 0.0
    %1716 = vmatprep.subr.mxu0 0.0
    %1717 = vmatpush1.msra.mxu0 0.0
    %1718 = vmatprep.subr.mxu0 0.0
    %1719 = vmatpush1.msra.mxu0 0.0
    %1720 = vmatprep.subr.mxu0 0.0
    %1721 = vmatpush1.msra.mxu0 0.0
    %1722 = vmatprep.subr.mxu0 0.0
    %1723 = vmatpush1.msra.mxu0 0.0
    %1724 = vmatprep.subr.mxu0 0.0
    %1725 = vmatpush1.msra.mxu0 0.0
    %1726 = vmatprep.subr.mxu0 0.0
    %1727 = vmatpush1.msra.mxu0 0.0
    %1728 = vmatprep.subr.mxu0 0.0
    %1729 = vmatpush1.msra.mxu0 0.0
    %1730 = vmatprep.subr.mxu0 0.0
    %1731 = vmatpush1.msra.mxu0 0.0
    %1732 = vmatprep.subr.mxu0 0.0
    %1733 = vmatpush1.msra.mxu0 0.0
    %1734 = vmatprep.subr.mxu0 0.0
    %1735 = vmatpush1.msra.mxu0 0.0
    %1736 = vmatprep.subr.mxu0 0.0
    %1737 = vmatpush1.msra.mxu0 0.0
    %1738 = vmatprep.subr.mxu0 0.0
    %1739 = vmatpush1.msra.mxu0 0.0
    %1740 = vmatprep.subr.mxu0 0.0
    %1741 = vmatpush1.msra.mxu0 0.0
    %1742 = vmatprep.subr.mxu0 0.0
    %1743 = vmatpush1.msra.mxu0 0.0
    %1744 = vmatprep.subr.mxu0 0.0
    %1745 = vmatpush1.msra.mxu0 0.0
    %1746 = vmatprep.subr.mxu0 0.0
    %1747 = vmatpush1.msra.mxu0 0.0
    %1748 = vmatprep.subr.mxu0 0.0
    %1749 = vmatpush1.msra.mxu0 0.0
    %1750 = vmatprep.subr.mxu0 0.0
    %1751 = vmatpush1.msra.mxu0 0.0
    %1752 = vmatprep.subr.mxu0 0.0
    %1753 = vmatpush1.msra.mxu0 0.0
    %1754 = vmatprep.mubr.f32.mxu0 0.0
    %1755 = vmatmul.mubr.f32.gmra.mrb[0].mxu0 %v1617
    %v1756 = vpop.f32.mrb[0].mxu0
    %v1757 = vadd.f32 %v571, %v1756
    %v1758 = vpop.f32.mrb[0].mxu0
    %1759 = vdwg.mxu0
    %v1761 = vrot.slane %v1686, 3
    %v1763 = vadd.f32 %v485, %v1761
    %v1764 = vxor.u32 %v1763, 2147483648
    %v1765 = vmul.f32 %v1764, 1.442695
    %v1766 = vpow.pop %v1765
    %v1767 = vadd.f32 %v1766, 1.0
    %v1768 = vrcp.pop %v1767
    %v1769 = vmul.f32 1.0, %v1768
    %v1771 = vrot.slane %v1688, 3
    %v1773 = vadd.f32 %v487, %v1771
    %v1774 = vxor.u32 %v1773, 2147483648
    %v1775 = vmul.f32 %v1774, 1.442695
    %v1776 = vpow.pop %v1775
    %v1777 = vadd.f32 %v1776, 1.0
    %v1778 = vrcp.pop %v1777
    %v1779 = vmul.f32 1.0, %v1778
    %v1781 = vrot.slane %v1757, 3
    %1782 = vrot.lane.b32.xlu0 %v1771, 64
    %v1783 = vpop.permute.xlu0 %1782
    %1784 = vrot.lane.b32.xlu0 %v1781, 64
    %v1785 = vpop.permute.xlu0 %1784
    %v1786 = vsel %vm740, %v1783, %v1785
    %v1788 = vmul.f32 %v1769, %v1786
    %1790 = vrot.lane.b32.xlu0 %v1788, 64
    %v1791 = vpop.permute.xlu0 %1790
    %v1793 = vadd.f32 %v487, %v1791
    %v1794 = vadd.f32 %v556, %v1791
    %v1795 = vtanh.pop %v1793
    %v1796 = vtanh.pop %v1794
    %v1797 = vsub.f32 1.0, %v1769
    %v1798 = vsub.f32 1.0, %v1779
    %1801 = vrot.lane.b32.xlu0 %v1795, 32
    %v1802 = vpop.permute.xlu0 %1801
    %1803 = vrot.lane.b32.xlu0 %v1796, 32
    %v1804 = vpop.permute.xlu0 %1803
    %v1805 = vsel %vm760, %v1802, %v1804
    %v1808 = vmul.f32 %v1797, %v1802
    %v1809 = vmul.f32 %v1798, %v1805
    %v1810 = vrot.slane %v1606, 7
    %v1811 = vrot.slane %v1607, 7
    %v1814 = vmul.f32 %v1769, %v1810
    %v1815 = vmul.f32 %v1779, %v1811
    %v1816 = vadd.f32 %v1808, %v1814
    %v1817 = vadd.f32 %v1809, %v1815
    %v1820 = vrot.slane %v1816, 5
    %v1821 = vrot.slane %v1817, 5
    %1822 = vrot.lane.b32.xlu0 %v1820, 32
    %v1823 = vpop.permute.xlu0 %1822
    %1824 = vrot.lane.b32.xlu0 %v1821, 32
    %v1825 = vpop.permute.xlu0 %1824
    %v1826 = vsel %vm760, %v1823, %v1825
    %v1827 = vsel %vm575, %v1826, 0
    %1829 = vmatprep.subr.mxu0 %v361
    %1830 = vmatpush1.msra.mxu0 %v360
    %1831 = vmatprep.subr.mxu0 %v364
    %1832 = vmatpush1.msra.mxu0 %v363
    %1833 = vmatprep.subr.mxu0 %v367
    %1834 = vmatpush1.msra.mxu0 %v366
    %1835 = vmatprep.subr.mxu0 %v370
    %1836 = vmatpush1.msra.mxu0 %v369
    %1837 = vmatprep.subr.mxu0 %v373
    %1838 = vmatpush1.msra.mxu0 %v372
    %1839 = vmatprep.subr.mxu0 %v376
    %1840 = vmatpush1.msra.mxu0 %v375
    %1841 = vmatprep.subr.mxu0 %v379
    %1842 = vmatpush1.msra.mxu0 %v378
    %1843 = vmatprep.subr.mxu0 %v382
    %1844 = vmatpush1.msra.mxu0 %v381
    %1845 = vmatprep.subr.mxu0 %v385
    %1846 = vmatpush1.msra.mxu0 %v384
    %1847 = vmatprep.subr.mxu0 %v388
    %1848 = vmatpush1.msra.mxu0 %v387
    %1849 = vmatprep.subr.mxu0 %v391
    %1850 = vmatpush1.msra.mxu0 %v390
    %1851 = vmatprep.subr.mxu0 %v394
    %1852 = vmatpush1.msra.mxu0 %v393
    %1853 = vmatprep.subr.mxu0 0.0
    %1854 = vmatpush1.msra.mxu0 0.0
    %1855 = vmatprep.subr.mxu0 0.0
    %1856 = vmatpush1.msra.mxu0 0.0
    %1857 = vmatprep.subr.mxu0 0.0
    %1858 = vmatpush1.msra.mxu0 0.0
    %1859 = vmatprep.subr.mxu0 0.0
    %1860 = vmatpush1.msra.mxu0 0.0
    %1861 = vmatprep.subr.mxu0 0.0
    %1862 = vmatpush1.msra.mxu0 0.0
    %1863 = vmatprep.subr.mxu0 0.0
    %1864 = vmatpush1.msra.mxu0 0.0
    %1865 = vmatprep.subr.mxu0 0.0
    %1866 = vmatpush1.msra.mxu0 0.0
    %1867 = vmatprep.subr.mxu0 0.0
    %1868 = vmatpush1.msra.mxu0 0.0
    %1869 = vmatprep.subr.mxu0 0.0
    %1870 = vmatpush1.msra.mxu0 0.0
    %1871 = vmatprep.subr.mxu0 0.0
    %1872 = vmatpush1.msra.mxu0 0.0
    %1873 = vmatprep.subr.mxu0 0.0
    %1874 = vmatpush1.msra.mxu0 0.0
    %1875 = vmatprep.subr.mxu0 0.0
    %1876 = vmatpush1.msra.mxu0 0.0
    %1877 = vmatprep.subr.mxu0 0.0
    %1878 = vmatpush1.msra.mxu0 0.0
    %1879 = vmatprep.subr.mxu0 0.0
    %1880 = vmatpush1.msra.mxu0 0.0
    %1881 = vmatprep.subr.mxu0 0.0
    %1882 = vmatpush1.msra.mxu0 0.0
    %1883 = vmatprep.subr.mxu0 0.0
    %1884 = vmatpush1.msra.mxu0 0.0
    %1885 = vmatprep.subr.mxu0 0.0
    %1886 = vmatpush1.msra.mxu0 0.0
    %1887 = vmatprep.subr.mxu0 0.0
    %1888 = vmatpush1.msra.mxu0 0.0
    %1889 = vmatprep.subr.mxu0 0.0
    %1890 = vmatpush1.msra.mxu0 0.0
    %1891 = vmatprep.subr.mxu0 0.0
    %1892 = vmatpush1.msra.mxu0 0.0
    %1893 = vmatprep.mubr.f32.mxu0 0.0
    %1894 = vmatmul.mubr.f32.gmra.mrb[0].mxu0 %v1827
    %v1895 = vpop.f32.mrb[0].mxu0
    %v1896 = vadd.f32 %v563, %v1895
    %v1897 = vpop.f32.mrb[0].mxu0
    %v1898 = vadd.f32 %v567, %v1897
    %1899 = vdwg.mxu0
    %1900 = vmatprep.subr.mxu0 0.0
    %1901 = vmatpush1.msra.mxu0 %v362
    %1902 = vmatprep.subr.mxu0 0.0
    %1903 = vmatpush1.msra.mxu0 %v365
    %1904 = vmatprep.subr.mxu0 0.0
    %1905 = vmatpush1.msra.mxu0 %v368
    %1906 = vmatprep.subr.mxu0 0.0
    %1907 = vmatpush1.msra.mxu0 %v371
    %1908 = vmatprep.subr.mxu0 0.0
    %1909 = vmatpush1.msra.mxu0 %v374
    %1910 = vmatprep.subr.mxu0 0.0
    %1911 = vmatpush1.msra.mxu0 %v377
    %1912 = vmatprep.subr.mxu0 0.0
    %1913 = vmatpush1.msra.mxu0 %v380
    %1914 = vmatprep.subr.mxu0 0.0
    %1915 = vmatpush1.msra.mxu0 %v383
    %1916 = vmatprep.subr.mxu0 0.0
    %1917 = vmatpush1.msra.mxu0 %v386
    %1918 = vmatprep.subr.mxu0 0.0
    %1919 = vmatpush1.msra.mxu0 %v389
    %1920 = vmatprep.subr.mxu0 0.0
    %1921 = vmatpush1.msra.mxu0 %v392
    %1922 = vmatprep.subr.mxu0 0.0
    %1923 = vmatpush1.msra.mxu0 %v395
    %1924 = vmatprep.subr.mxu0 0.0
    %1925 = vmatpush1.msra.mxu0 0.0
    %1926 = vmatprep.subr.mxu0 0.0
    %1927 = vmatpush1.msra.mxu0 0.0
    %1928 = vmatprep.subr.mxu0 0.0
    %1929 = vmatpush1.msra.mxu0 0.0
    %1930 = vmatprep.subr.mxu0 0.0
    %1931 = vmatpush1.msra.mxu0 0.0
    %1932 = vmatprep.subr.mxu0 0.0
    %1933 = vmatpush1.msra.mxu0 0.0
    %1934 = vmatprep.subr.mxu0 0.0
    %1935 = vmatpush1.msra.mxu0 0.0
    %1936 = vmatprep.subr.mxu0 0.0
    %1937 = vmatpush1.msra.mxu0 0.0
    %1938 = vmatprep.subr.mxu0 0.0
    %1939 = vmatpush1.msra.mxu0 0.0
    %1940 = vmatprep.subr.mxu0 0.0
    %1941 = vmatpush1.msra.mxu0 0.0
    %1942 = vmatprep.subr.mxu0 0.0
    %1943 = vmatpush1.msra.mxu0 0.0
    %1944 = vmatprep.subr.mxu0 0.0
    %1945 = vmatpush1.msra.mxu0 0.0
    %1946 = vmatprep.subr.mxu0 0.0
    %1947 = vmatpush1.msra.mxu0 0.0
    %1948 = vmatprep.subr.mxu0 0.0
    %1949 = vmatpush1.msra.mxu0 0.0
    %1950 = vmatprep.subr.mxu0 0.0
    %1951 = vmatpush1.msra.mxu0 0.0
    %1952 = vmatprep.subr.mxu0 0.0
    %1953 = vmatpush1.msra.mxu0 0.0
    %1954 = vmatprep.subr.mxu0 0.0
    %1955 = vmatpush1.msra.mxu0 0.0
    %1956 = vmatprep.subr.mxu0 0.0
    %1957 = vmatpush1.msra.mxu0 0.0
    %1958 = vmatprep.subr.mxu0 0.0
    %1959 = vmatpush1.msra.mxu0 0.0
    %1960 = vmatprep.subr.mxu0 0.0
    %1961 = vmatpush1.msra.mxu0 0.0
    %1962 = vmatprep.subr.mxu0 0.0
    %1963 = vmatpush1.msra.mxu0 0.0
    %1964 = vmatprep.mubr.f32.mxu0 0.0
    %1965 = vmatmul.mubr.f32.gmra.mrb[0].mxu0 %v1827
    %v1966 = vpop.f32.mrb[0].mxu0
    %v1967 = vadd.f32 %v571, %v1966
    %v1968 = vpop.f32.mrb[0].mxu0
    %1969 = vdwg.mxu0
    %v1971 = vrot.slane %v1896, 2
    %v1973 = vadd.f32 %v485, %v1971
    %v1974 = vxor.u32 %v1973, 2147483648
    %v1975 = vmul.f32 %v1974, 1.442695
    %v1976 = vpow.pop %v1975
    %v1977 = vadd.f32 %v1976, 1.0
    %v1978 = vrcp.pop %v1977
    %v1979 = vmul.f32 1.0, %v1978
    %v1981 = vrot.slane %v1898, 2
    %v1983 = vadd.f32 %v487, %v1981
    %v1984 = vxor.u32 %v1983, 2147483648
    %v1985 = vmul.f32 %v1984, 1.442695
    %v1986 = vpow.pop %v1985
    %v1987 = vadd.f32 %v1986, 1.0
    %v1988 = vrcp.pop %v1987
    %v1989 = vmul.f32 1.0, %v1988
    %v1991 = vrot.slane %v1967, 2
    %1992 = vrot.lane.b32.xlu0 %v1981, 64
    %v1993 = vpop.permute.xlu0 %1992
    %1994 = vrot.lane.b32.xlu0 %v1991, 64
    %v1995 = vpop.permute.xlu0 %1994
    %v1996 = vsel %vm740, %v1993, %v1995
    %v1998 = vmul.f32 %v1979, %v1996
    %2000 = vrot.lane.b32.xlu0 %v1998, 64
    %v2001 = vpop.permute.xlu0 %2000
    %v2003 = vadd.f32 %v487, %v2001
    %v2004 = vadd.f32 %v556, %v2001
    %v2005 = vtanh.pop %v2003
    %v2006 = vtanh.pop %v2004
    %v2007 = vsub.f32 1.0, %v1979
    %v2008 = vsub.f32 1.0, %v1989
    %2011 = vrot.lane.b32.xlu0 %v2005, 32
    %v2012 = vpop.permute.xlu0 %2011
    %2013 = vrot.lane.b32.xlu0 %v2006, 32
    %v2014 = vpop.permute.xlu0 %2013
    %v2015 = vsel %vm760, %v2012, %v2014
    %v2018 = vmul.f32 %v2007, %v2012
    %v2019 = vmul.f32 %v2008, %v2015
    %v2020 = vrot.slane %v1816, 7
    %v2021 = vrot.slane %v1817, 7
    %v2024 = vmul.f32 %v1979, %v2020
    %v2025 = vmul.f32 %v1989, %v2021
    %v2026 = vadd.f32 %v2018, %v2024
    %v2027 = vadd.f32 %v2019, %v2025
    %v2030 = vrot.slane %v2026, 6
    %v2031 = vrot.slane %v2027, 6
    %2032 = vrot.lane.b32.xlu0 %v2030, 32
    %v2033 = vpop.permute.xlu0 %2032
    %2034 = vrot.lane.b32.xlu0 %v2031, 32
    %v2035 = vpop.permute.xlu0 %2034
    %v2036 = vsel %vm760, %v2033, %v2035
    %v2037 = vsel %vm575, %v2036, 0
    %2039 = vmatprep.subr.mxu0 %v361
    %2040 = vmatpush1.msra.mxu0 %v360
    %2041 = vmatprep.subr.mxu0 %v364
    %2042 = vmatpush1.msra.mxu0 %v363
    %2043 = vmatprep.subr.mxu0 %v367
    %2044 = vmatpush1.msra.mxu0 %v366
    %2045 = vmatprep.subr.mxu0 %v370
    %2046 = vmatpush1.msra.mxu0 %v369
    %2047 = vmatprep.subr.mxu0 %v373
    %2048 = vmatpush1.msra.mxu0 %v372
    %2049 = vmatprep.subr.mxu0 %v376
    %2050 = vmatpush1.msra.mxu0 %v375
    %2051 = vmatprep.subr.mxu0 %v379
    %2052 = vmatpush1.msra.mxu0 %v378
    %2053 = vmatprep.subr.mxu0 %v382
    %2054 = vmatpush1.msra.mxu0 %v381
    %2055 = vmatprep.subr.mxu0 %v385
    %2056 = vmatpush1.msra.mxu0 %v384
    %2057 = vmatprep.subr.mxu0 %v388
    %2058 = vmatpush1.msra.mxu0 %v387
    %2059 = vmatprep.subr.mxu0 %v391
    %2060 = vmatpush1.msra.mxu0 %v390
    %2061 = vmatprep.subr.mxu0 %v394
    %2062 = vmatpush1.msra.mxu0 %v393
    %2063 = vmatprep.subr.mxu0 0.0
    %2064 = vmatpush1.msra.mxu0 0.0
    %2065 = vmatprep.subr.mxu0 0.0
    %2066 = vmatpush1.msra.mxu0 0.0
    %2067 = vmatprep.subr.mxu0 0.0
    %2068 = vmatpush1.msra.mxu0 0.0
    %2069 = vmatprep.subr.mxu0 0.0
    %2070 = vmatpush1.msra.mxu0 0.0
    %2071 = vmatprep.subr.mxu0 0.0
    %2072 = vmatpush1.msra.mxu0 0.0
    %2073 = vmatprep.subr.mxu0 0.0
    %2074 = vmatpush1.msra.mxu0 0.0
    %2075 = vmatprep.subr.mxu0 0.0
    %2076 = vmatpush1.msra.mxu0 0.0
    %2077 = vmatprep.subr.mxu0 0.0
    %2078 = vmatpush1.msra.mxu0 0.0
    %2079 = vmatprep.subr.mxu0 0.0
    %2080 = vmatpush1.msra.mxu0 0.0
    %2081 = vmatprep.subr.mxu0 0.0
    %2082 = vmatpush1.msra.mxu0 0.0
    %2083 = vmatprep.subr.mxu0 0.0
    %2084 = vmatpush1.msra.mxu0 0.0
    %2085 = vmatprep.subr.mxu0 0.0
    %2086 = vmatpush1.msra.mxu0 0.0
    %2087 = vmatprep.subr.mxu0 0.0
    %2088 = vmatpush1.msra.mxu0 0.0
    %2089 = vmatprep.subr.mxu0 0.0
    %2090 = vmatpush1.msra.mxu0 0.0
    %2091 = vmatprep.subr.mxu0 0.0
    %2092 = vmatpush1.msra.mxu0 0.0
    %2093 = vmatprep.subr.mxu0 0.0
    %2094 = vmatpush1.msra.mxu0 0.0
    %2095 = vmatprep.subr.mxu0 0.0
    %2096 = vmatpush1.msra.mxu0 0.0
    %2097 = vmatprep.subr.mxu0 0.0
    %2098 = vmatpush1.msra.mxu0 0.0
    %2099 = vmatprep.subr.mxu0 0.0
    %2100 = vmatpush1.msra.mxu0 0.0
    %2101 = vmatprep.subr.mxu0 0.0
    %2102 = vmatpush1.msra.mxu0 0.0
    %2103 = vmatprep.mubr.f32.mxu0 0.0
    %2104 = vmatmul.mubr.f32.gmra.mrb[0].mxu0 %v2037
    %v2105 = vpop.f32.mrb[0].mxu0
    %v2106 = vadd.f32 %v563, %v2105
    %v2107 = vpop.f32.mrb[0].mxu0
    %v2108 = vadd.f32 %v567, %v2107
    %2109 = vdwg.mxu0
    %2110 = vmatprep.subr.mxu0 0.0
    %2111 = vmatpush1.msra.mxu0 %v362
    %2112 = vmatprep.subr.mxu0 0.0
    %2113 = vmatpush1.msra.mxu0 %v365
    %2114 = vmatprep.subr.mxu0 0.0
    %2115 = vmatpush1.msra.mxu0 %v368
    %2116 = vmatprep.subr.mxu0 0.0
    %2117 = vmatpush1.msra.mxu0 %v371
    %2118 = vmatprep.subr.mxu0 0.0
    %2119 = vmatpush1.msra.mxu0 %v374
    %2120 = vmatprep.subr.mxu0 0.0
    %2121 = vmatpush1.msra.mxu0 %v377
    %2122 = vmatprep.subr.mxu0 0.0
    %2123 = vmatpush1.msra.mxu0 %v380
    %2124 = vmatprep.subr.mxu0 0.0
    %2125 = vmatpush1.msra.mxu0 %v383
    %2126 = vmatprep.subr.mxu0 0.0
    %2127 = vmatpush1.msra.mxu0 %v386
    %2128 = vmatprep.subr.mxu0 0.0
    %2129 = vmatpush1.msra.mxu0 %v389
    %2130 = vmatprep.subr.mxu0 0.0
    %2131 = vmatpush1.msra.mxu0 %v392
    %2132 = vmatprep.subr.mxu0 0.0
    %2133 = vmatpush1.msra.mxu0 %v395
    %2134 = vmatprep.subr.mxu0 0.0
    %2135 = vmatpush1.msra.mxu0 0.0
    %2136 = vmatprep.subr.mxu0 0.0
    %2137 = vmatpush1.msra.mxu0 0.0
    %2138 = vmatprep.subr.mxu0 0.0
    %2139 = vmatpush1.msra.mxu0 0.0
    %2140 = vmatprep.subr.mxu0 0.0
    %2141 = vmatpush1.msra.mxu0 0.0
    %2142 = vmatprep.subr.mxu0 0.0
    %2143 = vmatpush1.msra.mxu0 0.0
    %2144 = vmatprep.subr.mxu0 0.0
    %2145 = vmatpush1.msra.mxu0 0.0
    %2146 = vmatprep.subr.mxu0 0.0
    %2147 = vmatpush1.msra.mxu0 0.0
    %2148 = vmatprep.subr.mxu0 0.0
    %2149 = vmatpush1.msra.mxu0 0.0
    %2150 = vmatprep.subr.mxu0 0.0
    %2151 = vmatpush1.msra.mxu0 0.0
    %2152 = vmatprep.subr.mxu0 0.0
    %2153 = vmatpush1.msra.mxu0 0.0
    %2154 = vmatprep.subr.mxu0 0.0
    %2155 = vmatpush1.msra.mxu0 0.0
    %2156 = vmatprep.subr.mxu0 0.0
    %2157 = vmatpush1.msra.mxu0 0.0
    %2158 = vmatprep.subr.mxu0 0.0
    %2159 = vmatpush1.msra.mxu0 0.0
    %2160 = vmatprep.subr.mxu0 0.0
    %2161 = vmatpush1.msra.mxu0 0.0
    %2162 = vmatprep.subr.mxu0 0.0
    %2163 = vmatpush1.msra.mxu0 0.0
    %2164 = vmatprep.subr.mxu0 0.0
    %2165 = vmatpush1.msra.mxu0 0.0
    %2166 = vmatprep.subr.mxu0 0.0
    %2167 = vmatpush1.msra.mxu0 0.0
    %2168 = vmatprep.subr.mxu0 0.0
    %2169 = vmatpush1.msra.mxu0 0.0
    %2170 = vmatprep.subr.mxu0 0.0
    %2171 = vmatpush1.msra.mxu0 0.0
    %2172 = vmatprep.subr.mxu0 0.0
    %2173 = vmatpush1.msra.mxu0 0.0
    %2174 = vmatprep.mubr.f32.mxu0 0.0
    %2175 = vmatmul.mubr.f32.gmra.mrb[0].mxu0 %v2037
    %v2176 = vpop.f32.mrb[0].mxu0
    %v2177 = vadd.f32 %v571, %v2176
    %v2178 = vpop.f32.mrb[0].mxu0
    %2179 = vdwg.mxu0
    %v2181 = vrot.slane %v2106, 1
    %v2183 = vadd.f32 %v485, %v2181
    %v2184 = vxor.u32 %v2183, 2147483648
    %v2185 = vmul.f32 %v2184, 1.442695
    %v2186 = vpow.pop %v2185
    %v2187 = vadd.f32 %v2186, 1.0
    %v2188 = vrcp.pop %v2187
    %v2189 = vmul.f32 1.0, %v2188
    %v2191 = vrot.slane %v2108, 1
    %v2193 = vadd.f32 %v487, %v2191
    %v2194 = vxor.u32 %v2193, 2147483648
    %v2195 = vmul.f32 %v2194, 1.442695
    %v2196 = vpow.pop %v2195
    %v2197 = vadd.f32 %v2196, 1.0
    %v2198 = vrcp.pop %v2197
    %v2199 = vmul.f32 1.0, %v2198
    %v2201 = vrot.slane %v2177, 1
    %2202 = vrot.lane.b32.xlu0 %v2191, 64
    %v2203 = vpop.permute.xlu0 %2202
    %2204 = vrot.lane.b32.xlu0 %v2201, 64
    %v2205 = vpop.permute.xlu0 %2204
    %v2206 = vsel %vm740, %v2203, %v2205
    %v2208 = vmul.f32 %v2189, %v2206
    %2210 = vrot.lane.b32.xlu0 %v2208, 64
    %v2211 = vpop.permute.xlu0 %2210
    %v2213 = vadd.f32 %v487, %v2211
    %v2214 = vadd.f32 %v556, %v2211
    %v2215 = vtanh.pop %v2213
    %v2216 = vtanh.pop %v2214
    %v2217 = vsub.f32 1.0, %v2189
    %v2218 = vsub.f32 1.0, %v2199
    %2221 = vrot.lane.b32.xlu0 %v2215, 32
    %v2222 = vpop.permute.xlu0 %2221
    %2223 = vrot.lane.b32.xlu0 %v2216, 32
    %v2224 = vpop.permute.xlu0 %2223
    %v2225 = vsel %vm760, %v2222, %v2224
    %v2228 = vmul.f32 %v2217, %v2222
    %v2229 = vmul.f32 %v2218, %v2225
    %v2230 = vrot.slane %v2026, 7
    %v2231 = vrot.slane %v2027, 7
    %v2234 = vmul.f32 %v2189, %v2230
    %v2235 = vmul.f32 %v2199, %v2231
    %v2236 = vadd.f32 %v2228, %v2234
    %v2237 = vadd.f32 %v2229, %v2235
    %vm2238 = vcmask 1040384
    %v2239 = vsel %vm2238, %v768, %v976
    %v2240 = vsel %vm2238, %v769, %v977
    %vm2241 = vcmask 1041408
    %v2242 = vsel %vm2241, %v2239, %v1186
    %v2243 = vsel %vm2241, %v2240, %v1187
    %vm2244 = vcmask 1042432
    %v2245 = vsel %vm2244, %v2242, %v1396
    %v2246 = vsel %vm2244, %v2243, %v1397
    %vm2247 = vcmask 1043456
    %v2248 = vsel %vm2247, %v2245, %v1606
    %v2249 = vsel %vm2247, %v2246, %v1607
    %vm2250 = vcmask 1044480
    %v2251 = vsel %vm2250, %v2248, %v1816
    %v2252 = vsel %vm2250, %v2249, %v1817
    %v2253 = vsel %vm266, %v2251, %v2026
    %v2254 = vsel %vm266, %v2252, %v2027
    %vm2255 = vcmask 1046528
    %v2256 = vsel %vm2255, %v2253, %v2236
    %v2257 = vsel %vm2255, %v2254, %v2237
    %v2258 = vld [vmem:[#allocation11] sm:$0xff]
    %v2259 = vld [vmem:[#allocation11 + $0x8] sm:$0xff]
    %v2260 = vld [vmem:[#allocation11 + $0x10] sm:$0xff]
    %v2261 = vld [vmem:[#allocation11 + $0x18] sm:$0xff]
    %v2262 = vld [vmem:[#allocation11 + $0x20] sm:$0xff]
    %v2263 = vld [vmem:[#allocation11 + $0x28] sm:$0xff]
    %v2264 = vld [vmem:[#allocation11 + $0x30] sm:$0xff]
    %v2265 = vld [vmem:[#allocation11 + $0x38] sm:$0xff]
    %v2266 = vld [vmem:[#allocation11 + $0x40] sm:$0xff]
    %v2267 = vld [vmem:[#allocation11 + $0x48] sm:$0xff]
    %v2268 = vld [vmem:[#allocation11 + $0x50] sm:$0xff]
    %v2269 = vld [vmem:[#allocation11 + $0x58] sm:$0xff]
    %v2270 = vld [vmem:[#allocation11 + $0x60] sm:$0xff]
    %v2271 = vld [vmem:[#allocation11 + $0x68] sm:$0xff]
    %v2272 = vld [vmem:[#allocation11 + $0x70] sm:$0xff]
    %v2273 = vld [vmem:[#allocation11 + $0x78] sm:$0xff]
    %v2274 = vld [vmem:[#allocation11 + $0x80] sm:$0xff]
    %v2275 = vld [vmem:[#allocation11 + $0x88] sm:$0xff]
    %v2276 = vld [vmem:[#allocation11 + $0x90] sm:$0xff]
    %v2277 = vld [vmem:[#allocation11 + $0x98] sm:$0xff]
    %v2278 = vld [vmem:[#allocation11 + $0xa0] sm:$0xff]
    %v2279 = vld [vmem:[#allocation11 + $0xa8] sm:$0xff]
    %v2280 = vld [vmem:[#allocation11 + $0xb0] sm:$0xff]
    %v2281 = vld [vmem:[#allocation11 + $0xb8] sm:$0xff]
    %v2282 = vld [vmem:[#allocation11 + $0xc0] sm:$0xff]
    %v2283 = vld [vmem:[#allocation11 + $0xc8] sm:$0xff]
    %v2284 = vld [vmem:[#allocation11 + $0xd0] sm:$0xff]
    %v2285 = vld [vmem:[#allocation11 + $0xd8] sm:$0xff]
    %v2286 = vld [vmem:[#allocation11 + $0xe0] sm:$0xff]
    %v2287 = vld [vmem:[#allocation11 + $0xe8] sm:$0xff]
    %v2288 = vld [vmem:[#allocation11 + $0xf0] sm:$0xff]
    %v2289 = vld [vmem:[#allocation11 + $0xf8] sm:$0xff]
    %v2290 = vld [vmem:[#allocation11 + $0x100] sm:$0xff]
    %v2291 = vld [vmem:[#allocation11 + $0x108] sm:$0xff]
    %v2292 = vld [vmem:[#allocation11 + $0x110] sm:$0xff]
    %v2293 = vld [vmem:[#allocation11 + $0x118] sm:$0xff]
    %v2294 = vld [vmem:[#allocation12] sm:$0xff]
    %v2295 = vld [vmem:[#allocation12 + $0x8] sm:$0xff]
    %v2296 = vld [vmem:[#allocation12 + $0x10] sm:$0xff]
    %v2297 = vld [vmem:[#allocation12 + $0x18] sm:$0xff]
    %v2298 = vld [vmem:[#allocation12 + $0x20] sm:$0xff]
    %v2299 = vld [vmem:[#allocation12 + $0x28] sm:$0xff]
    %v2300 = vld [vmem:[#allocation12 + $0x30] sm:$0xff]
    %v2301 = vld [vmem:[#allocation12 + $0x38] sm:$0xff]
    %v2302 = vld [vmem:[#allocation12 + $0x40] sm:$0xff]
    %v2303 = vld [vmem:[#allocation12 + $0x48] sm:$0xff]
    %v2304 = vld [vmem:[#allocation12 + $0x50] sm:$0xff]
    %v2305 = vld [vmem:[#allocation12 + $0x58] sm:$0xff]
    %v2306 = vld [vmem:[#allocation12 + $0x60] sm:$0xff]
    %v2307 = vld [vmem:[#allocation12 + $0x68] sm:$0xff]
    %v2308 = vld [vmem:[#allocation12 + $0x70] sm:$0xff]
    %v2309 = vld [vmem:[#allocation12 + $0x78] sm:$0xff]
    %v2310 = vld [vmem:[#allocation12 + $0x80] sm:$0xff]
    %v2311 = vld [vmem:[#allocation12 + $0x88] sm:$0xff]
    %v2312 = vld [vmem:[#allocation12 + $0x90] sm:$0xff]
    %v2313 = vld [vmem:[#allocation12 + $0x98] sm:$0xff]
    %v2314 = vld [vmem:[#allocation12 + $0xa0] sm:$0xff]
    %v2315 = vld [vmem:[#allocation12 + $0xa8] sm:$0xff]
    %v2316 = vld [vmem:[#allocation12 + $0xb0] sm:$0xff]
    %v2317 = vld [vmem:[#allocation12 + $0xb8] sm:$0xff]
    %v2318 = vld [vmem:[#allocation12 + $0xc0] sm:$0xff]
    %v2319 = vld [vmem:[#allocation12 + $0xc8] sm:$0xff]
    %v2320 = vld [vmem:[#allocation12 + $0xd0] sm:$0xff]
    %v2321 = vld [vmem:[#allocation12 + $0xd8] sm:$0xff]
    %v2322 = vld [vmem:[#allocation12 + $0xe0] sm:$0xff]
    %v2323 = vld [vmem:[#allocation12 + $0xe8] sm:$0xff]
    %v2324 = vld [vmem:[#allocation12 + $0xf0] sm:$0xff]
    %v2325 = vld [vmem:[#allocation12 + $0xf8] sm:$0xff]
    %v2326 = vld [vmem:[#allocation12 + $0x100] sm:$0xff]
    %v2327 = vld [vmem:[#allocation12 + $0x108] sm:$0xff]
    %v2328 = vld [vmem:[#allocation12 + $0x110] sm:$0xff]
    %v2329 = vld [vmem:[#allocation12 + $0x118] sm:$0xff]
    %v2330 = vld [vmem:[#allocation14] sm:$0x7]
    %v2331 = vld [vmem:[#allocation15] sm:$0x7]
    %v2333 = vlaneseq
    %v2334 = vshrl.u32 %v2333, 7
    %v2335 = vsub.s32 0, %v2334
    %v2336 = vrot.slane %v2330, %v2335
    %v2337 = vlaneseq
    %v2338 = vshrl.u32 %v2337, 7
    %v2339 = vsub.s32 1, %v2338
    %v2340 = vrot.slane %v2330, %v2339
    %v2341 = vlaneseq
    %v2342 = vshrl.u32 %v2341, 7
    %v2343 = vsub.s32 2, %v2342
    %v2344 = vrot.slane %v2330, %v2343
    %2350 = vrot.lane.b32.xlu0 %v2256, 32
    %v2351 = vpop.permute.xlu0 %2350
    %2352 = vrot.lane.b32.xlu0 %v2257, 32
    %v2353 = vpop.permute.xlu0 %2352
    %v2354 = vsel %vm760, %v2351, %v2353
    %v2355 = vsel %vm575, %v2354, 0
    %2357 = vmatprep.subr.mxu0 %v2259
    %2358 = vmatpush1.msra.mxu0 %v2258
    %2359 = vmatprep.subr.mxu0 %v2262
    %2360 = vmatpush1.msra.mxu0 %v2261
    %2361 = vmatprep.subr.mxu0 %v2265
    %2362 = vmatpush1.msra.mxu0 %v2264
    %2363 = vmatprep.subr.mxu0 %v2268
    %2364 = vmatpush1.msra.mxu0 %v2267
    %2365 = vmatprep.subr.mxu0 %v2271
    %2366 = vmatpush1.msra.mxu0 %v2270
    %2367 = vmatprep.subr.mxu0 %v2274
    %2368 = vmatpush1.msra.mxu0 %v2273
    %2369 = vmatprep.subr.mxu0 %v2277
    %2370 = vmatpush1.msra.mxu0 %v2276
    %2371 = vmatprep.subr.mxu0 %v2280
    %2372 = vmatpush1.msra.mxu0 %v2279
    %2373 = vmatprep.subr.mxu0 %v2283
    %2374 = vmatpush1.msra.mxu0 %v2282
    %2375 = vmatprep.subr.mxu0 %v2286
    %2376 = vmatpush1.msra.mxu0 %v2285
    %2377 = vmatprep.subr.mxu0 %v2289
    %2378 = vmatpush1.msra.mxu0 %v2288
    %2379 = vmatprep.subr.mxu0 %v2292
    %2380 = vmatpush1.msra.mxu0 %v2291
    %2381 = vmatprep.subr.mxu0 0.0
    %2382 = vmatpush1.msra.mxu0 0.0
    %2383 = vmatprep.subr.mxu0 0.0
    %2384 = vmatpush1.msra.mxu0 0.0
    %2385 = vmatprep.subr.mxu0 0.0
    %2386 = vmatpush1.msra.mxu0 0.0
    %2387 = vmatprep.subr.mxu0 0.0
    %2388 = vmatpush1.msra.mxu0 0.0
    %2389 = vmatprep.subr.mxu0 0.0
    %2390 = vmatpush1.msra.mxu0 0.0
    %2391 = vmatprep.subr.mxu0 0.0
    %2392 = vmatpush1.msra.mxu0 0.0
    %2393 = vmatprep.subr.mxu0 0.0
    %2394 = vmatpush1.msra.mxu0 0.0
    %2395 = vmatprep.subr.mxu0 0.0
    %2396 = vmatpush1.msra.mxu0 0.0
    %2397 = vmatprep.subr.mxu0 0.0
    %2398 = vmatpush1.msra.mxu0 0.0
    %2399 = vmatprep.subr.mxu0 0.0
    %2400 = vmatpush1.msra.mxu0 0.0
    %2401 = vmatprep.subr.mxu0 0.0
    %2402 = vmatpush1.msra.mxu0 0.0
    %2403 = vmatprep.subr.mxu0 0.0
    %2404 = vmatpush1.msra.mxu0 0.0
    %2405 = vmatprep.subr.mxu0 0.0
    %2406 = vmatpush1.msra.mxu0 0.0
    %2407 = vmatprep.subr.mxu0 0.0
    %2408 = vmatpush1.msra.mxu0 0.0
    %2409 = vmatprep.subr.mxu0 0.0
    %2410 = vmatpush1.msra.mxu0 0.0
    %2411 = vmatprep.subr.mxu0 0.0
    %2412 = vmatpush1.msra.mxu0 0.0
    %2413 = vmatprep.subr.mxu0 0.0
    %2414 = vmatpush1.msra.mxu0 0.0
    %2415 = vmatprep.subr.mxu0 0.0
    %2416 = vmatpush1.msra.mxu0 0.0
    %2417 = vmatprep.subr.mxu0 0.0
    %2418 = vmatpush1.msra.mxu0 0.0
    %2419 = vmatprep.subr.mxu0 0.0
    %2420 = vmatpush1.msra.mxu0 0.0
    %2421 = vmatprep.mubr.f32.mxu0 0.0
    %2422 = vmatmul.mubr.f32.gmra.mrb[0].mxu0 %v2355
    %v2423 = vpop.f32.mrb[0].mxu0
    %v2424 = vadd.f32 %v2336, %v2423
    %v2425 = vpop.f32.mrb[0].mxu0
    %v2426 = vadd.f32 %v2340, %v2425
    %2427 = vdwg.mxu0
    %2428 = vmatprep.subr.mxu0 0.0
    %2429 = vmatpush1.msra.mxu0 %v2260
    %2430 = vmatprep.subr.mxu0 0.0
    %2431 = vmatpush1.msra.mxu0 %v2263
    %2432 = vmatprep.subr.mxu0 0.0
    %2433 = vmatpush1.msra.mxu0 %v2266
    %2434 = vmatprep.subr.mxu0 0.0
    %2435 = vmatpush1.msra.mxu0 %v2269
    %2436 = vmatprep.subr.mxu0 0.0
    %2437 = vmatpush1.msra.mxu0 %v2272
    %2438 = vmatprep.subr.mxu0 0.0
    %2439 = vmatpush1.msra.mxu0 %v2275
    %2440 = vmatprep.subr.mxu0 0.0
    %2441 = vmatpush1.msra.mxu0 %v2278
    %2442 = vmatprep.subr.mxu0 0.0
    %2443 = vmatpush1.msra.mxu0 %v2281
    %2444 = vmatprep.subr.mxu0 0.0
    %2445 = vmatpush1.msra.mxu0 %v2284
    %2446 = vmatprep.subr.mxu0 0.0
    %2447 = vmatpush1.msra.mxu0 %v2287
    %2448 = vmatprep.subr.mxu0 0.0
    %2449 = vmatpush1.msra.mxu0 %v2290
    %2450 = vmatprep.subr.mxu0 0.0
    %2451 = vmatpush1.msra.mxu0 %v2293
    %2452 = vmatprep.subr.mxu0 0.0
    %2453 = vmatpush1.msra.mxu0 0.0
    %2454 = vmatprep.subr.mxu0 0.0
    %2455 = vmatpush1.msra.mxu0 0.0
    %2456 = vmatprep.subr.mxu0 0.0
    %2457 = vmatpush1.msra.mxu0 0.0
    %2458 = vmatprep.subr.mxu0 0.0
    %2459 = vmatpush1.msra.mxu0 0.0
    %2460 = vmatprep.subr.mxu0 0.0
    %2461 = vmatpush1.msra.mxu0 0.0
    %2462 = vmatprep.subr.mxu0 0.0
    %2463 = vmatpush1.msra.mxu0 0.0
    %2464 = vmatprep.subr.mxu0 0.0
    %2465 = vmatpush1.msra.mxu0 0.0
    %2466 = vmatprep.subr.mxu0 0.0
    %2467 = vmatpush1.msra.mxu0 0.0
    %2468 = vmatprep.subr.mxu0 0.0
    %2469 = vmatpush1.msra.mxu0 0.0
    %2470 = vmatprep.subr.mxu0 0.0
    %2471 = vmatpush1.msra.mxu0 0.0
    %2472 = vmatprep.subr.mxu0 0.0
    %2473 = vmatpush1.msra.mxu0 0.0
    %2474 = vmatprep.subr.mxu0 0.0
    %2475 = vmatpush1.msra.mxu0 0.0
    %2476 = vmatprep.subr.mxu0 0.0
    %2477 = vmatpush1.msra.mxu0 0.0
    %2478 = vmatprep.subr.mxu0 0.0
    %2479 = vmatpush1.msra.mxu0 0.0
    %2480 = vmatprep.subr.mxu0 0.0
    %2481 = vmatpush1.msra.mxu0 0.0
    %2482 = vmatprep.subr.mxu0 0.0
    %2483 = vmatpush1.msra.mxu0 0.0
    %2484 = vmatprep.subr.mxu0 0.0
    %2485 = vmatpush1.msra.mxu0 0.0
    %2486 = vmatprep.subr.mxu0 0.0
    %2487 = vmatpush1.msra.mxu0 0.0
    %2488 = vmatprep.subr.mxu0 0.0
    %2489 = vmatpush1.msra.mxu0 0.0
    %2490 = vmatprep.subr.mxu0 0.0
    %2491 = vmatpush1.msra.mxu0 0.0
    %2492 = vmatprep.mubr.f32.mxu0 0.0
    %2493 = vmatmul.mubr.f32.gmra.mrb[0].mxu0 %v2355
    %v2494 = vpop.f32.mrb[0].mxu0
    %v2495 = vadd.f32 %v2344, %v2494
    %v2496 = vpop.f32.mrb[0].mxu0
    %2497 = vdwg.mxu0
    %v2499 = vlaneseq
    %v2500 = vshrl.u32 %v2499, 7
    %v2501 = vsub.s32 0, %v2500
    %v2502 = vrot.slane %v2331, %v2501
    %v2503 = vlaneseq
    %v2504 = vshrl.u32 %v2503, 7
    %v2505 = vsub.s32 1, %v2504
    %v2506 = vrot.slane %v2331, %v2505
    %v2507 = vlaneseq
    %v2508 = vshrl.u32 %v2507, 7
    %v2509 = vsub.s32 2, %v2508
    %v2510 = vrot.slane %v2331, %v2509
    %2514 = vmatprep.subr.mxu0 %v2295
    %2515 = vmatpush1.msra.mxu0 %v2294
    %2516 = vmatprep.subr.mxu0 %v2298
    %2517 = vmatpush1.msra.mxu0 %v2297
    %2518 = vmatprep.subr.mxu0 %v2301
    %2519 = vmatpush1.msra.mxu0 %v2300
    %2520 = vmatprep.subr.mxu0 %v2304
    %2521 = vmatpush1.msra.mxu0 %v2303
    %2522 = vmatprep.subr.mxu0 %v2307
    %2523 = vmatpush1.msra.mxu0 %v2306
    %2524 = vmatprep.subr.mxu0 %v2310
    %2525 = vmatpush1.msra.mxu0 %v2309
    %2526 = vmatprep.subr.mxu0 %v2313
    %2527 = vmatpush1.msra.mxu0 %v2312
    %2528 = vmatprep.subr.mxu0 %v2316
    %2529 = vmatpush1.msra.mxu0 %v2315
    %2530 = vmatprep.subr.mxu0 %v2319
    %2531 = vmatpush1.msra.mxu0 %v2318
    %2532 = vmatprep.subr.mxu0 %v2322
    %2533 = vmatpush1.msra.mxu0 %v2321
    %2534 = vmatprep.subr.mxu0 %v2325
    %2535 = vmatpush1.msra.mxu0 %v2324
    %2536 = vmatprep.subr.mxu0 %v2328
    %2537 = vmatpush1.msra.mxu0 %v2327
    %2538 = vmatprep.subr.mxu0 0.0
    %2539 = vmatpush1.msra.mxu0 0.0
    %2540 = vmatprep.subr.mxu0 0.0
    %2541 = vmatpush1.msra.mxu0 0.0
    %2542 = vmatprep.subr.mxu0 0.0
    %2543 = vmatpush1.msra.mxu0 0.0
    %2544 = vmatprep.subr.mxu0 0.0
    %2545 = vmatpush1.msra.mxu0 0.0
    %2546 = vmatprep.subr.mxu0 0.0
    %2547 = vmatpush1.msra.mxu0 0.0
    %2548 = vmatprep.subr.mxu0 0.0
    %2549 = vmatpush1.msra.mxu0 0.0
    %2550 = vmatprep.subr.mxu0 0.0
    %2551 = vmatpush1.msra.mxu0 0.0
    %2552 = vmatprep.subr.mxu0 0.0
    %2553 = vmatpush1.msra.mxu0 0.0
    %2554 = vmatprep.subr.mxu0 0.0
    %2555 = vmatpush1.msra.mxu0 0.0
    %2556 = vmatprep.subr.mxu0 0.0
    %2557 = vmatpush1.msra.mxu0 0.0
    %2558 = vmatprep.subr.mxu0 0.0
    %2559 = vmatpush1.msra.mxu0 0.0
    %2560 = vmatprep.subr.mxu0 0.0
    %2561 = vmatpush1.msra.mxu0 0.0
    %2562 = vmatprep.subr.mxu0 0.0
    %2563 = vmatpush1.msra.mxu0 0.0
    %2564 = vmatprep.subr.mxu0 0.0
    %2565 = vmatpush1.msra.mxu0 0.0
    %2566 = vmatprep.subr.mxu0 0.0
    %2567 = vmatpush1.msra.mxu0 0.0
    %2568 = vmatprep.subr.mxu0 0.0
    %2569 = vmatpush1.msra.mxu0 0.0
    %2570 = vmatprep.subr.mxu0 0.0
    %2571 = vmatpush1.msra.mxu0 0.0
    %2572 = vmatprep.subr.mxu0 0.0
    %2573 = vmatpush1.msra.mxu0 0.0
    %2574 = vmatprep.subr.mxu0 0.0
    %2575 = vmatpush1.msra.mxu0 0.0
    %2576 = vmatprep.subr.mxu0 0.0
    %2577 = vmatpush1.msra.mxu0 0.0
    %2578 = vmatprep.mubr.f32.mxu0 0.0
    %2579 = vmatmul.mubr.f32.gmra.mrb[0].mxu0 %v577
    %v2580 = vpop.f32.mrb[0].mxu0
    %v2581 = vadd.f32 %v2502, %v2580
    %v2582 = vpop.f32.mrb[0].mxu0
    %v2583 = vadd.f32 %v2506, %v2582
    %2584 = vdwg.mxu0
    %2585 = vmatprep.subr.mxu0 0.0
    %2586 = vmatpush1.msra.mxu0 %v2296
    %2587 = vmatprep.subr.mxu0 0.0
    %2588 = vmatpush1.msra.mxu0 %v2299
    %2589 = vmatprep.subr.mxu0 0.0
    %2590 = vmatpush1.msra.mxu0 %v2302
    %2591 = vmatprep.subr.mxu0 0.0
    %2592 = vmatpush1.msra.mxu0 %v2305
    %2593 = vmatprep.subr.mxu0 0.0
    %2594 = vmatpush1.msra.mxu0 %v2308
    %2595 = vmatprep.subr.mxu0 0.0
    %2596 = vmatpush1.msra.mxu0 %v2311
    %2597 = vmatprep.subr.mxu0 0.0
    %2598 = vmatpush1.msra.mxu0 %v2314
    %2599 = vmatprep.subr.mxu0 0.0
    %2600 = vmatpush1.msra.mxu0 %v2317
    %2601 = vmatprep.subr.mxu0 0.0
    %2602 = vmatpush1.msra.mxu0 %v2320
    %2603 = vmatprep.subr.mxu0 0.0
    %2604 = vmatpush1.msra.mxu0 %v2323
    %2605 = vmatprep.subr.mxu0 0.0
    %2606 = vmatpush1.msra.mxu0 %v2326
    %2607 = vmatprep.subr.mxu0 0.0
    %2608 = vmatpush1.msra.mxu0 %v2329
    %2609 = vmatprep.subr.mxu0 0.0
    %2610 = vmatpush1.msra.mxu0 0.0
    %2611 = vmatprep.subr.mxu0 0.0
    %2612 = vmatpush1.msra.mxu0 0.0
    %2613 = vmatprep.subr.mxu0 0.0
    %2614 = vmatpush1.msra.mxu0 0.0
    %2615 = vmatprep.subr.mxu0 0.0
    %2616 = vmatpush1.msra.mxu0 0.0
    %2617 = vmatprep.subr.mxu0 0.0
    %2618 = vmatpush1.msra.mxu0 0.0
    %2619 = vmatprep.subr.mxu0 0.0
    %2620 = vmatpush1.msra.mxu0 0.0
    %2621 = vmatprep.subr.mxu0 0.0
    %2622 = vmatpush1.msra.mxu0 0.0
    %2623 = vmatprep.subr.mxu0 0.0
    %2624 = vmatpush1.msra.mxu0 0.0
    %2625 = vmatprep.subr.mxu0 0.0
    %2626 = vmatpush1.msra.mxu0 0.0
    %2627 = vmatprep.subr.mxu0 0.0
    %2628 = vmatpush1.msra.mxu0 0.0
    %2629 = vmatprep.subr.mxu0 0.0
    %2630 = vmatpush1.msra.mxu0 0.0
    %2631 = vmatprep.subr.mxu0 0.0
    %2632 = vmatpush1.msra.mxu0 0.0
    %2633 = vmatprep.subr.mxu0 0.0
    %2634 = vmatpush1.msra.mxu0 0.0
    %2635 = vmatprep.subr.mxu0 0.0
    %2636 = vmatpush1.msra.mxu0 0.0
    %2637 = vmatprep.subr.mxu0 0.0
    %2638 = vmatpush1.msra.mxu0 0.0
    %2639 = vmatprep.subr.mxu0 0.0
    %2640 = vmatpush1.msra.mxu0 0.0
    %2641 = vmatprep.subr.mxu0 0.0
    %2642 = vmatpush1.msra.mxu0 0.0
    %2643 = vmatprep.subr.mxu0 0.0
    %2644 = vmatpush1.msra.mxu0 0.0
    %2645 = vmatprep.subr.mxu0 0.0
    %2646 = vmatpush1.msra.mxu0 0.0
    %2647 = vmatprep.subr.mxu0 0.0
    %2648 = vmatpush1.msra.mxu0 0.0
    %2649 = vmatprep.mubr.f32.mxu0 0.0
    %2650 = vmatmul.mubr.f32.gmra.mrb[0].mxu0 %v577
    %v2651 = vpop.f32.mrb[0].mxu0
    %v2652 = vadd.f32 %v2510, %v2651
    %v2653 = vpop.f32.mrb[0].mxu0
    %2654 = vdwg.mxu0
    %v2655 = vadd.f32 %v2424, %v2581
    %v2656 = vxor.u32 %v2655, 2147483648
    %v2657 = vmul.f32 %v2656, 1.442695
    %v2658 = vpow.pop %v2657
    %v2659 = vadd.f32 %v2658, 1.0
    %v2660 = vrcp.pop %v2659
    %v2661 = vmul.f32 1.0, %v2660
    %v2662 = vadd.f32 %v2426, %v2583
    %v2663 = vxor.u32 %v2662, 2147483648
    %v2664 = vmul.f32 %v2663, 1.442695
    %v2665 = vpow.pop %v2664
    %v2666 = vadd.f32 %v2665, 1.0
    %v2667 = vrcp.pop %v2666
    %v2668 = vmul.f32 1.0, %v2667
    %2671 = vrot.lane.b32.xlu0 %v2583, 64
    %v2672 = vpop.permute.xlu0 %2671
    %2673 = vrot.lane.b32.xlu0 %v2652, 64
    %v2674 = vpop.permute.xlu0 %2673
    %v2675 = vsel %vm740, %v2672, %v2674
    %v2677 = vmul.f32 %v2661, %v2675
    %2679 = vrot.lane.b32.xlu0 %v2677, 64
    %v2680 = vpop.permute.xlu0 %2679
    %v2682 = vadd.f32 %v2426, %v2680
    %v2683 = vadd.f32 %v2495, %v2680
    %v2684 = vtanh.pop %v2682
    %v2685 = vtanh.pop %v2683
    %v2686 = vsub.f32 1.0, %v2661
    %v2687 = vsub.f32 1.0, %v2668
    %2690 = vrot.lane.b32.xlu0 %v2684, 32
    %v2691 = vpop.permute.xlu0 %2690
    %2692 = vrot.lane.b32.xlu0 %v2685, 32
    %v2693 = vpop.permute.xlu0 %2692
    %v2694 = vsel %vm760, %v2691, %v2693
    %v2697 = vmul.f32 %v2686, %v2691
    %v2698 = vmul.f32 %v2687, %v2694
    %v2699 = vmul.f32 %v2661, 0.0
    %v2700 = vmul.f32 %v2668, 0.0
    %v2701 = vadd.f32 %v2697, %v2699
    %v2702 = vadd.f32 %v2698, %v2700
    %2705 = vrot.lane.b32.xlu0 %v2701, 32
    %v2706 = vpop.permute.xlu0 %2705
    %2707 = vrot.lane.b32.xlu0 %v2702, 32
    %v2708 = vpop.permute.xlu0 %2707
    %v2709 = vsel %vm760, %v2706, %v2708
    %v2710 = vsel %vm575, %v2709, 0
    %2712 = vmatprep.subr.mxu0 %v2295
    %2713 = vmatpush1.msra.mxu0 %v2294
    %2714 = vmatprep.subr.mxu0 %v2298
    %2715 = vmatpush1.msra.mxu0 %v2297
    %2716 = vmatprep.subr.mxu0 %v2301
    %2717 = vmatpush1.msra.mxu0 %v2300
    %2718 = vmatprep.subr.mxu0 %v2304
    %2719 = vmatpush1.msra.mxu0 %v2303
    %2720 = vmatprep.subr.mxu0 %v2307
    %2721 = vmatpush1.msra.mxu0 %v2306
    %2722 = vmatprep.subr.mxu0 %v2310
    %2723 = vmatpush1.msra.mxu0 %v2309
    %2724 = vmatprep.subr.mxu0 %v2313
    %2725 = vmatpush1.msra.mxu0 %v2312
    %2726 = vmatprep.subr.mxu0 %v2316
    %2727 = vmatpush1.msra.mxu0 %v2315
    %2728 = vmatprep.subr.mxu0 %v2319
    %2729 = vmatpush1.msra.mxu0 %v2318
    %2730 = vmatprep.subr.mxu0 %v2322
    %2731 = vmatpush1.msra.mxu0 %v2321
    %2732 = vmatprep.subr.mxu0 %v2325
    %2733 = vmatpush1.msra.mxu0 %v2324
    %2734 = vmatprep.subr.mxu0 %v2328
    %2735 = vmatpush1.msra.mxu0 %v2327
    %2736 = vmatprep.subr.mxu0 0.0
    %2737 = vmatpush1.msra.mxu0 0.0
    %2738 = vmatprep.subr.mxu0 0.0
    %2739 = vmatpush1.msra.mxu0 0.0
    %2740 = vmatprep.subr.mxu0 0.0
    %2741 = vmatpush1.msra.mxu0 0.0
    %2742 = vmatprep.subr.mxu0 0.0
    %2743 = vmatpush1.msra.mxu0 0.0
    %2744 = vmatprep.subr.mxu0 0.0
    %2745 = vmatpush1.msra.mxu0 0.0
    %2746 = vmatprep.subr.mxu0 0.0
    %2747 = vmatpush1.msra.mxu0 0.0
    %2748 = vmatprep.subr.mxu0 0.0
    %2749 = vmatpush1.msra.mxu0 0.0
    %2750 = vmatprep.subr.mxu0 0.0
    %2751 = vmatpush1.msra.mxu0 0.0
    %2752 = vmatprep.subr.mxu0 0.0
    %2753 = vmatpush1.msra.mxu0 0.0
    %2754 = vmatprep.subr.mxu0 0.0
    %2755 = vmatpush1.msra.mxu0 0.0
    %2756 = vmatprep.subr.mxu0 0.0
    %2757 = vmatpush1.msra.mxu0 0.0
    %2758 = vmatprep.subr.mxu0 0.0
    %2759 = vmatpush1.msra.mxu0 0.0
    %2760 = vmatprep.subr.mxu0 0.0
    %2761 = vmatpush1.msra.mxu0 0.0
    %2762 = vmatprep.subr.mxu0 0.0
    %2763 = vmatpush1.msra.mxu0 0.0
    %2764 = vmatprep.subr.mxu0 0.0
    %2765 = vmatpush1.msra.mxu0 0.0
    %2766 = vmatprep.subr.mxu0 0.0
    %2767 = vmatpush1.msra.mxu0 0.0
    %2768 = vmatprep.subr.mxu0 0.0
    %2769 = vmatpush1.msra.mxu0 0.0
    %2770 = vmatprep.subr.mxu0 0.0
    %2771 = vmatpush1.msra.mxu0 0.0
    %2772 = vmatprep.subr.mxu0 0.0
    %2773 = vmatpush1.msra.mxu0 0.0
    %2774 = vmatprep.subr.mxu0 0.0
    %2775 = vmatpush1.msra.mxu0 0.0
    %2776 = vmatprep.mubr.f32.mxu0 0.0
    %2777 = vmatmul.mubr.f32.gmra.mrb[0].mxu0 %v2710
    %v2778 = vpop.f32.mrb[0].mxu0
    %v2779 = vadd.f32 %v2502, %v2778
    %v2780 = vpop.f32.mrb[0].mxu0
    %v2781 = vadd.f32 %v2506, %v2780
    %2782 = vdwg.mxu0
    %2783 = vmatprep.subr.mxu0 0.0
    %2784 = vmatpush1.msra.mxu0 %v2296
    %2785 = vmatprep.subr.mxu0 0.0
    %2786 = vmatpush1.msra.mxu0 %v2299
    %2787 = vmatprep.subr.mxu0 0.0
    %2788 = vmatpush1.msra.mxu0 %v2302
    %2789 = vmatprep.subr.mxu0 0.0
    %2790 = vmatpush1.msra.mxu0 %v2305
    %2791 = vmatprep.subr.mxu0 0.0
    %2792 = vmatpush1.msra.mxu0 %v2308
    %2793 = vmatprep.subr.mxu0 0.0
    %2794 = vmatpush1.msra.mxu0 %v2311
    %2795 = vmatprep.subr.mxu0 0.0
    %2796 = vmatpush1.msra.mxu0 %v2314
    %2797 = vmatprep.subr.mxu0 0.0
    %2798 = vmatpush1.msra.mxu0 %v2317
    %2799 = vmatprep.subr.mxu0 0.0
    %2800 = vmatpush1.msra.mxu0 %v2320
    %2801 = vmatprep.subr.mxu0 0.0
    %2802 = vmatpush1.msra.mxu0 %v2323
    %2803 = vmatprep.subr.mxu0 0.0
    %2804 = vmatpush1.msra.mxu0 %v2326
    %2805 = vmatprep.subr.mxu0 0.0
    %2806 = vmatpush1.msra.mxu0 %v2329
    %2807 = vmatprep.subr.mxu0 0.0
    %2808 = vmatpush1.msra.mxu0 0.0
    %2809 = vmatprep.subr.mxu0 0.0
    %2810 = vmatpush1.msra.mxu0 0.0
    %2811 = vmatprep.subr.mxu0 0.0
    %2812 = vmatpush1.msra.mxu0 0.0
    %2813 = vmatprep.subr.mxu0 0.0
    %2814 = vmatpush1.msra.mxu0 0.0
    %2815 = vmatprep.subr.mxu0 0.0
    %2816 = vmatpush1.msra.mxu0 0.0
    %2817 = vmatprep.subr.mxu0 0.0
    %2818 = vmatpush1.msra.mxu0 0.0
    %2819 = vmatprep.subr.mxu0 0.0
    %2820 = vmatpush1.msra.mxu0 0.0
    %2821 = vmatprep.subr.mxu0 0.0
    %2822 = vmatpush1.msra.mxu0 0.0
    %2823 = vmatprep.subr.mxu0 0.0
    %2824 = vmatpush1.msra.mxu0 0.0
    %2825 = vmatprep.subr.mxu0 0.0
    %2826 = vmatpush1.msra.mxu0 0.0
    %2827 = vmatprep.subr.mxu0 0.0
    %2828 = vmatpush1.msra.mxu0 0.0
    %2829 = vmatprep.subr.mxu0 0.0
    %2830 = vmatpush1.msra.mxu0 0.0
    %2831 = vmatprep.subr.mxu0 0.0
    %2832 = vmatpush1.msra.mxu0 0.0
    %2833 = vmatprep.subr.mxu0 0.0
    %2834 = vmatpush1.msra.mxu0 0.0
    %2835 = vmatprep.subr.mxu0 0.0
    %2836 = vmatpush1.msra.mxu0 0.0
    %2837 = vmatprep.subr.mxu0 0.0
    %2838 = vmatpush1.msra.mxu0 0.0
    %2839 = vmatprep.subr.mxu0 0.0
    %2840 = vmatpush1.msra.mxu0 0.0
    %2841 = vmatprep.subr.mxu0 0.0
    %2842 = vmatpush1.msra.mxu0 0.0
    %2843 = vmatprep.subr.mxu0 0.0
    %2844 = vmatpush1.msra.mxu0 0.0
    %2845 = vmatprep.subr.mxu0 0.0
    %2846 = vmatpush1.msra.mxu0 0.0
    %2847 = vmatprep.mubr.f32.mxu0 0.0
    %2848 = vmatmul.mubr.f32.gmra.mrb[0].mxu0 %v2710
    %v2849 = vpop.f32.mrb[0].mxu0
    %v2850 = vadd.f32 %v2510, %v2849
    %v2851 = vpop.f32.mrb[0].mxu0
    %2852 = vdwg.mxu0
    %v2854 = vrot.slane %v2779, 7
    %v2856 = vadd.f32 %v2424, %v2854
    %v2857 = vxor.u32 %v2856, 2147483648
    %v2858 = vmul.f32 %v2857, 1.442695
    %v2859 = vpow.pop %v2858
    %v2860 = vadd.f32 %v2859, 1.0
    %v2861 = vrcp.pop %v2860
    %v2862 = vmul.f32 1.0, %v2861
    %v2864 = vrot.slane %v2781, 7
    %v2866 = vadd.f32 %v2426, %v2864
    %v2867 = vxor.u32 %v2866, 2147483648
    %v2868 = vmul.f32 %v2867, 1.442695
    %v2869 = vpow.pop %v2868
    %v2870 = vadd.f32 %v2869, 1.0
    %v2871 = vrcp.pop %v2870
    %v2872 = vmul.f32 1.0, %v2871
    %v2874 = vrot.slane %v2850, 7
    %2875 = vrot.lane.b32.xlu0 %v2864, 64
    %v2876 = vpop.permute.xlu0 %2875
    %2877 = vrot.lane.b32.xlu0 %v2874, 64
    %v2878 = vpop.permute.xlu0 %2877
    %v2879 = vsel %vm740, %v2876, %v2878
    %v2881 = vmul.f32 %v2862, %v2879
    %2883 = vrot.lane.b32.xlu0 %v2881, 64
    %v2884 = vpop.permute.xlu0 %2883
    %v2886 = vadd.f32 %v2426, %v2884
    %v2887 = vadd.f32 %v2495, %v2884
    %v2888 = vtanh.pop %v2886
    %v2889 = vtanh.pop %v2887
    %v2890 = vsub.f32 1.0, %v2862
    %v2891 = vsub.f32 1.0, %v2872
    %2894 = vrot.lane.b32.xlu0 %v2888, 32
    %v2895 = vpop.permute.xlu0 %2894
    %2896 = vrot.lane.b32.xlu0 %v2889, 32
    %v2897 = vpop.permute.xlu0 %2896
    %v2898 = vsel %vm760, %v2895, %v2897
    %v2901 = vmul.f32 %v2890, %v2895
    %v2902 = vmul.f32 %v2891, %v2898
    %v2903 = vrot.slane %v2701, 7
    %v2904 = vrot.slane %v2702, 7
    %v2907 = vmul.f32 %v2862, %v2903
    %v2908 = vmul.f32 %v2872, %v2904
    %v2909 = vadd.f32 %v2901, %v2907
    %v2910 = vadd.f32 %v2902, %v2908
    %v2913 = vrot.slane %v2909, 1
    %v2914 = vrot.slane %v2910, 1
    %2915 = vrot.lane.b32.xlu0 %v2913, 32
    %v2916 = vpop.permute.xlu0 %2915
    %2917 = vrot.lane.b32.xlu0 %v2914, 32
    %v2918 = vpop.permute.xlu0 %2917
    %v2919 = vsel %vm760, %v2916, %v2918
    %v2920 = vsel %vm575, %v2919, 0
    %2922 = vmatprep.subr.mxu0 %v2295
    %2923 = vmatpush1.msra.mxu0 %v2294
    %2924 = vmatprep.subr.mxu0 %v2298
    %2925 = vmatpush1.msra.mxu0 %v2297
    %2926 = vmatprep.subr.mxu0 %v2301
    %2927 = vmatpush1.msra.mxu0 %v2300
    %2928 = vmatprep.subr.mxu0 %v2304
    %2929 = vmatpush1.msra.mxu0 %v2303
    %2930 = vmatprep.subr.mxu0 %v2307
    %2931 = vmatpush1.msra.mxu0 %v2306
    %2932 = vmatprep.subr.mxu0 %v2310
    %2933 = vmatpush1.msra.mxu0 %v2309
    %2934 = vmatprep.subr.mxu0 %v2313
    %2935 = vmatpush1.msra.mxu0 %v2312
    %2936 = vmatprep.subr.mxu0 %v2316
    %2937 = vmatpush1.msra.mxu0 %v2315
    %2938 = vmatprep.subr.mxu0 %v2319
    %2939 = vmatpush1.msra.mxu0 %v2318
    %2940 = vmatprep.subr.mxu0 %v2322
    %2941 = vmatpush1.msra.mxu0 %v2321
    %2942 = vmatprep.subr.mxu0 %v2325
    %2943 = vmatpush1.msra.mxu0 %v2324
    %2944 = vmatprep.subr.mxu0 %v2328
    %2945 = vmatpush1.msra.mxu0 %v2327
    %2946 = vmatprep.subr.mxu0 0.0
    %2947 = vmatpush1.msra.mxu0 0.0
    %2948 = vmatprep.subr.mxu0 0.0
    %2949 = vmatpush1.msra.mxu0 0.0
    %2950 = vmatprep.subr.mxu0 0.0
    %2951 = vmatpush1.msra.mxu0 0.0
    %2952 = vmatprep.subr.mxu0 0.0
    %2953 = vmatpush1.msra.mxu0 0.0
    %2954 = vmatprep.subr.mxu0 0.0
    %2955 = vmatpush1.msra.mxu0 0.0
    %2956 = vmatprep.subr.mxu0 0.0
    %2957 = vmatpush1.msra.mxu0 0.0
    %2958 = vmatprep.subr.mxu0 0.0
    %2959 = vmatpush1.msra.mxu0 0.0
    %2960 = vmatprep.subr.mxu0 0.0
    %2961 = vmatpush1.msra.mxu0 0.0
    %2962 = vmatprep.subr.mxu0 0.0
    %2963 = vmatpush1.msra.mxu0 0.0
    %2964 = vmatprep.subr.mxu0 0.0
    %2965 = vmatpush1.msra.mxu0 0.0
    %2966 = vmatprep.subr.mxu0 0.0
    %2967 = vmatpush1.msra.mxu0 0.0
    %2968 = vmatprep.subr.mxu0 0.0
    %2969 = vmatpush1.msra.mxu0 0.0
    %2970 = vmatprep.subr.mxu0 0.0
    %2971 = vmatpush1.msra.mxu0 0.0
    %2972 = vmatprep.subr.mxu0 0.0
    %2973 = vmatpush1.msra.mxu0 0.0
    %2974 = vmatprep.subr.mxu0 0.0
    %2975 = vmatpush1.msra.mxu0 0.0
    %2976 = vmatprep.subr.mxu0 0.0
    %2977 = vmatpush1.msra.mxu0 0.0
    %2978 = vmatprep.subr.mxu0 0.0
    %2979 = vmatpush1.msra.mxu0 0.0
    %2980 = vmatprep.subr.mxu0 0.0
    %2981 = vmatpush1.msra.mxu0 0.0
    %2982 = vmatprep.subr.mxu0 0.0
    %2983 = vmatpush1.msra.mxu0 0.0
    %2984 = vmatprep.subr.mxu0 0.0
    %2985 = vmatpush1.msra.mxu0 0.0
    %2986 = vmatprep.mubr.f32.mxu0 0.0
    %2987 = vmatmul.mubr.f32.gmra.mrb[0].mxu0 %v2920
    %v2988 = vpop.f32.mrb[0].mxu0
    %v2989 = vadd.f32 %v2502, %v2988
    %v2990 = vpop.f32.mrb[0].mxu0
    %v2991 = vadd.f32 %v2506, %v2990
    %2992 = vdwg.mxu0
    %2993 = vmatprep.subr.mxu0 0.0
    %2994 = vmatpush1.msra.mxu0 %v2296
    %2995 = vmatprep.subr.mxu0 0.0
    %2996 = vmatpush1.msra.mxu0 %v2299
    %2997 = vmatprep.subr.mxu0 0.0
    %2998 = vmatpush1.msra.mxu0 %v2302
    %2999 = vmatprep.subr.mxu0 0.0
    %3000 = vmatpush1.msra.mxu0 %v2305
    %3001 = vmatprep.subr.mxu0 0.0
    %3002 = vmatpush1.msra.mxu0 %v2308
    %3003 = vmatprep.subr.mxu0 0.0
    %3004 = vmatpush1.msra.mxu0 %v2311
    %3005 = vmatprep.subr.mxu0 0.0
    %3006 = vmatpush1.msra.mxu0 %v2314
    %3007 = vmatprep.subr.mxu0 0.0
    %3008 = vmatpush1.msra.mxu0 %v2317
    %3009 = vmatprep.subr.mxu0 0.0
    %3010 = vmatpush1.msra.mxu0 %v2320
    %3011 = vmatprep.subr.mxu0 0.0
    %3012 = vmatpush1.msra.mxu0 %v2323
    %3013 = vmatprep.subr.mxu0 0.0
    %3014 = vmatpush1.msra.mxu0 %v2326
    %3015 = vmatprep.subr.mxu0 0.0
    %3016 = vmatpush1.msra.mxu0 %v2329
    %3017 = vmatprep.subr.mxu0 0.0
    %3018 = vmatpush1.msra.mxu0 0.0
    %3019 = vmatprep.subr.mxu0 0.0
    %3020 = vmatpush1.msra.mxu0 0.0
    %3021 = vmatprep.subr.mxu0 0.0
    %3022 = vmatpush1.msra.mxu0 0.0
    %3023 = vmatprep.subr.mxu0 0.0
    %3024 = vmatpush1.msra.mxu0 0.0
    %3025 = vmatprep.subr.mxu0 0.0
    %3026 = vmatpush1.msra.mxu0 0.0
    %3027 = vmatprep.subr.mxu0 0.0
    %3028 = vmatpush1.msra.mxu0 0.0
    %3029 = vmatprep.subr.mxu0 0.0
    %3030 = vmatpush1.msra.mxu0 0.0
    %3031 = vmatprep.subr.mxu0 0.0
    %3032 = vmatpush1.msra.mxu0 0.0
    %3033 = vmatprep.subr.mxu0 0.0
    %3034 = vmatpush1.msra.mxu0 0.0
    %3035 = vmatprep.subr.mxu0 0.0
    %3036 = vmatpush1.msra.mxu0 0.0
    %3037 = vmatprep.subr.mxu0 0.0
    %3038 = vmatpush1.msra.mxu0 0.0
    %3039 = vmatprep.subr.mxu0 0.0
    %3040 = vmatpush1.msra.mxu0 0.0
    %3041 = vmatprep.subr.mxu0 0.0
    %3042 = vmatpush1.msra.mxu0 0.0
    %3043 = vmatprep.subr.mxu0 0.0
    %3044 = vmatpush1.msra.mxu0 0.0
    %3045 = vmatprep.subr.mxu0 0.0
    %3046 = vmatpush1.msra.mxu0 0.0
    %3047 = vmatprep.subr.mxu0 0.0
    %3048 = vmatpush1.msra.mxu0 0.0
    %3049 = vmatprep.subr.mxu0 0.0
    %3050 = vmatpush1.msra.mxu0 0.0
    %3051 = vmatprep.subr.mxu0 0.0
    %3052 = vmatpush1.msra.mxu0 0.0
    %3053 = vmatprep.subr.mxu0 0.0
    %3054 = vmatpush1.msra.mxu0 0.0
    %3055 = vmatprep.subr.mxu0 0.0
    %3056 = vmatpush1.msra.mxu0 0.0
    %3057 = vmatprep.mubr.f32.mxu0 0.0
    %3058 = vmatmul.mubr.f32.gmra.mrb[0].mxu0 %v2920
    %v3059 = vpop.f32.mrb[0].mxu0
    %v3060 = vadd.f32 %v2510, %v3059
    %v3061 = vpop.f32.mrb[0].mxu0
    %3062 = vdwg.mxu0
    %v3064 = vrot.slane %v2989, 6
    %v3066 = vadd.f32 %v2424, %v3064
    %v3067 = vxor.u32 %v3066, 2147483648
    %v3068 = vmul.f32 %v3067, 1.442695
    %v3069 = vpow.pop %v3068
    %v3070 = vadd.f32 %v3069, 1.0
    %v3071 = vrcp.pop %v3070
    %v3072 = vmul.f32 1.0, %v3071
    %v3074 = vrot.slane %v2991, 6
    %v3076 = vadd.f32 %v2426, %v3074
    %v3077 = vxor.u32 %v3076, 2147483648
    %v3078 = vmul.f32 %v3077, 1.442695
    %v3079 = vpow.pop %v3078
    %v3080 = vadd.f32 %v3079, 1.0
    %v3081 = vrcp.pop %v3080
    %v3082 = vmul.f32 1.0, %v3081
    %v3084 = vrot.slane %v3060, 6
    %3085 = vrot.lane.b32.xlu0 %v3074, 64
    %v3086 = vpop.permute.xlu0 %3085
    %3087 = vrot.lane.b32.xlu0 %v3084, 64
    %v3088 = vpop.permute.xlu0 %3087
    %v3089 = vsel %vm740, %v3086, %v3088
    %v3091 = vmul.f32 %v3072, %v3089
    %3093 = vrot.lane.b32.xlu0 %v3091, 64
    %v3094 = vpop.permute.xlu0 %3093
    %v3096 = vadd.f32 %v2426, %v3094
    %v3097 = vadd.f32 %v2495, %v3094
    %v3098 = vtanh.pop %v3096
    %v3099 = vtanh.pop %v3097
    %v3100 = vsub.f32 1.0, %v3072
    %v3101 = vsub.f32 1.0, %v3082
    %3104 = vrot.lane.b32.xlu0 %v3098, 32
    %v3105 = vpop.permute.xlu0 %3104
    %3106 = vrot.lane.b32.xlu0 %v3099, 32
    %v3107 = vpop.permute.xlu0 %3106
    %v3108 = vsel %vm760, %v3105, %v3107
    %v3111 = vmul.f32 %v3100, %v3105
    %v3112 = vmul.f32 %v3101, %v3108
    %v3113 = vrot.slane %v2909, 7
    %v3114 = vrot.slane %v2910, 7
    %v3117 = vmul.f32 %v3072, %v3113
    %v3118 = vmul.f32 %v3082, %v3114
    %v3119 = vadd.f32 %v3111, %v3117
    %v3120 = vadd.f32 %v3112, %v3118
    %v3123 = vrot.slane %v3119, 2
    %v3124 = vrot.slane %v3120, 2
    %3125 = vrot.lane.b32.xlu0 %v3123, 32
    %v3126 = vpop.permute.xlu0 %3125
    %3127 = vrot.lane.b32.xlu0 %v3124, 32
    %v3128 = vpop.permute.xlu0 %3127
    %v3129 = vsel %vm760, %v3126, %v3128
    %v3130 = vsel %vm575, %v3129, 0
    %3132 = vmatprep.subr.mxu0 %v2295
    %3133 = vmatpush1.msra.mxu0 %v2294
    %3134 = vmatprep.subr.mxu0 %v2298
    %3135 = vmatpush1.msra.mxu0 %v2297
    %3136 = vmatprep.subr.mxu0 %v2301
    %3137 = vmatpush1.msra.mxu0 %v2300
    %3138 = vmatprep.subr.mxu0 %v2304
    %3139 = vmatpush1.msra.mxu0 %v2303
    %3140 = vmatprep.subr.mxu0 %v2307
    %3141 = vmatpush1.msra.mxu0 %v2306
    %3142 = vmatprep.subr.mxu0 %v2310
    %3143 = vmatpush1.msra.mxu0 %v2309
    %3144 = vmatprep.subr.mxu0 %v2313
    %3145 = vmatpush1.msra.mxu0 %v2312
    %3146 = vmatprep.subr.mxu0 %v2316
    %3147 = vmatpush1.msra.mxu0 %v2315
    %3148 = vmatprep.subr.mxu0 %v2319
    %3149 = vmatpush1.msra.mxu0 %v2318
    %3150 = vmatprep.subr.mxu0 %v2322
    %3151 = vmatpush1.msra.mxu0 %v2321
    %3152 = vmatprep.subr.mxu0 %v2325
    %3153 = vmatpush1.msra.mxu0 %v2324
    %3154 = vmatprep.subr.mxu0 %v2328
    %3155 = vmatpush1.msra.mxu0 %v2327
    %3156 = vmatprep.subr.mxu0 0.0
    %3157 = vmatpush1.msra.mxu0 0.0
    %3158 = vmatprep.subr.mxu0 0.0
    %3159 = vmatpush1.msra.mxu0 0.0
    %3160 = vmatprep.subr.mxu0 0.0
    %3161 = vmatpush1.msra.mxu0 0.0
    %3162 = vmatprep.subr.mxu0 0.0
    %3163 = vmatpush1.msra.mxu0 0.0
    %3164 = vmatprep.subr.mxu0 0.0
    %3165 = vmatpush1.msra.mxu0 0.0
    %3166 = vmatprep.subr.mxu0 0.0
    %3167 = vmatpush1.msra.mxu0 0.0
    %3168 = vmatprep.subr.mxu0 0.0
    %3169 = vmatpush1.msra.mxu0 0.0
    %3170 = vmatprep.subr.mxu0 0.0
    %3171 = vmatpush1.msra.mxu0 0.0
    %3172 = vmatprep.subr.mxu0 0.0
    %3173 = vmatpush1.msra.mxu0 0.0
    %3174 = vmatprep.subr.mxu0 0.0
    %3175 = vmatpush1.msra.mxu0 0.0
    %3176 = vmatprep.subr.mxu0 0.0
    %3177 = vmatpush1.msra.mxu0 0.0
    %3178 = vmatprep.subr.mxu0 0.0
    %3179 = vmatpush1.msra.mxu0 0.0
    %3180 = vmatprep.subr.mxu0 0.0
    %3181 = vmatpush1.msra.mxu0 0.0
    %3182 = vmatprep.subr.mxu0 0.0
    %3183 = vmatpush1.msra.mxu0 0.0
    %3184 = vmatprep.subr.mxu0 0.0
    %3185 = vmatpush1.msra.mxu0 0.0
    %3186 = vmatprep.subr.mxu0 0.0
    %3187 = vmatpush1.msra.mxu0 0.0
    %3188 = vmatprep.subr.mxu0 0.0
    %3189 = vmatpush1.msra.mxu0 0.0
    %3190 = vmatprep.subr.mxu0 0.0
    %3191 = vmatpush1.msra.mxu0 0.0
    %3192 = vmatprep.subr.mxu0 0.0
    %3193 = vmatpush1.msra.mxu0 0.0
    %3194 = vmatprep.subr.mxu0 0.0
    %3195 = vmatpush1.msra.mxu0 0.0
    %3196 = vmatprep.mubr.f32.mxu0 0.0
    %3197 = vmatmul.mubr.f32.gmra.mrb[0].mxu0 %v3130
    %v3198 = vpop.f32.mrb[0].mxu0
    %v3199 = vadd.f32 %v2502, %v3198
    %v3200 = vpop.f32.mrb[0].mxu0
    %v3201 = vadd.f32 %v2506, %v3200
    %3202 = vdwg.mxu0
    %3203 = vmatprep.subr.mxu0 0.0
    %3204 = vmatpush1.msra.mxu0 %v2296
    %3205 = vmatprep.subr.mxu0 0.0
    %3206 = vmatpush1.msra.mxu0 %v2299
    %3207 = vmatprep.subr.mxu0 0.0
    %3208 = vmatpush1.msra.mxu0 %v2302
    %3209 = vmatprep.subr.mxu0 0.0
    %3210 = vmatpush1.msra.mxu0 %v2305
    %3211 = vmatprep.subr.mxu0 0.0
    %3212 = vmatpush1.msra.mxu0 %v2308
    %3213 = vmatprep.subr.mxu0 0.0
    %3214 = vmatpush1.msra.mxu0 %v2311
    %3215 = vmatprep.subr.mxu0 0.0
    %3216 = vmatpush1.msra.mxu0 %v2314
    %3217 = vmatprep.subr.mxu0 0.0
    %3218 = vmatpush1.msra.mxu0 %v2317
    %3219 = vmatprep.subr.mxu0 0.0
    %3220 = vmatpush1.msra.mxu0 %v2320
    %3221 = vmatprep.subr.mxu0 0.0
    %3222 = vmatpush1.msra.mxu0 %v2323
    %3223 = vmatprep.subr.mxu0 0.0
    %3224 = vmatpush1.msra.mxu0 %v2326
    %3225 = vmatprep.subr.mxu0 0.0
    %3226 = vmatpush1.msra.mxu0 %v2329
    %3227 = vmatprep.subr.mxu0 0.0
    %3228 = vmatpush1.msra.mxu0 0.0
    %3229 = vmatprep.subr.mxu0 0.0
    %3230 = vmatpush1.msra.mxu0 0.0
    %3231 = vmatprep.subr.mxu0 0.0
    %3232 = vmatpush1.msra.mxu0 0.0
    %3233 = vmatprep.subr.mxu0 0.0
    %3234 = vmatpush1.msra.mxu0 0.0
    %3235 = vmatprep.subr.mxu0 0.0
    %3236 = vmatpush1.msra.mxu0 0.0
    %3237 = vmatprep.subr.mxu0 0.0
    %3238 = vmatpush1.msra.mxu0 0.0
    %3239 = vmatprep.subr.mxu0 0.0
    %3240 = vmatpush1.msra.mxu0 0.0
    %3241 = vmatprep.subr.mxu0 0.0
    %3242 = vmatpush1.msra.mxu0 0.0
    %3243 = vmatprep.subr.mxu0 0.0
    %3244 = vmatpush1.msra.mxu0 0.0
    %3245 = vmatprep.subr.mxu0 0.0
    %3246 = vmatpush1.msra.mxu0 0.0
    %3247 = vmatprep.subr.mxu0 0.0
    %3248 = vmatpush1.msra.mxu0 0.0
    %3249 = vmatprep.subr.mxu0 0.0
    %3250 = vmatpush1.msra.mxu0 0.0
    %3251 = vmatprep.subr.mxu0 0.0
    %3252 = vmatpush1.msra.mxu0 0.0
    %3253 = vmatprep.subr.mxu0 0.0
    %3254 = vmatpush1.msra.mxu0 0.0
    %3255 = vmatprep.subr.mxu0 0.0
    %3256 = vmatpush1.msra.mxu0 0.0
    %3257 = vmatprep.subr.mxu0 0.0
    %3258 = vmatpush1.msra.mxu0 0.0
    %3259 = vmatprep.subr.mxu0 0.0
    %3260 = vmatpush1.msra.mxu0 0.0
    %3261 = vmatprep.subr.mxu0 0.0
    %3262 = vmatpush1.msra.mxu0 0.0
    %3263 = vmatprep.subr.mxu0 0.0
    %3264 = vmatpush1.msra.mxu0 0.0
    %3265 = vmatprep.subr.mxu0 0.0
    %3266 = vmatpush1.msra.mxu0 0.0
    %3267 = vmatprep.mubr.f32.mxu0 0.0
    %3268 = vmatmul.mubr.f32.gmra.mrb[0].mxu0 %v3130
    %v3269 = vpop.f32.mrb[0].mxu0
    %v3270 = vadd.f32 %v2510, %v3269
    %v3271 = vpop.f32.mrb[0].mxu0
    %3272 = vdwg.mxu0
    %v3274 = vrot.slane %v3199, 5
    %v3276 = vadd.f32 %v2424, %v3274
    %v3277 = vxor.u32 %v3276, 2147483648
    %v3278 = vmul.f32 %v3277, 1.442695
    %v3279 = vpow.pop %v3278
    %v3280 = vadd.f32 %v3279, 1.0
    %v3281 = vrcp.pop %v3280
    %v3282 = vmul.f32 1.0, %v3281
    %v3284 = vrot.slane %v3201, 5
    %v3286 = vadd.f32 %v2426, %v3284
    %v3287 = vxor.u32 %v3286, 2147483648
    %v3288 = vmul.f32 %v3287, 1.442695
    %v3289 = vpow.pop %v3288
    %v3290 = vadd.f32 %v3289, 1.0
    %v3291 = vrcp.pop %v3290
    %v3292 = vmul.f32 1.0, %v3291
    %v3294 = vrot.slane %v3270, 5
    %3295 = vrot.lane.b32.xlu0 %v3284, 64
    %v3296 = vpop.permute.xlu0 %3295
    %3297 = vrot.lane.b32.xlu0 %v3294, 64
    %v3298 = vpop.permute.xlu0 %3297
    %v3299 = vsel %vm740, %v3296, %v3298
    %v3301 = vmul.f32 %v3282, %v3299
    %3303 = vrot.lane.b32.xlu0 %v3301, 64
    %v3304 = vpop.permute.xlu0 %3303
    %v3306 = vadd.f32 %v2426, %v3304
    %v3307 = vadd.f32 %v2495, %v3304
    %v3308 = vtanh.pop %v3306
    %v3309 = vtanh.pop %v3307
    %v3310 = vsub.f32 1.0, %v3282
    %v3311 = vsub.f32 1.0, %v3292
    %3314 = vrot.lane.b32.xlu0 %v3308, 32
    %v3315 = vpop.permute.xlu0 %3314
    %3316 = vrot.lane.b32.xlu0 %v3309, 32
    %v3317 = vpop.permute.xlu0 %3316
    %v3318 = vsel %vm760, %v3315, %v3317
    %v3321 = vmul.f32 %v3310, %v3315
    %v3322 = vmul.f32 %v3311, %v3318
    %v3323 = vrot.slane %v3119, 7
    %v3324 = vrot.slane %v3120, 7
    %v3327 = vmul.f32 %v3282, %v3323
    %v3328 = vmul.f32 %v3292, %v3324
    %v3329 = vadd.f32 %v3321, %v3327
    %v3330 = vadd.f32 %v3322, %v3328
    %v3333 = vrot.slane %v3329, 3
    %v3334 = vrot.slane %v3330, 3
    %3335 = vrot.lane.b32.xlu0 %v3333, 32
    %v3336 = vpop.permute.xlu0 %3335
    %3337 = vrot.lane.b32.xlu0 %v3334, 32
    %v3338 = vpop.permute.xlu0 %3337
    %v3339 = vsel %vm760, %v3336, %v3338
    %v3340 = vsel %vm575, %v3339, 0
    %3342 = vmatprep.subr.mxu0 %v2295
    %3343 = vmatpush1.msra.mxu0 %v2294
    %3344 = vmatprep.subr.mxu0 %v2298
    %3345 = vmatpush1.msra.mxu0 %v2297
    %3346 = vmatprep.subr.mxu0 %v2301
    %3347 = vmatpush1.msra.mxu0 %v2300
    %3348 = vmatprep.subr.mxu0 %v2304
    %3349 = vmatpush1.msra.mxu0 %v2303
    %3350 = vmatprep.subr.mxu0 %v2307
    %3351 = vmatpush1.msra.mxu0 %v2306
    %3352 = vmatprep.subr.mxu0 %v2310
    %3353 = vmatpush1.msra.mxu0 %v2309
    %3354 = vmatprep.subr.mxu0 %v2313
    %3355 = vmatpush1.msra.mxu0 %v2312
    %3356 = vmatprep.subr.mxu0 %v2316
    %3357 = vmatpush1.msra.mxu0 %v2315
    %3358 = vmatprep.subr.mxu0 %v2319
    %3359 = vmatpush1.msra.mxu0 %v2318
    %3360 = vmatprep.subr.mxu0 %v2322
    %3361 = vmatpush1.msra.mxu0 %v2321
    %3362 = vmatprep.subr.mxu0 %v2325
    %3363 = vmatpush1.msra.mxu0 %v2324
    %3364 = vmatprep.subr.mxu0 %v2328
    %3365 = vmatpush1.msra.mxu0 %v2327
    %3366 = vmatprep.subr.mxu0 0.0
    %3367 = vmatpush1.msra.mxu0 0.0
    %3368 = vmatprep.subr.mxu0 0.0
    %3369 = vmatpush1.msra.mxu0 0.0
    %3370 = vmatprep.subr.mxu0 0.0
    %3371 = vmatpush1.msra.mxu0 0.0
    %3372 = vmatprep.subr.mxu0 0.0
    %3373 = vmatpush1.msra.mxu0 0.0
    %3374 = vmatprep.subr.mxu0 0.0
    %3375 = vmatpush1.msra.mxu0 0.0
    %3376 = vmatprep.subr.mxu0 0.0
    %3377 = vmatpush1.msra.mxu0 0.0
    %3378 = vmatprep.subr.mxu0 0.0
    %3379 = vmatpush1.msra.mxu0 0.0
    %3380 = vmatprep.subr.mxu0 0.0
    %3381 = vmatpush1.msra.mxu0 0.0
    %3382 = vmatprep.subr.mxu0 0.0
    %3383 = vmatpush1.msra.mxu0 0.0
    %3384 = vmatprep.subr.mxu0 0.0
    %3385 = vmatpush1.msra.mxu0 0.0
    %3386 = vmatprep.subr.mxu0 0.0
    %3387 = vmatpush1.msra.mxu0 0.0
    %3388 = vmatprep.subr.mxu0 0.0
    %3389 = vmatpush1.msra.mxu0 0.0
    %3390 = vmatprep.subr.mxu0 0.0
    %3391 = vmatpush1.msra.mxu0 0.0
    %3392 = vmatprep.subr.mxu0 0.0
    %3393 = vmatpush1.msra.mxu0 0.0
    %3394 = vmatprep.subr.mxu0 0.0
    %3395 = vmatpush1.msra.mxu0 0.0
    %3396 = vmatprep.subr.mxu0 0.0
    %3397 = vmatpush1.msra.mxu0 0.0
    %3398 = vmatprep.subr.mxu0 0.0
    %3399 = vmatpush1.msra.mxu0 0.0
    %3400 = vmatprep.subr.mxu0 0.0
    %3401 = vmatpush1.msra.mxu0 0.0
    %3402 = vmatprep.subr.mxu0 0.0
    %3403 = vmatpush1.msra.mxu0 0.0
    %3404 = vmatprep.subr.mxu0 0.0
    %3405 = vmatpush1.msra.mxu0 0.0
    %3406 = vmatprep.mubr.f32.mxu0 0.0
    %3407 = vmatmul.mubr.f32.gmra.mrb[0].mxu0 %v3340
    %v3408 = vpop.f32.mrb[0].mxu0
    %v3409 = vadd.f32 %v2502, %v3408
    %v3410 = vpop.f32.mrb[0].mxu0
    %v3411 = vadd.f32 %v2506, %v3410
    %3412 = vdwg.mxu0
    %3413 = vmatprep.subr.mxu0 0.0
    %3414 = vmatpush1.msra.mxu0 %v2296
    %3415 = vmatprep.subr.mxu0 0.0
    %3416 = vmatpush1.msra.mxu0 %v2299
    %3417 = vmatprep.subr.mxu0 0.0
    %3418 = vmatpush1.msra.mxu0 %v2302
    %3419 = vmatprep.subr.mxu0 0.0
    %3420 = vmatpush1.msra.mxu0 %v2305
    %3421 = vmatprep.subr.mxu0 0.0
    %3422 = vmatpush1.msra.mxu0 %v2308
    %3423 = vmatprep.subr.mxu0 0.0
    %3424 = vmatpush1.msra.mxu0 %v2311
    %3425 = vmatprep.subr.mxu0 0.0
    %3426 = vmatpush1.msra.mxu0 %v2314
    %3427 = vmatprep.subr.mxu0 0.0
    %3428 = vmatpush1.msra.mxu0 %v2317
    %3429 = vmatprep.subr.mxu0 0.0
    %3430 = vmatpush1.msra.mxu0 %v2320
    %3431 = vmatprep.subr.mxu0 0.0
    %3432 = vmatpush1.msra.mxu0 %v2323
    %3433 = vmatprep.subr.mxu0 0.0
    %3434 = vmatpush1.msra.mxu0 %v2326
    %3435 = vmatprep.subr.mxu0 0.0
    %3436 = vmatpush1.msra.mxu0 %v2329
    %3437 = vmatprep.subr.mxu0 0.0
    %3438 = vmatpush1.msra.mxu0 0.0
    %3439 = vmatprep.subr.mxu0 0.0
    %3440 = vmatpush1.msra.mxu0 0.0
    %3441 = vmatprep.subr.mxu0 0.0
    %3442 = vmatpush1.msra.mxu0 0.0
    %3443 = vmatprep.subr.mxu0 0.0
    %3444 = vmatpush1.msra.mxu0 0.0
    %3445 = vmatprep.subr.mxu0 0.0
    %3446 = vmatpush1.msra.mxu0 0.0
    %3447 = vmatprep.subr.mxu0 0.0
    %3448 = vmatpush1.msra.mxu0 0.0
    %3449 = vmatprep.subr.mxu0 0.0
    %3450 = vmatpush1.msra.mxu0 0.0
    %3451 = vmatprep.subr.mxu0 0.0
    %3452 = vmatpush1.msra.mxu0 0.0
    %3453 = vmatprep.subr.mxu0 0.0
    %3454 = vmatpush1.msra.mxu0 0.0
    %3455 = vmatprep.subr.mxu0 0.0
    %3456 = vmatpush1.msra.mxu0 0.0
    %3457 = vmatprep.subr.mxu0 0.0
    %3458 = vmatpush1.msra.mxu0 0.0
    %3459 = vmatprep.subr.mxu0 0.0
    %3460 = vmatpush1.msra.mxu0 0.0
    %3461 = vmatprep.subr.mxu0 0.0
    %3462 = vmatpush1.msra.mxu0 0.0
    %3463 = vmatprep.subr.mxu0 0.0
    %3464 = vmatpush1.msra.mxu0 0.0
    %3465 = vmatprep.subr.mxu0 0.0
    %3466 = vmatpush1.msra.mxu0 0.0
    %3467 = vmatprep.subr.mxu0 0.0
    %3468 = vmatpush1.msra.mxu0 0.0
    %3469 = vmatprep.subr.mxu0 0.0
    %3470 = vmatpush1.msra.mxu0 0.0
    %3471 = vmatprep.subr.mxu0 0.0
    %3472 = vmatpush1.msra.mxu0 0.0
    %3473 = vmatprep.subr.mxu0 0.0
    %3474 = vmatpush1.msra.mxu0 0.0
    %3475 = vmatprep.subr.mxu0 0.0
    %3476 = vmatpush1.msra.mxu0 0.0
    %3477 = vmatprep.mubr.f32.mxu0 0.0
    %3478 = vmatmul.mubr.f32.gmra.mrb[0].mxu0 %v3340
    %v3479 = vpop.f32.mrb[0].mxu0
    %v3480 = vadd.f32 %v2510, %v3479
    %v3481 = vpop.f32.mrb[0].mxu0
    %3482 = vdwg.mxu0
    %v3484 = vrot.slane %v3409, 4
    %v3486 = vadd.f32 %v2424, %v3484
    %v3487 = vxor.u32 %v3486, 2147483648
    %v3488 = vmul.f32 %v3487, 1.442695
    %v3489 = vpow.pop %v3488
    %v3490 = vadd.f32 %v3489, 1.0
    %v3491 = vrcp.pop %v3490
    %v3492 = vmul.f32 1.0, %v3491
    %v3494 = vrot.slane %v3411, 4
    %v3496 = vadd.f32 %v2426, %v3494
    %v3497 = vxor.u32 %v3496, 2147483648
    %v3498 = vmul.f32 %v3497, 1.442695
    %v3499 = vpow.pop %v3498
    %v3500 = vadd.f32 %v3499, 1.0
    %v3501 = vrcp.pop %v3500
    %v3502 = vmul.f32 1.0, %v3501
    %v3504 = vrot.slane %v3480, 4
    %3505 = vrot.lane.b32.xlu0 %v3494, 64
    %v3506 = vpop.permute.xlu0 %3505
    %3507 = vrot.lane.b32.xlu0 %v3504, 64
    %v3508 = vpop.permute.xlu0 %3507
    %v3509 = vsel %vm740, %v3506, %v3508
    %v3511 = vmul.f32 %v3492, %v3509
    %3513 = vrot.lane.b32.xlu0 %v3511, 64
    %v3514 = vpop.permute.xlu0 %3513
    %v3516 = vadd.f32 %v2426, %v3514
    %v3517 = vadd.f32 %v2495, %v3514
    %v3518 = vtanh.pop %v3516
    %v3519 = vtanh.pop %v3517
    %v3520 = vsub.f32 1.0, %v3492
    %v3521 = vsub.f32 1.0, %v3502
    %3524 = vrot.lane.b32.xlu0 %v3518, 32
    %v3525 = vpop.permute.xlu0 %3524
    %3526 = vrot.lane.b32.xlu0 %v3519, 32
    %v3527 = vpop.permute.xlu0 %3526
    %v3528 = vsel %vm760, %v3525, %v3527
    %v3531 = vmul.f32 %v3520, %v3525
    %v3532 = vmul.f32 %v3521, %v3528
    %v3533 = vrot.slane %v3329, 7
    %v3534 = vrot.slane %v3330, 7
    %v3537 = vmul.f32 %v3492, %v3533
    %v3538 = vmul.f32 %v3502, %v3534
    %v3539 = vadd.f32 %v3531, %v3537
    %v3540 = vadd.f32 %v3532, %v3538
    %v3543 = vrot.slane %v3539, 4
    %v3544 = vrot.slane %v3540, 4
    %3545 = vrot.lane.b32.xlu0 %v3543, 32
    %v3546 = vpop.permute.xlu0 %3545
    %3547 = vrot.lane.b32.xlu0 %v3544, 32
    %v3548 = vpop.permute.xlu0 %3547
    %v3549 = vsel %vm760, %v3546, %v3548
    %v3550 = vsel %vm575, %v3549, 0
    %3552 = vmatprep.subr.mxu0 %v2295
    %3553 = vmatpush1.msra.mxu0 %v2294
    %3554 = vmatprep.subr.mxu0 %v2298
    %3555 = vmatpush1.msra.mxu0 %v2297
    %3556 = vmatprep.subr.mxu0 %v2301
    %3557 = vmatpush1.msra.mxu0 %v2300
    %3558 = vmatprep.subr.mxu0 %v2304
    %3559 = vmatpush1.msra.mxu0 %v2303
    %3560 = vmatprep.subr.mxu0 %v2307
    %3561 = vmatpush1.msra.mxu0 %v2306
    %3562 = vmatprep.subr.mxu0 %v2310
    %3563 = vmatpush1.msra.mxu0 %v2309
    %3564 = vmatprep.subr.mxu0 %v2313
    %3565 = vmatpush1.msra.mxu0 %v2312
    %3566 = vmatprep.subr.mxu0 %v2316
    %3567 = vmatpush1.msra.mxu0 %v2315
    %3568 = vmatprep.subr.mxu0 %v2319
    %3569 = vmatpush1.msra.mxu0 %v2318
    %3570 = vmatprep.subr.mxu0 %v2322
    %3571 = vmatpush1.msra.mxu0 %v2321
    %3572 = vmatprep.subr.mxu0 %v2325
    %3573 = vmatpush1.msra.mxu0 %v2324
    %3574 = vmatprep.subr.mxu0 %v2328
    %3575 = vmatpush1.msra.mxu0 %v2327
    %3576 = vmatprep.subr.mxu0 0.0
    %3577 = vmatpush1.msra.mxu0 0.0
    %3578 = vmatprep.subr.mxu0 0.0
    %3579 = vmatpush1.msra.mxu0 0.0
    %3580 = vmatprep.subr.mxu0 0.0
    %3581 = vmatpush1.msra.mxu0 0.0
    %3582 = vmatprep.subr.mxu0 0.0
    %3583 = vmatpush1.msra.mxu0 0.0
    %3584 = vmatprep.subr.mxu0 0.0
    %3585 = vmatpush1.msra.mxu0 0.0
    %3586 = vmatprep.subr.mxu0 0.0
    %3587 = vmatpush1.msra.mxu0 0.0
    %3588 = vmatprep.subr.mxu0 0.0
    %3589 = vmatpush1.msra.mxu0 0.0
    %3590 = vmatprep.subr.mxu0 0.0
    %3591 = vmatpush1.msra.mxu0 0.0
    %3592 = vmatprep.subr.mxu0 0.0
    %3593 = vmatpush1.msra.mxu0 0.0
    %3594 = vmatprep.subr.mxu0 0.0
    %3595 = vmatpush1.msra.mxu0 0.0
    %3596 = vmatprep.subr.mxu0 0.0
    %3597 = vmatpush1.msra.mxu0 0.0
    %3598 = vmatprep.subr.mxu0 0.0
    %3599 = vmatpush1.msra.mxu0 0.0
    %3600 = vmatprep.subr.mxu0 0.0
    %3601 = vmatpush1.msra.mxu0 0.0
    %3602 = vmatprep.subr.mxu0 0.0
    %3603 = vmatpush1.msra.mxu0 0.0
    %3604 = vmatprep.subr.mxu0 0.0
    %3605 = vmatpush1.msra.mxu0 0.0
    %3606 = vmatprep.subr.mxu0 0.0
    %3607 = vmatpush1.msra.mxu0 0.0
    %3608 = vmatprep.subr.mxu0 0.0
    %3609 = vmatpush1.msra.mxu0 0.0
    %3610 = vmatprep.subr.mxu0 0.0
    %3611 = vmatpush1.msra.mxu0 0.0
    %3612 = vmatprep.subr.mxu0 0.0
    %3613 = vmatpush1.msra.mxu0 0.0
    %3614 = vmatprep.subr.mxu0 0.0
    %3615 = vmatpush1.msra.mxu0 0.0
    %3616 = vmatprep.mubr.f32.mxu0 0.0
    %3617 = vmatmul.mubr.f32.gmra.mrb[0].mxu0 %v3550
    %v3618 = vpop.f32.mrb[0].mxu0
    %v3619 = vadd.f32 %v2502, %v3618
    %v3620 = vpop.f32.mrb[0].mxu0
    %v3621 = vadd.f32 %v2506, %v3620
    %3622 = vdwg.mxu0
    %3623 = vmatprep.subr.mxu0 0.0
    %3624 = vmatpush1.msra.mxu0 %v2296
    %3625 = vmatprep.subr.mxu0 0.0
    %3626 = vmatpush1.msra.mxu0 %v2299
    %3627 = vmatprep.subr.mxu0 0.0
    %3628 = vmatpush1.msra.mxu0 %v2302
    %3629 = vmatprep.subr.mxu0 0.0
    %3630 = vmatpush1.msra.mxu0 %v2305
    %3631 = vmatprep.subr.mxu0 0.0
    %3632 = vmatpush1.msra.mxu0 %v2308
    %3633 = vmatprep.subr.mxu0 0.0
    %3634 = vmatpush1.msra.mxu0 %v2311
    %3635 = vmatprep.subr.mxu0 0.0
    %3636 = vmatpush1.msra.mxu0 %v2314
    %3637 = vmatprep.subr.mxu0 0.0
    %3638 = vmatpush1.msra.mxu0 %v2317
    %3639 = vmatprep.subr.mxu0 0.0
    %3640 = vmatpush1.msra.mxu0 %v2320
    %3641 = vmatprep.subr.mxu0 0.0
    %3642 = vmatpush1.msra.mxu0 %v2323
    %3643 = vmatprep.subr.mxu0 0.0
    %3644 = vmatpush1.msra.mxu0 %v2326
    %3645 = vmatprep.subr.mxu0 0.0
    %3646 = vmatpush1.msra.mxu0 %v2329
    %3647 = vmatprep.subr.mxu0 0.0
    %3648 = vmatpush1.msra.mxu0 0.0
    %3649 = vmatprep.subr.mxu0 0.0
    %3650 = vmatpush1.msra.mxu0 0.0
    %3651 = vmatprep.subr.mxu0 0.0
    %3652 = vmatpush1.msra.mxu0 0.0
    %3653 = vmatprep.subr.mxu0 0.0
    %3654 = vmatpush1.msra.mxu0 0.0
    %3655 = vmatprep.subr.mxu0 0.0
    %3656 = vmatpush1.msra.mxu0 0.0
    %3657 = vmatprep.subr.mxu0 0.0
    %3658 = vmatpush1.msra.mxu0 0.0
    %3659 = vmatprep.subr.mxu0 0.0
    %3660 = vmatpush1.msra.mxu0 0.0
    %3661 = vmatprep.subr.mxu0 0.0
    %3662 = vmatpush1.msra.mxu0 0.0
    %3663 = vmatprep.subr.mxu0 0.0
    %3664 = vmatpush1.msra.mxu0 0.0
    %3665 = vmatprep.subr.mxu0 0.0
    %3666 = vmatpush1.msra.mxu0 0.0
    %3667 = vmatprep.subr.mxu0 0.0
    %3668 = vmatpush1.msra.mxu0 0.0
    %3669 = vmatprep.subr.mxu0 0.0
    %3670 = vmatpush1.msra.mxu0 0.0
    %3671 = vmatprep.subr.mxu0 0.0
    %3672 = vmatpush1.msra.mxu0 0.0
    %3673 = vmatprep.subr.mxu0 0.0
    %3674 = vmatpush1.msra.mxu0 0.0
    %3675 = vmatprep.subr.mxu0 0.0
    %3676 = vmatpush1.msra.mxu0 0.0
    %3677 = vmatprep.subr.mxu0 0.0
    %3678 = vmatpush1.msra.mxu0 0.0
    %3679 = vmatprep.subr.mxu0 0.0
    %3680 = vmatpush1.msra.mxu0 0.0
    %3681 = vmatprep.subr.mxu0 0.0
    %3682 = vmatpush1.msra.mxu0 0.0
    %3683 = vmatprep.subr.mxu0 0.0
    %3684 = vmatpush1.msra.mxu0 0.0
    %3685 = vmatprep.subr.mxu0 0.0
    %3686 = vmatpush1.msra.mxu0 0.0
    %3687 = vmatprep.mubr.f32.mxu0 0.0
    %3688 = vmatmul.mubr.f32.gmra.mrb[0].mxu0 %v3550
    %v3689 = vpop.f32.mrb[0].mxu0
    %v3690 = vadd.f32 %v2510, %v3689
    %v3691 = vpop.f32.mrb[0].mxu0
    %3692 = vdwg.mxu0
    %v3694 = vrot.slane %v3619, 3
    %v3696 = vadd.f32 %v2424, %v3694
    %v3697 = vxor.u32 %v3696, 2147483648
    %v3698 = vmul.f32 %v3697, 1.442695
    %v3699 = vpow.pop %v3698
    %v3700 = vadd.f32 %v3699, 1.0
    %v3701 = vrcp.pop %v3700
    %v3702 = vmul.f32 1.0, %v3701
    %v3704 = vrot.slane %v3621, 3
    %v3706 = vadd.f32 %v2426, %v3704
    %v3707 = vxor.u32 %v3706, 2147483648
    %v3708 = vmul.f32 %v3707, 1.442695
    %v3709 = vpow.pop %v3708
    %v3710 = vadd.f32 %v3709, 1.0
    %v3711 = vrcp.pop %v3710
    %v3712 = vmul.f32 1.0, %v3711
    %v3714 = vrot.slane %v3690, 3
    %3715 = vrot.lane.b32.xlu0 %v3704, 64
    %v3716 = vpop.permute.xlu0 %3715
    %3717 = vrot.lane.b32.xlu0 %v3714, 64
    %v3718 = vpop.permute.xlu0 %3717
    %v3719 = vsel %vm740, %v3716, %v3718
    %v3721 = vmul.f32 %v3702, %v3719
    %3723 = vrot.lane.b32.xlu0 %v3721, 64
    %v3724 = vpop.permute.xlu0 %3723
    %v3726 = vadd.f32 %v2426, %v3724
    %v3727 = vadd.f32 %v2495, %v3724
    %v3728 = vtanh.pop %v3726
    %v3729 = vtanh.pop %v3727
    %v3730 = vsub.f32 1.0, %v3702
    %v3731 = vsub.f32 1.0, %v3712
    %3734 = vrot.lane.b32.xlu0 %v3728, 32
    %v3735 = vpop.permute.xlu0 %3734
    %3736 = vrot.lane.b32.xlu0 %v3729, 32
    %v3737 = vpop.permute.xlu0 %3736
    %v3738 = vsel %vm760, %v3735, %v3737
    %v3741 = vmul.f32 %v3730, %v3735
    %v3742 = vmul.f32 %v3731, %v3738
    %v3743 = vrot.slane %v3539, 7
    %v3744 = vrot.slane %v3540, 7
    %v3747 = vmul.f32 %v3702, %v3743
    %v3748 = vmul.f32 %v3712, %v3744
    %v3749 = vadd.f32 %v3741, %v3747
    %v3750 = vadd.f32 %v3742, %v3748
    %v3753 = vrot.slane %v3749, 5
    %v3754 = vrot.slane %v3750, 5
    %3755 = vrot.lane.b32.xlu0 %v3753, 32
    %v3756 = vpop.permute.xlu0 %3755
    %3757 = vrot.lane.b32.xlu0 %v3754, 32
    %v3758 = vpop.permute.xlu0 %3757
    %v3759 = vsel %vm760, %v3756, %v3758
    %v3760 = vsel %vm575, %v3759, 0
    %3762 = vmatprep.subr.mxu0 %v2295
    %3763 = vmatpush1.msra.mxu0 %v2294
    %3764 = vmatprep.subr.mxu0 %v2298
    %3765 = vmatpush1.msra.mxu0 %v2297
    %3766 = vmatprep.subr.mxu0 %v2301
    %3767 = vmatpush1.msra.mxu0 %v2300
    %3768 = vmatprep.subr.mxu0 %v2304
    %3769 = vmatpush1.msra.mxu0 %v2303
    %3770 = vmatprep.subr.mxu0 %v2307
    %3771 = vmatpush1.msra.mxu0 %v2306
    %3772 = vmatprep.subr.mxu0 %v2310
    %3773 = vmatpush1.msra.mxu0 %v2309
    %3774 = vmatprep.subr.mxu0 %v2313
    %3775 = vmatpush1.msra.mxu0 %v2312
    %3776 = vmatprep.subr.mxu0 %v2316
    %3777 = vmatpush1.msra.mxu0 %v2315
    %3778 = vmatprep.subr.mxu0 %v2319
    %3779 = vmatpush1.msra.mxu0 %v2318
    %3780 = vmatprep.subr.mxu0 %v2322
    %3781 = vmatpush1.msra.mxu0 %v2321
    %3782 = vmatprep.subr.mxu0 %v2325
    %3783 = vmatpush1.msra.mxu0 %v2324
    %3784 = vmatprep.subr.mxu0 %v2328
    %3785 = vmatpush1.msra.mxu0 %v2327
    %3786 = vmatprep.subr.mxu0 0.0
    %3787 = vmatpush1.msra.mxu0 0.0
    %3788 = vmatprep.subr.mxu0 0.0
    %3789 = vmatpush1.msra.mxu0 0.0
    %3790 = vmatprep.subr.mxu0 0.0
    %3791 = vmatpush1.msra.mxu0 0.0
    %3792 = vmatprep.subr.mxu0 0.0
    %3793 = vmatpush1.msra.mxu0 0.0
    %3794 = vmatprep.subr.mxu0 0.0
    %3795 = vmatpush1.msra.mxu0 0.0
    %3796 = vmatprep.subr.mxu0 0.0
    %3797 = vmatpush1.msra.mxu0 0.0
    %3798 = vmatprep.subr.mxu0 0.0
    %3799 = vmatpush1.msra.mxu0 0.0
    %3800 = vmatprep.subr.mxu0 0.0
    %3801 = vmatpush1.msra.mxu0 0.0
    %3802 = vmatprep.subr.mxu0 0.0
    %3803 = vmatpush1.msra.mxu0 0.0
    %3804 = vmatprep.subr.mxu0 0.0
    %3805 = vmatpush1.msra.mxu0 0.0
    %3806 = vmatprep.subr.mxu0 0.0
    %3807 = vmatpush1.msra.mxu0 0.0
    %3808 = vmatprep.subr.mxu0 0.0
    %3809 = vmatpush1.msra.mxu0 0.0
    %3810 = vmatprep.subr.mxu0 0.0
    %3811 = vmatpush1.msra.mxu0 0.0
    %3812 = vmatprep.subr.mxu0 0.0
    %3813 = vmatpush1.msra.mxu0 0.0
    %3814 = vmatprep.subr.mxu0 0.0
    %3815 = vmatpush1.msra.mxu0 0.0
    %3816 = vmatprep.subr.mxu0 0.0
    %3817 = vmatpush1.msra.mxu0 0.0
    %3818 = vmatprep.subr.mxu0 0.0
    %3819 = vmatpush1.msra.mxu0 0.0
    %3820 = vmatprep.subr.mxu0 0.0
    %3821 = vmatpush1.msra.mxu0 0.0
    %3822 = vmatprep.subr.mxu0 0.0
    %3823 = vmatpush1.msra.mxu0 0.0
    %3824 = vmatprep.subr.mxu0 0.0
    %3825 = vmatpush1.msra.mxu0 0.0
    %3826 = vmatprep.mubr.f32.mxu0 0.0
    %3827 = vmatmul.mubr.f32.gmra.mrb[0].mxu0 %v3760
    %v3828 = vpop.f32.mrb[0].mxu0
    %v3829 = vadd.f32 %v2502, %v3828
    %v3830 = vpop.f32.mrb[0].mxu0
    %v3831 = vadd.f32 %v2506, %v3830
    %3832 = vdwg.mxu0
    %3833 = vmatprep.subr.mxu0 0.0
    %3834 = vmatpush1.msra.mxu0 %v2296
    %3835 = vmatprep.subr.mxu0 0.0
    %3836 = vmatpush1.msra.mxu0 %v2299
    %3837 = vmatprep.subr.mxu0 0.0
    %3838 = vmatpush1.msra.mxu0 %v2302
    %3839 = vmatprep.subr.mxu0 0.0
    %3840 = vmatpush1.msra.mxu0 %v2305
    %3841 = vmatprep.subr.mxu0 0.0
    %3842 = vmatpush1.msra.mxu0 %v2308
    %3843 = vmatprep.subr.mxu0 0.0
    %3844 = vmatpush1.msra.mxu0 %v2311
    %3845 = vmatprep.subr.mxu0 0.0
    %3846 = vmatpush1.msra.mxu0 %v2314
    %3847 = vmatprep.subr.mxu0 0.0
    %3848 = vmatpush1.msra.mxu0 %v2317
    %3849 = vmatprep.subr.mxu0 0.0
    %3850 = vmatpush1.msra.mxu0 %v2320
    %3851 = vmatprep.subr.mxu0 0.0
    %3852 = vmatpush1.msra.mxu0 %v2323
    %3853 = vmatprep.subr.mxu0 0.0
    %3854 = vmatpush1.msra.mxu0 %v2326
    %3855 = vmatprep.subr.mxu0 0.0
    %3856 = vmatpush1.msra.mxu0 %v2329
    %3857 = vmatprep.subr.mxu0 0.0
    %3858 = vmatpush1.msra.mxu0 0.0
    %3859 = vmatprep.subr.mxu0 0.0
    %3860 = vmatpush1.msra.mxu0 0.0
    %3861 = vmatprep.subr.mxu0 0.0
    %3862 = vmatpush1.msra.mxu0 0.0
    %3863 = vmatprep.subr.mxu0 0.0
    %3864 = vmatpush1.msra.mxu0 0.0
    %3865 = vmatprep.subr.mxu0 0.0
    %3866 = vmatpush1.msra.mxu0 0.0
    %3867 = vmatprep.subr.mxu0 0.0
    %3868 = vmatpush1.msra.mxu0 0.0
    %3869 = vmatprep.subr.mxu0 0.0
    %3870 = vmatpush1.msra.mxu0 0.0
    %3871 = vmatprep.subr.mxu0 0.0
    %3872 = vmatpush1.msra.mxu0 0.0
    %3873 = vmatprep.subr.mxu0 0.0
    %3874 = vmatpush1.msra.mxu0 0.0
    %3875 = vmatprep.subr.mxu0 0.0
    %3876 = vmatpush1.msra.mxu0 0.0
    %3877 = vmatprep.subr.mxu0 0.0
    %3878 = vmatpush1.msra.mxu0 0.0
    %3879 = vmatprep.subr.mxu0 0.0
    %3880 = vmatpush1.msra.mxu0 0.0
    %3881 = vmatprep.subr.mxu0 0.0
    %3882 = vmatpush1.msra.mxu0 0.0
    %3883 = vmatprep.subr.mxu0 0.0
    %3884 = vmatpush1.msra.mxu0 0.0
    %3885 = vmatprep.subr.mxu0 0.0
    %3886 = vmatpush1.msra.mxu0 0.0
    %3887 = vmatprep.subr.mxu0 0.0
    %3888 = vmatpush1.msra.mxu0 0.0
    %3889 = vmatprep.subr.mxu0 0.0
    %3890 = vmatpush1.msra.mxu0 0.0
    %3891 = vmatprep.subr.mxu0 0.0
    %3892 = vmatpush1.msra.mxu0 0.0
    %3893 = vmatprep.subr.mxu0 0.0
    %3894 = vmatpush1.msra.mxu0 0.0
    %3895 = vmatprep.subr.mxu0 0.0
    %3896 = vmatpush1.msra.mxu0 0.0
    %3897 = vmatprep.mubr.f32.mxu0 0.0
    %3898 = vmatmul.mubr.f32.gmra.mrb[0].mxu0 %v3760
    %v3899 = vpop.f32.mrb[0].mxu0
    %v3900 = vadd.f32 %v2510, %v3899
    %v3901 = vpop.f32.mrb[0].mxu0
    %3902 = vdwg.mxu0
    %v3904 = vrot.slane %v3829, 2
    %v3906 = vadd.f32 %v2424, %v3904
    %v3907 = vxor.u32 %v3906, 2147483648
    %v3908 = vmul.f32 %v3907, 1.442695
    %v3909 = vpow.pop %v3908
    %v3910 = vadd.f32 %v3909, 1.0
    %v3911 = vrcp.pop %v3910
    %v3912 = vmul.f32 1.0, %v3911
    %v3914 = vrot.slane %v3831, 2
    %v3916 = vadd.f32 %v2426, %v3914
    %v3917 = vxor.u32 %v3916, 2147483648
    %v3918 = vmul.f32 %v3917, 1.442695
    %v3919 = vpow.pop %v3918
    %v3920 = vadd.f32 %v3919, 1.0
    %v3921 = vrcp.pop %v3920
    %v3922 = vmul.f32 1.0, %v3921
    %v3924 = vrot.slane %v3900, 2
    %3925 = vrot.lane.b32.xlu0 %v3914, 64
    %v3926 = vpop.permute.xlu0 %3925
    %3927 = vrot.lane.b32.xlu0 %v3924, 64
    %v3928 = vpop.permute.xlu0 %3927
    %v3929 = vsel %vm740, %v3926, %v3928
    %v3931 = vmul.f32 %v3912, %v3929
    %3933 = vrot.lane.b32.xlu0 %v3931, 64
    %v3934 = vpop.permute.xlu0 %3933
    %v3936 = vadd.f32 %v2426, %v3934
    %v3937 = vadd.f32 %v2495, %v3934
    %v3938 = vtanh.pop %v3936
    %v3939 = vtanh.pop %v3937
    %v3940 = vsub.f32 1.0, %v3912
    %v3941 = vsub.f32 1.0, %v3922
    %3944 = vrot.lane.b32.xlu0 %v3938, 32
    %v3945 = vpop.permute.xlu0 %3944
    %3946 = vrot.lane.b32.xlu0 %v3939, 32
    %v3947 = vpop.permute.xlu0 %3946
    %v3948 = vsel %vm760, %v3945, %v3947
    %v3951 = vmul.f32 %v3940, %v3945
    %v3952 = vmul.f32 %v3941, %v3948
    %v3953 = vrot.slane %v3749, 7
    %v3954 = vrot.slane %v3750, 7
    %v3957 = vmul.f32 %v3912, %v3953
    %v3958 = vmul.f32 %v3922, %v3954
    %v3959 = vadd.f32 %v3951, %v3957
    %v3960 = vadd.f32 %v3952, %v3958
    %v3963 = vrot.slane %v3959, 6
    %v3964 = vrot.slane %v3960, 6
    %3965 = vrot.lane.b32.xlu0 %v3963, 32
    %v3966 = vpop.permute.xlu0 %3965
    %3967 = vrot.lane.b32.xlu0 %v3964, 32
    %v3968 = vpop.permute.xlu0 %3967
    %v3969 = vsel %vm760, %v3966, %v3968
    %v3970 = vsel %vm575, %v3969, 0
    %3972 = vmatprep.subr.mxu0 %v2295
    %3973 = vmatpush1.msra.mxu0 %v2294
    %3974 = vmatprep.subr.mxu0 %v2298
    %3975 = vmatpush1.msra.mxu0 %v2297
    %3976 = vmatprep.subr.mxu0 %v2301
    %3977 = vmatpush1.msra.mxu0 %v2300
    %3978 = vmatprep.subr.mxu0 %v2304
    %3979 = vmatpush1.msra.mxu0 %v2303
    %3980 = vmatprep.subr.mxu0 %v2307
    %3981 = vmatpush1.msra.mxu0 %v2306
    %3982 = vmatprep.subr.mxu0 %v2310
    %3983 = vmatpush1.msra.mxu0 %v2309
    %3984 = vmatprep.subr.mxu0 %v2313
    %3985 = vmatpush1.msra.mxu0 %v2312
    %3986 = vmatprep.subr.mxu0 %v2316
    %3987 = vmatpush1.msra.mxu0 %v2315
    %3988 = vmatprep.subr.mxu0 %v2319
    %3989 = vmatpush1.msra.mxu0 %v2318
    %3990 = vmatprep.subr.mxu0 %v2322
    %3991 = vmatpush1.msra.mxu0 %v2321
    %3992 = vmatprep.subr.mxu0 %v2325
    %3993 = vmatpush1.msra.mxu0 %v2324
    %3994 = vmatprep.subr.mxu0 %v2328
    %3995 = vmatpush1.msra.mxu0 %v2327
    %3996 = vmatprep.subr.mxu0 0.0
    %3997 = vmatpush1.msra.mxu0 0.0
    %3998 = vmatprep.subr.mxu0 0.0
    %3999 = vmatpush1.msra.mxu0 0.0
    %4000 = vmatprep.subr.mxu0 0.0
    %4001 = vmatpush1.msra.mxu0 0.0
    %4002 = vmatprep.subr.mxu0 0.0
    %4003 = vmatpush1.msra.mxu0 0.0
    %4004 = vmatprep.subr.mxu0 0.0
    %4005 = vmatpush1.msra.mxu0 0.0
    %4006 = vmatprep.subr.mxu0 0.0
    %4007 = vmatpush1.msra.mxu0 0.0
    %4008 = vmatprep.subr.mxu0 0.0
    %4009 = vmatpush1.msra.mxu0 0.0
    %4010 = vmatprep.subr.mxu0 0.0
    %4011 = vmatpush1.msra.mxu0 0.0
    %4012 = vmatprep.subr.mxu0 0.0
    %4013 = vmatpush1.msra.mxu0 0.0
    %4014 = vmatprep.subr.mxu0 0.0
    %4015 = vmatpush1.msra.mxu0 0.0
    %4016 = vmatprep.subr.mxu0 0.0
    %4017 = vmatpush1.msra.mxu0 0.0
    %4018 = vmatprep.subr.mxu0 0.0
    %4019 = vmatpush1.msra.mxu0 0.0
    %4020 = vmatprep.subr.mxu0 0.0
    %4021 = vmatpush1.msra.mxu0 0.0
    %4022 = vmatprep.subr.mxu0 0.0
    %4023 = vmatpush1.msra.mxu0 0.0
    %4024 = vmatprep.subr.mxu0 0.0
    %4025 = vmatpush1.msra.mxu0 0.0
    %4026 = vmatprep.subr.mxu0 0.0
    %4027 = vmatpush1.msra.mxu0 0.0
    %4028 = vmatprep.subr.mxu0 0.0
    %4029 = vmatpush1.msra.mxu0 0.0
    %4030 = vmatprep.subr.mxu0 0.0
    %4031 = vmatpush1.msra.mxu0 0.0
    %4032 = vmatprep.subr.mxu0 0.0
    %4033 = vmatpush1.msra.mxu0 0.0
    %4034 = vmatprep.subr.mxu0 0.0
    %4035 = vmatpush1.msra.mxu0 0.0
    %4036 = vmatprep.mubr.f32.mxu0 0.0
    %4037 = vmatmul.mubr.f32.gmra.mrb[0].mxu0 %v3970
    %v4038 = vpop.f32.mrb[0].mxu0
    %v4039 = vadd.f32 %v2502, %v4038
    %v4040 = vpop.f32.mrb[0].mxu0
    %v4041 = vadd.f32 %v2506, %v4040
    %4042 = vdwg.mxu0
    %4043 = vmatprep.subr.mxu0 0.0
    %4044 = vmatpush1.msra.mxu0 %v2296
    %4045 = vmatprep.subr.mxu0 0.0
    %4046 = vmatpush1.msra.mxu0 %v2299
    %4047 = vmatprep.subr.mxu0 0.0
    %4048 = vmatpush1.msra.mxu0 %v2302
    %4049 = vmatprep.subr.mxu0 0.0
    %4050 = vmatpush1.msra.mxu0 %v2305
    %4051 = vmatprep.subr.mxu0 0.0
    %4052 = vmatpush1.msra.mxu0 %v2308
    %4053 = vmatprep.subr.mxu0 0.0
    %4054 = vmatpush1.msra.mxu0 %v2311
    %4055 = vmatprep.subr.mxu0 0.0
    %4056 = vmatpush1.msra.mxu0 %v2314
    %4057 = vmatprep.subr.mxu0 0.0
    %4058 = vmatpush1.msra.mxu0 %v2317
    %4059 = vmatprep.subr.mxu0 0.0
    %4060 = vmatpush1.msra.mxu0 %v2320
    %4061 = vmatprep.subr.mxu0 0.0
    %4062 = vmatpush1.msra.mxu0 %v2323
    %4063 = vmatprep.subr.mxu0 0.0
    %4064 = vmatpush1.msra.mxu0 %v2326
    %4065 = vmatprep.subr.mxu0 0.0
    %4066 = vmatpush1.msra.mxu0 %v2329
    %4067 = vmatprep.subr.mxu0 0.0
    %4068 = vmatpush1.msra.mxu0 0.0
    %4069 = vmatprep.subr.mxu0 0.0
    %4070 = vmatpush1.msra.mxu0 0.0
    %4071 = vmatprep.subr.mxu0 0.0
    %4072 = vmatpush1.msra.mxu0 0.0
    %4073 = vmatprep.subr.mxu0 0.0
    %4074 = vmatpush1.msra.mxu0 0.0
    %4075 = vmatprep.subr.mxu0 0.0
    %4076 = vmatpush1.msra.mxu0 0.0
    %4077 = vmatprep.subr.mxu0 0.0
    %4078 = vmatpush1.msra.mxu0 0.0
    %4079 = vmatprep.subr.mxu0 0.0
    %4080 = vmatpush1.msra.mxu0 0.0
    %4081 = vmatprep.subr.mxu0 0.0
    %4082 = vmatpush1.msra.mxu0 0.0
    %4083 = vmatprep.subr.mxu0 0.0
    %4084 = vmatpush1.msra.mxu0 0.0
    %4085 = vmatprep.subr.mxu0 0.0
    %4086 = vmatpush1.msra.mxu0 0.0
    %4087 = vmatprep.subr.mxu0 0.0
    %4088 = vmatpush1.msra.mxu0 0.0
    %4089 = vmatprep.subr.mxu0 0.0
    %4090 = vmatpush1.msra.mxu0 0.0
    %4091 = vmatprep.subr.mxu0 0.0
    %4092 = vmatpush1.msra.mxu0 0.0
    %4093 = vmatprep.subr.mxu0 0.0
    %4094 = vmatpush1.msra.mxu0 0.0
    %4095 = vmatprep.subr.mxu0 0.0
    %4096 = vmatpush1.msra.mxu0 0.0
    %4097 = vmatprep.subr.mxu0 0.0
    %4098 = vmatpush1.msra.mxu0 0.0
    %4099 = vmatprep.subr.mxu0 0.0
    %4100 = vmatpush1.msra.mxu0 0.0
    %4101 = vmatprep.subr.mxu0 0.0
    %4102 = vmatpush1.msra.mxu0 0.0
    %4103 = vmatprep.subr.mxu0 0.0
    %4104 = vmatpush1.msra.mxu0 0.0
    %4105 = vmatprep.subr.mxu0 0.0
    %4106 = vmatpush1.msra.mxu0 0.0
    %4107 = vmatprep.mubr.f32.mxu0 0.0
    %4108 = vmatmul.mubr.f32.gmra.mrb[0].mxu0 %v3970
    %v4109 = vpop.f32.mrb[0].mxu0
    %v4110 = vadd.f32 %v2510, %v4109
    %v4111 = vpop.f32.mrb[0].mxu0
    %4112 = vdwg.mxu0
    %v4114 = vrot.slane %v4039, 1
    %v4116 = vadd.f32 %v2424, %v4114
    %v4117 = vxor.u32 %v4116, 2147483648
    %v4118 = vmul.f32 %v4117, 1.442695
    %v4119 = vpow.pop %v4118
    %v4120 = vadd.f32 %v4119, 1.0
    %v4121 = vrcp.pop %v4120
    %v4122 = vmul.f32 1.0, %v4121
    %v4124 = vrot.slane %v4041, 1
    %v4126 = vadd.f32 %v2426, %v4124
    %v4127 = vxor.u32 %v4126, 2147483648
    %v4128 = vmul.f32 %v4127, 1.442695
    %v4129 = vpow.pop %v4128
    %v4130 = vadd.f32 %v4129, 1.0
    %v4131 = vrcp.pop %v4130
    %v4132 = vmul.f32 1.0, %v4131
    %v4134 = vrot.slane %v4110, 1
    %4135 = vrot.lane.b32.xlu0 %v4124, 64
    %v4136 = vpop.permute.xlu0 %4135
    %4137 = vrot.lane.b32.xlu0 %v4134, 64
    %v4138 = vpop.permute.xlu0 %4137
    %v4139 = vsel %vm740, %v4136, %v4138
    %v4141 = vmul.f32 %v4122, %v4139
    %4143 = vrot.lane.b32.xlu0 %v4141, 64
    %v4144 = vpop.permute.xlu0 %4143
    %v4146 = vadd.f32 %v2426, %v4144
    %v4147 = vadd.f32 %v2495, %v4144
    %v4148 = vtanh.pop %v4146
    %v4149 = vtanh.pop %v4147
    %v4150 = vsub.f32 1.0, %v4122
    %v4151 = vsub.f32 1.0, %v4132
    %4154 = vrot.lane.b32.xlu0 %v4148, 32
    %v4155 = vpop.permute.xlu0 %4154
    %4156 = vrot.lane.b32.xlu0 %v4149, 32
    %v4157 = vpop.permute.xlu0 %4156
    %v4158 = vsel %vm760, %v4155, %v4157
    %v4161 = vmul.f32 %v4150, %v4155
    %v4162 = vmul.f32 %v4151, %v4158
    %v4163 = vrot.slane %v3959, 7
    %v4164 = vrot.slane %v3960, 7
    %v4167 = vmul.f32 %v4122, %v4163
    %v4168 = vmul.f32 %v4132, %v4164
    %v4169 = vadd.f32 %v4161, %v4167
    %v4170 = vadd.f32 %v4162, %v4168
    %v4171 = vsel %vm2238, %v2701, %v2909
    %v4172 = vsel %vm2238, %v2702, %v2910
    %v4173 = vsel %vm2241, %v4171, %v3119
    %v4174 = vsel %vm2241, %v4172, %v3120
    %v4175 = vsel %vm2244, %v4173, %v3329
    %v4176 = vsel %vm2244, %v4174, %v3330
    %v4177 = vsel %vm2247, %v4175, %v3539
    %v4178 = vsel %vm2247, %v4176, %v3540
    %v4179 = vsel %vm2250, %v4177, %v3749
    %v4180 = vsel %vm2250, %v4178, %v3750
    %v4181 = vsel %vm266, %v4179, %v3959
    %v4182 = vsel %vm266, %v4180, %v3960
    %v4183 = vsel %vm2255, %v4181, %v4169
    %v4184 = vsel %vm2255, %v4182, %v4170
    %v4185 = vld [vmem:[#allocation17] sm:$0xff]
    %v4186 = vld [vmem:[#allocation17 + $0x8] sm:$0xff]
    %v4187 = vld [vmem:[#allocation17 + $0x10] sm:$0xff]
    %v4188 = vld [vmem:[#allocation17 + $0x18] sm:$0xff]
    %v4189 = vld [vmem:[#allocation17 + $0x20] sm:$0xff]
    %v4190 = vld [vmem:[#allocation17 + $0x28] sm:$0xff]
    %v4191 = vld [vmem:[#allocation17 + $0x30] sm:$0xff]
    %v4192 = vld [vmem:[#allocation17 + $0x38] sm:$0xff]
    %v4193 = vld [vmem:[#allocation17 + $0x40] sm:$0xff]
    %v4194 = vld [vmem:[#allocation17 + $0x48] sm:$0xff]
    %v4195 = vld [vmem:[#allocation17 + $0x50] sm:$0xff]
    %v4196 = vld [vmem:[#allocation17 + $0x58] sm:$0xff]
    %v4197 = vld [vmem:[#allocation17 + $0x60] sm:$0xff]
    %v4198 = vld [vmem:[#allocation17 + $0x68] sm:$0xff]
    %v4199 = vld [vmem:[#allocation17 + $0x70] sm:$0xff]
    %v4200 = vld [vmem:[#allocation17 + $0x78] sm:$0xff]
    %v4201 = vld [vmem:[#allocation17 + $0x80] sm:$0xff]
    %v4202 = vld [vmem:[#allocation17 + $0x88] sm:$0xff]
    %v4203 = vld [vmem:[#allocation17 + $0x90] sm:$0xff]
    %v4204 = vld [vmem:[#allocation17 + $0x98] sm:$0xff]
    %v4205 = vld [vmem:[#allocation17 + $0xa0] sm:$0xff]
    %v4206 = vld [vmem:[#allocation17 + $0xa8] sm:$0xff]
    %v4207 = vld [vmem:[#allocation17 + $0xb0] sm:$0xff]
    %v4208 = vld [vmem:[#allocation17 + $0xb8] sm:$0xff]
    %v4209 = vld [vmem:[#allocation17 + $0xc0] sm:$0xff]
    %v4210 = vld [vmem:[#allocation17 + $0xc8] sm:$0xff]
    %v4211 = vld [vmem:[#allocation17 + $0xd0] sm:$0xff]
    %v4212 = vld [vmem:[#allocation17 + $0xd8] sm:$0xff]
    %v4213 = vld [vmem:[#allocation17 + $0xe0] sm:$0xff]
    %v4214 = vld [vmem:[#allocation17 + $0xe8] sm:$0xff]
    %v4215 = vld [vmem:[#allocation17 + $0xf0] sm:$0xff]
    %v4216 = vld [vmem:[#allocation17 + $0xf8] sm:$0xff]
    %v4217 = vld [vmem:[#allocation17 + $0x100] sm:$0xff]
    %v4218 = vld [vmem:[#allocation17 + $0x108] sm:$0xff]
    %v4219 = vld [vmem:[#allocation17 + $0x110] sm:$0xff]
    %v4220 = vld [vmem:[#allocation17 + $0x118] sm:$0xff]
    %v4221 = vld [vmem:[#allocation18] sm:$0xff]
    %v4222 = vld [vmem:[#allocation18 + $0x8] sm:$0xff]
    %v4223 = vld [vmem:[#allocation18 + $0x10] sm:$0xff]
    %v4224 = vld [vmem:[#allocation18 + $0x18] sm:$0xff]
    %v4225 = vld [vmem:[#allocation18 + $0x20] sm:$0xff]
    %v4226 = vld [vmem:[#allocation18 + $0x28] sm:$0xff]
    %v4227 = vld [vmem:[#allocation18 + $0x30] sm:$0xff]
    %v4228 = vld [vmem:[#allocation18 + $0x38] sm:$0xff]
    %v4229 = vld [vmem:[#allocation18 + $0x40] sm:$0xff]
    %v4230 = vld [vmem:[#allocation18 + $0x48] sm:$0xff]
    %v4231 = vld [vmem:[#allocation18 + $0x50] sm:$0xff]
    %v4232 = vld [vmem:[#allocation18 + $0x58] sm:$0xff]
    %v4233 = vld [vmem:[#allocation18 + $0x60] sm:$0xff]
    %v4234 = vld [vmem:[#allocation18 + $0x68] sm:$0xff]
    %v4235 = vld [vmem:[#allocation18 + $0x70] sm:$0xff]
    %v4236 = vld [vmem:[#allocation18 + $0x78] sm:$0xff]
    %v4237 = vld [vmem:[#allocation18 + $0x80] sm:$0xff]
    %v4238 = vld [vmem:[#allocation18 + $0x88] sm:$0xff]
    %v4239 = vld [vmem:[#allocation18 + $0x90] sm:$0xff]
    %v4240 = vld [vmem:[#allocation18 + $0x98] sm:$0xff]
    %v4241 = vld [vmem:[#allocation18 + $0xa0] sm:$0xff]
    %v4242 = vld [vmem:[#allocation18 + $0xa8] sm:$0xff]
    %v4243 = vld [vmem:[#allocation18 + $0xb0] sm:$0xff]
    %v4244 = vld [vmem:[#allocation18 + $0xb8] sm:$0xff]
    %v4245 = vld [vmem:[#allocation18 + $0xc0] sm:$0xff]
    %v4246 = vld [vmem:[#allocation18 + $0xc8] sm:$0xff]
    %v4247 = vld [vmem:[#allocation18 + $0xd0] sm:$0xff]
    %v4248 = vld [vmem:[#allocation18 + $0xd8] sm:$0xff]
    %v4249 = vld [vmem:[#allocation18 + $0xe0] sm:$0xff]
    %v4250 = vld [vmem:[#allocation18 + $0xe8] sm:$0xff]
    %v4251 = vld [vmem:[#allocation18 + $0xf0] sm:$0xff]
    %v4252 = vld [vmem:[#allocation18 + $0xf8] sm:$0xff]
    %v4253 = vld [vmem:[#allocation18 + $0x100] sm:$0xff]
    %v4254 = vld [vmem:[#allocation18 + $0x108] sm:$0xff]
    %v4255 = vld [vmem:[#allocation18 + $0x110] sm:$0xff]
    %v4256 = vld [vmem:[#allocation18 + $0x118] sm:$0xff]
    %v4257 = vld [vmem:[#allocation20] sm:$0x7]
    %v4258 = vld [vmem:[#allocation21] sm:$0x7]
    %v4260 = vlaneseq
    %v4261 = vshrl.u32 %v4260, 7
    %v4262 = vsub.s32 0, %v4261
    %v4263 = vrot.slane %v4257, %v4262
    %v4264 = vlaneseq
    %v4265 = vshrl.u32 %v4264, 7
    %v4266 = vsub.s32 1, %v4265
    %v4267 = vrot.slane %v4257, %v4266
    %v4268 = vlaneseq
    %v4269 = vshrl.u32 %v4268, 7
    %v4270 = vsub.s32 2, %v4269
    %v4271 = vrot.slane %v4257, %v4270
    %4277 = vrot.lane.b32.xlu0 %v4183, 32
    %v4278 = vpop.permute.xlu0 %4277
    %4279 = vrot.lane.b32.xlu0 %v4184, 32
    %v4280 = vpop.permute.xlu0 %4279
    %v4281 = vsel %vm760, %v4278, %v4280
    %v4282 = vsel %vm575, %v4281, 0
    %4284 = vmatprep.subr.mxu0 %v4186
    %4285 = vmatpush1.msra.mxu0 %v4185
    %4286 = vmatprep.subr.mxu0 %v4189
    %4287 = vmatpush1.msra.mxu0 %v4188
    %4288 = vmatprep.subr.mxu0 %v4192
    %4289 = vmatpush1.msra.mxu0 %v4191
    %4290 = vmatprep.subr.mxu0 %v4195
    %4291 = vmatpush1.msra.mxu0 %v4194
    %4292 = vmatprep.subr.mxu0 %v4198
    %4293 = vmatpush1.msra.mxu0 %v4197
    %4294 = vmatprep.subr.mxu0 %v4201
    %4295 = vmatpush1.msra.mxu0 %v4200
    %4296 = vmatprep.subr.mxu0 %v4204
    %4297 = vmatpush1.msra.mxu0 %v4203
    %4298 = vmatprep.subr.mxu0 %v4207
    %4299 = vmatpush1.msra.mxu0 %v4206
    %4300 = vmatprep.subr.mxu0 %v4210
    %4301 = vmatpush1.msra.mxu0 %v4209
    %4302 = vmatprep.subr.mxu0 %v4213
    %4303 = vmatpush1.msra.mxu0 %v4212
    %4304 = vmatprep.subr.mxu0 %v4216
    %4305 = vmatpush1.msra.mxu0 %v4215
    %4306 = vmatprep.subr.mxu0 %v4219
    %4307 = vmatpush1.msra.mxu0 %v4218
    %4308 = vmatprep.subr.mxu0 0.0
    %4309 = vmatpush1.msra.mxu0 0.0
    %4310 = vmatprep.subr.mxu0 0.0
    %4311 = vmatpush1.msra.mxu0 0.0
    %4312 = vmatprep.subr.mxu0 0.0
    %4313 = vmatpush1.msra.mxu0 0.0
    %4314 = vmatprep.subr.mxu0 0.0
    %4315 = vmatpush1.msra.mxu0 0.0
    %4316 = vmatprep.subr.mxu0 0.0
    %4317 = vmatpush1.msra.mxu0 0.0
    %4318 = vmatprep.subr.mxu0 0.0
    %4319 = vmatpush1.msra.mxu0 0.0
    %4320 = vmatprep.subr.mxu0 0.0
    %4321 = vmatpush1.msra.mxu0 0.0
    %4322 = vmatprep.subr.mxu0 0.0
    %4323 = vmatpush1.msra.mxu0 0.0
    %4324 = vmatprep.subr.mxu0 0.0
    %4325 = vmatpush1.msra.mxu0 0.0
    %4326 = vmatprep.subr.mxu0 0.0
    %4327 = vmatpush1.msra.mxu0 0.0
    %4328 = vmatprep.subr.mxu0 0.0
    %4329 = vmatpush1.msra.mxu0 0.0
    %4330 = vmatprep.subr.mxu0 0.0
    %4331 = vmatpush1.msra.mxu0 0.0
    %4332 = vmatprep.subr.mxu0 0.0
    %4333 = vmatpush1.msra.mxu0 0.0
    %4334 = vmatprep.subr.mxu0 0.0
    %4335 = vmatpush1.msra.mxu0 0.0
    %4336 = vmatprep.subr.mxu0 0.0
    %4337 = vmatpush1.msra.mxu0 0.0
    %4338 = vmatprep.subr.mxu0 0.0
    %4339 = vmatpush1.msra.mxu0 0.0
    %4340 = vmatprep.subr.mxu0 0.0
    %4341 = vmatpush1.msra.mxu0 0.0
    %4342 = vmatprep.subr.mxu0 0.0
    %4343 = vmatpush1.msra.mxu0 0.0
    %4344 = vmatprep.subr.mxu0 0.0
    %4345 = vmatpush1.msra.mxu0 0.0
    %4346 = vmatprep.subr.mxu0 0.0
    %4347 = vmatpush1.msra.mxu0 0.0
    %4348 = vmatprep.mubr.f32.mxu0 0.0
    %4349 = vmatmul.mubr.f32.gmra.mrb[0].mxu0 %v4282
    %v4350 = vpop.f32.mrb[0].mxu0
    %v4351 = vadd.f32 %v4263, %v4350
    %v4352 = vpop.f32.mrb[0].mxu0
    %v4353 = vadd.f32 %v4267, %v4352
    %4354 = vdwg.mxu0
    %4355 = vmatprep.subr.mxu0 0.0
    %4356 = vmatpush1.msra.mxu0 %v4187
    %4357 = vmatprep.subr.mxu0 0.0
    %4358 = vmatpush1.msra.mxu0 %v4190
    %4359 = vmatprep.subr.mxu0 0.0
    %4360 = vmatpush1.msra.mxu0 %v4193
    %4361 = vmatprep.subr.mxu0 0.0
    %4362 = vmatpush1.msra.mxu0 %v4196
    %4363 = vmatprep.subr.mxu0 0.0
    %4364 = vmatpush1.msra.mxu0 %v4199
    %4365 = vmatprep.subr.mxu0 0.0
    %4366 = vmatpush1.msra.mxu0 %v4202
    %4367 = vmatprep.subr.mxu0 0.0
    %4368 = vmatpush1.msra.mxu0 %v4205
    %4369 = vmatprep.subr.mxu0 0.0
    %4370 = vmatpush1.msra.mxu0 %v4208
    %4371 = vmatprep.subr.mxu0 0.0
    %4372 = vmatpush1.msra.mxu0 %v4211
    %4373 = vmatprep.subr.mxu0 0.0
    %4374 = vmatpush1.msra.mxu0 %v4214
    %4375 = vmatprep.subr.mxu0 0.0
    %4376 = vmatpush1.msra.mxu0 %v4217
    %4377 = vmatprep.subr.mxu0 0.0
    %4378 = vmatpush1.msra.mxu0 %v4220
    %4379 = vmatprep.subr.mxu0 0.0
    %4380 = vmatpush1.msra.mxu0 0.0
    %4381 = vmatprep.subr.mxu0 0.0
    %4382 = vmatpush1.msra.mxu0 0.0
    %4383 = vmatprep.subr.mxu0 0.0
    %4384 = vmatpush1.msra.mxu0 0.0
    %4385 = vmatprep.subr.mxu0 0.0
    %4386 = vmatpush1.msra.mxu0 0.0
    %4387 = vmatprep.subr.mxu0 0.0
    %4388 = vmatpush1.msra.mxu0 0.0
    %4389 = vmatprep.subr.mxu0 0.0
    %4390 = vmatpush1.msra.mxu0 0.0
    %4391 = vmatprep.subr.mxu0 0.0
    %4392 = vmatpush1.msra.mxu0 0.0
    %4393 = vmatprep.subr.mxu0 0.0
    %4394 = vmatpush1.msra.mxu0 0.0
    %4395 = vmatprep.subr.mxu0 0.0
    %4396 = vmatpush1.msra.mxu0 0.0
    %4397 = vmatprep.subr.mxu0 0.0
    %4398 = vmatpush1.msra.mxu0 0.0
    %4399 = vmatprep.subr.mxu0 0.0
    %4400 = vmatpush1.msra.mxu0 0.0
    %4401 = vmatprep.subr.mxu0 0.0
    %4402 = vmatpush1.msra.mxu0 0.0
    %4403 = vmatprep.subr.mxu0 0.0
    %4404 = vmatpush1.msra.mxu0 0.0
    %4405 = vmatprep.subr.mxu0 0.0
    %4406 = vmatpush1.msra.mxu0 0.0
    %4407 = vmatprep.subr.mxu0 0.0
    %4408 = vmatpush1.msra.mxu0 0.0
    %4409 = vmatprep.subr.mxu0 0.0
    %4410 = vmatpush1.msra.mxu0 0.0
    %4411 = vmatprep.subr.mxu0 0.0
    %4412 = vmatpush1.msra.mxu0 0.0
    %4413 = vmatprep.subr.mxu0 0.0
    %4414 = vmatpush1.msra.mxu0 0.0
    %4415 = vmatprep.subr.mxu0 0.0
    %4416 = vmatpush1.msra.mxu0 0.0
    %4417 = vmatprep.subr.mxu0 0.0
    %4418 = vmatpush1.msra.mxu0 0.0
    %4419 = vmatprep.mubr.f32.mxu0 0.0
    %4420 = vmatmul.mubr.f32.gmra.mrb[0].mxu0 %v4282
    %v4421 = vpop.f32.mrb[0].mxu0
    %v4422 = vadd.f32 %v4271, %v4421
    %v4423 = vpop.f32.mrb[0].mxu0
    %4424 = vdwg.mxu0
    %v4426 = vlaneseq
    %v4427 = vshrl.u32 %v4426, 7
    %v4428 = vsub.s32 0, %v4427
    %v4429 = vrot.slane %v4258, %v4428
    %v4430 = vlaneseq
    %v4431 = vshrl.u32 %v4430, 7
    %v4432 = vsub.s32 1, %v4431
    %v4433 = vrot.slane %v4258, %v4432
    %v4434 = vlaneseq
    %v4435 = vshrl.u32 %v4434, 7
    %v4436 = vsub.s32 2, %v4435
    %v4437 = vrot.slane %v4258, %v4436
    %4441 = vmatprep.subr.mxu0 %v4222
    %4442 = vmatpush1.msra.mxu0 %v4221
    %4443 = vmatprep.subr.mxu0 %v4225
    %4444 = vmatpush1.msra.mxu0 %v4224
    %4445 = vmatprep.subr.mxu0 %v4228
    %4446 = vmatpush1.msra.mxu0 %v4227
    %4447 = vmatprep.subr.mxu0 %v4231
    %4448 = vmatpush1.msra.mxu0 %v4230
    %4449 = vmatprep.subr.mxu0 %v4234
    %4450 = vmatpush1.msra.mxu0 %v4233
    %4451 = vmatprep.subr.mxu0 %v4237
    %4452 = vmatpush1.msra.mxu0 %v4236
    %4453 = vmatprep.subr.mxu0 %v4240
    %4454 = vmatpush1.msra.mxu0 %v4239
    %4455 = vmatprep.subr.mxu0 %v4243
    %4456 = vmatpush1.msra.mxu0 %v4242
    %4457 = vmatprep.subr.mxu0 %v4246
    %4458 = vmatpush1.msra.mxu0 %v4245
    %4459 = vmatprep.subr.mxu0 %v4249
    %4460 = vmatpush1.msra.mxu0 %v4248
    %4461 = vmatprep.subr.mxu0 %v4252
    %4462 = vmatpush1.msra.mxu0 %v4251
    %4463 = vmatprep.subr.mxu0 %v4255
    %4464 = vmatpush1.msra.mxu0 %v4254
    %4465 = vmatprep.subr.mxu0 0.0
    %4466 = vmatpush1.msra.mxu0 0.0
    %4467 = vmatprep.subr.mxu0 0.0
    %4468 = vmatpush1.msra.mxu0 0.0
    %4469 = vmatprep.subr.mxu0 0.0
    %4470 = vmatpush1.msra.mxu0 0.0
    %4471 = vmatprep.subr.mxu0 0.0
    %4472 = vmatpush1.msra.mxu0 0.0
    %4473 = vmatprep.subr.mxu0 0.0
    %4474 = vmatpush1.msra.mxu0 0.0
    %4475 = vmatprep.subr.mxu0 0.0
    %4476 = vmatpush1.msra.mxu0 0.0
    %4477 = vmatprep.subr.mxu0 0.0
    %4478 = vmatpush1.msra.mxu0 0.0
    %4479 = vmatprep.subr.mxu0 0.0
    %4480 = vmatpush1.msra.mxu0 0.0
    %4481 = vmatprep.subr.mxu0 0.0
    %4482 = vmatpush1.msra.mxu0 0.0
    %4483 = vmatprep.subr.mxu0 0.0
    %4484 = vmatpush1.msra.mxu0 0.0
    %4485 = vmatprep.subr.mxu0 0.0
    %4486 = vmatpush1.msra.mxu0 0.0
    %4487 = vmatprep.subr.mxu0 0.0
    %4488 = vmatpush1.msra.mxu0 0.0
    %4489 = vmatprep.subr.mxu0 0.0
    %4490 = vmatpush1.msra.mxu0 0.0
    %4491 = vmatprep.subr.mxu0 0.0
    %4492 = vmatpush1.msra.mxu0 0.0
    %4493 = vmatprep.subr.mxu0 0.0
    %4494 = vmatpush1.msra.mxu0 0.0
    %4495 = vmatprep.subr.mxu0 0.0
    %4496 = vmatpush1.msra.mxu0 0.0
    %4497 = vmatprep.subr.mxu0 0.0
    %4498 = vmatpush1.msra.mxu0 0.0
    %4499 = vmatprep.subr.mxu0 0.0
    %4500 = vmatpush1.msra.mxu0 0.0
    %4501 = vmatprep.subr.mxu0 0.0
    %4502 = vmatpush1.msra.mxu0 0.0
    %4503 = vmatprep.subr.mxu0 0.0
    %4504 = vmatpush1.msra.mxu0 0.0
    %4505 = vmatprep.mubr.f32.mxu0 0.0
    %4506 = vmatmul.mubr.f32.gmra.mrb[0].mxu0 %v577
    %v4507 = vpop.f32.mrb[0].mxu0
    %v4508 = vadd.f32 %v4429, %v4507
    %v4509 = vpop.f32.mrb[0].mxu0
    %v4510 = vadd.f32 %v4433, %v4509
    %4511 = vdwg.mxu0
    %4512 = vmatprep.subr.mxu0 0.0
    %4513 = vmatpush1.msra.mxu0 %v4223
    %4514 = vmatprep.subr.mxu0 0.0
    %4515 = vmatpush1.msra.mxu0 %v4226
    %4516 = vmatprep.subr.mxu0 0.0
    %4517 = vmatpush1.msra.mxu0 %v4229
    %4518 = vmatprep.subr.mxu0 0.0
    %4519 = vmatpush1.msra.mxu0 %v4232
    %4520 = vmatprep.subr.mxu0 0.0
    %4521 = vmatpush1.msra.mxu0 %v4235
    %4522 = vmatprep.subr.mxu0 0.0
    %4523 = vmatpush1.msra.mxu0 %v4238
    %4524 = vmatprep.subr.mxu0 0.0
    %4525 = vmatpush1.msra.mxu0 %v4241
    %4526 = vmatprep.subr.mxu0 0.0
    %4527 = vmatpush1.msra.mxu0 %v4244
    %4528 = vmatprep.subr.mxu0 0.0
    %4529 = vmatpush1.msra.mxu0 %v4247
    %4530 = vmatprep.subr.mxu0 0.0
    %4531 = vmatpush1.msra.mxu0 %v4250
    %4532 = vmatprep.subr.mxu0 0.0
    %4533 = vmatpush1.msra.mxu0 %v4253
    %4534 = vmatprep.subr.mxu0 0.0
    %4535 = vmatpush1.msra.mxu0 %v4256
    %4536 = vmatprep.subr.mxu0 0.0
    %4537 = vmatpush1.msra.mxu0 0.0
    %4538 = vmatprep.subr.mxu0 0.0
    %4539 = vmatpush1.msra.mxu0 0.0
    %4540 = vmatprep.subr.mxu0 0.0
    %4541 = vmatpush1.msra.mxu0 0.0
    %4542 = vmatprep.subr.mxu0 0.0
    %4543 = vmatpush1.msra.mxu0 0.0
    %4544 = vmatprep.subr.mxu0 0.0
    %4545 = vmatpush1.msra.mxu0 0.0
    %4546 = vmatprep.subr.mxu0 0.0
    %4547 = vmatpush1.msra.mxu0 0.0
    %4548 = vmatprep.subr.mxu0 0.0
    %4549 = vmatpush1.msra.mxu0 0.0
    %4550 = vmatprep.subr.mxu0 0.0
    %4551 = vmatpush1.msra.mxu0 0.0
    %4552 = vmatprep.subr.mxu0 0.0
    %4553 = vmatpush1.msra.mxu0 0.0
    %4554 = vmatprep.subr.mxu0 0.0
    %4555 = vmatpush1.msra.mxu0 0.0
    %4556 = vmatprep.subr.mxu0 0.0
    %4557 = vmatpush1.msra.mxu0 0.0
    %4558 = vmatprep.subr.mxu0 0.0
    %4559 = vmatpush1.msra.mxu0 0.0
    %4560 = vmatprep.subr.mxu0 0.0
    %4561 = vmatpush1.msra.mxu0 0.0
    %4562 = vmatprep.subr.mxu0 0.0
    %4563 = vmatpush1.msra.mxu0 0.0
    %4564 = vmatprep.subr.mxu0 0.0
    %4565 = vmatpush1.msra.mxu0 0.0
    %4566 = vmatprep.subr.mxu0 0.0
    %4567 = vmatpush1.msra.mxu0 0.0
    %4568 = vmatprep.subr.mxu0 0.0
    %4569 = vmatpush1.msra.mxu0 0.0
    %4570 = vmatprep.subr.mxu0 0.0
    %4571 = vmatpush1.msra.mxu0 0.0
    %4572 = vmatprep.subr.mxu0 0.0
    %4573 = vmatpush1.msra.mxu0 0.0
    %4574 = vmatprep.subr.mxu0 0.0
    %4575 = vmatpush1.msra.mxu0 0.0
    %4576 = vmatprep.mubr.f32.mxu0 0.0
    %4577 = vmatmul.mubr.f32.gmra.mrb[0].mxu0 %v577
    %v4578 = vpop.f32.mrb[0].mxu0
    %v4579 = vadd.f32 %v4437, %v4578
    %v4580 = vpop.f32.mrb[0].mxu0
    %4581 = vdwg.mxu0
    %v4582 = vadd.f32 %v4351, %v4508
    %v4583 = vxor.u32 %v4582, 2147483648
    %v4584 = vmul.f32 %v4583, 1.442695
    %v4585 = vpow.pop %v4584
    %v4586 = vadd.f32 %v4585, 1.0
    %v4587 = vrcp.pop %v4586
    %v4588 = vmul.f32 1.0, %v4587
    %v4589 = vadd.f32 %v4353, %v4510
    %v4590 = vxor.u32 %v4589, 2147483648
    %v4591 = vmul.f32 %v4590, 1.442695
    %v4592 = vpow.pop %v4591
    %v4593 = vadd.f32 %v4592, 1.0
    %v4594 = vrcp.pop %v4593
    %v4595 = vmul.f32 1.0, %v4594
    %4598 = vrot.lane.b32.xlu0 %v4510, 64
    %v4599 = vpop.permute.xlu0 %4598
    %4600 = vrot.lane.b32.xlu0 %v4579, 64
    %v4601 = vpop.permute.xlu0 %4600
    %v4602 = vsel %vm740, %v4599, %v4601
    %v4604 = vmul.f32 %v4588, %v4602
    %4606 = vrot.lane.b32.xlu0 %v4604, 64
    %v4607 = vpop.permute.xlu0 %4606
    %v4609 = vadd.f32 %v4353, %v4607
    %v4610 = vadd.f32 %v4422, %v4607
    %v4611 = vtanh.pop %v4609
    %v4612 = vtanh.pop %v4610
    %v4613 = vsub.f32 1.0, %v4588
    %v4614 = vsub.f32 1.0, %v4595
    %4617 = vrot.lane.b32.xlu0 %v4611, 32
    %v4618 = vpop.permute.xlu0 %4617
    %4619 = vrot.lane.b32.xlu0 %v4612, 32
    %v4620 = vpop.permute.xlu0 %4619
    %v4621 = vsel %vm760, %v4618, %v4620
    %v4624 = vmul.f32 %v4613, %v4618
    %v4625 = vmul.f32 %v4614, %v4621
    %v4626 = vmul.f32 %v4588, 0.0
    %v4627 = vmul.f32 %v4595, 0.0
    %v4628 = vadd.f32 %v4624, %v4626
    %v4629 = vadd.f32 %v4625, %v4627
    %4632 = vrot.lane.b32.xlu0 %v4628, 32
    %v4633 = vpop.permute.xlu0 %4632
    %4634 = vrot.lane.b32.xlu0 %v4629, 32
    %v4635 = vpop.permute.xlu0 %4634
    %v4636 = vsel %vm760, %v4633, %v4635
    %v4637 = vsel %vm575, %v4636, 0
    %4639 = vmatprep.subr.mxu0 %v4222
    %4640 = vmatpush1.msra.mxu0 %v4221
    %4641 = vmatprep.subr.mxu0 %v4225
    %4642 = vmatpush1.msra.mxu0 %v4224
    %4643 = vmatprep.subr.mxu0 %v4228
    %4644 = vmatpush1.msra.mxu0 %v4227
    %4645 = vmatprep.subr.mxu0 %v4231
    %4646 = vmatpush1.msra.mxu0 %v4230
    %4647 = vmatprep.subr.mxu0 %v4234
    %4648 = vmatpush1.msra.mxu0 %v4233
    %4649 = vmatprep.subr.mxu0 %v4237
    %4650 = vmatpush1.msra.mxu0 %v4236
    %4651 = vmatprep.subr.mxu0 %v4240
    %4652 = vmatpush1.msra.mxu0 %v4239
    %4653 = vmatprep.subr.mxu0 %v4243
    %4654 = vmatpush1.msra.mxu0 %v4242
    %4655 = vmatprep.subr.mxu0 %v4246
    %4656 = vmatpush1.msra.mxu0 %v4245
    %4657 = vmatprep.subr.mxu0 %v4249
    %4658 = vmatpush1.msra.mxu0 %v4248
    %4659 = vmatprep.subr.mxu0 %v4252
    %4660 = vmatpush1.msra.mxu0 %v4251
    %4661 = vmatprep.subr.mxu0 %v4255
    %4662 = vmatpush1.msra.mxu0 %v4254
    %4663 = vmatprep.subr.mxu0 0.0
    %4664 = vmatpush1.msra.mxu0 0.0
    %4665 = vmatprep.subr.mxu0 0.0
    %4666 = vmatpush1.msra.mxu0 0.0
    %4667 = vmatprep.subr.mxu0 0.0
    %4668 = vmatpush1.msra.mxu0 0.0
    %4669 = vmatprep.subr.mxu0 0.0
    %4670 = vmatpush1.msra.mxu0 0.0
    %4671 = vmatprep.subr.mxu0 0.0
    %4672 = vmatpush1.msra.mxu0 0.0
    %4673 = vmatprep.subr.mxu0 0.0
    %4674 = vmatpush1.msra.mxu0 0.0
    %4675 = vmatprep.subr.mxu0 0.0
    %4676 = vmatpush1.msra.mxu0 0.0
    %4677 = vmatprep.subr.mxu0 0.0
    %4678 = vmatpush1.msra.mxu0 0.0
    %4679 = vmatprep.subr.mxu0 0.0
    %4680 = vmatpush1.msra.mxu0 0.0
    %4681 = vmatprep.subr.mxu0 0.0
    %4682 = vmatpush1.msra.mxu0 0.0
    %4683 = vmatprep.subr.mxu0 0.0
    %4684 = vmatpush1.msra.mxu0 0.0
    %4685 = vmatprep.subr.mxu0 0.0
    %4686 = vmatpush1.msra.mxu0 0.0
    %4687 = vmatprep.subr.mxu0 0.0
    %4688 = vmatpush1.msra.mxu0 0.0
    %4689 = vmatprep.subr.mxu0 0.0
    %4690 = vmatpush1.msra.mxu0 0.0
    %4691 = vmatprep.subr.mxu0 0.0
    %4692 = vmatpush1.msra.mxu0 0.0
    %4693 = vmatprep.subr.mxu0 0.0
    %4694 = vmatpush1.msra.mxu0 0.0
    %4695 = vmatprep.subr.mxu0 0.0
    %4696 = vmatpush1.msra.mxu0 0.0
    %4697 = vmatprep.subr.mxu0 0.0
    %4698 = vmatpush1.msra.mxu0 0.0
    %4699 = vmatprep.subr.mxu0 0.0
    %4700 = vmatpush1.msra.mxu0 0.0
    %4701 = vmatprep.subr.mxu0 0.0
    %4702 = vmatpush1.msra.mxu0 0.0
    %4703 = vmatprep.mubr.f32.mxu0 0.0
    %4704 = vmatmul.mubr.f32.gmra.mrb[0].mxu0 %v4637
    %v4705 = vpop.f32.mrb[0].mxu0
    %v4706 = vadd.f32 %v4429, %v4705
    %v4707 = vpop.f32.mrb[0].mxu0
    %v4708 = vadd.f32 %v4433, %v4707
    %4709 = vdwg.mxu0
    %4710 = vmatprep.subr.mxu0 0.0
    %4711 = vmatpush1.msra.mxu0 %v4223
    %4712 = vmatprep.subr.mxu0 0.0
    %4713 = vmatpush1.msra.mxu0 %v4226
    %4714 = vmatprep.subr.mxu0 0.0
    %4715 = vmatpush1.msra.mxu0 %v4229
    %4716 = vmatprep.subr.mxu0 0.0
    %4717 = vmatpush1.msra.mxu0 %v4232
    %4718 = vmatprep.subr.mxu0 0.0
    %4719 = vmatpush1.msra.mxu0 %v4235
    %4720 = vmatprep.subr.mxu0 0.0
    %4721 = vmatpush1.msra.mxu0 %v4238
    %4722 = vmatprep.subr.mxu0 0.0
    %4723 = vmatpush1.msra.mxu0 %v4241
    %4724 = vmatprep.subr.mxu0 0.0
    %4725 = vmatpush1.msra.mxu0 %v4244
    %4726 = vmatprep.subr.mxu0 0.0
    %4727 = vmatpush1.msra.mxu0 %v4247
    %4728 = vmatprep.subr.mxu0 0.0
    %4729 = vmatpush1.msra.mxu0 %v4250
    %4730 = vmatprep.subr.mxu0 0.0
    %4731 = vmatpush1.msra.mxu0 %v4253
    %4732 = vmatprep.subr.mxu0 0.0
    %4733 = vmatpush1.msra.mxu0 %v4256
    %4734 = vmatprep.subr.mxu0 0.0
    %4735 = vmatpush1.msra.mxu0 0.0
    %4736 = vmatprep.subr.mxu0 0.0
    %4737 = vmatpush1.msra.mxu0 0.0
    %4738 = vmatprep.subr.mxu0 0.0
    %4739 = vmatpush1.msra.mxu0 0.0
    %4740 = vmatprep.subr.mxu0 0.0
    %4741 = vmatpush1.msra.mxu0 0.0
    %4742 = vmatprep.subr.mxu0 0.0
    %4743 = vmatpush1.msra.mxu0 0.0
    %4744 = vmatprep.subr.mxu0 0.0
    %4745 = vmatpush1.msra.mxu0 0.0
    %4746 = vmatprep.subr.mxu0 0.0
    %4747 = vmatpush1.msra.mxu0 0.0
    %4748 = vmatprep.subr.mxu0 0.0
    %4749 = vmatpush1.msra.mxu0 0.0
    %4750 = vmatprep.subr.mxu0 0.0
    %4751 = vmatpush1.msra.mxu0 0.0
    %4752 = vmatprep.subr.mxu0 0.0
    %4753 = vmatpush1.msra.mxu0 0.0
    %4754 = vmatprep.subr.mxu0 0.0
    %4755 = vmatpush1.msra.mxu0 0.0
    %4756 = vmatprep.subr.mxu0 0.0
    %4757 = vmatpush1.msra.mxu0 0.0
    %4758 = vmatprep.subr.mxu0 0.0
    %4759 = vmatpush1.msra.mxu0 0.0
    %4760 = vmatprep.subr.mxu0 0.0
    %4761 = vmatpush1.msra.mxu0 0.0
    %4762 = vmatprep.subr.mxu0 0.0
    %4763 = vmatpush1.msra.mxu0 0.0
    %4764 = vmatprep.subr.mxu0 0.0
    %4765 = vmatpush1.msra.mxu0 0.0
    %4766 = vmatprep.subr.mxu0 0.0
    %4767 = vmatpush1.msra.mxu0 0.0
    %4768 = vmatprep.subr.mxu0 0.0
    %4769 = vmatpush1.msra.mxu0 0.0
    %4770 = vmatprep.subr.mxu0 0.0
    %4771 = vmatpush1.msra.mxu0 0.0
    %4772 = vmatprep.subr.mxu0 0.0
    %4773 = vmatpush1.msra.mxu0 0.0
    %4774 = vmatprep.mubr.f32.mxu0 0.0
    %4775 = vmatmul.mubr.f32.gmra.mrb[0].mxu0 %v4637
    %v4776 = vpop.f32.mrb[0].mxu0
    %v4777 = vadd.f32 %v4437, %v4776
    %v4778 = vpop.f32.mrb[0].mxu0
    %4779 = vdwg.mxu0
    %v4781 = vrot.slane %v4706, 7
    %v4783 = vadd.f32 %v4351, %v4781
    %v4784 = vxor.u32 %v4783, 2147483648
    %v4785 = vmul.f32 %v4784, 1.442695
    %v4786 = vpow.pop %v4785
    %v4787 = vadd.f32 %v4786, 1.0
    %v4788 = vrcp.pop %v4787
    %v4789 = vmul.f32 1.0, %v4788
    %v4791 = vrot.slane %v4708, 7
    %v4793 = vadd.f32 %v4353, %v4791
    %v4794 = vxor.u32 %v4793, 2147483648
    %v4795 = vmul.f32 %v4794, 1.442695
    %v4796 = vpow.pop %v4795
    %v4797 = vadd.f32 %v4796, 1.0
    %v4798 = vrcp.pop %v4797
    %v4799 = vmul.f32 1.0, %v4798
    %v4801 = vrot.slane %v4777, 7
    %4802 = vrot.lane.b32.xlu0 %v4791, 64
    %v4803 = vpop.permute.xlu0 %4802
    %4804 = vrot.lane.b32.xlu0 %v4801, 64
    %v4805 = vpop.permute.xlu0 %4804
    %v4806 = vsel %vm740, %v4803, %v4805
    %v4808 = vmul.f32 %v4789, %v4806
    %4810 = vrot.lane.b32.xlu0 %v4808, 64
    %v4811 = vpop.permute.xlu0 %4810
    %v4813 = vadd.f32 %v4353, %v4811
    %v4814 = vadd.f32 %v4422, %v4811
    %v4815 = vtanh.pop %v4813
    %v4816 = vtanh.pop %v4814
    %v4817 = vsub.f32 1.0, %v4789
    %v4818 = vsub.f32 1.0, %v4799
    %4821 = vrot.lane.b32.xlu0 %v4815, 32
    %v4822 = vpop.permute.xlu0 %4821
    %4823 = vrot.lane.b32.xlu0 %v4816, 32
    %v4824 = vpop.permute.xlu0 %4823
    %v4825 = vsel %vm760, %v4822, %v4824
    %v4828 = vmul.f32 %v4817, %v4822
    %v4829 = vmul.f32 %v4818, %v4825
    %v4830 = vrot.slane %v4628, 7
    %v4831 = vrot.slane %v4629, 7
    %v4834 = vmul.f32 %v4789, %v4830
    %v4835 = vmul.f32 %v4799, %v4831
    %v4836 = vadd.f32 %v4828, %v4834
    %v4837 = vadd.f32 %v4829, %v4835
    %v4840 = vrot.slane %v4836, 1
    %v4841 = vrot.slane %v4837, 1
    %4842 = vrot.lane.b32.xlu0 %v4840, 32
    %v4843 = vpop.permute.xlu0 %4842
    %4844 = vrot.lane.b32.xlu0 %v4841, 32
    %v4845 = vpop.permute.xlu0 %4844
    %v4846 = vsel %vm760, %v4843, %v4845
    %v4847 = vsel %vm575, %v4846, 0
    %4849 = vmatprep.subr.mxu0 %v4222
    %4850 = vmatpush1.msra.mxu0 %v4221
    %4851 = vmatprep.subr.mxu0 %v4225
    %4852 = vmatpush1.msra.mxu0 %v4224
    %4853 = vmatprep.subr.mxu0 %v4228
    %4854 = vmatpush1.msra.mxu0 %v4227
    %4855 = vmatprep.subr.mxu0 %v4231
    %4856 = vmatpush1.msra.mxu0 %v4230
    %4857 = vmatprep.subr.mxu0 %v4234
    %4858 = vmatpush1.msra.mxu0 %v4233
    %4859 = vmatprep.subr.mxu0 %v4237
    %4860 = vmatpush1.msra.mxu0 %v4236
    %4861 = vmatprep.subr.mxu0 %v4240
    %4862 = vmatpush1.msra.mxu0 %v4239
    %4863 = vmatprep.subr.mxu0 %v4243
    %4864 = vmatpush1.msra.mxu0 %v4242
    %4865 = vmatprep.subr.mxu0 %v4246
    %4866 = vmatpush1.msra.mxu0 %v4245
    %4867 = vmatprep.subr.mxu0 %v4249
    %4868 = vmatpush1.msra.mxu0 %v4248
    %4869 = vmatprep.subr.mxu0 %v4252
    %4870 = vmatpush1.msra.mxu0 %v4251
    %4871 = vmatprep.subr.mxu0 %v4255
    %4872 = vmatpush1.msra.mxu0 %v4254
    %4873 = vmatprep.subr.mxu0 0.0
    %4874 = vmatpush1.msra.mxu0 0.0
    %4875 = vmatprep.subr.mxu0 0.0
    %4876 = vmatpush1.msra.mxu0 0.0
    %4877 = vmatprep.subr.mxu0 0.0
    %4878 = vmatpush1.msra.mxu0 0.0
    %4879 = vmatprep.subr.mxu0 0.0
    %4880 = vmatpush1.msra.mxu0 0.0
    %4881 = vmatprep.subr.mxu0 0.0
    %4882 = vmatpush1.msra.mxu0 0.0
    %4883 = vmatprep.subr.mxu0 0.0
    %4884 = vmatpush1.msra.mxu0 0.0
    %4885 = vmatprep.subr.mxu0 0.0
    %4886 = vmatpush1.msra.mxu0 0.0
    %4887 = vmatprep.subr.mxu0 0.0
    %4888 = vmatpush1.msra.mxu0 0.0
    %4889 = vmatprep.subr.mxu0 0.0
    %4890 = vmatpush1.msra.mxu0 0.0
    %4891 = vmatprep.subr.mxu0 0.0
    %4892 = vmatpush1.msra.mxu0 0.0
    %4893 = vmatprep.subr.mxu0 0.0
    %4894 = vmatpush1.msra.mxu0 0.0
    %4895 = vmatprep.subr.mxu0 0.0
    %4896 = vmatpush1.msra.mxu0 0.0
    %4897 = vmatprep.subr.mxu0 0.0
    %4898 = vmatpush1.msra.mxu0 0.0
    %4899 = vmatprep.subr.mxu0 0.0
    %4900 = vmatpush1.msra.mxu0 0.0
    %4901 = vmatprep.subr.mxu0 0.0
    %4902 = vmatpush1.msra.mxu0 0.0
    %4903 = vmatprep.subr.mxu0 0.0
    %4904 = vmatpush1.msra.mxu0 0.0
    %4905 = vmatprep.subr.mxu0 0.0
    %4906 = vmatpush1.msra.mxu0 0.0
    %4907 = vmatprep.subr.mxu0 0.0
    %4908 = vmatpush1.msra.mxu0 0.0
    %4909 = vmatprep.subr.mxu0 0.0
    %4910 = vmatpush1.msra.mxu0 0.0
    %4911 = vmatprep.subr.mxu0 0.0
    %4912 = vmatpush1.msra.mxu0 0.0
    %4913 = vmatprep.mubr.f32.mxu0 0.0
    %4914 = vmatmul.mubr.f32.gmra.mrb[0].mxu0 %v4847
    %v4915 = vpop.f32.mrb[0].mxu0
    %v4916 = vadd.f32 %v4429, %v4915
    %v4917 = vpop.f32.mrb[0].mxu0
    %v4918 = vadd.f32 %v4433, %v4917
    %4919 = vdwg.mxu0
    %4920 = vmatprep.subr.mxu0 0.0
    %4921 = vmatpush1.msra.mxu0 %v4223
    %4922 = vmatprep.subr.mxu0 0.0
    %4923 = vmatpush1.msra.mxu0 %v4226
    %4924 = vmatprep.subr.mxu0 0.0
    %4925 = vmatpush1.msra.mxu0 %v4229
    %4926 = vmatprep.subr.mxu0 0.0
    %4927 = vmatpush1.msra.mxu0 %v4232
    %4928 = vmatprep.subr.mxu0 0.0
    %4929 = vmatpush1.msra.mxu0 %v4235
    %4930 = vmatprep.subr.mxu0 0.0
    %4931 = vmatpush1.msra.mxu0 %v4238
    %4932 = vmatprep.subr.mxu0 0.0
    %4933 = vmatpush1.msra.mxu0 %v4241
    %4934 = vmatprep.subr.mxu0 0.0
    %4935 = vmatpush1.msra.mxu0 %v4244
    %4936 = vmatprep.subr.mxu0 0.0
    %4937 = vmatpush1.msra.mxu0 %v4247
    %4938 = vmatprep.subr.mxu0 0.0
    %4939 = vmatpush1.msra.mxu0 %v4250
    %4940 = vmatprep.subr.mxu0 0.0
    %4941 = vmatpush1.msra.mxu0 %v4253
    %4942 = vmatprep.subr.mxu0 0.0
    %4943 = vmatpush1.msra.mxu0 %v4256
    %4944 = vmatprep.subr.mxu0 0.0
    %4945 = vmatpush1.msra.mxu0 0.0
    %4946 = vmatprep.subr.mxu0 0.0
    %4947 = vmatpush1.msra.mxu0 0.0
    %4948 = vmatprep.subr.mxu0 0.0
    %4949 = vmatpush1.msra.mxu0 0.0
    %4950 = vmatprep.subr.mxu0 0.0
    %4951 = vmatpush1.msra.mxu0 0.0
    %4952 = vmatprep.subr.mxu0 0.0
    %4953 = vmatpush1.msra.mxu0 0.0
    %4954 = vmatprep.subr.mxu0 0.0
    %4955 = vmatpush1.msra.mxu0 0.0
    %4956 = vmatprep.subr.mxu0 0.0
    %4957 = vmatpush1.msra.mxu0 0.0
    %4958 = vmatprep.subr.mxu0 0.0
    %4959 = vmatpush1.msra.mxu0 0.0
    %4960 = vmatprep.subr.mxu0 0.0
    %4961 = vmatpush1.msra.mxu0 0.0
    %4962 = vmatprep.subr.mxu0 0.0
    %4963 = vmatpush1.msra.mxu0 0.0
    %4964 = vmatprep.subr.mxu0 0.0
    %4965 = vmatpush1.msra.mxu0 0.0
    %4966 = vmatprep.subr.mxu0 0.0
    %4967 = vmatpush1.msra.mxu0 0.0
    %4968 = vmatprep.subr.mxu0 0.0
    %4969 = vmatpush1.msra.mxu0 0.0
    %4970 = vmatprep.subr.mxu0 0.0
    %4971 = vmatpush1.msra.mxu0 0.0
    %4972 = vmatprep.subr.mxu0 0.0
    %4973 = vmatpush1.msra.mxu0 0.0
    %4974 = vmatprep.subr.mxu0 0.0
    %4975 = vmatpush1.msra.mxu0 0.0
    %4976 = vmatprep.subr.mxu0 0.0
    %4977 = vmatpush1.msra.mxu0 0.0
    %4978 = vmatprep.subr.mxu0 0.0
    %4979 = vmatpush1.msra.mxu0 0.0
    %4980 = vmatprep.subr.mxu0 0.0
    %4981 = vmatpush1.msra.mxu0 0.0
    %4982 = vmatprep.subr.mxu0 0.0
    %4983 = vmatpush1.msra.mxu0 0.0
    %4984 = vmatprep.mubr.f32.mxu0 0.0
    %4985 = vmatmul.mubr.f32.gmra.mrb[0].mxu0 %v4847
    %v4986 = vpop.f32.mrb[0].mxu0
    %v4987 = vadd.f32 %v4437, %v4986
    %v4988 = vpop.f32.mrb[0].mxu0
    %4989 = vdwg.mxu0
    %v4991 = vrot.slane %v4916, 6
    %v4993 = vadd.f32 %v4351, %v4991
    %v4994 = vxor.u32 %v4993, 2147483648
    %v4995 = vmul.f32 %v4994, 1.442695
    %v4996 = vpow.pop %v4995
    %v4997 = vadd.f32 %v4996, 1.0
    %v4998 = vrcp.pop %v4997
    %v4999 = vmul.f32 1.0, %v4998
    %v5001 = vrot.slane %v4918, 6
    %v5003 = vadd.f32 %v4353, %v5001
    %v5004 = vxor.u32 %v5003, 2147483648
    %v5005 = vmul.f32 %v5004, 1.442695
    %v5006 = vpow.pop %v5005
    %v5007 = vadd.f32 %v5006, 1.0
    %v5008 = vrcp.pop %v5007
    %v5009 = vmul.f32 1.0, %v5008
    %v5011 = vrot.slane %v4987, 6
    %5012 = vrot.lane.b32.xlu0 %v5001, 64
    %v5013 = vpop.permute.xlu0 %5012
    %5014 = vrot.lane.b32.xlu0 %v5011, 64
    %v5015 = vpop.permute.xlu0 %5014
    %v5016 = vsel %vm740, %v5013, %v5015
    %v5018 = vmul.f32 %v4999, %v5016
    %5020 = vrot.lane.b32.xlu0 %v5018, 64
    %v5021 = vpop.permute.xlu0 %5020
    %v5023 = vadd.f32 %v4353, %v5021
    %v5024 = vadd.f32 %v4422, %v5021
    %v5025 = vtanh.pop %v5023
    %v5026 = vtanh.pop %v5024
    %v5027 = vsub.f32 1.0, %v4999
    %v5028 = vsub.f32 1.0, %v5009
    %5031 = vrot.lane.b32.xlu0 %v5025, 32
    %v5032 = vpop.permute.xlu0 %5031
    %5033 = vrot.lane.b32.xlu0 %v5026, 32
    %v5034 = vpop.permute.xlu0 %5033
    %v5035 = vsel %vm760, %v5032, %v5034
    %v5038 = vmul.f32 %v5027, %v5032
    %v5039 = vmul.f32 %v5028, %v5035
    %v5040 = vrot.slane %v4836, 7
    %v5041 = vrot.slane %v4837, 7
    %v5044 = vmul.f32 %v4999, %v5040
    %v5045 = vmul.f32 %v5009, %v5041
    %v5046 = vadd.f32 %v5038, %v5044
    %v5047 = vadd.f32 %v5039, %v5045
    %v5050 = vrot.slane %v5046, 2
    %v5051 = vrot.slane %v5047, 2
    %5052 = vrot.lane.b32.xlu0 %v5050, 32
    %v5053 = vpop.permute.xlu0 %5052
    %5054 = vrot.lane.b32.xlu0 %v5051, 32
    %v5055 = vpop.permute.xlu0 %5054
    %v5056 = vsel %vm760, %v5053, %v5055
    %v5057 = vsel %vm575, %v5056, 0
    %5059 = vmatprep.subr.mxu0 %v4222
    %5060 = vmatpush1.msra.mxu0 %v4221
    %5061 = vmatprep.subr.mxu0 %v4225
    %5062 = vmatpush1.msra.mxu0 %v4224
    %5063 = vmatprep.subr.mxu0 %v4228
    %5064 = vmatpush1.msra.mxu0 %v4227
    %5065 = vmatprep.subr.mxu0 %v4231
    %5066 = vmatpush1.msra.mxu0 %v4230
    %5067 = vmatprep.subr.mxu0 %v4234
    %5068 = vmatpush1.msra.mxu0 %v4233
    %5069 = vmatprep.subr.mxu0 %v4237
    %5070 = vmatpush1.msra.mxu0 %v4236
    %5071 = vmatprep.subr.mxu0 %v4240
    %5072 = vmatpush1.msra.mxu0 %v4239
    %5073 = vmatprep.subr.mxu0 %v4243
    %5074 = vmatpush1.msra.mxu0 %v4242
    %5075 = vmatprep.subr.mxu0 %v4246
    %5076 = vmatpush1.msra.mxu0 %v4245
    %5077 = vmatprep.subr.mxu0 %v4249
    %5078 = vmatpush1.msra.mxu0 %v4248
    %5079 = vmatprep.subr.mxu0 %v4252
    %5080 = vmatpush1.msra.mxu0 %v4251
    %5081 = vmatprep.subr.mxu0 %v4255
    %5082 = vmatpush1.msra.mxu0 %v4254
    %5083 = vmatprep.subr.mxu0 0.0
    %5084 = vmatpush1.msra.mxu0 0.0
    %5085 = vmatprep.subr.mxu0 0.0
    %5086 = vmatpush1.msra.mxu0 0.0
    %5087 = vmatprep.subr.mxu0 0.0
    %5088 = vmatpush1.msra.mxu0 0.0
    %5089 = vmatprep.subr.mxu0 0.0
    %5090 = vmatpush1.msra.mxu0 0.0
    %5091 = vmatprep.subr.mxu0 0.0
    %5092 = vmatpush1.msra.mxu0 0.0
    %5093 = vmatprep.subr.mxu0 0.0
    %5094 = vmatpush1.msra.mxu0 0.0
    %5095 = vmatprep.subr.mxu0 0.0
    %5096 = vmatpush1.msra.mxu0 0.0
    %5097 = vmatprep.subr.mxu0 0.0
    %5098 = vmatpush1.msra.mxu0 0.0
    %5099 = vmatprep.subr.mxu0 0.0
    %5100 = vmatpush1.msra.mxu0 0.0
    %5101 = vmatprep.subr.mxu0 0.0
    %5102 = vmatpush1.msra.mxu0 0.0
    %5103 = vmatprep.subr.mxu0 0.0
    %5104 = vmatpush1.msra.mxu0 0.0
    %5105 = vmatprep.subr.mxu0 0.0
    %5106 = vmatpush1.msra.mxu0 0.0
    %5107 = vmatprep.subr.mxu0 0.0
    %5108 = vmatpush1.msra.mxu0 0.0
    %5109 = vmatprep.subr.mxu0 0.0
    %5110 = vmatpush1.msra.mxu0 0.0
    %5111 = vmatprep.subr.mxu0 0.0
    %5112 = vmatpush1.msra.mxu0 0.0
    %5113 = vmatprep.subr.mxu0 0.0
    %5114 = vmatpush1.msra.mxu0 0.0
    %5115 = vmatprep.subr.mxu0 0.0
    %5116 = vmatpush1.msra.mxu0 0.0
    %5117 = vmatprep.subr.mxu0 0.0
    %5118 = vmatpush1.msra.mxu0 0.0
    %5119 = vmatprep.subr.mxu0 0.0
    %5120 = vmatpush1.msra.mxu0 0.0
    %5121 = vmatprep.subr.mxu0 0.0
    %5122 = vmatpush1.msra.mxu0 0.0
    %5123 = vmatprep.mubr.f32.mxu0 0.0
    %5124 = vmatmul.mubr.f32.gmra.mrb[0].mxu0 %v5057
    %v5125 = vpop.f32.mrb[0].mxu0
    %v5126 = vadd.f32 %v4429, %v5125
    %v5127 = vpop.f32.mrb[0].mxu0
    %v5128 = vadd.f32 %v4433, %v5127
    %5129 = vdwg.mxu0
    %5130 = vmatprep.subr.mxu0 0.0
    %5131 = vmatpush1.msra.mxu0 %v4223
    %5132 = vmatprep.subr.mxu0 0.0
    %5133 = vmatpush1.msra.mxu0 %v4226
    %5134 = vmatprep.subr.mxu0 0.0
    %5135 = vmatpush1.msra.mxu0 %v4229
    %5136 = vmatprep.subr.mxu0 0.0
    %5137 = vmatpush1.msra.mxu0 %v4232
    %5138 = vmatprep.subr.mxu0 0.0
    %5139 = vmatpush1.msra.mxu0 %v4235
    %5140 = vmatprep.subr.mxu0 0.0
    %5141 = vmatpush1.msra.mxu0 %v4238
    %5142 = vmatprep.subr.mxu0 0.0
    %5143 = vmatpush1.msra.mxu0 %v4241
    %5144 = vmatprep.subr.mxu0 0.0
    %5145 = vmatpush1.msra.mxu0 %v4244
    %5146 = vmatprep.subr.mxu0 0.0
    %5147 = vmatpush1.msra.mxu0 %v4247
    %5148 = vmatprep.subr.mxu0 0.0
    %5149 = vmatpush1.msra.mxu0 %v4250
    %5150 = vmatprep.subr.mxu0 0.0
    %5151 = vmatpush1.msra.mxu0 %v4253
    %5152 = vmatprep.subr.mxu0 0.0
    %5153 = vmatpush1.msra.mxu0 %v4256
    %5154 = vmatprep.subr.mxu0 0.0
    %5155 = vmatpush1.msra.mxu0 0.0
    %5156 = vmatprep.subr.mxu0 0.0
    %5157 = vmatpush1.msra.mxu0 0.0
    %5158 = vmatprep.subr.mxu0 0.0
    %5159 = vmatpush1.msra.mxu0 0.0
    %5160 = vmatprep.subr.mxu0 0.0
    %5161 = vmatpush1.msra.mxu0 0.0
    %5162 = vmatprep.subr.mxu0 0.0
    %5163 = vmatpush1.msra.mxu0 0.0
    %5164 = vmatprep.subr.mxu0 0.0
    %5165 = vmatpush1.msra.mxu0 0.0
    %5166 = vmatprep.subr.mxu0 0.0
    %5167 = vmatpush1.msra.mxu0 0.0
    %5168 = vmatprep.subr.mxu0 0.0
    %5169 = vmatpush1.msra.mxu0 0.0
    %5170 = vmatprep.subr.mxu0 0.0
    %5171 = vmatpush1.msra.mxu0 0.0
    %5172 = vmatprep.subr.mxu0 0.0
    %5173 = vmatpush1.msra.mxu0 0.0
    %5174 = vmatprep.subr.mxu0 0.0
    %5175 = vmatpush1.msra.mxu0 0.0
    %5176 = vmatprep.subr.mxu0 0.0
    %5177 = vmatpush1.msra.mxu0 0.0
    %5178 = vmatprep.subr.mxu0 0.0
    %5179 = vmatpush1.msra.mxu0 0.0
    %5180 = vmatprep.subr.mxu0 0.0
    %5181 = vmatpush1.msra.mxu0 0.0
    %5182 = vmatprep.subr.mxu0 0.0
    %5183 = vmatpush1.msra.mxu0 0.0
    %5184 = vmatprep.subr.mxu0 0.0
    %5185 = vmatpush1.msra.mxu0 0.0
    %5186 = vmatprep.subr.mxu0 0.0
    %5187 = vmatpush1.msra.mxu0 0.0
    %5188 = vmatprep.subr.mxu0 0.0
    %5189 = vmatpush1.msra.mxu0 0.0
    %5190 = vmatprep.subr.mxu0 0.0
    %5191 = vmatpush1.msra.mxu0 0.0
    %5192 = vmatprep.subr.mxu0 0.0
    %5193 = vmatpush1.msra.mxu0 0.0
    %5194 = vmatprep.mubr.f32.mxu0 0.0
    %5195 = vmatmul.mubr.f32.gmra.mrb[0].mxu0 %v5057
    %v5196 = vpop.f32.mrb[0].mxu0
    %v5197 = vadd.f32 %v4437, %v5196
    %v5198 = vpop.f32.mrb[0].mxu0
    %5199 = vdwg.mxu0
    %v5201 = vrot.slane %v5126, 5
    %v5203 = vadd.f32 %v4351, %v5201
    %v5204 = vxor.u32 %v5203, 2147483648
    %v5205 = vmul.f32 %v5204, 1.442695
    %v5206 = vpow.pop %v5205
    %v5207 = vadd.f32 %v5206, 1.0
    %v5208 = vrcp.pop %v5207
    %v5209 = vmul.f32 1.0, %v5208
    %v5211 = vrot.slane %v5128, 5
    %v5213 = vadd.f32 %v4353, %v5211
    %v5214 = vxor.u32 %v5213, 2147483648
    %v5215 = vmul.f32 %v5214, 1.442695
    %v5216 = vpow.pop %v5215
    %v5217 = vadd.f32 %v5216, 1.0
    %v5218 = vrcp.pop %v5217
    %v5219 = vmul.f32 1.0, %v5218
    %v5221 = vrot.slane %v5197, 5
    %5222 = vrot.lane.b32.xlu0 %v5211, 64
    %v5223 = vpop.permute.xlu0 %5222
    %5224 = vrot.lane.b32.xlu0 %v5221, 64
    %v5225 = vpop.permute.xlu0 %5224
    %v5226 = vsel %vm740, %v5223, %v5225
    %v5228 = vmul.f32 %v5209, %v5226
    %5230 = vrot.lane.b32.xlu0 %v5228, 64
    %v5231 = vpop.permute.xlu0 %5230
    %v5233 = vadd.f32 %v4353, %v5231
    %v5234 = vadd.f32 %v4422, %v5231
    %v5235 = vtanh.pop %v5233
    %v5236 = vtanh.pop %v5234
    %v5237 = vsub.f32 1.0, %v5209
    %v5238 = vsub.f32 1.0, %v5219
    %5241 = vrot.lane.b32.xlu0 %v5235, 32
    %v5242 = vpop.permute.xlu0 %5241
    %5243 = vrot.lane.b32.xlu0 %v5236, 32
    %v5244 = vpop.permute.xlu0 %5243
    %v5245 = vsel %vm760, %v5242, %v5244
    %v5248 = vmul.f32 %v5237, %v5242
    %v5249 = vmul.f32 %v5238, %v5245
    %v5250 = vrot.slane %v5046, 7
    %v5251 = vrot.slane %v5047, 7
    %v5254 = vmul.f32 %v5209, %v5250
    %v5255 = vmul.f32 %v5219, %v5251
    %v5256 = vadd.f32 %v5248, %v5254
    %v5257 = vadd.f32 %v5249, %v5255
    %v5260 = vrot.slane %v5256, 3
    %v5261 = vrot.slane %v5257, 3
    %5262 = vrot.lane.b32.xlu0 %v5260, 32
    %v5263 = vpop.permute.xlu0 %5262
    %5264 = vrot.lane.b32.xlu0 %v5261, 32
    %v5265 = vpop.permute.xlu0 %5264
    %v5266 = vsel %vm760, %v5263, %v5265
    %v5267 = vsel %vm575, %v5266, 0
    %5269 = vmatprep.subr.mxu0 %v4222
    %5270 = vmatpush1.msra.mxu0 %v4221
    %5271 = vmatprep.subr.mxu0 %v4225
    %5272 = vmatpush1.msra.mxu0 %v4224
    %5273 = vmatprep.subr.mxu0 %v4228
    %5274 = vmatpush1.msra.mxu0 %v4227
    %5275 = vmatprep.subr.mxu0 %v4231
    %5276 = vmatpush1.msra.mxu0 %v4230
    %5277 = vmatprep.subr.mxu0 %v4234
    %5278 = vmatpush1.msra.mxu0 %v4233
    %5279 = vmatprep.subr.mxu0 %v4237
    %5280 = vmatpush1.msra.mxu0 %v4236
    %5281 = vmatprep.subr.mxu0 %v4240
    %5282 = vmatpush1.msra.mxu0 %v4239
    %5283 = vmatprep.subr.mxu0 %v4243
    %5284 = vmatpush1.msra.mxu0 %v4242
    %5285 = vmatprep.subr.mxu0 %v4246
    %5286 = vmatpush1.msra.mxu0 %v4245
    %5287 = vmatprep.subr.mxu0 %v4249
    %5288 = vmatpush1.msra.mxu0 %v4248
    %5289 = vmatprep.subr.mxu0 %v4252
    %5290 = vmatpush1.msra.mxu0 %v4251
    %5291 = vmatprep.subr.mxu0 %v4255
    %5292 = vmatpush1.msra.mxu0 %v4254
    %5293 = vmatprep.subr.mxu0 0.0
    %5294 = vmatpush1.msra.mxu0 0.0
    %5295 = vmatprep.subr.mxu0 0.0
    %5296 = vmatpush1.msra.mxu0 0.0
    %5297 = vmatprep.subr.mxu0 0.0
    %5298 = vmatpush1.msra.mxu0 0.0
    %5299 = vmatprep.subr.mxu0 0.0
    %5300 = vmatpush1.msra.mxu0 0.0
    %5301 = vmatprep.subr.mxu0 0.0
    %5302 = vmatpush1.msra.mxu0 0.0
    %5303 = vmatprep.subr.mxu0 0.0
    %5304 = vmatpush1.msra.mxu0 0.0
    %5305 = vmatprep.subr.mxu0 0.0
    %5306 = vmatpush1.msra.mxu0 0.0
    %5307 = vmatprep.subr.mxu0 0.0
    %5308 = vmatpush1.msra.mxu0 0.0
    %5309 = vmatprep.subr.mxu0 0.0
    %5310 = vmatpush1.msra.mxu0 0.0
    %5311 = vmatprep.subr.mxu0 0.0
    %5312 = vmatpush1.msra.mxu0 0.0
    %5313 = vmatprep.subr.mxu0 0.0
    %5314 = vmatpush1.msra.mxu0 0.0
    %5315 = vmatprep.subr.mxu0 0.0
    %5316 = vmatpush1.msra.mxu0 0.0
    %5317 = vmatprep.subr.mxu0 0.0
    %5318 = vmatpush1.msra.mxu0 0.0
    %5319 = vmatprep.subr.mxu0 0.0
    %5320 = vmatpush1.msra.mxu0 0.0
    %5321 = vmatprep.subr.mxu0 0.0
    %5322 = vmatpush1.msra.mxu0 0.0
    %5323 = vmatprep.subr.mxu0 0.0
    %5324 = vmatpush1.msra.mxu0 0.0
    %5325 = vmatprep.subr.mxu0 0.0
    %5326 = vmatpush1.msra.mxu0 0.0
    %5327 = vmatprep.subr.mxu0 0.0
    %5328 = vmatpush1.msra.mxu0 0.0
    %5329 = vmatprep.subr.mxu0 0.0
    %5330 = vmatpush1.msra.mxu0 0.0
    %5331 = vmatprep.subr.mxu0 0.0
    %5332 = vmatpush1.msra.mxu0 0.0
    %5333 = vmatprep.mubr.f32.mxu0 0.0
    %5334 = vmatmul.mubr.f32.gmra.mrb[0].mxu0 %v5267
    %v5335 = vpop.f32.mrb[0].mxu0
    %v5336 = vadd.f32 %v4429, %v5335
    %v5337 = vpop.f32.mrb[0].mxu0
    %v5338 = vadd.f32 %v4433, %v5337
    %5339 = vdwg.mxu0
    %5340 = vmatprep.subr.mxu0 0.0
    %5341 = vmatpush1.msra.mxu0 %v4223
    %5342 = vmatprep.subr.mxu0 0.0
    %5343 = vmatpush1.msra.mxu0 %v4226
    %5344 = vmatprep.subr.mxu0 0.0
    %5345 = vmatpush1.msra.mxu0 %v4229
    %5346 = vmatprep.subr.mxu0 0.0
    %5347 = vmatpush1.msra.mxu0 %v4232
    %5348 = vmatprep.subr.mxu0 0.0
    %5349 = vmatpush1.msra.mxu0 %v4235
    %5350 = vmatprep.subr.mxu0 0.0
    %5351 = vmatpush1.msra.mxu0 %v4238
    %5352 = vmatprep.subr.mxu0 0.0
    %5353 = vmatpush1.msra.mxu0 %v4241
    %5354 = vmatprep.subr.mxu0 0.0
    %5355 = vmatpush1.msra.mxu0 %v4244
    %5356 = vmatprep.subr.mxu0 0.0
    %5357 = vmatpush1.msra.mxu0 %v4247
    %5358 = vmatprep.subr.mxu0 0.0
    %5359 = vmatpush1.msra.mxu0 %v4250
    %5360 = vmatprep.subr.mxu0 0.0
    %5361 = vmatpush1.msra.mxu0 %v4253
    %5362 = vmatprep.subr.mxu0 0.0
    %5363 = vmatpush1.msra.mxu0 %v4256
    %5364 = vmatprep.subr.mxu0 0.0
    %5365 = vmatpush1.msra.mxu0 0.0
    %5366 = vmatprep.subr.mxu0 0.0
    %5367 = vmatpush1.msra.mxu0 0.0
    %5368 = vmatprep.subr.mxu0 0.0
    %5369 = vmatpush1.msra.mxu0 0.0
    %5370 = vmatprep.subr.mxu0 0.0
    %5371 = vmatpush1.msra.mxu0 0.0
    %5372 = vmatprep.subr.mxu0 0.0
    %5373 = vmatpush1.msra.mxu0 0.0
    %5374 = vmatprep.subr.mxu0 0.0
    %5375 = vmatpush1.msra.mxu0 0.0
    %5376 = vmatprep.subr.mxu0 0.0
    %5377 = vmatpush1.msra.mxu0 0.0
    %5378 = vmatprep.subr.mxu0 0.0
    %5379 = vmatpush1.msra.mxu0 0.0
    %5380 = vmatprep.subr.mxu0 0.0
    %5381 = vmatpush1.msra.mxu0 0.0
    %5382 = vmatprep.subr.mxu0 0.0
    %5383 = vmatpush1.msra.mxu0 0.0
    %5384 = vmatprep.subr.mxu0 0.0
    %5385 = vmatpush1.msra.mxu0 0.0
    %5386 = vmatprep.subr.mxu0 0.0
    %5387 = vmatpush1.msra.mxu0 0.0
    %5388 = vmatprep.subr.mxu0 0.0
    %5389 = vmatpush1.msra.mxu0 0.0
    %5390 = vmatprep.subr.mxu0 0.0
    %5391 = vmatpush1.msra.mxu0 0.0
    %5392 = vmatprep.subr.mxu0 0.0
    %5393 = vmatpush1.msra.mxu0 0.0
    %5394 = vmatprep.subr.mxu0 0.0
    %5395 = vmatpush1.msra.mxu0 0.0
    %5396 = vmatprep.subr.mxu0 0.0
    %5397 = vmatpush1.msra.mxu0 0.0
    %5398 = vmatprep.subr.mxu0 0.0
    %5399 = vmatpush1.msra.mxu0 0.0
    %5400 = vmatprep.subr.mxu0 0.0
    %5401 = vmatpush1.msra.mxu0 0.0
    %5402 = vmatprep.subr.mxu0 0.0
    %5403 = vmatpush1.msra.mxu0 0.0
    %5404 = vmatprep.mubr.f32.mxu0 0.0
    %5405 = vmatmul.mubr.f32.gmra.mrb[0].mxu0 %v5267
    %v5406 = vpop.f32.mrb[0].mxu0
    %v5407 = vadd.f32 %v4437, %v5406
    %v5408 = vpop.f32.mrb[0].mxu0
    %5409 = vdwg.mxu0
    %v5411 = vrot.slane %v5336, 4
    %v5413 = vadd.f32 %v4351, %v5411
    %v5414 = vxor.u32 %v5413, 2147483648
    %v5415 = vmul.f32 %v5414, 1.442695
    %v5416 = vpow.pop %v5415
    %v5417 = vadd.f32 %v5416, 1.0
    %v5418 = vrcp.pop %v5417
    %v5419 = vmul.f32 1.0, %v5418
    %v5421 = vrot.slane %v5338, 4
    %v5423 = vadd.f32 %v4353, %v5421
    %v5424 = vxor.u32 %v5423, 2147483648
    %v5425 = vmul.f32 %v5424, 1.442695
    %v5426 = vpow.pop %v5425
    %v5427 = vadd.f32 %v5426, 1.0
    %v5428 = vrcp.pop %v5427
    %v5429 = vmul.f32 1.0, %v5428
    %v5431 = vrot.slane %v5407, 4
    %5432 = vrot.lane.b32.xlu0 %v5421, 64
    %v5433 = vpop.permute.xlu0 %5432
    %5434 = vrot.lane.b32.xlu0 %v5431, 64
    %v5435 = vpop.permute.xlu0 %5434
    %v5436 = vsel %vm740, %v5433, %v5435
    %v5438 = vmul.f32 %v5419, %v5436
    %5440 = vrot.lane.b32.xlu0 %v5438, 64
    %v5441 = vpop.permute.xlu0 %5440
    %v5443 = vadd.f32 %v4353, %v5441
    %v5444 = vadd.f32 %v4422, %v5441
    %v5445 = vtanh.pop %v5443
    %v5446 = vtanh.pop %v5444
    %v5447 = vsub.f32 1.0, %v5419
    %v5448 = vsub.f32 1.0, %v5429
    %5451 = vrot.lane.b32.xlu0 %v5445, 32
    %v5452 = vpop.permute.xlu0 %5451
    %5453 = vrot.lane.b32.xlu0 %v5446, 32
    %v5454 = vpop.permute.xlu0 %5453
    %v5455 = vsel %vm760, %v5452, %v5454
    %v5458 = vmul.f32 %v5447, %v5452
    %v5459 = vmul.f32 %v5448, %v5455
    %v5460 = vrot.slane %v5256, 7
    %v5461 = vrot.slane %v5257, 7
    %v5464 = vmul.f32 %v5419, %v5460
    %v5465 = vmul.f32 %v5429, %v5461
    %v5466 = vadd.f32 %v5458, %v5464
    %v5467 = vadd.f32 %v5459, %v5465
    %v5470 = vrot.slane %v5466, 4
    %v5471 = vrot.slane %v5467, 4
    %5472 = vrot.lane.b32.xlu0 %v5470, 32
    %v5473 = vpop.permute.xlu0 %5472
    %5474 = vrot.lane.b32.xlu0 %v5471, 32
    %v5475 = vpop.permute.xlu0 %5474
    %v5476 = vsel %vm760, %v5473, %v5475
    %v5477 = vsel %vm575, %v5476, 0
    %5479 = vmatprep.subr.mxu0 %v4222
    %5480 = vmatpush1.msra.mxu0 %v4221
    %5481 = vmatprep.subr.mxu0 %v4225
    %5482 = vmatpush1.msra.mxu0 %v4224
    %5483 = vmatprep.subr.mxu0 %v4228
    %5484 = vmatpush1.msra.mxu0 %v4227
    %5485 = vmatprep.subr.mxu0 %v4231
    %5486 = vmatpush1.msra.mxu0 %v4230
    %5487 = vmatprep.subr.mxu0 %v4234
    %5488 = vmatpush1.msra.mxu0 %v4233
    %5489 = vmatprep.subr.mxu0 %v4237
    %5490 = vmatpush1.msra.mxu0 %v4236
    %5491 = vmatprep.subr.mxu0 %v4240
    %5492 = vmatpush1.msra.mxu0 %v4239
    %5493 = vmatprep.subr.mxu0 %v4243
    %5494 = vmatpush1.msra.mxu0 %v4242
    %5495 = vmatprep.subr.mxu0 %v4246
    %5496 = vmatpush1.msra.mxu0 %v4245
    %5497 = vmatprep.subr.mxu0 %v4249
    %5498 = vmatpush1.msra.mxu0 %v4248
    %5499 = vmatprep.subr.mxu0 %v4252
    %5500 = vmatpush1.msra.mxu0 %v4251
    %5501 = vmatprep.subr.mxu0 %v4255
    %5502 = vmatpush1.msra.mxu0 %v4254
    %5503 = vmatprep.subr.mxu0 0.0
    %5504 = vmatpush1.msra.mxu0 0.0
    %5505 = vmatprep.subr.mxu0 0.0
    %5506 = vmatpush1.msra.mxu0 0.0
    %5507 = vmatprep.subr.mxu0 0.0
    %5508 = vmatpush1.msra.mxu0 0.0
    %5509 = vmatprep.subr.mxu0 0.0
    %5510 = vmatpush1.msra.mxu0 0.0
    %5511 = vmatprep.subr.mxu0 0.0
    %5512 = vmatpush1.msra.mxu0 0.0
    %5513 = vmatprep.subr.mxu0 0.0
    %5514 = vmatpush1.msra.mxu0 0.0
    %5515 = vmatprep.subr.mxu0 0.0
    %5516 = vmatpush1.msra.mxu0 0.0
    %5517 = vmatprep.subr.mxu0 0.0
    %5518 = vmatpush1.msra.mxu0 0.0
    %5519 = vmatprep.subr.mxu0 0.0
    %5520 = vmatpush1.msra.mxu0 0.0
    %5521 = vmatprep.subr.mxu0 0.0
    %5522 = vmatpush1.msra.mxu0 0.0
    %5523 = vmatprep.subr.mxu0 0.0
    %5524 = vmatpush1.msra.mxu0 0.0
    %5525 = vmatprep.subr.mxu0 0.0
    %5526 = vmatpush1.msra.mxu0 0.0
    %5527 = vmatprep.subr.mxu0 0.0
    %5528 = vmatpush1.msra.mxu0 0.0
    %5529 = vmatprep.subr.mxu0 0.0
    %5530 = vmatpush1.msra.mxu0 0.0
    %5531 = vmatprep.subr.mxu0 0.0
    %5532 = vmatpush1.msra.mxu0 0.0
    %5533 = vmatprep.subr.mxu0 0.0
    %5534 = vmatpush1.msra.mxu0 0.0
    %5535 = vmatprep.subr.mxu0 0.0
    %5536 = vmatpush1.msra.mxu0 0.0
    %5537 = vmatprep.subr.mxu0 0.0
    %5538 = vmatpush1.msra.mxu0 0.0
    %5539 = vmatprep.subr.mxu0 0.0
    %5540 = vmatpush1.msra.mxu0 0.0
    %5541 = vmatprep.subr.mxu0 0.0
    %5542 = vmatpush1.msra.mxu0 0.0
    %5543 = vmatprep.mubr.f32.mxu0 0.0
    %5544 = vmatmul.mubr.f32.gmra.mrb[0].mxu0 %v5477
    %v5545 = vpop.f32.mrb[0].mxu0
    %v5546 = vadd.f32 %v4429, %v5545
    %v5547 = vpop.f32.mrb[0].mxu0
    %v5548 = vadd.f32 %v4433, %v5547
    %5549 = vdwg.mxu0
    %5550 = vmatprep.subr.mxu0 0.0
    %5551 = vmatpush1.msra.mxu0 %v4223
    %5552 = vmatprep.subr.mxu0 0.0
    %5553 = vmatpush1.msra.mxu0 %v4226
    %5554 = vmatprep.subr.mxu0 0.0
    %5555 = vmatpush1.msra.mxu0 %v4229
    %5556 = vmatprep.subr.mxu0 0.0
    %5557 = vmatpush1.msra.mxu0 %v4232
    %5558 = vmatprep.subr.mxu0 0.0
    %5559 = vmatpush1.msra.mxu0 %v4235
    %5560 = vmatprep.subr.mxu0 0.0
    %5561 = vmatpush1.msra.mxu0 %v4238
    %5562 = vmatprep.subr.mxu0 0.0
    %5563 = vmatpush1.msra.mxu0 %v4241
    %5564 = vmatprep.subr.mxu0 0.0
    %5565 = vmatpush1.msra.mxu0 %v4244
    %5566 = vmatprep.subr.mxu0 0.0
    %5567 = vmatpush1.msra.mxu0 %v4247
    %5568 = vmatprep.subr.mxu0 0.0
    %5569 = vmatpush1.msra.mxu0 %v4250
    %5570 = vmatprep.subr.mxu0 0.0
    %5571 = vmatpush1.msra.mxu0 %v4253
    %5572 = vmatprep.subr.mxu0 0.0
    %5573 = vmatpush1.msra.mxu0 %v4256
    %5574 = vmatprep.subr.mxu0 0.0
    %5575 = vmatpush1.msra.mxu0 0.0
    %5576 = vmatprep.subr.mxu0 0.0
    %5577 = vmatpush1.msra.mxu0 0.0
    %5578 = vmatprep.subr.mxu0 0.0
    %5579 = vmatpush1.msra.mxu0 0.0
    %5580 = vmatprep.subr.mxu0 0.0
    %5581 = vmatpush1.msra.mxu0 0.0
    %5582 = vmatprep.subr.mxu0 0.0
    %5583 = vmatpush1.msra.mxu0 0.0
    %5584 = vmatprep.subr.mxu0 0.0
    %5585 = vmatpush1.msra.mxu0 0.0
    %5586 = vmatprep.subr.mxu0 0.0
    %5587 = vmatpush1.msra.mxu0 0.0
    %5588 = vmatprep.subr.mxu0 0.0
    %5589 = vmatpush1.msra.mxu0 0.0
    %5590 = vmatprep.subr.mxu0 0.0
    %5591 = vmatpush1.msra.mxu0 0.0
    %5592 = vmatprep.subr.mxu0 0.0
    %5593 = vmatpush1.msra.mxu0 0.0
    %5594 = vmatprep.subr.mxu0 0.0
    %5595 = vmatpush1.msra.mxu0 0.0
    %5596 = vmatprep.subr.mxu0 0.0
    %5597 = vmatpush1.msra.mxu0 0.0
    %5598 = vmatprep.subr.mxu0 0.0
    %5599 = vmatpush1.msra.mxu0 0.0
    %5600 = vmatprep.subr.mxu0 0.0
    %5601 = vmatpush1.msra.mxu0 0.0
    %5602 = vmatprep.subr.mxu0 0.0
    %5603 = vmatpush1.msra.mxu0 0.0
    %5604 = vmatprep.subr.mxu0 0.0
    %5605 = vmatpush1.msra.mxu0 0.0
    %5606 = vmatprep.subr.mxu0 0.0
    %5607 = vmatpush1.msra.mxu0 0.0
    %5608 = vmatprep.subr.mxu0 0.0
    %5609 = vmatpush1.msra.mxu0 0.0
    %5610 = vmatprep.subr.mxu0 0.0
    %5611 = vmatpush1.msra.mxu0 0.0
    %5612 = vmatprep.subr.mxu0 0.0
    %5613 = vmatpush1.msra.mxu0 0.0
    %5614 = vmatprep.mubr.f32.mxu0 0.0
    %5615 = vmatmul.mubr.f32.gmra.mrb[0].mxu0 %v5477
    %v5616 = vpop.f32.mrb[0].mxu0
    %v5617 = vadd.f32 %v4437, %v5616
    %v5618 = vpop.f32.mrb[0].mxu0
    %5619 = vdwg.mxu0
    %v5621 = vrot.slane %v5546, 3
    %v5623 = vadd.f32 %v4351, %v5621
    %v5624 = vxor.u32 %v5623, 2147483648
    %v5625 = vmul.f32 %v5624, 1.442695
    %v5626 = vpow.pop %v5625
    %v5627 = vadd.f32 %v5626, 1.0
    %v5628 = vrcp.pop %v5627
    %v5629 = vmul.f32 1.0, %v5628
    %v5631 = vrot.slane %v5548, 3
    %v5633 = vadd.f32 %v4353, %v5631
    %v5634 = vxor.u32 %v5633, 2147483648
    %v5635 = vmul.f32 %v5634, 1.442695
    %v5636 = vpow.pop %v5635
    %v5637 = vadd.f32 %v5636, 1.0
    %v5638 = vrcp.pop %v5637
    %v5639 = vmul.f32 1.0, %v5638
    %v5641 = vrot.slane %v5617, 3
    %5642 = vrot.lane.b32.xlu0 %v5631, 64
    %v5643 = vpop.permute.xlu0 %5642
    %5644 = vrot.lane.b32.xlu0 %v5641, 64
    %v5645 = vpop.permute.xlu0 %5644
    %v5646 = vsel %vm740, %v5643, %v5645
    %v5648 = vmul.f32 %v5629, %v5646
    %5650 = vrot.lane.b32.xlu0 %v5648, 64
    %v5651 = vpop.permute.xlu0 %5650
    %v5653 = vadd.f32 %v4353, %v5651
    %v5654 = vadd.f32 %v4422, %v5651
    %v5655 = vtanh.pop %v5653
    %v5656 = vtanh.pop %v5654
    %v5657 = vsub.f32 1.0, %v5629
    %v5658 = vsub.f32 1.0, %v5639
    %5661 = vrot.lane.b32.xlu0 %v5655, 32
    %v5662 = vpop.permute.xlu0 %5661
    %5663 = vrot.lane.b32.xlu0 %v5656, 32
    %v5664 = vpop.permute.xlu0 %5663
    %v5665 = vsel %vm760, %v5662, %v5664
    %v5668 = vmul.f32 %v5657, %v5662
    %v5669 = vmul.f32 %v5658, %v5665
    %v5670 = vrot.slane %v5466, 7
    %v5671 = vrot.slane %v5467, 7
    %v5674 = vmul.f32 %v5629, %v5670
    %v5675 = vmul.f32 %v5639, %v5671
    %v5676 = vadd.f32 %v5668, %v5674
    %v5677 = vadd.f32 %v5669, %v5675
    %v5680 = vrot.slane %v5676, 5
    %v5681 = vrot.slane %v5677, 5
    %5682 = vrot.lane.b32.xlu0 %v5680, 32
    %v5683 = vpop.permute.xlu0 %5682
    %5684 = vrot.lane.b32.xlu0 %v5681, 32
    %v5685 = vpop.permute.xlu0 %5684
    %v5686 = vsel %vm760, %v5683, %v5685
    %v5687 = vsel %vm575, %v5686, 0
    %5689 = vmatprep.subr.mxu0 %v4222
    %5690 = vmatpush1.msra.mxu0 %v4221
    %5691 = vmatprep.subr.mxu0 %v4225
    %5692 = vmatpush1.msra.mxu0 %v4224
    %5693 = vmatprep.subr.mxu0 %v4228
    %5694 = vmatpush1.msra.mxu0 %v4227
    %5695 = vmatprep.subr.mxu0 %v4231
    %5696 = vmatpush1.msra.mxu0 %v4230
    %5697 = vmatprep.subr.mxu0 %v4234
    %5698 = vmatpush1.msra.mxu0 %v4233
    %5699 = vmatprep.subr.mxu0 %v4237
    %5700 = vmatpush1.msra.mxu0 %v4236
    %5701 = vmatprep.subr.mxu0 %v4240
    %5702 = vmatpush1.msra.mxu0 %v4239
    %5703 = vmatprep.subr.mxu0 %v4243
    %5704 = vmatpush1.msra.mxu0 %v4242
    %5705 = vmatprep.subr.mxu0 %v4246
    %5706 = vmatpush1.msra.mxu0 %v4245
    %5707 = vmatprep.subr.mxu0 %v4249
    %5708 = vmatpush1.msra.mxu0 %v4248
    %5709 = vmatprep.subr.mxu0 %v4252
    %5710 = vmatpush1.msra.mxu0 %v4251
    %5711 = vmatprep.subr.mxu0 %v4255
    %5712 = vmatpush1.msra.mxu0 %v4254
    %5713 = vmatprep.subr.mxu0 0.0
    %5714 = vmatpush1.msra.mxu0 0.0
    %5715 = vmatprep.subr.mxu0 0.0
    %5716 = vmatpush1.msra.mxu0 0.0
    %5717 = vmatprep.subr.mxu0 0.0
    %5718 = vmatpush1.msra.mxu0 0.0
    %5719 = vmatprep.subr.mxu0 0.0
    %5720 = vmatpush1.msra.mxu0 0.0
    %5721 = vmatprep.subr.mxu0 0.0
    %5722 = vmatpush1.msra.mxu0 0.0
    %5723 = vmatprep.subr.mxu0 0.0
    %5724 = vmatpush1.msra.mxu0 0.0
    %5725 = vmatprep.subr.mxu0 0.0
    %5726 = vmatpush1.msra.mxu0 0.0
    %5727 = vmatprep.subr.mxu0 0.0
    %5728 = vmatpush1.msra.mxu0 0.0
    %5729 = vmatprep.subr.mxu0 0.0
    %5730 = vmatpush1.msra.mxu0 0.0
    %5731 = vmatprep.subr.mxu0 0.0
    %5732 = vmatpush1.msra.mxu0 0.0
    %5733 = vmatprep.subr.mxu0 0.0
    %5734 = vmatpush1.msra.mxu0 0.0
    %5735 = vmatprep.subr.mxu0 0.0
    %5736 = vmatpush1.msra.mxu0 0.0
    %5737 = vmatprep.subr.mxu0 0.0
    %5738 = vmatpush1.msra.mxu0 0.0
    %5739 = vmatprep.subr.mxu0 0.0
    %5740 = vmatpush1.msra.mxu0 0.0
    %5741 = vmatprep.subr.mxu0 0.0
    %5742 = vmatpush1.msra.mxu0 0.0
    %5743 = vmatprep.subr.mxu0 0.0
    %5744 = vmatpush1.msra.mxu0 0.0
    %5745 = vmatprep.subr.mxu0 0.0
    %5746 = vmatpush1.msra.mxu0 0.0
    %5747 = vmatprep.subr.mxu0 0.0
    %5748 = vmatpush1.msra.mxu0 0.0
    %5749 = vmatprep.subr.mxu0 0.0
    %5750 = vmatpush1.msra.mxu0 0.0
    %5751 = vmatprep.subr.mxu0 0.0
    %5752 = vmatpush1.msra.mxu0 0.0
    %5753 = vmatprep.mubr.f32.mxu0 0.0
    %5754 = vmatmul.mubr.f32.gmra.mrb[0].mxu0 %v5687
    %v5755 = vpop.f32.mrb[0].mxu0
    %v5756 = vadd.f32 %v4429, %v5755
    %v5757 = vpop.f32.mrb[0].mxu0
    %v5758 = vadd.f32 %v4433, %v5757
    %5759 = vdwg.mxu0
    %5760 = vmatprep.subr.mxu0 0.0
    %5761 = vmatpush1.msra.mxu0 %v4223
    %5762 = vmatprep.subr.mxu0 0.0
    %5763 = vmatpush1.msra.mxu0 %v4226
    %5764 = vmatprep.subr.mxu0 0.0
    %5765 = vmatpush1.msra.mxu0 %v4229
    %5766 = vmatprep.subr.mxu0 0.0
    %5767 = vmatpush1.msra.mxu0 %v4232
    %5768 = vmatprep.subr.mxu0 0.0
    %5769 = vmatpush1.msra.mxu0 %v4235
    %5770 = vmatprep.subr.mxu0 0.0
    %5771 = vmatpush1.msra.mxu0 %v4238
    %5772 = vmatprep.subr.mxu0 0.0
    %5773 = vmatpush1.msra.mxu0 %v4241
    %5774 = vmatprep.subr.mxu0 0.0
    %5775 = vmatpush1.msra.mxu0 %v4244
    %5776 = vmatprep.subr.mxu0 0.0
    %5777 = vmatpush1.msra.mxu0 %v4247
    %5778 = vmatprep.subr.mxu0 0.0
    %5779 = vmatpush1.msra.mxu0 %v4250
    %5780 = vmatprep.subr.mxu0 0.0
    %5781 = vmatpush1.msra.mxu0 %v4253
    %5782 = vmatprep.subr.mxu0 0.0
    %5783 = vmatpush1.msra.mxu0 %v4256
    %5784 = vmatprep.subr.mxu0 0.0
    %5785 = vmatpush1.msra.mxu0 0.0
    %5786 = vmatprep.subr.mxu0 0.0
    %5787 = vmatpush1.msra.mxu0 0.0
    %5788 = vmatprep.subr.mxu0 0.0
    %5789 = vmatpush1.msra.mxu0 0.0
    %5790 = vmatprep.subr.mxu0 0.0
    %5791 = vmatpush1.msra.mxu0 0.0
    %5792 = vmatprep.subr.mxu0 0.0
    %5793 = vmatpush1.msra.mxu0 0.0
    %5794 = vmatprep.subr.mxu0 0.0
    %5795 = vmatpush1.msra.mxu0 0.0
    %5796 = vmatprep.subr.mxu0 0.0
    %5797 = vmatpush1.msra.mxu0 0.0
    %5798 = vmatprep.subr.mxu0 0.0
    %5799 = vmatpush1.msra.mxu0 0.0
    %5800 = vmatprep.subr.mxu0 0.0
    %5801 = vmatpush1.msra.mxu0 0.0
    %5802 = vmatprep.subr.mxu0 0.0
    %5803 = vmatpush1.msra.mxu0 0.0
    %5804 = vmatprep.subr.mxu0 0.0
    %5805 = vmatpush1.msra.mxu0 0.0
    %5806 = vmatprep.subr.mxu0 0.0
    %5807 = vmatpush1.msra.mxu0 0.0
    %5808 = vmatprep.subr.mxu0 0.0
    %5809 = vmatpush1.msra.mxu0 0.0
    %5810 = vmatprep.subr.mxu0 0.0
    %5811 = vmatpush1.msra.mxu0 0.0
    %5812 = vmatprep.subr.mxu0 0.0
    %5813 = vmatpush1.msra.mxu0 0.0
    %5814 = vmatprep.subr.mxu0 0.0
    %5815 = vmatpush1.msra.mxu0 0.0
    %5816 = vmatprep.subr.mxu0 0.0
    %5817 = vmatpush1.msra.mxu0 0.0
    %5818 = vmatprep.subr.mxu0 0.0
    %5819 = vmatpush1.msra.mxu0 0.0
    %5820 = vmatprep.subr.mxu0 0.0
    %5821 = vmatpush1.msra.mxu0 0.0
    %5822 = vmatprep.subr.mxu0 0.0
    %5823 = vmatpush1.msra.mxu0 0.0
    %5824 = vmatprep.mubr.f32.mxu0 0.0
    %5825 = vmatmul.mubr.f32.gmra.mrb[0].mxu0 %v5687
    %v5826 = vpop.f32.mrb[0].mxu0
    %v5827 = vadd.f32 %v4437, %v5826
    %v5828 = vpop.f32.mrb[0].mxu0
    %5829 = vdwg.mxu0
    %v5831 = vrot.slane %v5756, 2
    %v5833 = vadd.f32 %v4351, %v5831
    %v5834 = vxor.u32 %v5833, 2147483648
    %v5835 = vmul.f32 %v5834, 1.442695
    %v5836 = vpow.pop %v5835
    %v5837 = vadd.f32 %v5836, 1.0
    %v5838 = vrcp.pop %v5837
    %v5839 = vmul.f32 1.0, %v5838
    %v5841 = vrot.slane %v5758, 2
    %v5843 = vadd.f32 %v4353, %v5841
    %v5844 = vxor.u32 %v5843, 2147483648
    %v5845 = vmul.f32 %v5844, 1.442695
    %v5846 = vpow.pop %v5845
    %v5847 = vadd.f32 %v5846, 1.0
    %v5848 = vrcp.pop %v5847
    %v5849 = vmul.f32 1.0, %v5848
    %v5851 = vrot.slane %v5827, 2
    %5852 = vrot.lane.b32.xlu0 %v5841, 64
    %v5853 = vpop.permute.xlu0 %5852
    %5854 = vrot.lane.b32.xlu0 %v5851, 64
    %v5855 = vpop.permute.xlu0 %5854
    %v5856 = vsel %vm740, %v5853, %v5855
    %v5858 = vmul.f32 %v5839, %v5856
    %5860 = vrot.lane.b32.xlu0 %v5858, 64
    %v5861 = vpop.permute.xlu0 %5860
    %v5863 = vadd.f32 %v4353, %v5861
    %v5864 = vadd.f32 %v4422, %v5861
    %v5865 = vtanh.pop %v5863
    %v5866 = vtanh.pop %v5864
    %v5867 = vsub.f32 1.0, %v5839
    %v5868 = vsub.f32 1.0, %v5849
    %5871 = vrot.lane.b32.xlu0 %v5865, 32
    %v5872 = vpop.permute.xlu0 %5871
    %5873 = vrot.lane.b32.xlu0 %v5866, 32
    %v5874 = vpop.permute.xlu0 %5873
    %v5875 = vsel %vm760, %v5872, %v5874
    %v5878 = vmul.f32 %v5867, %v5872
    %v5879 = vmul.f32 %v5868, %v5875
    %v5880 = vrot.slane %v5676, 7
    %v5881 = vrot.slane %v5677, 7
    %v5884 = vmul.f32 %v5839, %v5880
    %v5885 = vmul.f32 %v5849, %v5881
    %v5886 = vadd.f32 %v5878, %v5884
    %v5887 = vadd.f32 %v5879, %v5885
    %v5890 = vrot.slane %v5886, 6
    %v5891 = vrot.slane %v5887, 6
    %5892 = vrot.lane.b32.xlu0 %v5890, 32
    %v5893 = vpop.permute.xlu0 %5892
    %5894 = vrot.lane.b32.xlu0 %v5891, 32
    %v5895 = vpop.permute.xlu0 %5894
    %v5896 = vsel %vm760, %v5893, %v5895
    %v5897 = vsel %vm575, %v5896, 0
    %5899 = vmatprep.subr.mxu0 %v4222
    %5900 = vmatpush1.msra.mxu0 %v4221
    %5901 = vmatprep.subr.mxu0 %v4225
    %5902 = vmatpush1.msra.mxu0 %v4224
    %5903 = vmatprep.subr.mxu0 %v4228
    %5904 = vmatpush1.msra.mxu0 %v4227
    %5905 = vmatprep.subr.mxu0 %v4231
    %5906 = vmatpush1.msra.mxu0 %v4230
    %5907 = vmatprep.subr.mxu0 %v4234
    %5908 = vmatpush1.msra.mxu0 %v4233
    %5909 = vmatprep.subr.mxu0 %v4237
    %5910 = vmatpush1.msra.mxu0 %v4236
    %5911 = vmatprep.subr.mxu0 %v4240
    %5912 = vmatpush1.msra.mxu0 %v4239
    %5913 = vmatprep.subr.mxu0 %v4243
    %5914 = vmatpush1.msra.mxu0 %v4242
    %5915 = vmatprep.subr.mxu0 %v4246
    %5916 = vmatpush1.msra.mxu0 %v4245
    %5917 = vmatprep.subr.mxu0 %v4249
    %5918 = vmatpush1.msra.mxu0 %v4248
    %5919 = vmatprep.subr.mxu0 %v4252
    %5920 = vmatpush1.msra.mxu0 %v4251
    %5921 = vmatprep.subr.mxu0 %v4255
    %5922 = vmatpush1.msra.mxu0 %v4254
    %5923 = vmatprep.subr.mxu0 0.0
    %5924 = vmatpush1.msra.mxu0 0.0
    %5925 = vmatprep.subr.mxu0 0.0
    %5926 = vmatpush1.msra.mxu0 0.0
    %5927 = vmatprep.subr.mxu0 0.0
    %5928 = vmatpush1.msra.mxu0 0.0
    %5929 = vmatprep.subr.mxu0 0.0
    %5930 = vmatpush1.msra.mxu0 0.0
    %5931 = vmatprep.subr.mxu0 0.0
    %5932 = vmatpush1.msra.mxu0 0.0
    %5933 = vmatprep.subr.mxu0 0.0
    %5934 = vmatpush1.msra.mxu0 0.0
    %5935 = vmatprep.subr.mxu0 0.0
    %5936 = vmatpush1.msra.mxu0 0.0
    %5937 = vmatprep.subr.mxu0 0.0
    %5938 = vmatpush1.msra.mxu0 0.0
    %5939 = vmatprep.subr.mxu0 0.0
    %5940 = vmatpush1.msra.mxu0 0.0
    %5941 = vmatprep.subr.mxu0 0.0
    %5942 = vmatpush1.msra.mxu0 0.0
    %5943 = vmatprep.subr.mxu0 0.0
    %5944 = vmatpush1.msra.mxu0 0.0
    %5945 = vmatprep.subr.mxu0 0.0
    %5946 = vmatpush1.msra.mxu0 0.0
    %5947 = vmatprep.subr.mxu0 0.0
    %5948 = vmatpush1.msra.mxu0 0.0
    %5949 = vmatprep.subr.mxu0 0.0
    %5950 = vmatpush1.msra.mxu0 0.0
    %5951 = vmatprep.subr.mxu0 0.0
    %5952 = vmatpush1.msra.mxu0 0.0
    %5953 = vmatprep.subr.mxu0 0.0
    %5954 = vmatpush1.msra.mxu0 0.0
    %5955 = vmatprep.subr.mxu0 0.0
    %5956 = vmatpush1.msra.mxu0 0.0
    %5957 = vmatprep.subr.mxu0 0.0
    %5958 = vmatpush1.msra.mxu0 0.0
    %5959 = vmatprep.subr.mxu0 0.0
    %5960 = vmatpush1.msra.mxu0 0.0
    %5961 = vmatprep.subr.mxu0 0.0
    %5962 = vmatpush1.msra.mxu0 0.0
    %5963 = vmatprep.mubr.f32.mxu0 0.0
    %5964 = vmatmul.mubr.f32.gmra.mrb[0].mxu0 %v5897
    %v5965 = vpop.f32.mrb[0].mxu0
    %v5966 = vadd.f32 %v4429, %v5965
    %v5967 = vpop.f32.mrb[0].mxu0
    %v5968 = vadd.f32 %v4433, %v5967
    %5969 = vdwg.mxu0
    %5970 = vmatprep.subr.mxu0 0.0
    %5971 = vmatpush1.msra.mxu0 %v4223
    %5972 = vmatprep.subr.mxu0 0.0
    %5973 = vmatpush1.msra.mxu0 %v4226
    %5974 = vmatprep.subr.mxu0 0.0
    %5975 = vmatpush1.msra.mxu0 %v4229
    %5976 = vmatprep.subr.mxu0 0.0
    %5977 = vmatpush1.msra.mxu0 %v4232
    %5978 = vmatprep.subr.mxu0 0.0
    %5979 = vmatpush1.msra.mxu0 %v4235
    %5980 = vmatprep.subr.mxu0 0.0
    %5981 = vmatpush1.msra.mxu0 %v4238
    %5982 = vmatprep.subr.mxu0 0.0
    %5983 = vmatpush1.msra.mxu0 %v4241
    %5984 = vmatprep.subr.mxu0 0.0
    %5985 = vmatpush1.msra.mxu0 %v4244
    %5986 = vmatprep.subr.mxu0 0.0
    %5987 = vmatpush1.msra.mxu0 %v4247
    %5988 = vmatprep.subr.mxu0 0.0
    %5989 = vmatpush1.msra.mxu0 %v4250
    %5990 = vmatprep.subr.mxu0 0.0
    %5991 = vmatpush1.msra.mxu0 %v4253
    %5992 = vmatprep.subr.mxu0 0.0
    %5993 = vmatpush1.msra.mxu0 %v4256
    %5994 = vmatprep.subr.mxu0 0.0
    %5995 = vmatpush1.msra.mxu0 0.0
    %5996 = vmatprep.subr.mxu0 0.0
    %5997 = vmatpush1.msra.mxu0 0.0
    %5998 = vmatprep.subr.mxu0 0.0
    %5999 = vmatpush1.msra.mxu0 0.0
    %6000 = vmatprep.subr.mxu0 0.0
    %6001 = vmatpush1.msra.mxu0 0.0
    %6002 = vmatprep.subr.mxu0 0.0
    %6003 = vmatpush1.msra.mxu0 0.0
    %6004 = vmatprep.subr.mxu0 0.0
    %6005 = vmatpush1.msra.mxu0 0.0
    %6006 = vmatprep.subr.mxu0 0.0
    %6007 = vmatpush1.msra.mxu0 0.0
    %6008 = vmatprep.subr.mxu0 0.0
    %6009 = vmatpush1.msra.mxu0 0.0
    %6010 = vmatprep.subr.mxu0 0.0
    %6011 = vmatpush1.msra.mxu0 0.0
    %6012 = vmatprep.subr.mxu0 0.0
    %6013 = vmatpush1.msra.mxu0 0.0
    %6014 = vmatprep.subr.mxu0 0.0
    %6015 = vmatpush1.msra.mxu0 0.0
    %6016 = vmatprep.subr.mxu0 0.0
    %6017 = vmatpush1.msra.mxu0 0.0
    %6018 = vmatprep.subr.mxu0 0.0
    %6019 = vmatpush1.msra.mxu0 0.0
    %6020 = vmatprep.subr.mxu0 0.0
    %6021 = vmatpush1.msra.mxu0 0.0
    %6022 = vmatprep.subr.mxu0 0.0
    %6023 = vmatpush1.msra.mxu0 0.0
    %6024 = vmatprep.subr.mxu0 0.0
    %6025 = vmatpush1.msra.mxu0 0.0
    %6026 = vmatprep.subr.mxu0 0.0
    %6027 = vmatpush1.msra.mxu0 0.0
    %6028 = vmatprep.subr.mxu0 0.0
    %6029 = vmatpush1.msra.mxu0 0.0
    %6030 = vmatprep.subr.mxu0 0.0
    %6031 = vmatpush1.msra.mxu0 0.0
    %6032 = vmatprep.subr.mxu0 0.0
    %6033 = vmatpush1.msra.mxu0 0.0
    %6034 = vmatprep.mubr.f32.mxu0 0.0
    %6035 = vmatmul.mubr.f32.gmra.mrb[0].mxu0 %v5897
    %v6036 = vpop.f32.mrb[0].mxu0
    %v6037 = vadd.f32 %v4437, %v6036
    %v6038 = vpop.f32.mrb[0].mxu0
    %6039 = vdwg.mxu0
    %v6041 = vrot.slane %v5966, 1
    %v6043 = vadd.f32 %v4351, %v6041
    %v6044 = vxor.u32 %v6043, 2147483648
    %v6045 = vmul.f32 %v6044, 1.442695
    %v6046 = vpow.pop %v6045
    %v6047 = vadd.f32 %v6046, 1.0
    %v6048 = vrcp.pop %v6047
    %v6049 = vmul.f32 1.0, %v6048
    %v6051 = vrot.slane %v5968, 1
    %v6053 = vadd.f32 %v4353, %v6051
    %v6054 = vxor.u32 %v6053, 2147483648
    %v6055 = vmul.f32 %v6054, 1.442695
    %v6056 = vpow.pop %v6055
    %v6057 = vadd.f32 %v6056, 1.0
    %v6058 = vrcp.pop %v6057
    %v6059 = vmul.f32 1.0, %v6058
    %v6061 = vrot.slane %v6037, 1
    %6062 = vrot.lane.b32.xlu0 %v6051, 64
    %v6063 = vpop.permute.xlu0 %6062
    %6064 = vrot.lane.b32.xlu0 %v6061, 64
    %v6065 = vpop.permute.xlu0 %6064
    %v6066 = vsel %vm740, %v6063, %v6065
    %v6068 = vmul.f32 %v6049, %v6066
    %6070 = vrot.lane.b32.xlu0 %v6068, 64
    %v6071 = vpop.permute.xlu0 %6070
    %v6073 = vadd.f32 %v4353, %v6071
    %v6074 = vadd.f32 %v4422, %v6071
    %v6075 = vtanh.pop %v6073
    %v6076 = vtanh.pop %v6074
    %v6077 = vsub.f32 1.0, %v6049
    %v6078 = vsub.f32 1.0, %v6059
    %6081 = vrot.lane.b32.xlu0 %v6075, 32
    %v6082 = vpop.permute.xlu0 %6081
    %6083 = vrot.lane.b32.xlu0 %v6076, 32
    %v6084 = vpop.permute.xlu0 %6083
    %v6085 = vsel %vm760, %v6082, %v6084
    %v6088 = vmul.f32 %v6077, %v6082
    %v6089 = vmul.f32 %v6078, %v6085
    %v6090 = vrot.slane %v5886, 7
    %v6091 = vrot.slane %v5887, 7
    %v6094 = vmul.f32 %v6049, %v6090
    %v6095 = vmul.f32 %v6059, %v6091
    %v6096 = vadd.f32 %v6088, %v6094
    %v6097 = vadd.f32 %v6089, %v6095
    %v6098 = vsel %vm2238, %v4628, %v4836
    %v6099 = vsel %vm2238, %v4629, %v4837
    %v6100 = vsel %vm2241, %v6098, %v5046
    %v6101 = vsel %vm2241, %v6099, %v5047
    %v6102 = vsel %vm2244, %v6100, %v5256
    %v6103 = vsel %vm2244, %v6101, %v5257
    %v6104 = vsel %vm2247, %v6102, %v5466
    %v6105 = vsel %vm2247, %v6103, %v5467
    %v6106 = vsel %vm2250, %v6104, %v5676
    %v6107 = vsel %vm2250, %v6105, %v5677
    %v6108 = vsel %vm266, %v6106, %v5886
    %v6109 = vsel %vm266, %v6107, %v5887
    %v6110 = vsel %vm2255, %v6108, %v6096
    %v6111 = vsel %vm2255, %v6109, %v6097
    %v6112 = vld [vmem:[%s17] sm:$0xff]
    %v6113 = vld [vmem:[%s17 + $0x8] sm:$0xff]
    %v6114 = vld [vmem:[%s17 + $0x10] sm:$0xff]
    %v6115 = vld [vmem:[%s17 + $0x18] sm:$0xff]
    %v6116 = vld [vmem:[%s18] sm:$0xff]
    %v6117 = vld [vmem:[%s18 + $0x8] sm:$0xff]
    %v6118 = vld [vmem:[%s18 + $0x10] sm:$0xff]
    %v6119 = vld [vmem:[%s18 + $0x18] sm:$0xff]
    %v6120 = vld [vmem:[%s18 + $0x20] sm:$0xff]
    %v6121 = vld [vmem:[%s18 + $0x28] sm:$0xff]
    %v6122 = vld [vmem:[%s18 + $0x30] sm:$0xff]
    %v6123 = vld [vmem:[%s18 + $0x38] sm:$0xff]
    %v6124 = vld [vmem:[%s18 + $0x40] sm:$0xff]
    %v6125 = vld [vmem:[%s18 + $0x48] sm:$0xff]
    %v6126 = vld [vmem:[%s18 + $0x50] sm:$0xff]
    %v6127 = vld [vmem:[%s18 + $0x58] sm:$0xff]
    %6130 = vrot.lane.b32.xlu0 %v6110, 32
    %v6131 = vpop.permute.xlu0 %6130
    %6132 = vrot.lane.b32.xlu0 %v6111, 32
    %v6133 = vpop.permute.xlu0 %6132
    %v6134 = vsel %vm760, %v6131, %v6133
    %v6135 = vsel %vm575, %v6134, 0
    %6137 = vmatprep.subr.mxu0 0.0
    %6138 = vmatpush1.msra.mxu0 %v6116
    %6139 = vmatprep.subr.mxu0 0.0
    %6140 = vmatpush1.msra.mxu0 %v6117
    %6141 = vmatprep.subr.mxu0 0.0
    %6142 = vmatpush1.msra.mxu0 %v6118
    %6143 = vmatprep.subr.mxu0 0.0
    %6144 = vmatpush1.msra.mxu0 %v6119
    %6145 = vmatprep.subr.mxu0 0.0
    %6146 = vmatpush1.msra.mxu0 %v6120
    %6147 = vmatprep.subr.mxu0 0.0
    %6148 = vmatpush1.msra.mxu0 %v6121
    %6149 = vmatprep.subr.mxu0 0.0
    %6150 = vmatpush1.msra.mxu0 %v6122
    %6151 = vmatprep.subr.mxu0 0.0
    %6152 = vmatpush1.msra.mxu0 %v6123
    %6153 = vmatprep.subr.mxu0 0.0
    %6154 = vmatpush1.msra.mxu0 %v6124
    %6155 = vmatprep.subr.mxu0 0.0
    %6156 = vmatpush1.msra.mxu0 %v6125
    %6157 = vmatprep.subr.mxu0 0.0
    %6158 = vmatpush1.msra.mxu0 %v6126
    %6159 = vmatprep.subr.mxu0 0.0
    %6160 = vmatpush1.msra.mxu0 %v6127
    %6161 = vmatprep.subr.mxu0 0.0
    %6162 = vmatpush1.msra.mxu0 0.0
    %6163 = vmatprep.subr.mxu0 0.0
    %6164 = vmatpush1.msra.mxu0 0.0
    %6165 = vmatprep.subr.mxu0 0.0
    %6166 = vmatpush1.msra.mxu0 0.0
    %6167 = vmatprep.subr.mxu0 0.0
    %6168 = vmatpush1.msra.mxu0 0.0
    %6169 = vmatprep.subr.mxu0 0.0
    %6170 = vmatpush1.msra.mxu0 0.0
    %6171 = vmatprep.subr.mxu0 0.0
    %6172 = vmatpush1.msra.mxu0 0.0
    %6173 = vmatprep.subr.mxu0 0.0
    %6174 = vmatpush1.msra.mxu0 0.0
    %6175 = vmatprep.subr.mxu0 0.0
    %6176 = vmatpush1.msra.mxu0 0.0
    %6177 = vmatprep.subr.mxu0 0.0
    %6178 = vmatpush1.msra.mxu0 0.0
    %6179 = vmatprep.subr.mxu0 0.0
    %6180 = vmatpush1.msra.mxu0 0.0
    %6181 = vmatprep.subr.mxu0 0.0
    %6182 = vmatpush1.msra.mxu0 0.0
    %6183 = vmatprep.subr.mxu0 0.0
    %6184 = vmatpush1.msra.mxu0 0.0
    %6185 = vmatprep.subr.mxu0 0.0
    %6186 = vmatpush1.msra.mxu0 0.0
    %6187 = vmatprep.subr.mxu0 0.0
    %6188 = vmatpush1.msra.mxu0 0.0
    %6189 = vmatprep.subr.mxu0 0.0
    %6190 = vmatpush1.msra.mxu0 0.0
    %6191 = vmatprep.subr.mxu0 0.0
    %6192 = vmatpush1.msra.mxu0 0.0
    %6193 = vmatprep.subr.mxu0 0.0
    %6194 = vmatpush1.msra.mxu0 0.0
    %6195 = vmatprep.subr.mxu0 0.0
    %6196 = vmatpush1.msra.mxu0 0.0
    %6197 = vmatprep.subr.mxu0 0.0
    %6198 = vmatpush1.msra.mxu0 0.0
    %6199 = vmatprep.subr.mxu0 0.0
    %6200 = vmatpush1.msra.mxu0 0.0
    %6201 = vmatprep.mubr.f32.mxu0 0.0
    %6202 = vmatmul.mubr.f32.gmra.mrb[0].mxu0 %v6135
    %v6203 = vpop.f32.mrb[0].mxu0
    %v6204 = vadd.f32 0.0, %v6203
    %v6205 = vpop.f32.mrb[0].mxu0
    %6206 = vdwg.mxu0
    %v6208 = vsel %vm760, %v340, 0
    %6210 = vmatprep.subr.mxu0 0.0
    %6211 = vmatpush1.msra.mxu0 %v6112
    %6212 = vmatprep.subr.mxu0 0.0
    %6213 = vmatpush1.msra.mxu0 %v6113
    %6214 = vmatprep.subr.mxu0 0.0
    %6215 = vmatpush1.msra.mxu0 %v6114
    %6216 = vmatprep.subr.mxu0 0.0
    %6217 = vmatpush1.msra.mxu0 %v6115
    %6218 = vmatprep.subr.mxu0 0.0
    %6219 = vmatpush1.msra.mxu0 0.0
    %6220 = vmatprep.subr.mxu0 0.0
    %6221 = vmatpush1.msra.mxu0 0.0
    %6222 = vmatprep.subr.mxu0 0.0
    %6223 = vmatpush1.msra.mxu0 0.0
    %6224 = vmatprep.subr.mxu0 0.0
    %6225 = vmatpush1.msra.mxu0 0.0
    %6226 = vmatprep.subr.mxu0 0.0
    %6227 = vmatpush1.msra.mxu0 0.0
    %6228 = vmatprep.subr.mxu0 0.0
    %6229 = vmatpush1.msra.mxu0 0.0
    %6230 = vmatprep.subr.mxu0 0.0
    %6231 = vmatpush1.msra.mxu0 0.0
    %6232 = vmatprep.subr.mxu0 0.0
    %6233 = vmatpush1.msra.mxu0 0.0
    %6234 = vmatprep.subr.mxu0 0.0
    %6235 = vmatpush1.msra.mxu0 0.0
    %6236 = vmatprep.subr.mxu0 0.0
    %6237 = vmatpush1.msra.mxu0 0.0
    %6238 = vmatprep.subr.mxu0 0.0
    %6239 = vmatpush1.msra.mxu0 0.0
    %6240 = vmatprep.subr.mxu0 0.0
    %6241 = vmatpush1.msra.mxu0 0.0
    %6242 = vmatprep.subr.mxu0 0.0
    %6243 = vmatpush1.msra.mxu0 0.0
    %6244 = vmatprep.subr.mxu0 0.0
    %6245 = vmatpush1.msra.mxu0 0.0
    %6246 = vmatprep.subr.mxu0 0.0
    %6247 = vmatpush1.msra.mxu0 0.0
    %6248 = vmatprep.subr.mxu0 0.0
    %6249 = vmatpush1.msra.mxu0 0.0
    %6250 = vmatprep.subr.mxu0 0.0
    %6251 = vmatpush1.msra.mxu0 0.0
    %6252 = vmatprep.subr.mxu0 0.0
    %6253 = vmatpush1.msra.mxu0 0.0
    %6254 = vmatprep.subr.mxu0 0.0
    %6255 = vmatpush1.msra.mxu0 0.0
    %6256 = vmatprep.subr.mxu0 0.0
    %6257 = vmatpush1.msra.mxu0 0.0
    %6258 = vmatprep.subr.mxu0 0.0
    %6259 = vmatpush1.msra.mxu0 0.0
    %6260 = vmatprep.subr.mxu0 0.0
    %6261 = vmatpush1.msra.mxu0 0.0
    %6262 = vmatprep.subr.mxu0 0.0
    %6263 = vmatpush1.msra.mxu0 0.0
    %6264 = vmatprep.subr.mxu0 0.0
    %6265 = vmatpush1.msra.mxu0 0.0
    %6266 = vmatprep.subr.mxu0 0.0
    %6267 = vmatpush1.msra.mxu0 0.0
    %6268 = vmatprep.subr.mxu0 0.0
    %6269 = vmatpush1.msra.mxu0 0.0
    %6270 = vmatprep.subr.mxu0 0.0
    %6271 = vmatpush1.msra.mxu0 0.0
    %6272 = vmatprep.subr.mxu0 0.0
    %6273 = vmatpush1.msra.mxu0 0.0
    %6274 = vmatprep.mubr.f32.mxu0 0.0
    %6275 = vmatmul.mubr.f32.gmra.mrb[0].mxu0 %v6208
    %v6276 = vpop.f32.mrb[0].mxu0
    %v6277 = vadd.f32 %v6204, %v6276
    %v6278 = vpop.f32.mrb[0].mxu0
    %6279 = vdwg.mxu0
    %v6280 = vld [vmem:[#allocation23] sm:$0x1]
    %v6282 = vlaneseq
    %v6283 = vshrl.u32 %v6282, 7
    %v6284 = vsub.s32 0, %v6283
    %v6285 = vrot.slane %v6280, %v6284
    %v6287 = vadd.f32 %v6277, %v6285
    %v6288 = vmax.f32 %v6287, 0.0
    %v6289 = vld [vmem:[%s20] sm:$0xff]
    %v6290 = vld [vmem:[%s20 + $0x8] sm:$0xff]
    %v6291 = vld [vmem:[%s20 + $0x10] sm:$0xff]
    %v6292 = vld [vmem:[%s20 + $0x18] sm:$0xff]
    %v6293 = vld [vmem:[#allocation24] sm:$0x1]
    %v6295 = vlaneseq
    %v6296 = vshrl.u32 %v6295, 7
    %v6297 = vsub.s32 0, %v6296
    %v6298 = vrot.slane %v6293, %v6297
    %v6301 = vsel %vm760, %v6288, 0
    %6303 = vmatprep.subr.mxu0 0.0
    %6304 = vmatpush1.msra.mxu0 %v6289
    %6305 = vmatprep.subr.mxu0 0.0
    %6306 = vmatpush1.msra.mxu0 %v6290
    %6307 = vmatprep.subr.mxu0 0.0
    %6308 = vmatpush1.msra.mxu0 %v6291
    %6309 = vmatprep.subr.mxu0 0.0
    %6310 = vmatpush1.msra.mxu0 %v6292
    %6311 = vmatprep.subr.mxu0 0.0
    %6312 = vmatpush1.msra.mxu0 0.0
    %6313 = vmatprep.subr.mxu0 0.0
    %6314 = vmatpush1.msra.mxu0 0.0
    %6315 = vmatprep.subr.mxu0 0.0
    %6316 = vmatpush1.msra.mxu0 0.0
    %6317 = vmatprep.subr.mxu0 0.0
    %6318 = vmatpush1.msra.mxu0 0.0
    %6319 = vmatprep.subr.mxu0 0.0
    %6320 = vmatpush1.msra.mxu0 0.0
    %6321 = vmatprep.subr.mxu0 0.0
    %6322 = vmatpush1.msra.mxu0 0.0
    %6323 = vmatprep.subr.mxu0 0.0
    %6324 = vmatpush1.msra.mxu0 0.0
    %6325 = vmatprep.subr.mxu0 0.0
    %6326 = vmatpush1.msra.mxu0 0.0
    %6327 = vmatprep.subr.mxu0 0.0
    %6328 = vmatpush1.msra.mxu0 0.0
    %6329 = vmatprep.subr.mxu0 0.0
    %6330 = vmatpush1.msra.mxu0 0.0
    %6331 = vmatprep.subr.mxu0 0.0
    %6332 = vmatpush1.msra.mxu0 0.0
    %6333 = vmatprep.subr.mxu0 0.0
    %6334 = vmatpush1.msra.mxu0 0.0
    %6335 = vmatprep.subr.mxu0 0.0
    %6336 = vmatpush1.msra.mxu0 0.0
    %6337 = vmatprep.subr.mxu0 0.0
    %6338 = vmatpush1.msra.mxu0 0.0
    %6339 = vmatprep.subr.mxu0 0.0
    %6340 = vmatpush1.msra.mxu0 0.0
    %6341 = vmatprep.subr.mxu0 0.0
    %6342 = vmatpush1.msra.mxu0 0.0
    %6343 = vmatprep.subr.mxu0 0.0
    %6344 = vmatpush1.msra.mxu0 0.0
    %6345 = vmatprep.subr.mxu0 0.0
    %6346 = vmatpush1.msra.mxu0 0.0
    %6347 = vmatprep.subr.mxu0 0.0
    %6348 = vmatpush1.msra.mxu0 0.0
    %6349 = vmatprep.subr.mxu0 0.0
    %6350 = vmatpush1.msra.mxu0 0.0
    %6351 = vmatprep.subr.mxu0 0.0
    %6352 = vmatpush1.msra.mxu0 0.0
    %6353 = vmatprep.subr.mxu0 0.0
    %6354 = vmatpush1.msra.mxu0 0.0
    %6355 = vmatprep.subr.mxu0 0.0
    %6356 = vmatpush1.msra.mxu0 0.0
    %6357 = vmatprep.subr.mxu0 0.0
    %6358 = vmatpush1.msra.mxu0 0.0
    %6359 = vmatprep.subr.mxu0 0.0
    %6360 = vmatpush1.msra.mxu0 0.0
    %6361 = vmatprep.subr.mxu0 0.0
    %6362 = vmatpush1.msra.mxu0 0.0
    %6363 = vmatprep.subr.mxu0 0.0
    %6364 = vmatpush1.msra.mxu0 0.0
    %6365 = vmatprep.subr.mxu0 0.0
    %6366 = vmatpush1.msra.mxu0 0.0
    %6367 = vmatprep.mubr.f32.mxu0 0.0
    %6368 = vmatmul.mubr.f32.gmra.mrb[0].mxu0 %v6301
    %v6369 = vpop.f32.mrb[0].mxu0
    %v6370 = vadd.f32 %v6298, %v6369
    %v6371 = vpop.f32.mrb[0].mxu0
    %6372 = vdwg.mxu0
    %v6373 = vmax.f32 %v6370, 0.0
    %v6374 = vld [vmem:[%s22] sm:$0xff]
    %v6375 = vld [vmem:[%s22 + $0x8] sm:$0xff]
    %v6376 = vld [vmem:[%s23] sm:$0x1]
    %v6378 = vlaneseq
    %v6379 = vshrl.u32 %v6378, 7
    %v6380 = vsub.s32 0, %v6379
    %v6381 = vrot.slane %v6376, %v6380
    %vm6383 = vcmask 130048
    %v6385 = vsel %vm6383, %v6373, 0
    %6387 = vmatprep.subr.mxu0 0.0
    %6388 = vmatpush1.msra.mxu0 %v6374
    %6389 = vmatprep.subr.mxu0 0.0
    %6390 = vmatpush1.msra.mxu0 %v6375
    %6391 = vmatprep.subr.mxu0 0.0
    %6392 = vmatpush1.msra.mxu0 0.0
    %6393 = vmatprep.subr.mxu0 0.0
    %6394 = vmatpush1.msra.mxu0 0.0
    %6395 = vmatprep.subr.mxu0 0.0
    %6396 = vmatpush1.msra.mxu0 0.0
    %6397 = vmatprep.subr.mxu0 0.0
    %6398 = vmatpush1.msra.mxu0 0.0
    %6399 = vmatprep.subr.mxu0 0.0
    %6400 = vmatpush1.msra.mxu0 0.0
    %6401 = vmatprep.subr.mxu0 0.0
    %6402 = vmatpush1.msra.mxu0 0.0
    %6403 = vmatprep.subr.mxu0 0.0
    %6404 = vmatpush1.msra.mxu0 0.0
    %6405 = vmatprep.subr.mxu0 0.0
    %6406 = vmatpush1.msra.mxu0 0.0
    %6407 = vmatprep.subr.mxu0 0.0
    %6408 = vmatpush1.msra.mxu0 0.0
    %6409 = vmatprep.subr.mxu0 0.0
    %6410 = vmatpush1.msra.mxu0 0.0
    %6411 = vmatprep.subr.mxu0 0.0
    %6412 = vmatpush1.msra.mxu0 0.0
    %6413 = vmatprep.subr.mxu0 0.0
    %6414 = vmatpush1.msra.mxu0 0.0
    %6415 = vmatprep.subr.mxu0 0.0
    %6416 = vmatpush1.msra.mxu0 0.0
    %6417 = vmatprep.subr.mxu0 0.0
    %6418 = vmatpush1.msra.mxu0 0.0
    %6419 = vmatprep.subr.mxu0 0.0
    %6420 = vmatpush1.msra.mxu0 0.0
    %6421 = vmatprep.subr.mxu0 0.0
    %6422 = vmatpush1.msra.mxu0 0.0
    %6423 = vmatprep.subr.mxu0 0.0
    %6424 = vmatpush1.msra.mxu0 0.0
    %6425 = vmatprep.subr.mxu0 0.0
    %6426 = vmatpush1.msra.mxu0 0.0
    %6427 = vmatprep.subr.mxu0 0.0
    %6428 = vmatpush1.msra.mxu0 0.0
    %6429 = vmatprep.subr.mxu0 0.0
    %6430 = vmatpush1.msra.mxu0 0.0
    %6431 = vmatprep.subr.mxu0 0.0
    %6432 = vmatpush1.msra.mxu0 0.0
    %6433 = vmatprep.subr.mxu0 0.0
    %6434 = vmatpush1.msra.mxu0 0.0
    %6435 = vmatprep.subr.mxu0 0.0
    %6436 = vmatpush1.msra.mxu0 0.0
    %6437 = vmatprep.subr.mxu0 0.0
    %6438 = vmatpush1.msra.mxu0 0.0
    %6439 = vmatprep.subr.mxu0 0.0
    %6440 = vmatpush1.msra.mxu0 0.0
    %6441 = vmatprep.subr.mxu0 0.0
    %6442 = vmatpush1.msra.mxu0 0.0
    %6443 = vmatprep.subr.mxu0 0.0
    %6444 = vmatpush1.msra.mxu0 0.0
    %6445 = vmatprep.subr.mxu0 0.0
    %6446 = vmatpush1.msra.mxu0 0.0
    %6447 = vmatprep.subr.mxu0 0.0
    %6448 = vmatpush1.msra.mxu0 0.0
    %6449 = vmatprep.subr.mxu0 0.0
    %6450 = vmatpush1.msra.mxu0 0.0
    %6451 = vmatprep.mubr.f32.mxu0 0.0
    %6452 = vmatmul.mubr.f32.gmra.mrb[0].mxu0 %v6385
    %v6453 = vpop.f32.mrb[0].mxu0
    %v6454 = vadd.f32 %v6381, %v6453
    %v6455 = vpop.f32.mrb[0].mxu0
    %6456 = vdwg.mxu0
    %v6457 = vld [vmem:[%s2] sm:$0xff]
    %v6458 = vld [vmem:[%s2 + $0x8] sm:$0xf]
    %v6459 = vld [vmem:[%s2 + $0x10] sm:$0xff]
    %v6460 = vld [vmem:[%s2 + $0x18] sm:$0xf]
    %v6461 = vld [vmem:[%s2 + $0x20] sm:$0xff]
    %v6462 = vld [vmem:[%s2 + $0x28] sm:$0xf]
    %v6463 = vld [vmem:[%s2 + $0x30] sm:$0xff]
    %v6464 = vld [vmem:[%s2 + $0x38] sm:$0xf]
    %v6465 = vld [vmem:[%s2 + $0x40] sm:$0xff]
    %v6466 = vld [vmem:[%s2 + $0x48] sm:$0xf]
    %v6467 = vld [vmem:[%s2 + $0x50] sm:$0xff]
    %v6468 = vld [vmem:[%s2 + $0x58] sm:$0xf]
    %v6469 = vld [vmem:[%s2 + $0x60] sm:$0xff]
    %v6470 = vld [vmem:[%s2 + $0x68] sm:$0xf]
    %v6471 = vld [vmem:[%s2 + $0x70] sm:$0xff]
    %v6472 = vld [vmem:[%s2 + $0x78] sm:$0xf]
    %v6474 = vcombine.high %v6454, %v6454
    %v6476 = vunpack.c.l.s4 1966171168
    %v6477 = vunpack.c.0.s8 %v6476
    %v6478 = vlaneseq
    %v6479 = vshrl.u32 %v6478, 7
    %v6480 = vsub.s32 %v6477, %v6479
    %v6481 = vrot.slane %v6454, %v6480
    %v6483 = vunpack.c.l.s4 1966171168
    %v6484 = vunpack.c.0.s8 %v6483
    %v6485 = vlaneseq
    %v6486 = vshrl.u32 %v6485, 7
    %v6487 = vsub.s32 %v6484, %v6486
    %v6488 = vrot.slane %v6474, %v6487
    %v6489 = vcombine.high %v6481, %v6481
    %v6490 = vcombine.high %v6488, %v6488
    %v6492 = vunpack.c.l.s4 1966171168
    %v6493 = vunpack.c.0.s8 %v6492
    %v6494 = vlaneseq
    %v6495 = vshrl.u32 %v6494, 7
    %v6496 = vsub.s32 %v6493, %v6495
    %v6497 = vrot.slane %v6481, %v6496
    %v6499 = vunpack.c.l.s4 1966171168
    %v6500 = vunpack.c.0.s8 %v6499
    %v6501 = vlaneseq
    %v6502 = vshrl.u32 %v6501, 7
    %v6503 = vsub.s32 %v6500, %v6502
    %v6504 = vrot.slane %v6488, %v6503
    %v6506 = vunpack.c.l.s4 1966171168
    %v6507 = vunpack.c.0.s8 %v6506
    %v6508 = vlaneseq
    %v6509 = vshrl.u32 %v6508, 7
    %v6510 = vsub.s32 %v6507, %v6509
    %v6511 = vrot.slane %v6489, %v6510
    %v6513 = vunpack.c.l.s4 1966171168
    %v6514 = vunpack.c.0.s8 %v6513
    %v6515 = vlaneseq
    %v6516 = vshrl.u32 %v6515, 7
    %v6517 = vsub.s32 %v6514, %v6516
    %v6518 = vrot.slane %v6490, %v6517
    %v6519 = vcombine.high %v6497, %v6497
    %v6520 = vcombine.high %v6504, %v6504
    %v6521 = vcombine.high %v6511, %v6511
    %v6522 = vcombine.high %v6518, %v6518
    %v6523 = vlaneseq
    %v6524 = vshrl.u32 %v6523, 7
    %v6525 = vsub.s32 0, %v6524
    %v6526 = vrot.slane %v6497, %v6525
    %v6527 = vlaneseq
    %v6528 = vshrl.u32 %v6527, 7
    %v6529 = vsub.s32 0, %v6528
    %v6530 = vrot.slane %v6511, %v6529
    %v6531 = vlaneseq
    %v6532 = vshrl.u32 %v6531, 7
    %v6533 = vsub.s32 0, %v6532
    %v6534 = vrot.slane %v6519, %v6533
    %v6535 = vlaneseq
    %v6536 = vshrl.u32 %v6535, 7
    %v6537 = vsub.s32 0, %v6536
    %v6538 = vrot.slane %v6521, %v6537
    %v6539 = vlaneseq
    %v6540 = vshrl.u32 %v6539, 7
    %v6541 = vsub.s32 0, %v6540
    %v6542 = vrot.slane %v6504, %v6541
    %v6543 = vlaneseq
    %v6544 = vshrl.u32 %v6543, 7
    %v6545 = vsub.s32 0, %v6544
    %v6546 = vrot.slane %v6518, %v6545
    %v6547 = vlaneseq
    %v6548 = vshrl.u32 %v6547, 7
    %v6549 = vsub.s32 0, %v6548
    %v6550 = vrot.slane %v6520, %v6549
    %v6551 = vlaneseq
    %v6552 = vshrl.u32 %v6551, 7
    %v6553 = vsub.s32 0, %v6552
    %v6554 = vrot.slane %v6522, %v6553
    %v6563 = vmul.f32 %v6457, %v6526
    %v6564 = vmul.f32 %v6458, %v6526
    %v6565 = vmul.f32 %v6459, %v6530
    %v6566 = vmul.f32 %v6460, %v6530
    %v6567 = vmul.f32 %v6461, %v6534
    %v6568 = vmul.f32 %v6462, %v6534
    %v6569 = vmul.f32 %v6463, %v6538
    %v6570 = vmul.f32 %v6464, %v6538
    %v6571 = vmul.f32 %v6465, %v6542
    %v6572 = vmul.f32 %v6466, %v6542
    %v6573 = vmul.f32 %v6467, %v6546
    %v6574 = vmul.f32 %v6468, %v6546
    %v6575 = vmul.f32 %v6469, %v6550
    %v6576 = vmul.f32 %v6470, %v6550
    %v6577 = vmul.f32 %v6471, %v6554
    %v6578 = vmul.f32 %v6472, %v6554
    %vm6579 = vcmask 39936
    %v6580 = vsel %vm6579, %v6563, 0.0
    %6581 = vadd.xlane.f32.xlu0 %v6580
    %v6582 = vpop.xlane.xlu0 %6581
    %vm6583 = vcmask 35840
    %v6584 = vsel %vm6583, %v6564, 0.0
    %6585 = vadd.xlane.f32.xlu0 %v6584
    %v6586 = vpop.xlane.xlu0 %6585
    %v6587 = vsel %vm6579, %v6565, 0.0
    %6588 = vadd.xlane.f32.xlu0 %v6587
    %v6589 = vpop.xlane.xlu0 %6588
    %v6590 = vsel %vm6583, %v6566, 0.0
    %6591 = vadd.xlane.f32.xlu0 %v6590
    %v6592 = vpop.xlane.xlu0 %6591
    %v6593 = vsel %vm6579, %v6567, 0.0
    %6594 = vadd.xlane.f32.xlu0 %v6593
    %v6595 = vpop.xlane.xlu0 %6594
    %v6596 = vsel %vm6583, %v6568, 0.0
    %6597 = vadd.xlane.f32.xlu0 %v6596
    %v6598 = vpop.xlane.xlu0 %6597
    %v6599 = vsel %vm6579, %v6569, 0.0
    %6600 = vadd.xlane.f32.xlu0 %v6599
    %v6601 = vpop.xlane.xlu0 %6600
    %v6602 = vsel %vm6583, %v6570, 0.0
    %6603 = vadd.xlane.f32.xlu0 %v6602
    %v6604 = vpop.xlane.xlu0 %6603
    %v6605 = vsel %vm6579, %v6571, 0.0
    %6606 = vadd.xlane.f32.xlu0 %v6605
    %v6607 = vpop.xlane.xlu0 %6606
    %v6608 = vsel %vm6583, %v6572, 0.0
    %6609 = vadd.xlane.f32.xlu0 %v6608
    %v6610 = vpop.xlane.xlu0 %6609
    %v6611 = vsel %vm6579, %v6573, 0.0
    %6612 = vadd.xlane.f32.xlu0 %v6611
    %v6613 = vpop.xlane.xlu0 %6612
    %v6614 = vsel %vm6583, %v6574, 0.0
    %6615 = vadd.xlane.f32.xlu0 %v6614
    %v6616 = vpop.xlane.xlu0 %6615
    %v6617 = vsel %vm6579, %v6575, 0.0
    %6618 = vadd.xlane.f32.xlu0 %v6617
    %v6619 = vpop.xlane.xlu0 %6618
    %v6620 = vsel %vm6583, %v6576, 0.0
    %6621 = vadd.xlane.f32.xlu0 %v6620
    %v6622 = vpop.xlane.xlu0 %6621
    %v6623 = vsel %vm6579, %v6577, 0.0
    %6624 = vadd.xlane.f32.xlu0 %v6623
    %v6625 = vpop.xlane.xlu0 %6624
    %v6626 = vsel %vm6583, %v6578, 0.0
    %6627 = vadd.xlane.f32.xlu0 %v6626
    %v6628 = vpop.xlane.xlu0 %6627
    %v6629 = vld [vmem:[#allocation2] sm:$0x1]
    %v6631 = vlaneseq
    %v6632 = vshrl.u32 %v6631, 7
    %v6633 = vsub.s32 0, %v6632
    %v6634 = vrot.slane %v6629, %v6633
    %6635 = vset.pattern.permute.xlu0 0
    %6636 = vperm.xlu0 %6635, %v6634
    %v6637 = vpop.permute.xlu0 %6636
    %v6639 = vadd.f32 %v6582, %v6637
    %v6640 = vadd.f32 %v6586, %v6637
    %v6641 = vadd.f32 %v6589, %v6637
    %v6642 = vadd.f32 %v6592, %v6637
    %v6643 = vadd.f32 %v6595, %v6637
    %v6644 = vadd.f32 %v6598, %v6637
    %v6645 = vadd.f32 %v6601, %v6637
    %v6646 = vadd.f32 %v6604, %v6637
    %v6647 = vadd.f32 %v6607, %v6637
    %v6648 = vadd.f32 %v6610, %v6637
    %v6649 = vadd.f32 %v6613, %v6637
    %v6650 = vadd.f32 %v6616, %v6637
    %v6651 = vadd.f32 %v6619, %v6637
    %v6652 = vadd.f32 %v6622, %v6637
    %v6653 = vadd.f32 %v6625, %v6637
    %v6654 = vadd.f32 %v6628, %v6637
    %v6671 = vlaneseq
    %v6672 = vand.u32 %v6671, 127
    %v6673 = vlaneseq
    %v6674 = vshrl.u32 %v6673, 7
    %v6675 = vsub.s32 %v6672, %v6674
    %v6676 = vrot.slane %v6639, %v6675
    %v6677 = vadd.s32 %v6672, 4294967288
    %v6678 = vlaneseq
    %v6679 = vshrl.u32 %v6678, 7
    %v6680 = vsub.s32 %v6677, %v6679
    %v6681 = vrot.slane %v6640, %v6680
    %vm6682 = vcmask 130112
    %v6683 = vsel %vm6682, %v6681, %v6676
    %v6684 = vlaneseq
    %v6685 = vshrl.u32 %v6684, 7
    %v6686 = vsub.s32 %v6672, %v6685
    %v6687 = vrot.slane %v6641, %v6686
    %v6688 = vlaneseq
    %v6689 = vshrl.u32 %v6688, 7
    %v6690 = vsub.s32 %v6677, %v6689
    %v6691 = vrot.slane %v6642, %v6690
    %v6692 = vsel %vm6682, %v6691, %v6687
    %v6693 = vlaneseq
    %v6694 = vshrl.u32 %v6693, 7
    %v6695 = vsub.s32 %v6672, %v6694
    %v6696 = vrot.slane %v6643, %v6695
    %v6697 = vlaneseq
    %v6698 = vshrl.u32 %v6697, 7
    %v6699 = vsub.s32 %v6677, %v6698
    %v6700 = vrot.slane %v6644, %v6699
    %v6701 = vsel %vm6682, %v6700, %v6696
    %v6702 = vlaneseq
    %v6703 = vshrl.u32 %v6702, 7
    %v6704 = vsub.s32 %v6672, %v6703
    %v6705 = vrot.slane %v6645, %v6704
    %v6706 = vlaneseq
    %v6707 = vshrl.u32 %v6706, 7
    %v6708 = vsub.s32 %v6677, %v6707
    %v6709 = vrot.slane %v6646, %v6708
    %v6710 = vsel %vm6682, %v6709, %v6705
    %v6711 = vlaneseq
    %v6712 = vshrl.u32 %v6711, 7
    %v6713 = vsub.s32 %v6672, %v6712
    %v6714 = vrot.slane %v6647, %v6713
    %v6715 = vlaneseq
    %v6716 = vshrl.u32 %v6715, 7
    %v6717 = vsub.s32 %v6677, %v6716
    %v6718 = vrot.slane %v6648, %v6717
    %v6719 = vsel %vm6682, %v6718, %v6714
    %v6720 = vlaneseq
    %v6721 = vshrl.u32 %v6720, 7
    %v6722 = vsub.s32 %v6672, %v6721
    %v6723 = vrot.slane %v6649, %v6722
    %v6724 = vlaneseq
    %v6725 = vshrl.u32 %v6724, 7
    %v6726 = vsub.s32 %v6677, %v6725
    %v6727 = vrot.slane %v6650, %v6726
    %v6728 = vsel %vm6682, %v6727, %v6723
    %v6729 = vlaneseq
    %v6730 = vshrl.u32 %v6729, 7
    %v6731 = vsub.s32 %v6672, %v6730
    %v6732 = vrot.slane %v6651, %v6731
    %v6733 = vlaneseq
    %v6734 = vshrl.u32 %v6733, 7
    %v6735 = vsub.s32 %v6677, %v6734
    %v6736 = vrot.slane %v6652, %v6735
    %v6737 = vsel %vm6682, %v6736, %v6732
    %v6738 = vlaneseq
    %v6739 = vshrl.u32 %v6738, 7
    %v6740 = vsub.s32 %v6672, %v6739
    %v6741 = vrot.slane %v6653, %v6740
    %v6742 = vlaneseq
    %v6743 = vshrl.u32 %v6742, 7
    %v6744 = vsub.s32 %v6677, %v6743
    %v6745 = vrot.slane %v6654, %v6744
    %v6746 = vsel %vm6682, %v6745, %v6741
    %vm6747 = vcmask 1041409
    %v6748 = vsel %vm6747, %v6692, %v6683
    %vm6749 = vcmask 1042434
    %v6750 = vsel %vm6749, %v6701, %v6748
    %vm6751 = vcmask 1043459
    %v6752 = vsel %vm6751, %v6710, %v6750
    %vm6753 = vcmask 1044484
    %v6754 = vsel %vm6753, %v6719, %v6752
    %vm6755 = vcmask 1045509
    %v6756 = vsel %vm6755, %v6728, %v6754
    %vm6757 = vcmask 1046534
    %v6758 = vsel %vm6757, %v6737, %v6756
    %vm6759 = vcmask 1047559
    %v6760 = vsel %vm6759, %v6746, %v6758
    %vm6762 = vcmask 97280
    %6763 = vst.msk [vmem:[#allocation26] sm:$0xff] %vm6762, %v6760
    // Predicated region
    $region158: #{tts_fused_forward.1} parent=1 // pred_check
      _
    $region159: #{tts_fused_forward.1} parent=1 // pred_check_branch
      %6765 = sbr.rel (0) target = $region161
    $region160: #{tts_fused_forward.1} parent=1 // pred_region
      %s6767 = ssub.s32 128, 128
      %6768 = vsyncadd [#allocation5], %s6767
      %s6770 = sshll.u32 [#allocation26], 4
      %s6771 = int_to_ptr.vmem [resolvable:$true] %s6770
      %6773 = dma.vmem_to_hbm [thread:$0]  %s6771, 128, %s25, [#allocation5]
    $region161: #{tts_fused_forward.1} parent=1 // pred_fallthru
      _
    // Predicated region
    $region162: #{tts_fused_forward.1} parent=1 // pred_check
      _
    $region163: #{tts_fused_forward.1} parent=1 // pred_check_branch
      %6775 = sbr.rel (0) target = $region165
    $region164: #{tts_fused_forward.1} parent=1 // pred_region
      %6776 = dma.done [#allocation5], 128
    $region165: #{tts_fused_forward.1} parent=1 // pred_fallthru
      _
    %6777 = vsyncpa [#allocation4], 1
    %6778 = vsyncpa [#allocation7], 1
    %6779 = vsyncpa [#allocation10], 1
    %6780 = vsyncpa [#allocation13], 1
    %6781 = vsyncpa [#allocation16], 1
    %6782 = vsyncpa [#allocation19], 1
    %6783 = vsyncpa [#allocation22], 1
    %6784 = vsyncpa [#allocation25], 1
    %6785 = vsyncpa [#allocation5], 1

</llo_original>
